<compile_context>
chip_gen: v6e
topology: v6e:2x2x1
jax: 0.10.0
libtpu: 0.0.40
codegen_flags: <defaults>
</compile_context>

<pallas_src>
import functools

import jax
import jax.numpy as jnp
from jax.experimental import pallas as pl
from jax.experimental.pallas import tpu as pltpu

# Geometry for the 32x32 input this module implies (conv5/pool2/conv5/pool2/
# conv5 -> 1x1 spatial).  Flattened-image layout: column = h*32 + w.
_ROW = 32        # lane stride of one image row
_S0 = 1024       # per-image lane stride for stage 0/1   (32*32, 8 lane tiles)
_S1 = 896        # per-image lane stride after pool1     (7 lane tiles)
_S2 = 640        # per-image lane stride after pool2     (5 lane tiles)


def _shl(x, off):
    """result[:, p] = x[:, (p + off) % W]  (circular left shift along lanes).

    Spelled out with two lane slices + a concat so the semantics are
    unambiguous; wrap-around only ever lands in garbage columns.
    """
    if off == 0:
        return x
    return jnp.concatenate([x[:, off:], x[:, :off]], axis=1)


# ----------------------------- fused Pallas kernel ---------------------------

def _kernel(x_ref, w1_ref, b1_ref, w2_ref, b2_ref, w3_ref, b3_ref, out_ref,
            *, batch_block):
    """Full FeatureExtractor forward for one block of `batch_block` images.

    Activations are (C, B*stride) slabs: channels on sublanes, images
    concatenated on the lane axis.  Pool results stay in place at dilated
    positions, so the following conv uses dilated tap offsets instead of a
    compaction matmul.
    """
    B = batch_block

    def conv5x5_relu(act, w_ref, b_ref, dil):
        # Folded-tap conv: one (Cout, 25*Cin) x (25*Cin, W) bf16 MXU matmul.
        a = act.astype(jnp.bfloat16)
        parts = []
        for i in range(5):
            for j in range(5):
                parts.append(_shl(a, dil * (i * _ROW + j)))
        stacked = jnp.concatenate(parts, axis=0)             # (25*Cin, W) bf16
        y = jnp.dot(w_ref[...], stacked,
                    preferred_element_type=jnp.float32)       # (Cout, W) f32
        return jnp.maximum(y + b_ref[...], 0.0)

    def maxpool2x2(act, dil):
        # 2x2/2 max = elementwise max of 4 shifted slabs; result valid at
        # columns with dilation 2*dil (no compaction / selection matmul).
        return jnp.maximum(
            jnp.maximum(act, _shl(act, dil)),
            jnp.maximum(_shl(act, dil * _ROW), _shl(act, dil * (_ROW + 1))))

    def restride(act, old_s, new_s):
        # Trim each image's unused tail (aligned slices: old_s, new_s are
        # multiples of 128) so later full-width matmuls are narrower.
        return jnp.concatenate(
            [act[:, b * old_s: b * old_s + new_s] for b in range(B)], axis=1)

    x = x_ref[0]                                   # (Cin_pad, B*S0) bf16
    h = conv5x5_relu(x, w1_ref, b1_ref, dil=1)     # valid @ cols 32h + w
    h = maxpool2x2(h, dil=1)                       # valid @ cols 64a + 2b
    h = restride(h, _S0, _S1)                      # (C1, B*S1)
    h = conv5x5_relu(h, w2_ref, b2_ref, dil=2)     # valid @ cols 64a + 2b
    h = maxpool2x2(h, dil=2)                       # valid @ cols 128u + 4v
    h = restride(h, _S1, _S2)                      # (C2, B*S2)
    h = conv5x5_relu(h, w3_ref, b3_ref, dil=4)     # 1x1 output @ col b*S2
    out_ref[0] = jnp.concatenate(
        [h[:, b * _S2: b * _S2 + 1] for b in range(B)], axis=1)   # (C3, B)


# ------------------------------- wrapper --------------------------------------

def feature_extractor_forward(x, params, *, batch_block=4):
    """Fused Pallas implementation of FeatureExtractor.forward (NCHW input)."""
    n, cin, h0, w0 = x.shape
    assert (h0, w0) == (32, 32), "FeatureExtractor implies 32x32 inputs"
    c1 = params["w1"].shape[0]            # ndf
    c2 = params["w2"].shape[0]            # ndf
    c3 = params["w3"].shape[0]            # 2*ndf
    B = batch_block
    assert n % B == 0, "batch must be a multiple of batch_block"
    nblk = n // B

    # Pad input channels up to ndf so every stacked piece is a full sublane
    # group; extra channels (and the matching weight columns) are zero.
    cinp = c1
    assert cin <= cinp

    # Input slab: (nblk, cinp, B*S0) bf16, channels on sublanes, images
    # side-by-side on lanes with per-image stride S0 = 1024 (lane-tile aligned).
    xp = jnp.pad(x, ((0, 0), (0, cinp - cin), (0, 0), (0, 0)))
    slab = (xp.reshape(nblk, B, cinp, _S0)
              .transpose(0, 2, 1, 3)
              .reshape(nblk, cinp, B * _S0)
              .astype(jnp.bfloat16))

    def prep_w(w, cpad):                  # (Cout, Cin, 5, 5) -> (Cout, 25*cpad)
        cout, cin_ = w.shape[:2]
        wp = jnp.pad(w, ((0, 0), (0, cpad - cin_), (0, 0), (0, 0)))
        # column index = (i*5 + j)*cpad + c  -- matches the stacked-slab order
        return (jnp.transpose(wp, (0, 2, 3, 1))
                  .reshape(cout, 25 * cpad)
                  .astype(jnp.bfloat16))

    w1f = prep_w(params["w1"], cinp)      # (c1, 25*cinp)
    w2f = prep_w(params["w2"], c1)        # (c2, 25*c1)
    w3f = prep_w(params["w3"], c2)        # (c3, 25*c2)
    b1c = params["b1"].reshape(c1, 1).astype(jnp.float32)
    b2c = params["b2"].reshape(c2, 1).astype(jnp.float32)
    b3c = params["b3"].reshape(c3, 1).astype(jnp.float32)

    flops = 2 * n * (c1 * 25 * cinp * _S0
                     + c2 * 25 * c1 * _S1
                     + c3 * 25 * c2 * _S2)
    bytes_accessed = (slab.size * 2
                      + (w1f.size + w2f.size + w3f.size) * 2
                      + (c1 + c2 + c3) * 4 + n * c3 * 4)

    kernel = functools.partial(_kernel, batch_block=B)

    out = pl.pallas_call(
        kernel,
        out_shape=jax.ShapeDtypeStruct((nblk, c3, B), jnp.float32),
        grid=(nblk,),
        in_specs=[
            pl.BlockSpec((1, cinp, B * _S0), lambda i: (i, 0, 0)),
            pl.BlockSpec((c1, 25 * cinp), lambda i: (0, 0)),
            pl.BlockSpec((c1, 1), lambda i: (0, 0)),
            pl.BlockSpec((c2, 25 * c1), lambda i: (0, 0)),
            pl.BlockSpec((c2, 1), lambda i: (0, 0)),
            pl.BlockSpec((c3, 25 * c2), lambda i: (0, 0)),
            pl.BlockSpec((c3, 1), lambda i: (0, 0)),
        ],
        out_specs=pl.BlockSpec((1, c3, B), lambda i: (i, 0, 0)),
        compiler_params=pltpu.CompilerParams(
            dimension_semantics=("parallel",),
            vmem_limit_bytes=32 * 1024 * 1024),
        cost_estimate=pl.CostEstimate(
            flops=flops, transcendentals=0, bytes_accessed=bytes_accessed),
    )(slab, w1f, b1c, w2f, b2c, w3f, b3c)

    # (nblk, c3, B) -> (n, c3), matching output.view(-1, 2*ndf)
    return out.transpose(0, 2, 1).reshape(n, c3)


# ------------------------------ reference / test ------------------------------

def reference_forward(x, params):
    """Pure-JAX reference (lax.conv + reduce_window) for validation."""
    dn = ("NCHW", "OIHW", "NCHW")

    def conv(h, w, b):
        y = jax.lax.conv_general_dilated(h, w, (1, 1), "VALID",
                                         dimension_numbers=dn)
        return jax.nn.relu(y + b[None, :, None, None])

    def pool(h):
        return jax.lax.reduce_window(h, -jnp.inf, jax.lax.max,
                                     (1, 1, 2, 2), (1, 1, 2, 2), "VALID")

    h = pool(conv(x, params["w1"], params["b1"]))
    h = pool(conv(h, params["w2"], params["b2"]))
    h = conv(h, params["w3"], params["b3"])
    return h.reshape(-1, 2 * params["w1"].shape[0])


def init_params(key, ndim=32):
    """Deterministic synthetic parameters (shapes from FeatureExtractor.__init__)."""
    ndf = ndim // 2
    ks = jax.random.split(key, 6)
    p = {
        "w1": jax.random.normal(ks[0], (ndf, 3, 5, 5), jnp.float32) * 0.1,
        "b1": jax.random.normal(ks[1], (ndf,), jnp.float32) * 0.01,
        "w2": jax.random.normal(ks[2], (ndf, ndf, 5, 5), jnp.float32) * 0.05,
        "b2": jax.random.normal(ks[3], (ndf,), jnp.float32) * 0.01,
        "w3": jax.random.normal(ks[4], (2 * ndf, ndf, 5, 5), jnp.float32) * 0.05,
        "b3": jax.random.normal(ks[5], (2 * ndf,), jnp.float32) * 0.01,
    }
    return p, ndf


if __name__ == "__main__":
    key = jax.random.PRNGKey(0)
    k_x, k_p = jax.random.split(key)

    ndim = 32                       # opt.ndim -> ndf = 16, output dim = 32
    params, ndf = init_params(k_p, ndim=ndim)

    # 32x32 input: conv5/pool2/conv5/pool2/conv5 -> 1x1 spatial, matching the
    # final .view(-1, 2*ndf) (classic DANN/GTA digits setup).  16 images so the
    # batch-blocked grid has 4 "parallel" steps of 4 images each.
    x = jax.random.normal(k_x, (16, 3, 32, 32), jnp.float32)

    fwd = jax.jit(feature_extractor_forward)
    out = jax.block_until_ready(fwd(x, params))
    assert out.shape == (16, 2 * ndf), out.shape

    ref = jax.block_until_ready(reference_forward(x, params))
    err = float(jnp.max(jnp.abs(out - ref)))
    scale = float(jnp.max(jnp.abs(ref))) + 1e-6
    # bf16 MXU operands (per the perf review) with f32 accumulation: allow a
    # slightly looser tolerance than the pure-f32 version.
    assert err <= 2e-2 * scale + 1e-3, f"mismatch: max abs err {err}"

    print("KERNEL_OK")
</pallas_src>

<mosaic_0001>
module attributes {stable_mosaic.version = 11 : i64} {
  func.func @_kernel(%arg0: i32, %arg1: memref<1x16x4096xbf16, #tpu.memory_space<vmem>>, %arg2: memref<16x400xbf16, #tpu.memory_space<vmem>>, %arg3: memref<16x1xf32, #tpu.memory_space<vmem>>, %arg4: memref<16x400xbf16, #tpu.memory_space<vmem>>, %arg5: memref<16x1xf32, #tpu.memory_space<vmem>>, %arg6: memref<32x400xbf16, #tpu.memory_space<vmem>>, %arg7: memref<32x1xf32, #tpu.memory_space<vmem>>, %arg8: memref<1x32x4xf32, #tpu.memory_space<vmem>>) attributes {dimension_semantics = [#tpu.dimension_semantics<parallel>], iteration_bounds = array<i64: 4>, scalar_prefetch = 0 : i64, scratch_operands = 0 : i64, tpu.core_type = #tpu.core_type<tc>, window_params = [{transform_indices = @transform_0, window_bounds = array<i64: 1, 16, 4096>}, {pipeline_mode = #tpu.pipeline_mode<synchronous>, transform_indices = @transform_1, window_bounds = array<i64: 16, 400>}, {pipeline_mode = #tpu.pipeline_mode<synchronous>, transform_indices = @transform_2, window_bounds = array<i64: 16, 1>}, {pipeline_mode = #tpu.pipeline_mode<synchronous>, transform_indices = @transform_3, window_bounds = array<i64: 16, 400>}, {pipeline_mode = #tpu.pipeline_mode<synchronous>, transform_indices = @transform_4, window_bounds = array<i64: 16, 1>}, {pipeline_mode = #tpu.pipeline_mode<synchronous>, transform_indices = @transform_5, window_bounds = array<i64: 32, 400>}, {pipeline_mode = #tpu.pipeline_mode<synchronous>, transform_indices = @transform_6, window_bounds = array<i64: 32, 1>}, {transform_indices = @transform_7, window_bounds = array<i64: 1, 32, 4>}]} {
    %c0 = arith.constant 0 : index
    %c0_0 = arith.constant 0 : index
    %c0_1 = arith.constant 0 : index
    %0 = vector.load %arg1[%c0, %c0_0, %c0_1] : memref<1x16x4096xbf16, #tpu.memory_space<vmem>>, vector<1x16x4096xbf16>
    %1 = vector.shape_cast %0 : vector<1x16x4096xbf16> to vector<16x4096xbf16>
    %2 = vector.extract_strided_slice %1 {offsets = [0, 1], sizes = [16, 4095], strides = [1, 1]} : vector<16x4096xbf16> to vector<16x4095xbf16>
    %3 = vector.extract_strided_slice %1 {offsets = [0, 0], sizes = [16, 1], strides = [1, 1]} : vector<16x4096xbf16> to vector<16x1xbf16>
    %4 = tpu.concatenate %2, %3 in 1 : vector<16x4095xbf16>, vector<16x1xbf16> -> vector<16x4096xbf16>
    %5 = vector.extract_strided_slice %1 {offsets = [0, 2], sizes = [16, 4094], strides = [1, 1]} : vector<16x4096xbf16> to vector<16x4094xbf16>
    %6 = vector.extract_strided_slice %1 {offsets = [0, 0], sizes = [16, 2], strides = [1, 1]} : vector<16x4096xbf16> to vector<16x2xbf16>
    %7 = tpu.concatenate %5, %6 in 1 : vector<16x4094xbf16>, vector<16x2xbf16> -> vector<16x4096xbf16>
    %8 = vector.extract_strided_slice %1 {offsets = [0, 3], sizes = [16, 4093], strides = [1, 1]} : vector<16x4096xbf16> to vector<16x4093xbf16>
    %9 = vector.extract_strided_slice %1 {offsets = [0, 0], sizes = [16, 3], strides = [1, 1]} : vector<16x4096xbf16> to vector<16x3xbf16>
    %10 = tpu.concatenate %8, %9 in 1 : vector<16x4093xbf16>, vector<16x3xbf16> -> vector<16x4096xbf16>
    %11 = vector.extract_strided_slice %1 {offsets = [0, 4], sizes = [16, 4092], strides = [1, 1]} : vector<16x4096xbf16> to vector<16x4092xbf16>
    %12 = vector.extract_strided_slice %1 {offsets = [0, 0], sizes = [16, 4], strides = [1, 1]} : vector<16x4096xbf16> to vector<16x4xbf16>
    %13 = tpu.concatenate %11, %12 in 1 : vector<16x4092xbf16>, vector<16x4xbf16> -> vector<16x4096xbf16>
    %14 = vector.extract_strided_slice %1 {offsets = [0, 32], sizes = [16, 4064], strides = [1, 1]} : vector<16x4096xbf16> to vector<16x4064xbf16>
    %15 = vector.extract_strided_slice %1 {offsets = [0, 0], sizes = [16, 32], strides = [1, 1]} : vector<16x4096xbf16> to vector<16x32xbf16>
    %16 = tpu.concatenate %14, %15 in 1 : vector<16x4064xbf16>, vector<16x32xbf16> -> vector<16x4096xbf16>
    %17 = vector.extract_strided_slice %1 {offsets = [0, 33], sizes = [16, 4063], strides = [1, 1]} : vector<16x4096xbf16> to vector<16x4063xbf16>
    %18 = vector.extract_strided_slice %1 {offsets = [0, 0], sizes = [16, 33], strides = [1, 1]} : vector<16x4096xbf16> to vector<16x33xbf16>
    %19 = tpu.concatenate %17, %18 in 1 : vector<16x4063xbf16>, vector<16x33xbf16> -> vector<16x4096xbf16>
    %20 = vector.extract_strided_slice %1 {offsets = [0, 34], sizes = [16, 4062], strides = [1, 1]} : vector<16x4096xbf16> to vector<16x4062xbf16>
    %21 = vector.extract_strided_slice %1 {offsets = [0, 0], sizes = [16, 34], strides = [1, 1]} : vector<16x4096xbf16> to vector<16x34xbf16>
    %22 = tpu.concatenate %20, %21 in 1 : vector<16x4062xbf16>, vector<16x34xbf16> -> vector<16x4096xbf16>
    %23 = vector.extract_strided_slice %1 {offsets = [0, 35], sizes = [16, 4061], strides = [1, 1]} : vector<16x4096xbf16> to vector<16x4061xbf16>
    %24 = vector.extract_strided_slice %1 {offsets = [0, 0], sizes = [16, 35], strides = [1, 1]} : vector<16x4096xbf16> to vector<16x35xbf16>
    %25 = tpu.concatenate %23, %24 in 1 : vector<16x4061xbf16>, vector<16x35xbf16> -> vector<16x4096xbf16>
    %26 = vector.extract_strided_slice %1 {offsets = [0, 36], sizes = [16, 4060], strides = [1, 1]} : vector<16x4096xbf16> to vector<16x4060xbf16>
    %27 = vector.extract_strided_slice %1 {offsets = [0, 0], sizes = [16, 36], strides = [1, 1]} : vector<16x4096xbf16> to vector<16x36xbf16>
    %28 = tpu.concatenate %26, %27 in 1 : vector<16x4060xbf16>, vector<16x36xbf16> -> vector<16x4096xbf16>
    %29 = vector.extract_strided_slice %1 {offsets = [0, 64], sizes = [16, 4032], strides = [1, 1]} : vector<16x4096xbf16> to vector<16x4032xbf16>
    %30 = vector.extract_strided_slice %1 {offsets = [0, 0], sizes = [16, 64], strides = [1, 1]} : vector<16x4096xbf16> to vector<16x64xbf16>
    %31 = tpu.concatenate %29, %30 in 1 : vector<16x4032xbf16>, vector<16x64xbf16> -> vector<16x4096xbf16>
    %32 = vector.extract_strided_slice %1 {offsets = [0, 65], sizes = [16, 4031], strides = [1, 1]} : vector<16x4096xbf16> to vector<16x4031xbf16>
    %33 = vector.extract_strided_slice %1 {offsets = [0, 0], sizes = [16, 65], strides = [1, 1]} : vector<16x4096xbf16> to vector<16x65xbf16>
    %34 = tpu.concatenate %32, %33 in 1 : vector<16x4031xbf16>, vector<16x65xbf16> -> vector<16x4096xbf16>
    %35 = vector.extract_strided_slice %1 {offsets = [0, 66], sizes = [16, 4030], strides = [1, 1]} : vector<16x4096xbf16> to vector<16x4030xbf16>
    %36 = vector.extract_strided_slice %1 {offsets = [0, 0], sizes = [16, 66], strides = [1, 1]} : vector<16x4096xbf16> to vector<16x66xbf16>
    %37 = tpu.concatenate %35, %36 in 1 : vector<16x4030xbf16>, vector<16x66xbf16> -> vector<16x4096xbf16>
    %38 = vector.extract_strided_slice %1 {offsets = [0, 67], sizes = [16, 4029], strides = [1, 1]} : vector<16x4096xbf16> to vector<16x4029xbf16>
    %39 = vector.extract_strided_slice %1 {offsets = [0, 0], sizes = [16, 67], strides = [1, 1]} : vector<16x4096xbf16> to vector<16x67xbf16>
    %40 = tpu.concatenate %38, %39 in 1 : vector<16x4029xbf16>, vector<16x67xbf16> -> vector<16x4096xbf16>
    %41 = vector.extract_strided_slice %1 {offsets = [0, 68], sizes = [16, 4028], strides = [1, 1]} : vector<16x4096xbf16> to vector<16x4028xbf16>
    %42 = vector.extract_strided_slice %1 {offsets = [0, 0], sizes = [16, 68], strides = [1, 1]} : vector<16x4096xbf16> to vector<16x68xbf16>
    %43 = tpu.concatenate %41, %42 in 1 : vector<16x4028xbf16>, vector<16x68xbf16> -> vector<16x4096xbf16>
    %44 = vector.extract_strided_slice %1 {offsets = [0, 96], sizes = [16, 4000], strides = [1, 1]} : vector<16x4096xbf16> to vector<16x4000xbf16>
    %45 = vector.extract_strided_slice %1 {offsets = [0, 0], sizes = [16, 96], strides = [1, 1]} : vector<16x4096xbf16> to vector<16x96xbf16>
    %46 = tpu.concatenate %44, %45 in 1 : vector<16x4000xbf16>, vector<16x96xbf16> -> vector<16x4096xbf16>
    %47 = vector.extract_strided_slice %1 {offsets = [0, 97], sizes = [16, 3999], strides = [1, 1]} : vector<16x4096xbf16> to vector<16x3999xbf16>
    %48 = vector.extract_strided_slice %1 {offsets = [0, 0], sizes = [16, 97], strides = [1, 1]} : vector<16x4096xbf16> to vector<16x97xbf16>
    %49 = tpu.concatenate %47, %48 in 1 : vector<16x3999xbf16>, vector<16x97xbf16> -> vector<16x4096xbf16>
    %50 = vector.extract_strided_slice %1 {offsets = [0, 98], sizes = [16, 3998], strides = [1, 1]} : vector<16x4096xbf16> to vector<16x3998xbf16>
    %51 = vector.extract_strided_slice %1 {offsets = [0, 0], sizes = [16, 98], strides = [1, 1]} : vector<16x4096xbf16> to vector<16x98xbf16>
    %52 = tpu.concatenate %50, %51 in 1 : vector<16x3998xbf16>, vector<16x98xbf16> -> vector<16x4096xbf16>
    %53 = vector.extract_strided_slice %1 {offsets = [0, 99], sizes = [16, 3997], strides = [1, 1]} : vector<16x4096xbf16> to vector<16x3997xbf16>
    %54 = vector.extract_strided_slice %1 {offsets = [0, 0], sizes = [16, 99], strides = [1, 1]} : vector<16x4096xbf16> to vector<16x99xbf16>
    %55 = tpu.concatenate %53, %54 in 1 : vector<16x3997xbf16>, vector<16x99xbf16> -> vector<16x4096xbf16>
    %56 = vector.extract_strided_slice %1 {offsets = [0, 100], sizes = [16, 3996], strides = [1, 1]} : vector<16x4096xbf16> to vector<16x3996xbf16>
    %57 = vector.extract_strided_slice %1 {offsets = [0, 0], sizes = [16, 100], strides = [1, 1]} : vector<16x4096xbf16> to vector<16x100xbf16>
    %58 = tpu.concatenate %56, %57 in 1 : vector<16x3996xbf16>, vector<16x100xbf16> -> vector<16x4096xbf16>
    %59 = vector.extract_strided_slice %1 {offsets = [0, 128], sizes = [16, 3968], strides = [1, 1]} : vector<16x4096xbf16> to vector<16x3968xbf16>
    %60 = vector.extract_strided_slice %1 {offsets = [0, 0], sizes = [16, 128], strides = [1, 1]} : vector<16x4096xbf16> to vector<16x128xbf16>
    %61 = tpu.concatenate %59, %60 in 1 : vector<16x3968xbf16>, vector<16x128xbf16> -> vector<16x4096xbf16>
    %62 = vector.extract_strided_slice %1 {offsets = [0, 129], sizes = [16, 3967], strides = [1, 1]} : vector<16x4096xbf16> to vector<16x3967xbf16>
    %63 = vector.extract_strided_slice %1 {offsets = [0, 0], sizes = [16, 129], strides = [1, 1]} : vector<16x4096xbf16> to vector<16x129xbf16>
    %64 = tpu.concatenate %62, %63 in 1 : vector<16x3967xbf16>, vector<16x129xbf16> -> vector<16x4096xbf16>
    %65 = vector.extract_strided_slice %1 {offsets = [0, 130], sizes = [16, 3966], strides = [1, 1]} : vector<16x4096xbf16> to vector<16x3966xbf16>
    %66 = vector.extract_strided_slice %1 {offsets = [0, 0], sizes = [16, 130], strides = [1, 1]} : vector<16x4096xbf16> to vector<16x130xbf16>
    %67 = tpu.concatenate %65, %66 in 1 : vector<16x3966xbf16>, vector<16x130xbf16> -> vector<16x4096xbf16>
    %68 = vector.extract_strided_slice %1 {offsets = [0, 131], sizes = [16, 3965], strides = [1, 1]} : vector<16x4096xbf16> to vector<16x3965xbf16>
    %69 = vector.extract_strided_slice %1 {offsets = [0, 0], sizes = [16, 131], strides = [1, 1]} : vector<16x4096xbf16> to vector<16x131xbf16>
    %70 = tpu.concatenate %68, %69 in 1 : vector<16x3965xbf16>, vector<16x131xbf16> -> vector<16x4096xbf16>
    %71 = vector.extract_strided_slice %1 {offsets = [0, 132], sizes = [16, 3964], strides = [1, 1]} : vector<16x4096xbf16> to vector<16x3964xbf16>
    %72 = vector.extract_strided_slice %1 {offsets = [0, 0], sizes = [16, 132], strides = [1, 1]} : vector<16x4096xbf16> to vector<16x132xbf16>
    %73 = tpu.concatenate %71, %72 in 1 : vector<16x3964xbf16>, vector<16x132xbf16> -> vector<16x4096xbf16>
    %74 = tpu.concatenate %1, %4, %7, %10, %13, %16, %19, %22, %25, %28, %31, %34, %37, %40, %43, %46 in 0 : vector<16x4096xbf16>, vector<16x4096xbf16>, vector<16x4096xbf16>, vector<16x4096xbf16>, vector<16x4096xbf16>, vector<16x4096xbf16>, vector<16x4096xbf16>, vector<16x4096xbf16>, vector<16x4096xbf16>, vector<16x4096xbf16>, vector<16x4096xbf16>, vector<16x4096xbf16>, vector<16x4096xbf16>, vector<16x4096xbf16>, vector<16x4096xbf16>, vector<16x4096xbf16> -> vector<256x4096xbf16>
    %75 = tpu.concatenate %49, %52, %55, %58, %61, %64, %67, %70, %73 in 0 : vector<16x4096xbf16>, vector<16x4096xbf16>, vector<16x4096xbf16>, vector<16x4096xbf16>, vector<16x4096xbf16>, vector<16x4096xbf16>, vector<16x4096xbf16>, vector<16x4096xbf16>, vector<16x4096xbf16> -> vector<144x4096xbf16>
    %76 = tpu.concatenate %74, %75 in 0 : vector<256x4096xbf16>, vector<144x4096xbf16> -> vector<400x4096xbf16>
    %c0_2 = arith.constant 0 : index
    %c0_3 = arith.constant 0 : index
    %77 = vector.load %arg2[%c0_2, %c0_3] : memref<16x400xbf16, #tpu.memory_space<vmem>>, vector<16x400xbf16>
    %cst = arith.constant dense<0.000000e+00> : vector<16x4096xf32>
    %78 = tpu.matmul %77, %76, %cst {dimension_numbers = #tpu.dot_dimension_numbers<[1], [0], [0], [1], [0, 0, 1, 1], [], []>} : vector<16x400xbf16>, vector<400x4096xbf16>, vector<16x4096xf32> -> vector<16x4096xf32>
    %c0_4 = arith.constant 0 : index
    %c0_5 = arith.constant 0 : index
    %79 = vector.load %arg3[%c0_4, %c0_5] : memref<16x1xf32, #tpu.memory_space<vmem>>, vector<16x1xf32>
    %80 = vector.broadcast %79 : vector<16x1xf32> to vector<16x4096xf32>
    %81 = arith.addf %78, %80 : vector<16x4096xf32>
    %cst_6 = arith.constant 0.000000e+00 : f32
    %82 = vector.broadcast %cst_6 : f32 to vector<16x4096xf32>
    %83 = arith.maximumf %81, %82 : vector<16x4096xf32>
    %84 = vector.extract_strided_slice %83 {offsets = [0, 1], sizes = [16, 4095], strides = [1, 1]} : vector<16x4096xf32> to vector<16x4095xf32>
    %85 = vector.extract_strided_slice %83 {offsets = [0, 0], sizes = [16, 1], strides = [1, 1]} : vector<16x4096xf32> to vector<16x1xf32>
    %86 = tpu.concatenate %84, %85 in 1 : vector<16x4095xf32>, vector<16x1xf32> -> vector<16x4096xf32>
    %87 = arith.maximumf %83, %86 : vector<16x4096xf32>
    %88 = vector.extract_strided_slice %83 {offsets = [0, 32], sizes = [16, 4064], strides = [1, 1]} : vector<16x4096xf32> to vector<16x4064xf32>
    %89 = vector.extract_strided_slice %83 {offsets = [0, 0], sizes = [16, 32], strides = [1, 1]} : vector<16x4096xf32> to vector<16x32xf32>
    %90 = tpu.concatenate %88, %89 in 1 : vector<16x4064xf32>, vector<16x32xf32> -> vector<16x4096xf32>
    %91 = vector.extract_strided_slice %83 {offsets = [0, 33], sizes = [16, 4063], strides = [1, 1]} : vector<16x4096xf32> to vector<16x4063xf32>
    %92 = vector.extract_strided_slice %83 {offsets = [0, 0], sizes = [16, 33], strides = [1, 1]} : vector<16x4096xf32> to vector<16x33xf32>
    %93 = tpu.concatenate %91, %92 in 1 : vector<16x4063xf32>, vector<16x33xf32> -> vector<16x4096xf32>
    %94 = arith.maximumf %90, %93 : vector<16x4096xf32>
    %95 = arith.maximumf %87, %94 : vector<16x4096xf32>
    %96 = vector.extract_strided_slice %95 {offsets = [0, 0], sizes = [16, 896], strides = [1, 1]} : vector<16x4096xf32> to vector<16x896xf32>
    %97 = vector.extract_strided_slice %95 {offsets = [0, 1024], sizes = [16, 896], strides = [1, 1]} : vector<16x4096xf32> to vector<16x896xf32>
    %98 = vector.extract_strided_slice %95 {offsets = [0, 2048], sizes = [16, 896], strides = [1, 1]} : vector<16x4096xf32> to vector<16x896xf32>
    %99 = vector.extract_strided_slice %95 {offsets = [0, 3072], sizes = [16, 896], strides = [1, 1]} : vector<16x4096xf32> to vector<16x896xf32>
    %100 = tpu.concatenate %96, %97, %98, %99 in 1 : vector<16x896xf32>, vector<16x896xf32>, vector<16x896xf32>, vector<16x896xf32> -> vector<16x3584xf32>
    %101 = arith.truncf %100 : vector<16x3584xf32> to vector<16x3584xbf16>
    %102 = vector.extract_strided_slice %101 {offsets = [0, 2], sizes = [16, 3582], strides = [1, 1]} : vector<16x3584xbf16> to vector<16x3582xbf16>
    %103 = vector.extract_strided_slice %101 {offsets = [0, 0], sizes = [16, 2], strides = [1, 1]} : vector<16x3584xbf16> to vector<16x2xbf16>
    %104 = tpu.concatenate %102, %103 in 1 : vector<16x3582xbf16>, vector<16x2xbf16> -> vector<16x3584xbf16>
    %105 = vector.extract_strided_slice %101 {offsets = [0, 4], sizes = [16, 3580], strides = [1, 1]} : vector<16x3584xbf16> to vector<16x3580xbf16>
    %106 = vector.extract_strided_slice %101 {offsets = [0, 0], sizes = [16, 4], strides = [1, 1]} : vector<16x3584xbf16> to vector<16x4xbf16>
    %107 = tpu.concatenate %105, %106 in 1 : vector<16x3580xbf16>, vector<16x4xbf16> -> vector<16x3584xbf16>
    %108 = vector.extract_strided_slice %101 {offsets = [0, 6], sizes = [16, 3578], strides = [1, 1]} : vector<16x3584xbf16> to vector<16x3578xbf16>
    %109 = vector.extract_strided_slice %101 {offsets = [0, 0], sizes = [16, 6], strides = [1, 1]} : vector<16x3584xbf16> to vector<16x6xbf16>
    %110 = tpu.concatenate %108, %109 in 1 : vector<16x3578xbf16>, vector<16x6xbf16> -> vector<16x3584xbf16>
    %111 = vector.extract_strided_slice %101 {offsets = [0, 8], sizes = [16, 3576], strides = [1, 1]} : vector<16x3584xbf16> to vector<16x3576xbf16>
    %112 = vector.extract_strided_slice %101 {offsets = [0, 0], sizes = [16, 8], strides = [1, 1]} : vector<16x3584xbf16> to vector<16x8xbf16>
    %113 = tpu.concatenate %111, %112 in 1 : vector<16x3576xbf16>, vector<16x8xbf16> -> vector<16x3584xbf16>
    %114 = vector.extract_strided_slice %101 {offsets = [0, 64], sizes = [16, 3520], strides = [1, 1]} : vector<16x3584xbf16> to vector<16x3520xbf16>
    %115 = vector.extract_strided_slice %101 {offsets = [0, 0], sizes = [16, 64], strides = [1, 1]} : vector<16x3584xbf16> to vector<16x64xbf16>
    %116 = tpu.concatenate %114, %115 in 1 : vector<16x3520xbf16>, vector<16x64xbf16> -> vector<16x3584xbf16>
    %117 = vector.extract_strided_slice %101 {offsets = [0, 66], sizes = [16, 3518], strides = [1, 1]} : vector<16x3584xbf16> to vector<16x3518xbf16>
    %118 = vector.extract_strided_slice %101 {offsets = [0, 0], sizes = [16, 66], strides = [1, 1]} : vector<16x3584xbf16> to vector<16x66xbf16>
    %119 = tpu.concatenate %117, %118 in 1 : vector<16x3518xbf16>, vector<16x66xbf16> -> vector<16x3584xbf16>
    %120 = vector.extract_strided_slice %101 {offsets = [0, 68], sizes = [16, 3516], strides = [1, 1]} : vector<16x3584xbf16> to vector<16x3516xbf16>
    %121 = vector.extract_strided_slice %101 {offsets = [0, 0], sizes = [16, 68], strides = [1, 1]} : vector<16x3584xbf16> to vector<16x68xbf16>
    %122 = tpu.concatenate %120, %121 in 1 : vector<16x3516xbf16>, vector<16x68xbf16> -> vector<16x3584xbf16>
    %123 = vector.extract_strided_slice %101 {offsets = [0, 70], sizes = [16, 3514], strides = [1, 1]} : vector<16x3584xbf16> to vector<16x3514xbf16>
    %124 = vector.extract_strided_slice %101 {offsets = [0, 0], sizes = [16, 70], strides = [1, 1]} : vector<16x3584xbf16> to vector<16x70xbf16>
    %125 = tpu.concatenate %123, %124 in 1 : vector<16x3514xbf16>, vector<16x70xbf16> -> vector<16x3584xbf16>
    %126 = vector.extract_strided_slice %101 {offsets = [0, 72], sizes = [16, 3512], strides = [1, 1]} : vector<16x3584xbf16> to vector<16x3512xbf16>
    %127 = vector.extract_strided_slice %101 {offsets = [0, 0], sizes = [16, 72], strides = [1, 1]} : vector<16x3584xbf16> to vector<16x72xbf16>
    %128 = tpu.concatenate %126, %127 in 1 : vector<16x3512xbf16>, vector<16x72xbf16> -> vector<16x3584xbf16>
    %129 = vector.extract_strided_slice %101 {offsets = [0, 128], sizes = [16, 3456], strides = [1, 1]} : vector<16x3584xbf16> to vector<16x3456xbf16>
    %130 = vector.extract_strided_slice %101 {offsets = [0, 0], sizes = [16, 128], strides = [1, 1]} : vector<16x3584xbf16> to vector<16x128xbf16>
    %131 = tpu.concatenate %129, %130 in 1 : vector<16x3456xbf16>, vector<16x128xbf16> -> vector<16x3584xbf16>
    %132 = vector.extract_strided_slice %101 {offsets = [0, 130], sizes = [16, 3454], strides = [1, 1]} : vector<16x3584xbf16> to vector<16x3454xbf16>
    %133 = vector.extract_strided_slice %101 {offsets = [0, 0], sizes = [16, 130], strides = [1, 1]} : vector<16x3584xbf16> to vector<16x130xbf16>
    %134 = tpu.concatenate %132, %133 in 1 : vector<16x3454xbf16>, vector<16x130xbf16> -> vector<16x3584xbf16>
    %135 = vector.extract_strided_slice %101 {offsets = [0, 132], sizes = [16, 3452], strides = [1, 1]} : vector<16x3584xbf16> to vector<16x3452xbf16>
    %136 = vector.extract_strided_slice %101 {offsets = [0, 0], sizes = [16, 132], strides = [1, 1]} : vector<16x3584xbf16> to vector<16x132xbf16>
    %137 = tpu.concatenate %135, %136 in 1 : vector<16x3452xbf16>, vector<16x132xbf16> -> vector<16x3584xbf16>
    %138 = vector.extract_strided_slice %101 {offsets = [0, 134], sizes = [16, 3450], strides = [1, 1]} : vector<16x3584xbf16> to vector<16x3450xbf16>
    %139 = vector.extract_strided_slice %101 {offsets = [0, 0], sizes = [16, 134], strides = [1, 1]} : vector<16x3584xbf16> to vector<16x134xbf16>
    %140 = tpu.concatenate %138, %139 in 1 : vector<16x3450xbf16>, vector<16x134xbf16> -> vector<16x3584xbf16>
    %141 = vector.extract_strided_slice %101 {offsets = [0, 136], sizes = [16, 3448], strides = [1, 1]} : vector<16x3584xbf16> to vector<16x3448xbf16>
    %142 = vector.extract_strided_slice %101 {offsets = [0, 0], sizes = [16, 136], strides = [1, 1]} : vector<16x3584xbf16> to vector<16x136xbf16>
    %143 = tpu.concatenate %141, %142 in 1 : vector<16x3448xbf16>, vector<16x136xbf16> -> vector<16x3584xbf16>
    %144 = vector.extract_strided_slice %101 {offsets = [0, 192], sizes = [16, 3392], strides = [1, 1]} : vector<16x3584xbf16> to vector<16x3392xbf16>
    %145 = vector.extract_strided_slice %101 {offsets = [0, 0], sizes = [16, 192], strides = [1, 1]} : vector<16x3584xbf16> to vector<16x192xbf16>
    %146 = tpu.concatenate %144, %145 in 1 : vector<16x3392xbf16>, vector<16x192xbf16> -> vector<16x3584xbf16>
    %147 = vector.extract_strided_slice %101 {offsets = [0, 194], sizes = [16, 3390], strides = [1, 1]} : vector<16x3584xbf16> to vector<16x3390xbf16>
    %148 = vector.extract_strided_slice %101 {offsets = [0, 0], sizes = [16, 194], strides = [1, 1]} : vector<16x3584xbf16> to vector<16x194xbf16>
    %149 = tpu.concatenate %147, %148 in 1 : vector<16x3390xbf16>, vector<16x194xbf16> -> vector<16x3584xbf16>
    %150 = vector.extract_strided_slice %101 {offsets = [0, 196], sizes = [16, 3388], strides = [1, 1]} : vector<16x3584xbf16> to vector<16x3388xbf16>
    %151 = vector.extract_strided_slice %101 {offsets = [0, 0], sizes = [16, 196], strides = [1, 1]} : vector<16x3584xbf16> to vector<16x196xbf16>
    %152 = tpu.concatenate %150, %151 in 1 : vector<16x3388xbf16>, vector<16x196xbf16> -> vector<16x3584xbf16>
    %153 = vector.extract_strided_slice %101 {offsets = [0, 198], sizes = [16, 3386], strides = [1, 1]} : vector<16x3584xbf16> to vector<16x3386xbf16>
    %154 = vector.extract_strided_slice %101 {offsets = [0, 0], sizes = [16, 198], strides = [1, 1]} : vector<16x3584xbf16> to vector<16x198xbf16>
    %155 = tpu.concatenate %153, %154 in 1 : vector<16x3386xbf16>, vector<16x198xbf16> -> vector<16x3584xbf16>
    %156 = vector.extract_strided_slice %101 {offsets = [0, 200], sizes = [16, 3384], strides = [1, 1]} : vector<16x3584xbf16> to vector<16x3384xbf16>
    %157 = vector.extract_strided_slice %101 {offsets = [0, 0], sizes = [16, 200], strides = [1, 1]} : vector<16x3584xbf16> to vector<16x200xbf16>
    %158 = tpu.concatenate %156, %157 in 1 : vector<16x3384xbf16>, vector<16x200xbf16> -> vector<16x3584xbf16>
    %159 = vector.extract_strided_slice %101 {offsets = [0, 256], sizes = [16, 3328], strides = [1, 1]} : vector<16x3584xbf16> to vector<16x3328xbf16>
    %160 = vector.extract_strided_slice %101 {offsets = [0, 0], sizes = [16, 256], strides = [1, 1]} : vector<16x3584xbf16> to vector<16x256xbf16>
    %161 = tpu.concatenate %159, %160 in 1 : vector<16x3328xbf16>, vector<16x256xbf16> -> vector<16x3584xbf16>
    %162 = vector.extract_strided_slice %101 {offsets = [0, 258], sizes = [16, 3326], strides = [1, 1]} : vector<16x3584xbf16> to vector<16x3326xbf16>
    %163 = vector.extract_strided_slice %101 {offsets = [0, 0], sizes = [16, 258], strides = [1, 1]} : vector<16x3584xbf16> to vector<16x258xbf16>
    %164 = tpu.concatenate %162, %163 in 1 : vector<16x3326xbf16>, vector<16x258xbf16> -> vector<16x3584xbf16>
    %165 = vector.extract_strided_slice %101 {offsets = [0, 260], sizes = [16, 3324], strides = [1, 1]} : vector<16x3584xbf16> to vector<16x3324xbf16>
    %166 = vector.extract_strided_slice %101 {offsets = [0, 0], sizes = [16, 260], strides = [1, 1]} : vector<16x3584xbf16> to vector<16x260xbf16>
    %167 = tpu.concatenate %165, %166 in 1 : vector<16x3324xbf16>, vector<16x260xbf16> -> vector<16x3584xbf16>
    %168 = vector.extract_strided_slice %101 {offsets = [0, 262], sizes = [16, 3322], strides = [1, 1]} : vector<16x3584xbf16> to vector<16x3322xbf16>
    %169 = vector.extract_strided_slice %101 {offsets = [0, 0], sizes = [16, 262], strides = [1, 1]} : vector<16x3584xbf16> to vector<16x262xbf16>
    %170 = tpu.concatenate %168, %169 in 1 : vector<16x3322xbf16>, vector<16x262xbf16> -> vector<16x3584xbf16>
    %171 = vector.extract_strided_slice %101 {offsets = [0, 264], sizes = [16, 3320], strides = [1, 1]} : vector<16x3584xbf16> to vector<16x3320xbf16>
    %172 = vector.extract_strided_slice %101 {offsets = [0, 0], sizes = [16, 264], strides = [1, 1]} : vector<16x3584xbf16> to vector<16x264xbf16>
    %173 = tpu.concatenate %171, %172 in 1 : vector<16x3320xbf16>, vector<16x264xbf16> -> vector<16x3584xbf16>
    %174 = tpu.concatenate %101, %104, %107, %110, %113, %116, %119, %122, %125, %128, %131, %134, %137, %140, %143, %146 in 0 : vector<16x3584xbf16>, vector<16x3584xbf16>, vector<16x3584xbf16>, vector<16x3584xbf16>, vector<16x3584xbf16>, vector<16x3584xbf16>, vector<16x3584xbf16>, vector<16x3584xbf16>, vector<16x3584xbf16>, vector<16x3584xbf16>, vector<16x3584xbf16>, vector<16x3584xbf16>, vector<16x3584xbf16>, vector<16x3584xbf16>, vector<16x3584xbf16>, vector<16x3584xbf16> -> vector<256x3584xbf16>
    %175 = tpu.concatenate %149, %152, %155, %158, %161, %164, %167, %170, %173 in 0 : vector<16x3584xbf16>, vector<16x3584xbf16>, vector<16x3584xbf16>, vector<16x3584xbf16>, vector<16x3584xbf16>, vector<16x3584xbf16>, vector<16x3584xbf16>, vector<16x3584xbf16>, vector<16x3584xbf16> -> vector<144x3584xbf16>
    %176 = tpu.concatenate %174, %175 in 0 : vector<256x3584xbf16>, vector<144x3584xbf16> -> vector<400x3584xbf16>
    %c0_7 = arith.constant 0 : index
    %c0_8 = arith.constant 0 : index
    %177 = vector.load %arg4[%c0_7, %c0_8] : memref<16x400xbf16, #tpu.memory_space<vmem>>, vector<16x400xbf16>
    %cst_9 = arith.constant dense<0.000000e+00> : vector<16x3584xf32>
    %178 = tpu.matmul %177, %176, %cst_9 {dimension_numbers = #tpu.dot_dimension_numbers<[1], [0], [0], [1], [0, 0, 1, 1], [], []>} : vector<16x400xbf16>, vector<400x3584xbf16>, vector<16x3584xf32> -> vector<16x3584xf32>
    %c0_10 = arith.constant 0 : index
    %c0_11 = arith.constant 0 : index
    %179 = vector.load %arg5[%c0_10, %c0_11] : memref<16x1xf32, #tpu.memory_space<vmem>>, vector<16x1xf32>
    %180 = vector.broadcast %179 : vector<16x1xf32> to vector<16x3584xf32>
    %181 = arith.addf %178, %180 : vector<16x3584xf32>
    %cst_12 = arith.constant 0.000000e+00 : f32
    %182 = vector.broadcast %cst_12 : f32 to vector<16x3584xf32>
    %183 = arith.maximumf %181, %182 : vector<16x3584xf32>
    %184 = vector.extract_strided_slice %183 {offsets = [0, 2], sizes = [16, 3582], strides = [1, 1]} : vector<16x3584xf32> to vector<16x3582xf32>
    %185 = vector.extract_strided_slice %183 {offsets = [0, 0], sizes = [16, 2], strides = [1, 1]} : vector<16x3584xf32> to vector<16x2xf32>
    %186 = tpu.concatenate %184, %185 in 1 : vector<16x3582xf32>, vector<16x2xf32> -> vector<16x3584xf32>
    %187 = arith.maximumf %183, %186 : vector<16x3584xf32>
    %188 = vector.extract_strided_slice %183 {offsets = [0, 64], sizes = [16, 3520], strides = [1, 1]} : vector<16x3584xf32> to vector<16x3520xf32>
    %189 = vector.extract_strided_slice %183 {offsets = [0, 0], sizes = [16, 64], strides = [1, 1]} : vector<16x3584xf32> to vector<16x64xf32>
    %190 = tpu.concatenate %188, %189 in 1 : vector<16x3520xf32>, vector<16x64xf32> -> vector<16x3584xf32>
    %191 = vector.extract_strided_slice %183 {offsets = [0, 66], sizes = [16, 3518], strides = [1, 1]} : vector<16x3584xf32> to vector<16x3518xf32>
    %192 = vector.extract_strided_slice %183 {offsets = [0, 0], sizes = [16, 66], strides = [1, 1]} : vector<16x3584xf32> to vector<16x66xf32>
    %193 = tpu.concatenate %191, %192 in 1 : vector<16x3518xf32>, vector<16x66xf32> -> vector<16x3584xf32>
    %194 = arith.maximumf %190, %193 : vector<16x3584xf32>
    %195 = arith.maximumf %187, %194 : vector<16x3584xf32>
    %196 = vector.extract_strided_slice %195 {offsets = [0, 0], sizes = [16, 640], strides = [1, 1]} : vector<16x3584xf32> to vector<16x640xf32>
    %197 = vector.extract_strided_slice %195 {offsets = [0, 896], sizes = [16, 640], strides = [1, 1]} : vector<16x3584xf32> to vector<16x640xf32>
    %198 = vector.extract_strided_slice %195 {offsets = [0, 1792], sizes = [16, 640], strides = [1, 1]} : vector<16x3584xf32> to vector<16x640xf32>
    %199 = vector.extract_strided_slice %195 {offsets = [0, 2688], sizes = [16, 640], strides = [1, 1]} : vector<16x3584xf32> to vector<16x640xf32>
    %200 = tpu.concatenate %196, %197, %198, %199 in 1 : vector<16x640xf32>, vector<16x640xf32>, vector<16x640xf32>, vector<16x640xf32> -> vector<16x2560xf32>
    %201 = arith.truncf %200 : vector<16x2560xf32> to vector<16x2560xbf16>
    %202 = vector.extract_strided_slice %201 {offsets = [0, 4], sizes = [16, 2556], strides = [1, 1]} : vector<16x2560xbf16> to vector<16x2556xbf16>
    %203 = vector.extract_strided_slice %201 {offsets = [0, 0], sizes = [16, 4], strides = [1, 1]} : vector<16x2560xbf16> to vector<16x4xbf16>
    %204 = tpu.concatenate %202, %203 in 1 : vector<16x2556xbf16>, vector<16x4xbf16> -> vector<16x2560xbf16>
    %205 = vector.extract_strided_slice %201 {offsets = [0, 8], sizes = [16, 2552], strides = [1, 1]} : vector<16x2560xbf16> to vector<16x2552xbf16>
    %206 = vector.extract_strided_slice %201 {offsets = [0, 0], sizes = [16, 8], strides = [1, 1]} : vector<16x2560xbf16> to vector<16x8xbf16>
    %207 = tpu.concatenate %205, %206 in 1 : vector<16x2552xbf16>, vector<16x8xbf16> -> vector<16x2560xbf16>
    %208 = vector.extract_strided_slice %201 {offsets = [0, 12], sizes = [16, 2548], strides = [1, 1]} : vector<16x2560xbf16> to vector<16x2548xbf16>
    %209 = vector.extract_strided_slice %201 {offsets = [0, 0], sizes = [16, 12], strides = [1, 1]} : vector<16x2560xbf16> to vector<16x12xbf16>
    %210 = tpu.concatenate %208, %209 in 1 : vector<16x2548xbf16>, vector<16x12xbf16> -> vector<16x2560xbf16>
    %211 = vector.extract_strided_slice %201 {offsets = [0, 16], sizes = [16, 2544], strides = [1, 1]} : vector<16x2560xbf16> to vector<16x2544xbf16>
    %212 = vector.extract_strided_slice %201 {offsets = [0, 0], sizes = [16, 16], strides = [1, 1]} : vector<16x2560xbf16> to vector<16x16xbf16>
    %213 = tpu.concatenate %211, %212 in 1 : vector<16x2544xbf16>, vector<16x16xbf16> -> vector<16x2560xbf16>
    %214 = vector.extract_strided_slice %201 {offsets = [0, 128], sizes = [16, 2432], strides = [1, 1]} : vector<16x2560xbf16> to vector<16x2432xbf16>
    %215 = vector.extract_strided_slice %201 {offsets = [0, 0], sizes = [16, 128], strides = [1, 1]} : vector<16x2560xbf16> to vector<16x128xbf16>
    %216 = tpu.concatenate %214, %215 in 1 : vector<16x2432xbf16>, vector<16x128xbf16> -> vector<16x2560xbf16>
    %217 = vector.extract_strided_slice %201 {offsets = [0, 132], sizes = [16, 2428], strides = [1, 1]} : vector<16x2560xbf16> to vector<16x2428xbf16>
    %218 = vector.extract_strided_slice %201 {offsets = [0, 0], sizes = [16, 132], strides = [1, 1]} : vector<16x2560xbf16> to vector<16x132xbf16>
    %219 = tpu.concatenate %217, %218 in 1 : vector<16x2428xbf16>, vector<16x132xbf16> -> vector<16x2560xbf16>
    %220 = vector.extract_strided_slice %201 {offsets = [0, 136], sizes = [16, 2424], strides = [1, 1]} : vector<16x2560xbf16> to vector<16x2424xbf16>
    %221 = vector.extract_strided_slice %201 {offsets = [0, 0], sizes = [16, 136], strides = [1, 1]} : vector<16x2560xbf16> to vector<16x136xbf16>
    %222 = tpu.concatenate %220, %221 in 1 : vector<16x2424xbf16>, vector<16x136xbf16> -> vector<16x2560xbf16>
    %223 = vector.extract_strided_slice %201 {offsets = [0, 140], sizes = [16, 2420], strides = [1, 1]} : vector<16x2560xbf16> to vector<16x2420xbf16>
    %224 = vector.extract_strided_slice %201 {offsets = [0, 0], sizes = [16, 140], strides = [1, 1]} : vector<16x2560xbf16> to vector<16x140xbf16>
    %225 = tpu.concatenate %223, %224 in 1 : vector<16x2420xbf16>, vector<16x140xbf16> -> vector<16x2560xbf16>
    %226 = vector.extract_strided_slice %201 {offsets = [0, 144], sizes = [16, 2416], strides = [1, 1]} : vector<16x2560xbf16> to vector<16x2416xbf16>
    %227 = vector.extract_strided_slice %201 {offsets = [0, 0], sizes = [16, 144], strides = [1, 1]} : vector<16x2560xbf16> to vector<16x144xbf16>
    %228 = tpu.concatenate %226, %227 in 1 : vector<16x2416xbf16>, vector<16x144xbf16> -> vector<16x2560xbf16>
    %229 = vector.extract_strided_slice %201 {offsets = [0, 256], sizes = [16, 2304], strides = [1, 1]} : vector<16x2560xbf16> to vector<16x2304xbf16>
    %230 = vector.extract_strided_slice %201 {offsets = [0, 0], sizes = [16, 256], strides = [1, 1]} : vector<16x2560xbf16> to vector<16x256xbf16>
    %231 = tpu.concatenate %229, %230 in 1 : vector<16x2304xbf16>, vector<16x256xbf16> -> vector<16x2560xbf16>
    %232 = vector.extract_strided_slice %201 {offsets = [0, 260], sizes = [16, 2300], strides = [1, 1]} : vector<16x2560xbf16> to vector<16x2300xbf16>
    %233 = vector.extract_strided_slice %201 {offsets = [0, 0], sizes = [16, 260], strides = [1, 1]} : vector<16x2560xbf16> to vector<16x260xbf16>
    %234 = tpu.concatenate %232, %233 in 1 : vector<16x2300xbf16>, vector<16x260xbf16> -> vector<16x2560xbf16>
    %235 = vector.extract_strided_slice %201 {offsets = [0, 264], sizes = [16, 2296], strides = [1, 1]} : vector<16x2560xbf16> to vector<16x2296xbf16>
    %236 = vector.extract_strided_slice %201 {offsets = [0, 0], sizes = [16, 264], strides = [1, 1]} : vector<16x2560xbf16> to vector<16x264xbf16>
    %237 = tpu.concatenate %235, %236 in 1 : vector<16x2296xbf16>, vector<16x264xbf16> -> vector<16x2560xbf16>
    %238 = vector.extract_strided_slice %201 {offsets = [0, 268], sizes = [16, 2292], strides = [1, 1]} : vector<16x2560xbf16> to vector<16x2292xbf16>
    %239 = vector.extract_strided_slice %201 {offsets = [0, 0], sizes = [16, 268], strides = [1, 1]} : vector<16x2560xbf16> to vector<16x268xbf16>
    %240 = tpu.concatenate %238, %239 in 1 : vector<16x2292xbf16>, vector<16x268xbf16> -> vector<16x2560xbf16>
    %241 = vector.extract_strided_slice %201 {offsets = [0, 272], sizes = [16, 2288], strides = [1, 1]} : vector<16x2560xbf16> to vector<16x2288xbf16>
    %242 = vector.extract_strided_slice %201 {offsets = [0, 0], sizes = [16, 272], strides = [1, 1]} : vector<16x2560xbf16> to vector<16x272xbf16>
    %243 = tpu.concatenate %241, %242 in 1 : vector<16x2288xbf16>, vector<16x272xbf16> -> vector<16x2560xbf16>
    %244 = vector.extract_strided_slice %201 {offsets = [0, 384], sizes = [16, 2176], strides = [1, 1]} : vector<16x2560xbf16> to vector<16x2176xbf16>
    %245 = vector.extract_strided_slice %201 {offsets = [0, 0], sizes = [16, 384], strides = [1, 1]} : vector<16x2560xbf16> to vector<16x384xbf16>
    %246 = tpu.concatenate %244, %245 in 1 : vector<16x2176xbf16>, vector<16x384xbf16> -> vector<16x2560xbf16>
    %247 = vector.extract_strided_slice %201 {offsets = [0, 388], sizes = [16, 2172], strides = [1, 1]} : vector<16x2560xbf16> to vector<16x2172xbf16>
    %248 = vector.extract_strided_slice %201 {offsets = [0, 0], sizes = [16, 388], strides = [1, 1]} : vector<16x2560xbf16> to vector<16x388xbf16>
    %249 = tpu.concatenate %247, %248 in 1 : vector<16x2172xbf16>, vector<16x388xbf16> -> vector<16x2560xbf16>
    %250 = vector.extract_strided_slice %201 {offsets = [0, 392], sizes = [16, 2168], strides = [1, 1]} : vector<16x2560xbf16> to vector<16x2168xbf16>
    %251 = vector.extract_strided_slice %201 {offsets = [0, 0], sizes = [16, 392], strides = [1, 1]} : vector<16x2560xbf16> to vector<16x392xbf16>
    %252 = tpu.concatenate %250, %251 in 1 : vector<16x2168xbf16>, vector<16x392xbf16> -> vector<16x2560xbf16>
    %253 = vector.extract_strided_slice %201 {offsets = [0, 396], sizes = [16, 2164], strides = [1, 1]} : vector<16x2560xbf16> to vector<16x2164xbf16>
    %254 = vector.extract_strided_slice %201 {offsets = [0, 0], sizes = [16, 396], strides = [1, 1]} : vector<16x2560xbf16> to vector<16x396xbf16>
    %255 = tpu.concatenate %253, %254 in 1 : vector<16x2164xbf16>, vector<16x396xbf16> -> vector<16x2560xbf16>
    %256 = vector.extract_strided_slice %201 {offsets = [0, 400], sizes = [16, 2160], strides = [1, 1]} : vector<16x2560xbf16> to vector<16x2160xbf16>
    %257 = vector.extract_strided_slice %201 {offsets = [0, 0], sizes = [16, 400], strides = [1, 1]} : vector<16x2560xbf16> to vector<16x400xbf16>
    %258 = tpu.concatenate %256, %257 in 1 : vector<16x2160xbf16>, vector<16x400xbf16> -> vector<16x2560xbf16>
    %259 = vector.extract_strided_slice %201 {offsets = [0, 512], sizes = [16, 2048], strides = [1, 1]} : vector<16x2560xbf16> to vector<16x2048xbf16>
    %260 = vector.extract_strided_slice %201 {offsets = [0, 0], sizes = [16, 512], strides = [1, 1]} : vector<16x2560xbf16> to vector<16x512xbf16>
    %261 = tpu.concatenate %259, %260 in 1 : vector<16x2048xbf16>, vector<16x512xbf16> -> vector<16x2560xbf16>
    %262 = vector.extract_strided_slice %201 {offsets = [0, 516], sizes = [16, 2044], strides = [1, 1]} : vector<16x2560xbf16> to vector<16x2044xbf16>
    %263 = vector.extract_strided_slice %201 {offsets = [0, 0], sizes = [16, 516], strides = [1, 1]} : vector<16x2560xbf16> to vector<16x516xbf16>
    %264 = tpu.concatenate %262, %263 in 1 : vector<16x2044xbf16>, vector<16x516xbf16> -> vector<16x2560xbf16>
    %265 = vector.extract_strided_slice %201 {offsets = [0, 520], sizes = [16, 2040], strides = [1, 1]} : vector<16x2560xbf16> to vector<16x2040xbf16>
    %266 = vector.extract_strided_slice %201 {offsets = [0, 0], sizes = [16, 520], strides = [1, 1]} : vector<16x2560xbf16> to vector<16x520xbf16>
    %267 = tpu.concatenate %265, %266 in 1 : vector<16x2040xbf16>, vector<16x520xbf16> -> vector<16x2560xbf16>
    %268 = vector.extract_strided_slice %201 {offsets = [0, 524], sizes = [16, 2036], strides = [1, 1]} : vector<16x2560xbf16> to vector<16x2036xbf16>
    %269 = vector.extract_strided_slice %201 {offsets = [0, 0], sizes = [16, 524], strides = [1, 1]} : vector<16x2560xbf16> to vector<16x524xbf16>
    %270 = tpu.concatenate %268, %269 in 1 : vector<16x2036xbf16>, vector<16x524xbf16> -> vector<16x2560xbf16>
    %271 = vector.extract_strided_slice %201 {offsets = [0, 528], sizes = [16, 2032], strides = [1, 1]} : vector<16x2560xbf16> to vector<16x2032xbf16>
    %272 = vector.extract_strided_slice %201 {offsets = [0, 0], sizes = [16, 528], strides = [1, 1]} : vector<16x2560xbf16> to vector<16x528xbf16>
    %273 = tpu.concatenate %271, %272 in 1 : vector<16x2032xbf16>, vector<16x528xbf16> -> vector<16x2560xbf16>
    %274 = tpu.concatenate %201, %204, %207, %210, %213, %216, %219, %222, %225, %228, %231, %234, %237, %240, %243, %246 in 0 : vector<16x2560xbf16>, vector<16x2560xbf16>, vector<16x2560xbf16>, vector<16x2560xbf16>, vector<16x2560xbf16>, vector<16x2560xbf16>, vector<16x2560xbf16>, vector<16x2560xbf16>, vector<16x2560xbf16>, vector<16x2560xbf16>, vector<16x2560xbf16>, vector<16x2560xbf16>, vector<16x2560xbf16>, vector<16x2560xbf16>, vector<16x2560xbf16>, vector<16x2560xbf16> -> vector<256x2560xbf16>
    %275 = tpu.concatenate %249, %252, %255, %258, %261, %264, %267, %270, %273 in 0 : vector<16x2560xbf16>, vector<16x2560xbf16>, vector<16x2560xbf16>, vector<16x2560xbf16>, vector<16x2560xbf16>, vector<16x2560xbf16>, vector<16x2560xbf16>, vector<16x2560xbf16>, vector<16x2560xbf16> -> vector<144x2560xbf16>
    %276 = tpu.concatenate %274, %275 in 0 : vector<256x2560xbf16>, vector<144x2560xbf16> -> vector<400x2560xbf16>
    %c0_13 = arith.constant 0 : index
    %c0_14 = arith.constant 0 : index
    %277 = vector.load %arg6[%c0_13, %c0_14] : memref<32x400xbf16, #tpu.memory_space<vmem>>, vector<32x400xbf16>
    %cst_15 = arith.constant dense<0.000000e+00> : vector<32x2560xf32>
    %278 = tpu.matmul %277, %276, %cst_15 {dimension_numbers = #tpu.dot_dimension_numbers<[1], [0], [0], [1], [0, 0, 1, 1], [], []>} : vector<32x400xbf16>, vector<400x2560xbf16>, vector<32x2560xf32> -> vector<32x2560xf32>
    %c0_16 = arith.constant 0 : index
    %c0_17 = arith.constant 0 : index
    %279 = vector.load %arg7[%c0_16, %c0_17] : memref<32x1xf32, #tpu.memory_space<vmem>>, vector<32x1xf32>
    %280 = vector.broadcast %279 : vector<32x1xf32> to vector<32x2560xf32>
    %281 = arith.addf %278, %280 : vector<32x2560xf32>
    %cst_18 = arith.constant 0.000000e+00 : f32
    %282 = vector.broadcast %cst_18 : f32 to vector<32x2560xf32>
    %283 = arith.maximumf %281, %282 : vector<32x2560xf32>
    %284 = vector.extract_strided_slice %283 {offsets = [0, 0], sizes = [32, 1], strides = [1, 1]} : vector<32x2560xf32> to vector<32x1xf32>
    %285 = vector.extract_strided_slice %283 {offsets = [0, 640], sizes = [32, 1], strides = [1, 1]} : vector<32x2560xf32> to vector<32x1xf32>
    %286 = vector.extract_strided_slice %283 {offsets = [0, 1280], sizes = [32, 1], strides = [1, 1]} : vector<32x2560xf32> to vector<32x1xf32>
    %287 = vector.extract_strided_slice %283 {offsets = [0, 1920], sizes = [32, 1], strides = [1, 1]} : vector<32x2560xf32> to vector<32x1xf32>
    %288 = tpu.concatenate %284, %285, %286, %287 in 1 : vector<32x1xf32>, vector<32x1xf32>, vector<32x1xf32>, vector<32x1xf32> -> vector<32x4xf32>
    %c0_19 = arith.constant 0 : index
    %c0_20 = arith.constant 0 : index
    %c0_21 = arith.constant 0 : index
    %289 = vector.load %arg8[%c0_19, %c0_20, %c0_21] : memref<1x32x4xf32, #tpu.memory_space<vmem>>, vector<1x32x4xf32>
    %290 = vector.shape_cast %289 : vector<1x32x4xf32> to vector<32x4xf32>
    %291 = vector.shape_cast %288 : vector<32x4xf32> to vector<1x32x4xf32>
    tpu.vector_store %arg8[%c0_19, %c0_20, %c0_21], %291 {strides = array<i32>} : memref<1x32x4xf32, #tpu.memory_space<vmem>>, vector<1x32x4xf32>,
    return
  }
  func.func @transform_0(%arg0: i32) -> (i32, i32, i32) {
    %c0_i32 = arith.constant 0 : i32
    %c0_i32_0 = arith.constant 0 : i32
    %c0_i32_1 = arith.constant 0 : i32
    return %arg0, %c0_i32, %c0_i32_0 : i32, i32, i32
  }
  func.func @transform_1(%arg0: i32) -> (i32, i32) {
    %c0_i32 = arith.constant 0 : i32
    %c0_i32_0 = arith.constant 0 : i32
    %c0_i32_1 = arith.constant 0 : i32
    return %c0_i32, %c0_i32_0 : i32, i32
  }
  func.func @transform_2(%arg0: i32) -> (i32, i32) {
    %c0_i32 = arith.constant 0 : i32
    %c0_i32_0 = arith.constant 0 : i32
    %c0_i32_1 = arith.constant 0 : i32
    return %c0_i32, %c0_i32_0 : i32, i32
  }
  func.func @transform_3(%arg0: i32) -> (i32, i32) {
    %c0_i32 = arith.constant 0 : i32
    %c0_i32_0 = arith.constant 0 : i32
    %c0_i32_1 = arith.constant 0 : i32
    return %c0_i32, %c0_i32_0 : i32, i32
  }
  func.func @transform_4(%arg0: i32) -> (i32, i32) {
    %c0_i32 = arith.constant 0 : i32
    %c0_i32_0 = arith.constant 0 : i32
    %c0_i32_1 = arith.constant 0 : i32
    return %c0_i32, %c0_i32_0 : i32, i32
  }
  func.func @transform_5(%arg0: i32) -> (i32, i32) {
    %c0_i32 = arith.constant 0 : i32
    %c0_i32_0 = arith.constant 0 : i32
    %c0_i32_1 = arith.constant 0 : i32
    return %c0_i32, %c0_i32_0 : i32, i32
  }
  func.func @transform_6(%arg0: i32) -> (i32, i32) {
    %c0_i32 = arith.constant 0 : i32
    %c0_i32_0 = arith.constant 0 : i32
    %c0_i32_1 = arith.constant 0 : i32
    return %c0_i32, %c0_i32_0 : i32, i32
  }
  func.func @transform_7(%arg0: i32) -> (i32, i32, i32) {
    %c0_i32 = arith.constant 0 : i32
    %c0_i32_0 = arith.constant 0 : i32
    %c0_i32_1 = arith.constant 0 : i32
    return %arg0, %c0_i32, %c0_i32_0 : i32, i32, i32
  }
}

</mosaic_0001>

<llo_original>
// kernel: feature_extractor_forward.1
$region0: #{feature_extractor_forward.1}
  #allocation0 [shape = 'u32[]', space=smem, size = 0x4, offset = 0x4, fixed_abs, tag = 'smem constant byte address 0x4 - core index']
  #allocation1 [shape = 'u32[144,128]{1,0:T(1,128)}', space=vmem, size = 0x12000, scoped, tag = 'internal scratch']
  %s0 = inlined_call_operand.vmem [shape: bf16[4,16,4096], index: 0, kind: input, shape index: {}]
  %s1 = inlined_call_operand.vmem [shape: bf16[16,400], index: 1, kind: input, shape index: {}]
  %s2 = inlined_call_operand.vmem [shape: f32[16,1], index: 2, kind: input, shape index: {}]
  %s3 = inlined_call_operand.vmem [shape: bf16[16,400], index: 3, kind: input, shape index: {}]
  %s4 = inlined_call_operand.vmem [shape: f32[16,1], index: 4, kind: input, shape index: {}]
  %s5 = inlined_call_operand.vmem [shape: bf16[32,400], index: 5, kind: input, shape index: {}]
  %s6 = inlined_call_operand.vmem [shape: f32[32,1], index: 6, kind: input, shape index: {}]
  %s7 = inlined_call_operand.vmem [shape: f32[4,32,4], index: 7, kind: output, shape index: {}]
  %s8 = sld [smem:[#allocation0]]
  $region61: #{feature_extractor_forward.1} parent=0
    _
  %s10 = ssub.s32 1, %s8
  %s11 = scalar_select 0, %s10, %s8
  loop: start=0, step=1, limit=6
  $region2: #{feature_extractor_forward.1} parent=0 // loop_pre_header
    _
  $region3: #{feature_extractor_forward.1} parent=0 // loop_header
    %s13 = sphi 0, %s17
    %p14 = scmp.ge.s32.totalorder %s13, 6
    %s23 = sphi 0, %s25
    %s26 = sphi 0, %s23
    %s27 = sphi 0, %s26
    %s43 = sphi 0, %s27
    %s47 = sphi 0, %s47
    %s49 = sphi 0, %s47
    %s50 = sphi 0, %s49
    %s64 = sphi 0, %s50
    %s68 = sphi 0, %s68
    %s70 = sphi 0, %s68
    %s71 = sphi 0, %s70
    %s85 = sphi 0, %s71
    %s89 = sphi 0, %s89
    %s91 = sphi 0, %s89
    %s92 = sphi 0, %s91
    %s106 = sphi 0, %s92
    %s110 = sphi 0, %s110
    %s112 = sphi 0, %s110
    %s113 = sphi 0, %s112
    %s127 = sphi 0, %s113
    %s131 = sphi 0, %s131
    %s133 = sphi 0, %s131
    %s134 = sphi 0, %s133
    %s148 = sphi 0, %s134
    %s152 = sphi 0, %s152
    %s154 = sphi 0, %s152
    %s155 = sphi 0, %s154
    %s169 = sphi 0, %s155
    %s175 = sphi 0, %s177
    %s178 = sphi 0, %s175
    %s179 = sphi 0, %s178
    %s195 = sphi 0, %s179
  $region4: #{feature_extractor_forward.1} parent=0 // loop_header_branch
    %16 = sbr.rel (%p14) target = $region8
  $region5: #{feature_extractor_forward.1} parent=0 // loop_body
    %s18 = ssub.s32 %s13, 1
    %s19 = ssub.s32 %s13, 2
    %s20 = sadd.s32 %s13, 1
    %s21 = ssub.s32 %s13, %s20
    %p22 = scmp.eq.s32.totalorder %s21, 0
    %s24 = sadd.s32 %s23, 1
    %s25 = scalar_select %p22, %s23, %s24
    %p28 = pneg %p22
    %p29 = scmp.eq.s32.totalorder %s13, 3
    %p30 = por %p28, %p29
    %p31 = scmp.ne.s32.totalorder %s23, %s26
    %p32 = scmp.eq.s32.totalorder %s13, 0
    %p33 = por %p31, %p32
    %p34 = scmp.ne.s32.totalorder %s23, %s26
    %p35 = scmp.eq.s32.totalorder %s18, 3
    %p36 = por %p34, %p35
    %p37 = scmp.ne.s32.totalorder %s26, %s27
    %p38 = scmp.eq.s32.totalorder %s18, 0
    %p39 = por %p37, %p38
    %p40 = scmp.ne.s32.totalorder %s26, %s27
    %p41 = scmp.eq.s32.totalorder %s19, 3
    %p42 = por %p40, %p41
    %p44 = scmp.ne.s32.totalorder %s27, %s43
    %p45 = scmp.eq.s32.totalorder %s19, 0
    %p46 = por %p44, %p45
    %s48 = sadd.s32 %s47, 1
    %p51 = scmp.eq.s32.totalorder %s13, 3
    %p52 = scmp.ne.s32.totalorder %s47, %s49
    %p53 = scmp.eq.s32.totalorder %s13, 0
    %p54 = por %p52, %p53
    %p55 = scmp.ne.s32.totalorder %s47, %s49
    %p56 = scmp.eq.s32.totalorder %s18, 3
    %p57 = por %p55, %p56
    %p58 = scmp.ne.s32.totalorder %s49, %s50
    %p59 = scmp.eq.s32.totalorder %s18, 0
    %p60 = por %p58, %p59
    %p61 = scmp.ne.s32.totalorder %s49, %s50
    %p62 = scmp.eq.s32.totalorder %s19, 3
    %p63 = por %p61, %p62
    %p65 = scmp.ne.s32.totalorder %s50, %s64
    %p66 = scmp.eq.s32.totalorder %s19, 0
    %p67 = por %p65, %p66
    %s69 = sadd.s32 %s68, 1
    %p72 = scmp.eq.s32.totalorder %s13, 3
    %p73 = scmp.ne.s32.totalorder %s68, %s70
    %p74 = scmp.eq.s32.totalorder %s13, 0
    %p75 = por %p73, %p74
    %p76 = scmp.ne.s32.totalorder %s68, %s70
    %p77 = scmp.eq.s32.totalorder %s18, 3
    %p78 = por %p76, %p77
    %p79 = scmp.ne.s32.totalorder %s70, %s71
    %p80 = scmp.eq.s32.totalorder %s18, 0
    %p81 = por %p79, %p80
    %p82 = scmp.ne.s32.totalorder %s70, %s71
    %p83 = scmp.eq.s32.totalorder %s19, 3
    %p84 = por %p82, %p83
    %p86 = scmp.ne.s32.totalorder %s71, %s85
    %p87 = scmp.eq.s32.totalorder %s19, 0
    %p88 = por %p86, %p87
    %s90 = sadd.s32 %s89, 1
    %p93 = scmp.eq.s32.totalorder %s13, 3
    %p94 = scmp.ne.s32.totalorder %s89, %s91
    %p95 = scmp.eq.s32.totalorder %s13, 0
    %p96 = por %p94, %p95
    %p97 = scmp.ne.s32.totalorder %s89, %s91
    %p98 = scmp.eq.s32.totalorder %s18, 3
    %p99 = por %p97, %p98
    %p100 = scmp.ne.s32.totalorder %s91, %s92
    %p101 = scmp.eq.s32.totalorder %s18, 0
    %p102 = por %p100, %p101
    %p103 = scmp.ne.s32.totalorder %s91, %s92
    %p104 = scmp.eq.s32.totalorder %s19, 3
    %p105 = por %p103, %p104
    %p107 = scmp.ne.s32.totalorder %s92, %s106
    %p108 = scmp.eq.s32.totalorder %s19, 0
    %p109 = por %p107, %p108
    %s111 = sadd.s32 %s110, 1
    %p114 = scmp.eq.s32.totalorder %s13, 3
    %p115 = scmp.ne.s32.totalorder %s110, %s112
    %p116 = scmp.eq.s32.totalorder %s13, 0
    %p117 = por %p115, %p116
    %p118 = scmp.ne.s32.totalorder %s110, %s112
    %p119 = scmp.eq.s32.totalorder %s18, 3
    %p120 = por %p118, %p119
    %p121 = scmp.ne.s32.totalorder %s112, %s113
    %p122 = scmp.eq.s32.totalorder %s18, 0
    %p123 = por %p121, %p122
    %p124 = scmp.ne.s32.totalorder %s112, %s113
    %p125 = scmp.eq.s32.totalorder %s19, 3
    %p126 = por %p124, %p125
    %p128 = scmp.ne.s32.totalorder %s113, %s127
    %p129 = scmp.eq.s32.totalorder %s19, 0
    %p130 = por %p128, %p129
    %s132 = sadd.s32 %s131, 1
    %p135 = scmp.eq.s32.totalorder %s13, 3
    %p136 = scmp.ne.s32.totalorder %s131, %s133
    %p137 = scmp.eq.s32.totalorder %s13, 0
    %p138 = por %p136, %p137
    %p139 = scmp.ne.s32.totalorder %s131, %s133
    %p140 = scmp.eq.s32.totalorder %s18, 3
    %p141 = por %p139, %p140
    %p142 = scmp.ne.s32.totalorder %s133, %s134
    %p143 = scmp.eq.s32.totalorder %s18, 0
    %p144 = por %p142, %p143
    %p145 = scmp.ne.s32.totalorder %s133, %s134
    %p146 = scmp.eq.s32.totalorder %s19, 3
    %p147 = por %p145, %p146
    %p149 = scmp.ne.s32.totalorder %s134, %s148
    %p150 = scmp.eq.s32.totalorder %s19, 0
    %p151 = por %p149, %p150
    %s153 = sadd.s32 %s152, 1
    %p156 = scmp.eq.s32.totalorder %s13, 3
    %p157 = scmp.ne.s32.totalorder %s152, %s154
    %p158 = scmp.eq.s32.totalorder %s13, 0
    %p159 = por %p157, %p158
    %p160 = scmp.ne.s32.totalorder %s152, %s154
    %p161 = scmp.eq.s32.totalorder %s18, 3
    %p162 = por %p160, %p161
    %p163 = scmp.ne.s32.totalorder %s154, %s155
    %p164 = scmp.eq.s32.totalorder %s18, 0
    %p165 = por %p163, %p164
    %p166 = scmp.ne.s32.totalorder %s154, %s155
    %p167 = scmp.eq.s32.totalorder %s19, 3
    %p168 = por %p166, %p167
    %p170 = scmp.ne.s32.totalorder %s155, %s169
    %p171 = scmp.eq.s32.totalorder %s19, 0
    %p172 = por %p170, %p171
    %s173 = ssub.s32 %s13, %s20
    %p174 = scmp.eq.s32.totalorder %s173, 0
    %s176 = sadd.s32 %s175, 1
    %s177 = scalar_select %p174, %s175, %s176
    %p180 = pneg %p174
    %p181 = scmp.eq.s32.totalorder %s13, 3
    %p182 = por %p180, %p181
    %p183 = scmp.ne.s32.totalorder %s175, %s178
    %p184 = scmp.eq.s32.totalorder %s13, 0
    %p185 = por %p183, %p184
    %p186 = scmp.ne.s32.totalorder %s175, %s178
    %p187 = scmp.eq.s32.totalorder %s18, 3
    %p188 = por %p186, %p187
    %p189 = scmp.ne.s32.totalorder %s178, %s179
    %p190 = scmp.eq.s32.totalorder %s18, 0
    %p191 = por %p189, %p190
    %p192 = scmp.ne.s32.totalorder %s178, %s179
    %p193 = scmp.eq.s32.totalorder %s19, 3
    %p194 = por %p192, %p193
    %p196 = scmp.ne.s32.totalorder %s179, %s195
    %p197 = scmp.eq.s32.totalorder %s19, 0
    %p198 = por %p196, %p197
    %p199 = scmp.le.s32.totalorder 1, %s13
    %p200 = scmp.lt.s32.totalorder %s13, 5
    %p201 = pnand %p199, %p200
    %p202 = pneg %p201
    // Predicated region
    $region9: #{feature_extractor_forward.1} parent=5 // pred_check
      _
    $region10: #{feature_extractor_forward.1} parent=5 // pred_check_branch
      %204 = sbr.rel (%p201) target = $region12
    $region11: #{feature_extractor_forward.1} parent=5 // pred_region
      %s205 = ssub.s32 %s13, 1
      // Predicated region
      $region13: #{feature_extractor_forward.1} parent=11 // pred_check
        %p206 = pneg %p60
      $region14: #{feature_extractor_forward.1} parent=11 // pred_check_branch
        %208 = sbr.rel (%p206) target = $region16
      $region15: #{feature_extractor_forward.1} parent=11 // pred_region
        _
      $region16: #{feature_extractor_forward.1} parent=11 // pred_fallthru
        _
      // Predicated region
      $region17: #{feature_extractor_forward.1} parent=11 // pred_check
        %p209 = pneg %p81
      $region18: #{feature_extractor_forward.1} parent=11 // pred_check_branch
        %211 = sbr.rel (%p209) target = $region20
      $region19: #{feature_extractor_forward.1} parent=11 // pred_region
        _
      $region20: #{feature_extractor_forward.1} parent=11 // pred_fallthru
        _
      // Predicated region
      $region21: #{feature_extractor_forward.1} parent=11 // pred_check
        %p212 = pneg %p102
      $region22: #{feature_extractor_forward.1} parent=11 // pred_check_branch
        %214 = sbr.rel (%p212) target = $region24
      $region23: #{feature_extractor_forward.1} parent=11 // pred_region
        _
      $region24: #{feature_extractor_forward.1} parent=11 // pred_fallthru
        _
      // Predicated region
      $region25: #{feature_extractor_forward.1} parent=11 // pred_check
        %p215 = pneg %p123
      $region26: #{feature_extractor_forward.1} parent=11 // pred_check_branch
        %217 = sbr.rel (%p215) target = $region28
      $region27: #{feature_extractor_forward.1} parent=11 // pred_region
        _
      $region28: #{feature_extractor_forward.1} parent=11 // pred_fallthru
        _
      // Predicated region
      $region29: #{feature_extractor_forward.1} parent=11 // pred_check
        %p218 = pneg %p144
      $region30: #{feature_extractor_forward.1} parent=11 // pred_check_branch
        %220 = sbr.rel (%p218) target = $region32
      $region31: #{feature_extractor_forward.1} parent=11 // pred_region
        _
      $region32: #{feature_extractor_forward.1} parent=11 // pred_fallthru
        _
      // Predicated region
      $region33: #{feature_extractor_forward.1} parent=11 // pred_check
        %p221 = pneg %p165
      $region34: #{feature_extractor_forward.1} parent=11 // pred_check_branch
        %223 = sbr.rel (%p221) target = $region36
      $region35: #{feature_extractor_forward.1} parent=11 // pred_region
        _
      $region36: #{feature_extractor_forward.1} parent=11 // pred_fallthru
        _
    $region12: #{feature_extractor_forward.1} parent=5 // pred_fallthru
      _
    %p224 = scmp.lt.s32.totalorder %s13, 4
    // Predicated region
    $region37: #{feature_extractor_forward.1} parent=5 // pred_check
      %p225 = pneg %p224
    $region38: #{feature_extractor_forward.1} parent=5 // pred_check_branch
      %227 = sbr.rel (%p225) target = $region40
    $region39: #{feature_extractor_forward.1} parent=5 // pred_region
      // Predicated region
      $region41: #{feature_extractor_forward.1} parent=39 // pred_check
        %p228 = pneg %p33
      $region42: #{feature_extractor_forward.1} parent=39 // pred_check_branch
        %230 = sbr.rel (%p228) target = $region44
      $region43: #{feature_extractor_forward.1} parent=39 // pred_region
        %p231 = scmp.lt.s32.totalorder %s13, 3
        %s232 = scalar_select %p231, %s13, 3
        %s233 = smul.addr %s232, 64
        %s234 = smul.addr %s233, 4
        %s235 = scalar_lea.vmem %s0, %s234
      $region44: #{feature_extractor_forward.1} parent=39 // pred_fallthru
        _
    $region40: #{feature_extractor_forward.1} parent=5 // pred_fallthru
      _
    %p236 = scmp.le.s32.totalorder 1, %s13
    %p237 = scmp.lt.s32.totalorder %s13, 5
    %p238 = pnand %p236, %p237
    %p239 = pneg %p238
    // Predicated region
    $region45: #{feature_extractor_forward.1} parent=5 // pred_check
      _
    $region46: #{feature_extractor_forward.1} parent=5 // pred_check_branch
      %241 = sbr.rel (%p238) target = $region48
    $region47: #{feature_extractor_forward.1} parent=5 // pred_region
      %s242 = ssub.s32 %s13, 1
      %p243 = scmp.lt.s32.totalorder %s18, 3
      %s244 = scalar_select %p243, %s18, 3
      %s245 = smul.addr %s244, 64
      %s246 = smul.addr %s245, 4
      %s247 = scalar_lea.vmem %s0, %s246
      %p248 = pneg %p39
      %p249 = pneg %p36
      %p250 = pneg %p60
      %p251 = pneg %p57
      %p252 = pneg %p81
      %p253 = pneg %p78
      %p254 = pneg %p102
      %p255 = pneg %p99
      %p256 = pneg %p123
      %p257 = pneg %p120
      %p258 = pneg %p144
      %p259 = pneg %p141
      %p260 = pneg %p165
      %p261 = pneg %p162
      %p262 = pneg %p191
      %p263 = pneg %p188
      %p264 = scmp.lt.s32.totalorder %s18, 3
      %s265 = scalar_select %p264, %s18, 3
      %s266 = smul.addr %s265, 4
      %s267 = smul.addr %s266, 8
      %s268 = scalar_lea.vmem %s7, %s267
      %p269 = scmp.lt.s32.totalorder %s18, 3
      %s270 = scalar_select %p269, %s18, 3
      %s271 = smul.addr %s270, 64
      %s272 = smul.addr %s271, 4
      %s273 = scalar_lea.vmem %s0, %s272
      %p274 = scmp.lt.s32.totalorder %s18, 3
      %s275 = scalar_select %p274, %s18, 3
      %s276 = smul.addr %s275, 4
      %s277 = smul.addr %s276, 8
      %s278 = scalar_lea.vmem %s7, %s277
      %v280 = vld [vmem:[%s273] sm:$0xff]
      %v281 = vld [vmem:[%s273 + $0x8] sm:$0xff]
      %v282 = vld [vmem:[%s273 + $0x10] sm:$0xff]
      %v283 = vld [vmem:[%s273 + $0x18] sm:$0xff]
      %v284 = vld [vmem:[%s273 + $0x20] sm:$0xff]
      %v285 = vld [vmem:[%s273 + $0x28] sm:$0xff]
      %v286 = vld [vmem:[%s273 + $0x30] sm:$0xff]
      %v287 = vld [vmem:[%s273 + $0x38] sm:$0xff]
      %v288 = vld [vmem:[%s273 + $0x40] sm:$0xff]
      %v289 = vld [vmem:[%s273 + $0x48] sm:$0xff]
      %v290 = vld [vmem:[%s273 + $0x50] sm:$0xff]
      %v291 = vld [vmem:[%s273 + $0x58] sm:$0xff]
      %v292 = vld [vmem:[%s273 + $0x60] sm:$0xff]
      %v293 = vld [vmem:[%s273 + $0x68] sm:$0xff]
      %v294 = vld [vmem:[%s273 + $0x70] sm:$0xff]
      %v295 = vld [vmem:[%s273 + $0x78] sm:$0xff]
      %v296 = vld [vmem:[%s273 + $0x80] sm:$0xff]
      %v297 = vld [vmem:[%s273 + $0x88] sm:$0xff]
      %v298 = vld [vmem:[%s273 + $0x90] sm:$0xff]
      %v299 = vld [vmem:[%s273 + $0x98] sm:$0xff]
      %v300 = vld [vmem:[%s273 + $0xa0] sm:$0xff]
      %v301 = vld [vmem:[%s273 + $0xa8] sm:$0xff]
      %v302 = vld [vmem:[%s273 + $0xb0] sm:$0xff]
      %v303 = vld [vmem:[%s273 + $0xb8] sm:$0xff]
      %v304 = vld [vmem:[%s273 + $0xc0] sm:$0xff]
      %v305 = vld [vmem:[%s273 + $0xc8] sm:$0xff]
      %v306 = vld [vmem:[%s273 + $0xd0] sm:$0xff]
      %v307 = vld [vmem:[%s273 + $0xd8] sm:$0xff]
      %v308 = vld [vmem:[%s273 + $0xe0] sm:$0xff]
      %v309 = vld [vmem:[%s273 + $0xe8] sm:$0xff]
      %v310 = vld [vmem:[%s273 + $0xf0] sm:$0xff]
      %v311 = vld [vmem:[%s273 + $0xf8] sm:$0xff]
      %v344 = vunpack.c.l.b16 %v280
      %v345 = vunpack.c.h.b16 %v280
      %v346 = vunpack.c.l.b16 %v281
      %v347 = vunpack.c.h.b16 %v281
      %v348 = vunpack.c.l.b16 %v282
      %v349 = vunpack.c.h.b16 %v282
      %v350 = vunpack.c.l.b16 %v283
      %v351 = vunpack.c.h.b16 %v283
      %v352 = vunpack.c.l.b16 %v284
      %v353 = vunpack.c.h.b16 %v284
      %v354 = vunpack.c.l.b16 %v285
      %v355 = vunpack.c.h.b16 %v285
      %v356 = vunpack.c.l.b16 %v286
      %v357 = vunpack.c.h.b16 %v286
      %v358 = vunpack.c.l.b16 %v287
      %v359 = vunpack.c.h.b16 %v287
      %v360 = vunpack.c.l.b16 %v288
      %v361 = vunpack.c.h.b16 %v288
      %v362 = vunpack.c.l.b16 %v289
      %v363 = vunpack.c.h.b16 %v289
      %v364 = vunpack.c.l.b16 %v290
      %v365 = vunpack.c.h.b16 %v290
      %v366 = vunpack.c.l.b16 %v291
      %v367 = vunpack.c.h.b16 %v291
      %v368 = vunpack.c.l.b16 %v292
      %v369 = vunpack.c.h.b16 %v292
      %v370 = vunpack.c.l.b16 %v293
      %v371 = vunpack.c.h.b16 %v293
      %v372 = vunpack.c.l.b16 %v294
      %v373 = vunpack.c.h.b16 %v294
      %v374 = vunpack.c.l.b16 %v295
      %v375 = vunpack.c.h.b16 %v295
      %v376 = vunpack.c.l.b16 %v296
      %v377 = vunpack.c.h.b16 %v296
      %v378 = vunpack.c.l.b16 %v297
      %v379 = vunpack.c.h.b16 %v297
      %v380 = vunpack.c.l.b16 %v298
      %v381 = vunpack.c.h.b16 %v298
      %v382 = vunpack.c.l.b16 %v299
      %v383 = vunpack.c.h.b16 %v299
      %v384 = vunpack.c.l.b16 %v300
      %v385 = vunpack.c.h.b16 %v300
      %v386 = vunpack.c.l.b16 %v301
      %v387 = vunpack.c.h.b16 %v301
      %v388 = vunpack.c.l.b16 %v302
      %v389 = vunpack.c.h.b16 %v302
      %v390 = vunpack.c.l.b16 %v303
      %v391 = vunpack.c.h.b16 %v303
      %v392 = vunpack.c.l.b16 %v304
      %v393 = vunpack.c.h.b16 %v304
      %v394 = vunpack.c.l.b16 %v305
      %v395 = vunpack.c.h.b16 %v305
      %v396 = vunpack.c.l.b16 %v306
      %v397 = vunpack.c.h.b16 %v306
      %v398 = vunpack.c.l.b16 %v307
      %v399 = vunpack.c.h.b16 %v307
      %v400 = vunpack.c.l.b16 %v308
      %v401 = vunpack.c.h.b16 %v308
      %v402 = vunpack.c.l.b16 %v309
      %v403 = vunpack.c.h.b16 %v309
      %v404 = vunpack.c.l.b16 %v310
      %v405 = vunpack.c.h.b16 %v310
      %v406 = vunpack.c.l.b16 %v311
      %v407 = vunpack.c.h.b16 %v311
      %v408 = vpack.c.b16 %v376, %v344
      %v409 = vpack.c.b16 %v377, %v345
      %v410 = vpack.c.b16 %v378, %v346
      %v411 = vpack.c.b16 %v379, %v347
      %v412 = vpack.c.b16 %v380, %v348
      %v413 = vpack.c.b16 %v381, %v349
      %v414 = vpack.c.b16 %v382, %v350
      %v415 = vpack.c.b16 %v383, %v351
      %v416 = vpack.c.b16 %v384, %v352
      %v417 = vpack.c.b16 %v385, %v353
      %v418 = vpack.c.b16 %v386, %v354
      %v419 = vpack.c.b16 %v387, %v355
      %v420 = vpack.c.b16 %v388, %v356
      %v421 = vpack.c.b16 %v389, %v357
      %v422 = vpack.c.b16 %v390, %v358
      %v423 = vpack.c.b16 %v391, %v359
      %v424 = vpack.c.b16 %v392, %v360
      %v425 = vpack.c.b16 %v393, %v361
      %v426 = vpack.c.b16 %v394, %v362
      %v427 = vpack.c.b16 %v395, %v363
      %v428 = vpack.c.b16 %v396, %v364
      %v429 = vpack.c.b16 %v397, %v365
      %v430 = vpack.c.b16 %v398, %v366
      %v431 = vpack.c.b16 %v399, %v367
      %v432 = vpack.c.b16 %v400, %v368
      %v433 = vpack.c.b16 %v401, %v369
      %v434 = vpack.c.b16 %v402, %v370
      %v435 = vpack.c.b16 %v403, %v371
      %v436 = vpack.c.b16 %v404, %v372
      %v437 = vpack.c.b16 %v405, %v373
      %v438 = vpack.c.b16 %v406, %v374
      %v439 = vpack.c.b16 %v407, %v375
      %440 = vrot.lane.b32.xlu0 %v408, 127
      %v441 = vpop.permute.xlu0 %440
      %442 = vrot.lane.b32.xlu0 %v409, 127
      %v443 = vpop.permute.xlu0 %442
      %444 = vrot.lane.b32.xlu0 %v410, 127
      %v445 = vpop.permute.xlu0 %444
      %446 = vrot.lane.b32.xlu0 %v411, 127
      %v447 = vpop.permute.xlu0 %446
      %448 = vrot.lane.b32.xlu0 %v412, 127
      %v449 = vpop.permute.xlu0 %448
      %450 = vrot.lane.b32.xlu0 %v413, 127
      %v451 = vpop.permute.xlu0 %450
      %452 = vrot.lane.b32.xlu0 %v414, 127
      %v453 = vpop.permute.xlu0 %452
      %454 = vrot.lane.b32.xlu0 %v415, 127
      %v455 = vpop.permute.xlu0 %454
      %456 = vrot.lane.b32.xlu0 %v416, 127
      %v457 = vpop.permute.xlu0 %456
      %458 = vrot.lane.b32.xlu0 %v417, 127
      %v459 = vpop.permute.xlu0 %458
      %460 = vrot.lane.b32.xlu0 %v418, 127
      %v461 = vpop.permute.xlu0 %460
      %462 = vrot.lane.b32.xlu0 %v419, 127
      %v463 = vpop.permute.xlu0 %462
      %464 = vrot.lane.b32.xlu0 %v420, 127
      %v465 = vpop.permute.xlu0 %464
      %466 = vrot.lane.b32.xlu0 %v421, 127
      %v467 = vpop.permute.xlu0 %466
      %468 = vrot.lane.b32.xlu0 %v422, 127
      %v469 = vpop.permute.xlu0 %468
      %470 = vrot.lane.b32.xlu0 %v423, 127
      %v471 = vpop.permute.xlu0 %470
      %472 = vrot.lane.b32.xlu0 %v424, 127
      %v473 = vpop.permute.xlu0 %472
      %474 = vrot.lane.b32.xlu0 %v425, 127
      %v475 = vpop.permute.xlu0 %474
      %476 = vrot.lane.b32.xlu0 %v426, 127
      %v477 = vpop.permute.xlu0 %476
      %478 = vrot.lane.b32.xlu0 %v427, 127
      %v479 = vpop.permute.xlu0 %478
      %480 = vrot.lane.b32.xlu0 %v428, 127
      %v481 = vpop.permute.xlu0 %480
      %482 = vrot.lane.b32.xlu0 %v429, 127
      %v483 = vpop.permute.xlu0 %482
      %484 = vrot.lane.b32.xlu0 %v430, 127
      %v485 = vpop.permute.xlu0 %484
      %486 = vrot.lane.b32.xlu0 %v431, 127
      %v487 = vpop.permute.xlu0 %486
      %488 = vrot.lane.b32.xlu0 %v432, 127
      %v489 = vpop.permute.xlu0 %488
      %490 = vrot.lane.b32.xlu0 %v433, 127
      %v491 = vpop.permute.xlu0 %490
      %492 = vrot.lane.b32.xlu0 %v434, 127
      %v493 = vpop.permute.xlu0 %492
      %494 = vrot.lane.b32.xlu0 %v435, 127
      %v495 = vpop.permute.xlu0 %494
      %496 = vrot.lane.b32.xlu0 %v436, 127
      %v497 = vpop.permute.xlu0 %496
      %498 = vrot.lane.b32.xlu0 %v437, 127
      %v499 = vpop.permute.xlu0 %498
      %500 = vrot.lane.b32.xlu0 %v438, 127
      %v501 = vpop.permute.xlu0 %500
      %502 = vrot.lane.b32.xlu0 %v439, 127
      %v503 = vpop.permute.xlu0 %502
      %vm504 = vcmask 1039360
      %v505 = vsel %vm504, %v441, %v443
      %v506 = vsel %vm504, %v443, %v445
      %v507 = vsel %vm504, %v445, %v447
      %v508 = vsel %vm504, %v447, %v449
      %v509 = vsel %vm504, %v449, %v451
      %v510 = vsel %vm504, %v451, %v453
      %v511 = vsel %vm504, %v453, %v455
      %v512 = vsel %vm504, %v455, %v457
      %v513 = vsel %vm504, %v457, %v459
      %v514 = vsel %vm504, %v459, %v461
      %v515 = vsel %vm504, %v461, %v463
      %v516 = vsel %vm504, %v463, %v465
      %v517 = vsel %vm504, %v465, %v467
      %v518 = vsel %vm504, %v467, %v469
      %v519 = vsel %vm504, %v469, %v471
      %v520 = vsel %vm504, %v471, %v473
      %v521 = vsel %vm504, %v473, %v475
      %v522 = vsel %vm504, %v475, %v477
      %v523 = vsel %vm504, %v477, %v479
      %v524 = vsel %vm504, %v479, %v481
      %v525 = vsel %vm504, %v481, %v483
      %v526 = vsel %vm504, %v483, %v485
      %v527 = vsel %vm504, %v485, %v487
      %v528 = vsel %vm504, %v487, %v489
      %v529 = vsel %vm504, %v489, %v491
      %v530 = vsel %vm504, %v491, %v493
      %v531 = vsel %vm504, %v493, %v495
      %v532 = vsel %vm504, %v495, %v497
      %v533 = vsel %vm504, %v497, %v499
      %v534 = vsel %vm504, %v499, %v501
      %v535 = vsel %vm504, %v501, %v503
      %vm567 = vcmask 1039360
      %v570 = vsel %vm567, %v503, %v441
      %572 = vrot.lane.b32.xlu0 %v408, 126
      %v573 = vpop.permute.xlu0 %572
      %574 = vrot.lane.b32.xlu0 %v409, 126
      %v575 = vpop.permute.xlu0 %574
      %576 = vrot.lane.b32.xlu0 %v410, 126
      %v577 = vpop.permute.xlu0 %576
      %578 = vrot.lane.b32.xlu0 %v411, 126
      %v579 = vpop.permute.xlu0 %578
      %580 = vrot.lane.b32.xlu0 %v412, 126
      %v581 = vpop.permute.xlu0 %580
      %582 = vrot.lane.b32.xlu0 %v413, 126
      %v583 = vpop.permute.xlu0 %582
      %584 = vrot.lane.b32.xlu0 %v414, 126
      %v585 = vpop.permute.xlu0 %584
      %586 = vrot.lane.b32.xlu0 %v415, 126
      %v587 = vpop.permute.xlu0 %586
      %588 = vrot.lane.b32.xlu0 %v416, 126
      %v589 = vpop.permute.xlu0 %588
      %590 = vrot.lane.b32.xlu0 %v417, 126
      %v591 = vpop.permute.xlu0 %590
      %592 = vrot.lane.b32.xlu0 %v418, 126
      %v593 = vpop.permute.xlu0 %592
      %594 = vrot.lane.b32.xlu0 %v419, 126
      %v595 = vpop.permute.xlu0 %594
      %596 = vrot.lane.b32.xlu0 %v420, 126
      %v597 = vpop.permute.xlu0 %596
      %598 = vrot.lane.b32.xlu0 %v421, 126
      %v599 = vpop.permute.xlu0 %598
      %600 = vrot.lane.b32.xlu0 %v422, 126
      %v601 = vpop.permute.xlu0 %600
      %602 = vrot.lane.b32.xlu0 %v423, 126
      %v603 = vpop.permute.xlu0 %602
      %604 = vrot.lane.b32.xlu0 %v424, 126
      %v605 = vpop.permute.xlu0 %604
      %606 = vrot.lane.b32.xlu0 %v425, 126
      %v607 = vpop.permute.xlu0 %606
      %608 = vrot.lane.b32.xlu0 %v426, 126
      %v609 = vpop.permute.xlu0 %608
      %610 = vrot.lane.b32.xlu0 %v427, 126
      %v611 = vpop.permute.xlu0 %610
      %612 = vrot.lane.b32.xlu0 %v428, 126
      %v613 = vpop.permute.xlu0 %612
      %614 = vrot.lane.b32.xlu0 %v429, 126
      %v615 = vpop.permute.xlu0 %614
      %616 = vrot.lane.b32.xlu0 %v430, 126
      %v617 = vpop.permute.xlu0 %616
      %618 = vrot.lane.b32.xlu0 %v431, 126
      %v619 = vpop.permute.xlu0 %618
      %620 = vrot.lane.b32.xlu0 %v432, 126
      %v621 = vpop.permute.xlu0 %620
      %622 = vrot.lane.b32.xlu0 %v433, 126
      %v623 = vpop.permute.xlu0 %622
      %624 = vrot.lane.b32.xlu0 %v434, 126
      %v625 = vpop.permute.xlu0 %624
      %626 = vrot.lane.b32.xlu0 %v435, 126
      %v627 = vpop.permute.xlu0 %626
      %628 = vrot.lane.b32.xlu0 %v436, 126
      %v629 = vpop.permute.xlu0 %628
      %630 = vrot.lane.b32.xlu0 %v437, 126
      %v631 = vpop.permute.xlu0 %630
      %632 = vrot.lane.b32.xlu0 %v438, 126
      %v633 = vpop.permute.xlu0 %632
      %634 = vrot.lane.b32.xlu0 %v439, 126
      %v635 = vpop.permute.xlu0 %634
      %vm636 = vcmask 1031168
      %v637 = vsel %vm636, %v573, %v575
      %v638 = vsel %vm636, %v575, %v577
      %v639 = vsel %vm636, %v577, %v579
      %v640 = vsel %vm636, %v579, %v581
      %v641 = vsel %vm636, %v581, %v583
      %v642 = vsel %vm636, %v583, %v585
      %v643 = vsel %vm636, %v585, %v587
      %v644 = vsel %vm636, %v587, %v589
      %v645 = vsel %vm636, %v589, %v591
      %v646 = vsel %vm636, %v591, %v593
      %v647 = vsel %vm636, %v593, %v595
      %v648 = vsel %vm636, %v595, %v597
      %v649 = vsel %vm636, %v597, %v599
      %v650 = vsel %vm636, %v599, %v601
      %v651 = vsel %vm636, %v601, %v603
      %v652 = vsel %vm636, %v603, %v605
      %v653 = vsel %vm636, %v605, %v607
      %v654 = vsel %vm636, %v607, %v609
      %v655 = vsel %vm636, %v609, %v611
      %v656 = vsel %vm636, %v611, %v613
      %v657 = vsel %vm636, %v613, %v615
      %v658 = vsel %vm636, %v615, %v617
      %v659 = vsel %vm636, %v617, %v619
      %v660 = vsel %vm636, %v619, %v621
      %v661 = vsel %vm636, %v621, %v623
      %v662 = vsel %vm636, %v623, %v625
      %v663 = vsel %vm636, %v625, %v627
      %v664 = vsel %vm636, %v627, %v629
      %v665 = vsel %vm636, %v629, %v631
      %v666 = vsel %vm636, %v631, %v633
      %v667 = vsel %vm636, %v633, %v635
      %vm699 = vcmask 1031168
      %v702 = vsel %vm699, %v635, %v573
      %704 = vrot.lane.b32.xlu0 %v408, 125
      %v705 = vpop.permute.xlu0 %704
      %706 = vrot.lane.b32.xlu0 %v409, 125
      %v707 = vpop.permute.xlu0 %706
      %708 = vrot.lane.b32.xlu0 %v410, 125
      %v709 = vpop.permute.xlu0 %708
      %710 = vrot.lane.b32.xlu0 %v411, 125
      %v711 = vpop.permute.xlu0 %710
      %712 = vrot.lane.b32.xlu0 %v412, 125
      %v713 = vpop.permute.xlu0 %712
      %714 = vrot.lane.b32.xlu0 %v413, 125
      %v715 = vpop.permute.xlu0 %714
      %716 = vrot.lane.b32.xlu0 %v414, 125
      %v717 = vpop.permute.xlu0 %716
      %718 = vrot.lane.b32.xlu0 %v415, 125
      %v719 = vpop.permute.xlu0 %718
      %720 = vrot.lane.b32.xlu0 %v416, 125
      %v721 = vpop.permute.xlu0 %720
      %722 = vrot.lane.b32.xlu0 %v417, 125
      %v723 = vpop.permute.xlu0 %722
      %724 = vrot.lane.b32.xlu0 %v418, 125
      %v725 = vpop.permute.xlu0 %724
      %726 = vrot.lane.b32.xlu0 %v419, 125
      %v727 = vpop.permute.xlu0 %726
      %728 = vrot.lane.b32.xlu0 %v420, 125
      %v729 = vpop.permute.xlu0 %728
      %730 = vrot.lane.b32.xlu0 %v421, 125
      %v731 = vpop.permute.xlu0 %730
      %732 = vrot.lane.b32.xlu0 %v422, 125
      %v733 = vpop.permute.xlu0 %732
      %734 = vrot.lane.b32.xlu0 %v423, 125
      %v735 = vpop.permute.xlu0 %734
      %736 = vrot.lane.b32.xlu0 %v424, 125
      %v737 = vpop.permute.xlu0 %736
      %738 = vrot.lane.b32.xlu0 %v425, 125
      %v739 = vpop.permute.xlu0 %738
      %740 = vrot.lane.b32.xlu0 %v426, 125
      %v741 = vpop.permute.xlu0 %740
      %742 = vrot.lane.b32.xlu0 %v427, 125
      %v743 = vpop.permute.xlu0 %742
      %744 = vrot.lane.b32.xlu0 %v428, 125
      %v745 = vpop.permute.xlu0 %744
      %746 = vrot.lane.b32.xlu0 %v429, 125
      %v747 = vpop.permute.xlu0 %746
      %748 = vrot.lane.b32.xlu0 %v430, 125
      %v749 = vpop.permute.xlu0 %748
      %750 = vrot.lane.b32.xlu0 %v431, 125
      %v751 = vpop.permute.xlu0 %750
      %752 = vrot.lane.b32.xlu0 %v432, 125
      %v753 = vpop.permute.xlu0 %752
      %754 = vrot.lane.b32.xlu0 %v433, 125
      %v755 = vpop.permute.xlu0 %754
      %756 = vrot.lane.b32.xlu0 %v434, 125
      %v757 = vpop.permute.xlu0 %756
      %758 = vrot.lane.b32.xlu0 %v435, 125
      %v759 = vpop.permute.xlu0 %758
      %760 = vrot.lane.b32.xlu0 %v436, 125
      %v761 = vpop.permute.xlu0 %760
      %762 = vrot.lane.b32.xlu0 %v437, 125
      %v763 = vpop.permute.xlu0 %762
      %764 = vrot.lane.b32.xlu0 %v438, 125
      %v765 = vpop.permute.xlu0 %764
      %766 = vrot.lane.b32.xlu0 %v439, 125
      %v767 = vpop.permute.xlu0 %766
      %vm768 = vcmask 1022976
      %v769 = vsel %vm768, %v705, %v707
      %v770 = vsel %vm768, %v707, %v709
      %v771 = vsel %vm768, %v709, %v711
      %v772 = vsel %vm768, %v711, %v713
      %v773 = vsel %vm768, %v713, %v715
      %v774 = vsel %vm768, %v715, %v717
      %v775 = vsel %vm768, %v717, %v719
      %v776 = vsel %vm768, %v719, %v721
      %v777 = vsel %vm768, %v721, %v723
      %v778 = vsel %vm768, %v723, %v725
      %v779 = vsel %vm768, %v725, %v727
      %v780 = vsel %vm768, %v727, %v729
      %v781 = vsel %vm768, %v729, %v731
      %v782 = vsel %vm768, %v731, %v733
      %v783 = vsel %vm768, %v733, %v735
      %v784 = vsel %vm768, %v735, %v737
      %v785 = vsel %vm768, %v737, %v739
      %v786 = vsel %vm768, %v739, %v741
      %v787 = vsel %vm768, %v741, %v743
      %v788 = vsel %vm768, %v743, %v745
      %v789 = vsel %vm768, %v745, %v747
      %v790 = vsel %vm768, %v747, %v749
      %v791 = vsel %vm768, %v749, %v751
      %v792 = vsel %vm768, %v751, %v753
      %v793 = vsel %vm768, %v753, %v755
      %v794 = vsel %vm768, %v755, %v757
      %v795 = vsel %vm768, %v757, %v759
      %v796 = vsel %vm768, %v759, %v761
      %v797 = vsel %vm768, %v761, %v763
      %v798 = vsel %vm768, %v763, %v765
      %v799 = vsel %vm768, %v765, %v767
      %vm831 = vcmask 1022976
      %v834 = vsel %vm831, %v767, %v705
      %836 = vrot.lane.b32.xlu0 %v408, 124
      %v837 = vpop.permute.xlu0 %836
      %838 = vrot.lane.b32.xlu0 %v409, 124
      %v839 = vpop.permute.xlu0 %838
      %840 = vrot.lane.b32.xlu0 %v410, 124
      %v841 = vpop.permute.xlu0 %840
      %842 = vrot.lane.b32.xlu0 %v411, 124
      %v843 = vpop.permute.xlu0 %842
      %844 = vrot.lane.b32.xlu0 %v412, 124
      %v845 = vpop.permute.xlu0 %844
      %846 = vrot.lane.b32.xlu0 %v413, 124
      %v847 = vpop.permute.xlu0 %846
      %848 = vrot.lane.b32.xlu0 %v414, 124
      %v849 = vpop.permute.xlu0 %848
      %850 = vrot.lane.b32.xlu0 %v415, 124
      %v851 = vpop.permute.xlu0 %850
      %852 = vrot.lane.b32.xlu0 %v416, 124
      %v853 = vpop.permute.xlu0 %852
      %854 = vrot.lane.b32.xlu0 %v417, 124
      %v855 = vpop.permute.xlu0 %854
      %856 = vrot.lane.b32.xlu0 %v418, 124
      %v857 = vpop.permute.xlu0 %856
      %858 = vrot.lane.b32.xlu0 %v419, 124
      %v859 = vpop.permute.xlu0 %858
      %860 = vrot.lane.b32.xlu0 %v420, 124
      %v861 = vpop.permute.xlu0 %860
      %862 = vrot.lane.b32.xlu0 %v421, 124
      %v863 = vpop.permute.xlu0 %862
      %864 = vrot.lane.b32.xlu0 %v422, 124
      %v865 = vpop.permute.xlu0 %864
      %866 = vrot.lane.b32.xlu0 %v423, 124
      %v867 = vpop.permute.xlu0 %866
      %868 = vrot.lane.b32.xlu0 %v424, 124
      %v869 = vpop.permute.xlu0 %868
      %870 = vrot.lane.b32.xlu0 %v425, 124
      %v871 = vpop.permute.xlu0 %870
      %872 = vrot.lane.b32.xlu0 %v426, 124
      %v873 = vpop.permute.xlu0 %872
      %874 = vrot.lane.b32.xlu0 %v427, 124
      %v875 = vpop.permute.xlu0 %874
      %876 = vrot.lane.b32.xlu0 %v428, 124
      %v877 = vpop.permute.xlu0 %876
      %878 = vrot.lane.b32.xlu0 %v429, 124
      %v879 = vpop.permute.xlu0 %878
      %880 = vrot.lane.b32.xlu0 %v430, 124
      %v881 = vpop.permute.xlu0 %880
      %882 = vrot.lane.b32.xlu0 %v431, 124
      %v883 = vpop.permute.xlu0 %882
      %884 = vrot.lane.b32.xlu0 %v432, 124
      %v885 = vpop.permute.xlu0 %884
      %886 = vrot.lane.b32.xlu0 %v433, 124
      %v887 = vpop.permute.xlu0 %886
      %888 = vrot.lane.b32.xlu0 %v434, 124
      %v889 = vpop.permute.xlu0 %888
      %890 = vrot.lane.b32.xlu0 %v435, 124
      %v891 = vpop.permute.xlu0 %890
      %892 = vrot.lane.b32.xlu0 %v436, 124
      %v893 = vpop.permute.xlu0 %892
      %894 = vrot.lane.b32.xlu0 %v437, 124
      %v895 = vpop.permute.xlu0 %894
      %896 = vrot.lane.b32.xlu0 %v438, 124
      %v897 = vpop.permute.xlu0 %896
      %898 = vrot.lane.b32.xlu0 %v439, 124
      %v899 = vpop.permute.xlu0 %898
      %vm900 = vcmask 1014784
      %v901 = vsel %vm900, %v837, %v839
      %v902 = vsel %vm900, %v839, %v841
      %v903 = vsel %vm900, %v841, %v843
      %v904 = vsel %vm900, %v843, %v845
      %v905 = vsel %vm900, %v845, %v847
      %v906 = vsel %vm900, %v847, %v849
      %v907 = vsel %vm900, %v849, %v851
      %v908 = vsel %vm900, %v851, %v853
      %v909 = vsel %vm900, %v853, %v855
      %v910 = vsel %vm900, %v855, %v857
      %v911 = vsel %vm900, %v857, %v859
      %v912 = vsel %vm900, %v859, %v861
      %v913 = vsel %vm900, %v861, %v863
      %v914 = vsel %vm900, %v863, %v865
      %v915 = vsel %vm900, %v865, %v867
      %v916 = vsel %vm900, %v867, %v869
      %v917 = vsel %vm900, %v869, %v871
      %v918 = vsel %vm900, %v871, %v873
      %v919 = vsel %vm900, %v873, %v875
      %v920 = vsel %vm900, %v875, %v877
      %v921 = vsel %vm900, %v877, %v879
      %v922 = vsel %vm900, %v879, %v881
      %v923 = vsel %vm900, %v881, %v883
      %v924 = vsel %vm900, %v883, %v885
      %v925 = vsel %vm900, %v885, %v887
      %v926 = vsel %vm900, %v887, %v889
      %v927 = vsel %vm900, %v889, %v891
      %v928 = vsel %vm900, %v891, %v893
      %v929 = vsel %vm900, %v893, %v895
      %v930 = vsel %vm900, %v895, %v897
      %v931 = vsel %vm900, %v897, %v899
      %vm963 = vcmask 1014784
      %v966 = vsel %vm963, %v899, %v837
      %968 = vrot.lane.b32.xlu0 %v408, 96
      %v969 = vpop.permute.xlu0 %968
      %970 = vrot.lane.b32.xlu0 %v409, 96
      %v971 = vpop.permute.xlu0 %970
      %972 = vrot.lane.b32.xlu0 %v410, 96
      %v973 = vpop.permute.xlu0 %972
      %974 = vrot.lane.b32.xlu0 %v411, 96
      %v975 = vpop.permute.xlu0 %974
      %976 = vrot.lane.b32.xlu0 %v412, 96
      %v977 = vpop.permute.xlu0 %976
      %978 = vrot.lane.b32.xlu0 %v413, 96
      %v979 = vpop.permute.xlu0 %978
      %980 = vrot.lane.b32.xlu0 %v414, 96
      %v981 = vpop.permute.xlu0 %980
      %982 = vrot.lane.b32.xlu0 %v415, 96
      %v983 = vpop.permute.xlu0 %982
      %984 = vrot.lane.b32.xlu0 %v416, 96
      %v985 = vpop.permute.xlu0 %984
      %986 = vrot.lane.b32.xlu0 %v417, 96
      %v987 = vpop.permute.xlu0 %986
      %988 = vrot.lane.b32.xlu0 %v418, 96
      %v989 = vpop.permute.xlu0 %988
      %990 = vrot.lane.b32.xlu0 %v419, 96
      %v991 = vpop.permute.xlu0 %990
      %992 = vrot.lane.b32.xlu0 %v420, 96
      %v993 = vpop.permute.xlu0 %992
      %994 = vrot.lane.b32.xlu0 %v421, 96
      %v995 = vpop.permute.xlu0 %994
      %996 = vrot.lane.b32.xlu0 %v422, 96
      %v997 = vpop.permute.xlu0 %996
      %998 = vrot.lane.b32.xlu0 %v423, 96
      %v999 = vpop.permute.xlu0 %998
      %1000 = vrot.lane.b32.xlu0 %v424, 96
      %v1001 = vpop.permute.xlu0 %1000
      %1002 = vrot.lane.b32.xlu0 %v425, 96
      %v1003 = vpop.permute.xlu0 %1002
      %1004 = vrot.lane.b32.xlu0 %v426, 96
      %v1005 = vpop.permute.xlu0 %1004
      %1006 = vrot.lane.b32.xlu0 %v427, 96
      %v1007 = vpop.permute.xlu0 %1006
      %1008 = vrot.lane.b32.xlu0 %v428, 96
      %v1009 = vpop.permute.xlu0 %1008
      %1010 = vrot.lane.b32.xlu0 %v429, 96
      %v1011 = vpop.permute.xlu0 %1010
      %1012 = vrot.lane.b32.xlu0 %v430, 96
      %v1013 = vpop.permute.xlu0 %1012
      %1014 = vrot.lane.b32.xlu0 %v431, 96
      %v1015 = vpop.permute.xlu0 %1014
      %1016 = vrot.lane.b32.xlu0 %v432, 96
      %v1017 = vpop.permute.xlu0 %1016
      %1018 = vrot.lane.b32.xlu0 %v433, 96
      %v1019 = vpop.permute.xlu0 %1018
      %1020 = vrot.lane.b32.xlu0 %v434, 96
      %v1021 = vpop.permute.xlu0 %1020
      %1022 = vrot.lane.b32.xlu0 %v435, 96
      %v1023 = vpop.permute.xlu0 %1022
      %1024 = vrot.lane.b32.xlu0 %v436, 96
      %v1025 = vpop.permute.xlu0 %1024
      %1026 = vrot.lane.b32.xlu0 %v437, 96
      %v1027 = vpop.permute.xlu0 %1026
      %1028 = vrot.lane.b32.xlu0 %v438, 96
      %v1029 = vpop.permute.xlu0 %1028
      %1030 = vrot.lane.b32.xlu0 %v439, 96
      %v1031 = vpop.permute.xlu0 %1030
      %vm1032 = vcmask 785408
      %v1033 = vsel %vm1032, %v969, %v971
      %v1034 = vsel %vm1032, %v971, %v973
      %v1035 = vsel %vm1032, %v973, %v975
      %v1036 = vsel %vm1032, %v975, %v977
      %v1037 = vsel %vm1032, %v977, %v979
      %v1038 = vsel %vm1032, %v979, %v981
      %v1039 = vsel %vm1032, %v981, %v983
      %v1040 = vsel %vm1032, %v983, %v985
      %v1041 = vsel %vm1032, %v985, %v987
      %v1042 = vsel %vm1032, %v987, %v989
      %v1043 = vsel %vm1032, %v989, %v991
      %v1044 = vsel %vm1032, %v991, %v993
      %v1045 = vsel %vm1032, %v993, %v995
      %v1046 = vsel %vm1032, %v995, %v997
      %v1047 = vsel %vm1032, %v997, %v999
      %v1048 = vsel %vm1032, %v999, %v1001
      %v1049 = vsel %vm1032, %v1001, %v1003
      %v1050 = vsel %vm1032, %v1003, %v1005
      %v1051 = vsel %vm1032, %v1005, %v1007
      %v1052 = vsel %vm1032, %v1007, %v1009
      %v1053 = vsel %vm1032, %v1009, %v1011
      %v1054 = vsel %vm1032, %v1011, %v1013
      %v1055 = vsel %vm1032, %v1013, %v1015
      %v1056 = vsel %vm1032, %v1015, %v1017
      %v1057 = vsel %vm1032, %v1017, %v1019
      %v1058 = vsel %vm1032, %v1019, %v1021
      %v1059 = vsel %vm1032, %v1021, %v1023
      %v1060 = vsel %vm1032, %v1023, %v1025
      %v1061 = vsel %vm1032, %v1025, %v1027
      %v1062 = vsel %vm1032, %v1027, %v1029
      %v1063 = vsel %vm1032, %v1029, %v1031
      %vm1095 = vcmask 785408
      %v1098 = vsel %vm1095, %v1031, %v969
      %1100 = vrot.lane.b32.xlu0 %v408, 95
      %v1101 = vpop.permute.xlu0 %1100
      %1102 = vrot.lane.b32.xlu0 %v409, 95
      %v1103 = vpop.permute.xlu0 %1102
      %1104 = vrot.lane.b32.xlu0 %v410, 95
      %v1105 = vpop.permute.xlu0 %1104
      %1106 = vrot.lane.b32.xlu0 %v411, 95
      %v1107 = vpop.permute.xlu0 %1106
      %1108 = vrot.lane.b32.xlu0 %v412, 95
      %v1109 = vpop.permute.xlu0 %1108
      %1110 = vrot.lane.b32.xlu0 %v413, 95
      %v1111 = vpop.permute.xlu0 %1110
      %1112 = vrot.lane.b32.xlu0 %v414, 95
      %v1113 = vpop.permute.xlu0 %1112
      %1114 = vrot.lane.b32.xlu0 %v415, 95
      %v1115 = vpop.permute.xlu0 %1114
      %1116 = vrot.lane.b32.xlu0 %v416, 95
      %v1117 = vpop.permute.xlu0 %1116
      %1118 = vrot.lane.b32.xlu0 %v417, 95
      %v1119 = vpop.permute.xlu0 %1118
      %1120 = vrot.lane.b32.xlu0 %v418, 95
      %v1121 = vpop.permute.xlu0 %1120
      %1122 = vrot.lane.b32.xlu0 %v419, 95
      %v1123 = vpop.permute.xlu0 %1122
      %1124 = vrot.lane.b32.xlu0 %v420, 95
      %v1125 = vpop.permute.xlu0 %1124
      %1126 = vrot.lane.b32.xlu0 %v421, 95
      %v1127 = vpop.permute.xlu0 %1126
      %1128 = vrot.lane.b32.xlu0 %v422, 95
      %v1129 = vpop.permute.xlu0 %1128
      %1130 = vrot.lane.b32.xlu0 %v423, 95
      %v1131 = vpop.permute.xlu0 %1130
      %1132 = vrot.lane.b32.xlu0 %v424, 95
      %v1133 = vpop.permute.xlu0 %1132
      %1134 = vrot.lane.b32.xlu0 %v425, 95
      %v1135 = vpop.permute.xlu0 %1134
      %1136 = vrot.lane.b32.xlu0 %v426, 95
      %v1137 = vpop.permute.xlu0 %1136
      %1138 = vrot.lane.b32.xlu0 %v427, 95
      %v1139 = vpop.permute.xlu0 %1138
      %1140 = vrot.lane.b32.xlu0 %v428, 95
      %v1141 = vpop.permute.xlu0 %1140
      %1142 = vrot.lane.b32.xlu0 %v429, 95
      %v1143 = vpop.permute.xlu0 %1142
      %1144 = vrot.lane.b32.xlu0 %v430, 95
      %v1145 = vpop.permute.xlu0 %1144
      %1146 = vrot.lane.b32.xlu0 %v431, 95
      %v1147 = vpop.permute.xlu0 %1146
      %1148 = vrot.lane.b32.xlu0 %v432, 95
      %v1149 = vpop.permute.xlu0 %1148
      %1150 = vrot.lane.b32.xlu0 %v433, 95
      %v1151 = vpop.permute.xlu0 %1150
      %1152 = vrot.lane.b32.xlu0 %v434, 95
      %v1153 = vpop.permute.xlu0 %1152
      %1154 = vrot.lane.b32.xlu0 %v435, 95
      %v1155 = vpop.permute.xlu0 %1154
      %1156 = vrot.lane.b32.xlu0 %v436, 95
      %v1157 = vpop.permute.xlu0 %1156
      %1158 = vrot.lane.b32.xlu0 %v437, 95
      %v1159 = vpop.permute.xlu0 %1158
      %1160 = vrot.lane.b32.xlu0 %v438, 95
      %v1161 = vpop.permute.xlu0 %1160
      %1162 = vrot.lane.b32.xlu0 %v439, 95
      %v1163 = vpop.permute.xlu0 %1162
      %vm1164 = vcmask 777216
      %v1165 = vsel %vm1164, %v1101, %v1103
      %v1166 = vsel %vm1164, %v1103, %v1105
      %v1167 = vsel %vm1164, %v1105, %v1107
      %v1168 = vsel %vm1164, %v1107, %v1109
      %v1169 = vsel %vm1164, %v1109, %v1111
      %v1170 = vsel %vm1164, %v1111, %v1113
      %v1171 = vsel %vm1164, %v1113, %v1115
      %v1172 = vsel %vm1164, %v1115, %v1117
      %v1173 = vsel %vm1164, %v1117, %v1119
      %v1174 = vsel %vm1164, %v1119, %v1121
      %v1175 = vsel %vm1164, %v1121, %v1123
      %v1176 = vsel %vm1164, %v1123, %v1125
      %v1177 = vsel %vm1164, %v1125, %v1127
      %v1178 = vsel %vm1164, %v1127, %v1129
      %v1179 = vsel %vm1164, %v1129, %v1131
      %v1180 = vsel %vm1164, %v1131, %v1133
      %v1181 = vsel %vm1164, %v1133, %v1135
      %v1182 = vsel %vm1164, %v1135, %v1137
      %v1183 = vsel %vm1164, %v1137, %v1139
      %v1184 = vsel %vm1164, %v1139, %v1141
      %v1185 = vsel %vm1164, %v1141, %v1143
      %v1186 = vsel %vm1164, %v1143, %v1145
      %v1187 = vsel %vm1164, %v1145, %v1147
      %v1188 = vsel %vm1164, %v1147, %v1149
      %v1189 = vsel %vm1164, %v1149, %v1151
      %v1190 = vsel %vm1164, %v1151, %v1153
      %v1191 = vsel %vm1164, %v1153, %v1155
      %v1192 = vsel %vm1164, %v1155, %v1157
      %v1193 = vsel %vm1164, %v1157, %v1159
      %v1194 = vsel %vm1164, %v1159, %v1161
      %v1195 = vsel %vm1164, %v1161, %v1163
      %vm1227 = vcmask 777216
      %v1230 = vsel %vm1227, %v1163, %v1101
      %1232 = vrot.lane.b32.xlu0 %v408, 94
      %v1233 = vpop.permute.xlu0 %1232
      %1234 = vrot.lane.b32.xlu0 %v409, 94
      %v1235 = vpop.permute.xlu0 %1234
      %1236 = vrot.lane.b32.xlu0 %v410, 94
      %v1237 = vpop.permute.xlu0 %1236
      %1238 = vrot.lane.b32.xlu0 %v411, 94
      %v1239 = vpop.permute.xlu0 %1238
      %1240 = vrot.lane.b32.xlu0 %v412, 94
      %v1241 = vpop.permute.xlu0 %1240
      %1242 = vrot.lane.b32.xlu0 %v413, 94
      %v1243 = vpop.permute.xlu0 %1242
      %1244 = vrot.lane.b32.xlu0 %v414, 94
      %v1245 = vpop.permute.xlu0 %1244
      %1246 = vrot.lane.b32.xlu0 %v415, 94
      %v1247 = vpop.permute.xlu0 %1246
      %1248 = vrot.lane.b32.xlu0 %v416, 94
      %v1249 = vpop.permute.xlu0 %1248
      %1250 = vrot.lane.b32.xlu0 %v417, 94
      %v1251 = vpop.permute.xlu0 %1250
      %1252 = vrot.lane.b32.xlu0 %v418, 94
      %v1253 = vpop.permute.xlu0 %1252
      %1254 = vrot.lane.b32.xlu0 %v419, 94
      %v1255 = vpop.permute.xlu0 %1254
      %1256 = vrot.lane.b32.xlu0 %v420, 94
      %v1257 = vpop.permute.xlu0 %1256
      %1258 = vrot.lane.b32.xlu0 %v421, 94
      %v1259 = vpop.permute.xlu0 %1258
      %1260 = vrot.lane.b32.xlu0 %v422, 94
      %v1261 = vpop.permute.xlu0 %1260
      %1262 = vrot.lane.b32.xlu0 %v423, 94
      %v1263 = vpop.permute.xlu0 %1262
      %1264 = vrot.lane.b32.xlu0 %v424, 94
      %v1265 = vpop.permute.xlu0 %1264
      %1266 = vrot.lane.b32.xlu0 %v425, 94
      %v1267 = vpop.permute.xlu0 %1266
      %1268 = vrot.lane.b32.xlu0 %v426, 94
      %v1269 = vpop.permute.xlu0 %1268
      %1270 = vrot.lane.b32.xlu0 %v427, 94
      %v1271 = vpop.permute.xlu0 %1270
      %1272 = vrot.lane.b32.xlu0 %v428, 94
      %v1273 = vpop.permute.xlu0 %1272
      %1274 = vrot.lane.b32.xlu0 %v429, 94
      %v1275 = vpop.permute.xlu0 %1274
      %1276 = vrot.lane.b32.xlu0 %v430, 94
      %v1277 = vpop.permute.xlu0 %1276
      %1278 = vrot.lane.b32.xlu0 %v431, 94
      %v1279 = vpop.permute.xlu0 %1278
      %1280 = vrot.lane.b32.xlu0 %v432, 94
      %v1281 = vpop.permute.xlu0 %1280
      %1282 = vrot.lane.b32.xlu0 %v433, 94
      %v1283 = vpop.permute.xlu0 %1282
      %1284 = vrot.lane.b32.xlu0 %v434, 94
      %v1285 = vpop.permute.xlu0 %1284
      %1286 = vrot.lane.b32.xlu0 %v435, 94
      %v1287 = vpop.permute.xlu0 %1286
      %1288 = vrot.lane.b32.xlu0 %v436, 94
      %v1289 = vpop.permute.xlu0 %1288
      %1290 = vrot.lane.b32.xlu0 %v437, 94
      %v1291 = vpop.permute.xlu0 %1290
      %1292 = vrot.lane.b32.xlu0 %v438, 94
      %v1293 = vpop.permute.xlu0 %1292
      %1294 = vrot.lane.b32.xlu0 %v439, 94
      %v1295 = vpop.permute.xlu0 %1294
      %vm1296 = vcmask 769024
      %v1297 = vsel %vm1296, %v1233, %v1235
      %v1298 = vsel %vm1296, %v1235, %v1237
      %v1299 = vsel %vm1296, %v1237, %v1239
      %v1300 = vsel %vm1296, %v1239, %v1241
      %v1301 = vsel %vm1296, %v1241, %v1243
      %v1302 = vsel %vm1296, %v1243, %v1245
      %v1303 = vsel %vm1296, %v1245, %v1247
      %v1304 = vsel %vm1296, %v1247, %v1249
      %v1305 = vsel %vm1296, %v1249, %v1251
      %v1306 = vsel %vm1296, %v1251, %v1253
      %v1307 = vsel %vm1296, %v1253, %v1255
      %v1308 = vsel %vm1296, %v1255, %v1257
      %v1309 = vsel %vm1296, %v1257, %v1259
      %v1310 = vsel %vm1296, %v1259, %v1261
      %v1311 = vsel %vm1296, %v1261, %v1263
      %v1312 = vsel %vm1296, %v1263, %v1265
      %v1313 = vsel %vm1296, %v1265, %v1267
      %v1314 = vsel %vm1296, %v1267, %v1269
      %v1315 = vsel %vm1296, %v1269, %v1271
      %v1316 = vsel %vm1296, %v1271, %v1273
      %v1317 = vsel %vm1296, %v1273, %v1275
      %v1318 = vsel %vm1296, %v1275, %v1277
      %v1319 = vsel %vm1296, %v1277, %v1279
      %v1320 = vsel %vm1296, %v1279, %v1281
      %v1321 = vsel %vm1296, %v1281, %v1283
      %v1322 = vsel %vm1296, %v1283, %v1285
      %v1323 = vsel %vm1296, %v1285, %v1287
      %v1324 = vsel %vm1296, %v1287, %v1289
      %v1325 = vsel %vm1296, %v1289, %v1291
      %v1326 = vsel %vm1296, %v1291, %v1293
      %v1327 = vsel %vm1296, %v1293, %v1295
      %vm1359 = vcmask 769024
      %v1362 = vsel %vm1359, %v1295, %v1233
      %1364 = vrot.lane.b32.xlu0 %v408, 93
      %v1365 = vpop.permute.xlu0 %1364
      %1366 = vrot.lane.b32.xlu0 %v409, 93
      %v1367 = vpop.permute.xlu0 %1366
      %1368 = vrot.lane.b32.xlu0 %v410, 93
      %v1369 = vpop.permute.xlu0 %1368
      %1370 = vrot.lane.b32.xlu0 %v411, 93
      %v1371 = vpop.permute.xlu0 %1370
      %1372 = vrot.lane.b32.xlu0 %v412, 93
      %v1373 = vpop.permute.xlu0 %1372
      %1374 = vrot.lane.b32.xlu0 %v413, 93
      %v1375 = vpop.permute.xlu0 %1374
      %1376 = vrot.lane.b32.xlu0 %v414, 93
      %v1377 = vpop.permute.xlu0 %1376
      %1378 = vrot.lane.b32.xlu0 %v415, 93
      %v1379 = vpop.permute.xlu0 %1378
      %1380 = vrot.lane.b32.xlu0 %v416, 93
      %v1381 = vpop.permute.xlu0 %1380
      %1382 = vrot.lane.b32.xlu0 %v417, 93
      %v1383 = vpop.permute.xlu0 %1382
      %1384 = vrot.lane.b32.xlu0 %v418, 93
      %v1385 = vpop.permute.xlu0 %1384
      %1386 = vrot.lane.b32.xlu0 %v419, 93
      %v1387 = vpop.permute.xlu0 %1386
      %1388 = vrot.lane.b32.xlu0 %v420, 93
      %v1389 = vpop.permute.xlu0 %1388
      %1390 = vrot.lane.b32.xlu0 %v421, 93
      %v1391 = vpop.permute.xlu0 %1390
      %1392 = vrot.lane.b32.xlu0 %v422, 93
      %v1393 = vpop.permute.xlu0 %1392
      %1394 = vrot.lane.b32.xlu0 %v423, 93
      %v1395 = vpop.permute.xlu0 %1394
      %1396 = vrot.lane.b32.xlu0 %v424, 93
      %v1397 = vpop.permute.xlu0 %1396
      %1398 = vrot.lane.b32.xlu0 %v425, 93
      %v1399 = vpop.permute.xlu0 %1398
      %1400 = vrot.lane.b32.xlu0 %v426, 93
      %v1401 = vpop.permute.xlu0 %1400
      %1402 = vrot.lane.b32.xlu0 %v427, 93
      %v1403 = vpop.permute.xlu0 %1402
      %1404 = vrot.lane.b32.xlu0 %v428, 93
      %v1405 = vpop.permute.xlu0 %1404
      %1406 = vrot.lane.b32.xlu0 %v429, 93
      %v1407 = vpop.permute.xlu0 %1406
      %1408 = vrot.lane.b32.xlu0 %v430, 93
      %v1409 = vpop.permute.xlu0 %1408
      %1410 = vrot.lane.b32.xlu0 %v431, 93
      %v1411 = vpop.permute.xlu0 %1410
      %1412 = vrot.lane.b32.xlu0 %v432, 93
      %v1413 = vpop.permute.xlu0 %1412
      %1414 = vrot.lane.b32.xlu0 %v433, 93
      %v1415 = vpop.permute.xlu0 %1414
      %1416 = vrot.lane.b32.xlu0 %v434, 93
      %v1417 = vpop.permute.xlu0 %1416
      %1418 = vrot.lane.b32.xlu0 %v435, 93
      %v1419 = vpop.permute.xlu0 %1418
      %1420 = vrot.lane.b32.xlu0 %v436, 93
      %v1421 = vpop.permute.xlu0 %1420
      %1422 = vrot.lane.b32.xlu0 %v437, 93
      %v1423 = vpop.permute.xlu0 %1422
      %1424 = vrot.lane.b32.xlu0 %v438, 93
      %v1425 = vpop.permute.xlu0 %1424
      %1426 = vrot.lane.b32.xlu0 %v439, 93
      %v1427 = vpop.permute.xlu0 %1426
      %vm1428 = vcmask 760832
      %v1429 = vsel %vm1428, %v1365, %v1367
      %v1430 = vsel %vm1428, %v1367, %v1369
      %v1431 = vsel %vm1428, %v1369, %v1371
      %v1432 = vsel %vm1428, %v1371, %v1373
      %v1433 = vsel %vm1428, %v1373, %v1375
      %v1434 = vsel %vm1428, %v1375, %v1377
      %v1435 = vsel %vm1428, %v1377, %v1379
      %v1436 = vsel %vm1428, %v1379, %v1381
      %v1437 = vsel %vm1428, %v1381, %v1383
      %v1438 = vsel %vm1428, %v1383, %v1385
      %v1439 = vsel %vm1428, %v1385, %v1387
      %v1440 = vsel %vm1428, %v1387, %v1389
      %v1441 = vsel %vm1428, %v1389, %v1391
      %v1442 = vsel %vm1428, %v1391, %v1393
      %v1443 = vsel %vm1428, %v1393, %v1395
      %v1444 = vsel %vm1428, %v1395, %v1397
      %v1445 = vsel %vm1428, %v1397, %v1399
      %v1446 = vsel %vm1428, %v1399, %v1401
      %v1447 = vsel %vm1428, %v1401, %v1403
      %v1448 = vsel %vm1428, %v1403, %v1405
      %v1449 = vsel %vm1428, %v1405, %v1407
      %v1450 = vsel %vm1428, %v1407, %v1409
      %v1451 = vsel %vm1428, %v1409, %v1411
      %v1452 = vsel %vm1428, %v1411, %v1413
      %v1453 = vsel %vm1428, %v1413, %v1415
      %v1454 = vsel %vm1428, %v1415, %v1417
      %v1455 = vsel %vm1428, %v1417, %v1419
      %v1456 = vsel %vm1428, %v1419, %v1421
      %v1457 = vsel %vm1428, %v1421, %v1423
      %v1458 = vsel %vm1428, %v1423, %v1425
      %v1459 = vsel %vm1428, %v1425, %v1427
      %vm1491 = vcmask 760832
      %v1494 = vsel %vm1491, %v1427, %v1365
      %1496 = vrot.lane.b32.xlu0 %v408, 92
      %v1497 = vpop.permute.xlu0 %1496
      %1498 = vrot.lane.b32.xlu0 %v409, 92
      %v1499 = vpop.permute.xlu0 %1498
      %1500 = vrot.lane.b32.xlu0 %v410, 92
      %v1501 = vpop.permute.xlu0 %1500
      %1502 = vrot.lane.b32.xlu0 %v411, 92
      %v1503 = vpop.permute.xlu0 %1502
      %1504 = vrot.lane.b32.xlu0 %v412, 92
      %v1505 = vpop.permute.xlu0 %1504
      %1506 = vrot.lane.b32.xlu0 %v413, 92
      %v1507 = vpop.permute.xlu0 %1506
      %1508 = vrot.lane.b32.xlu0 %v414, 92
      %v1509 = vpop.permute.xlu0 %1508
      %1510 = vrot.lane.b32.xlu0 %v415, 92
      %v1511 = vpop.permute.xlu0 %1510
      %1512 = vrot.lane.b32.xlu0 %v416, 92
      %v1513 = vpop.permute.xlu0 %1512
      %1514 = vrot.lane.b32.xlu0 %v417, 92
      %v1515 = vpop.permute.xlu0 %1514
      %1516 = vrot.lane.b32.xlu0 %v418, 92
      %v1517 = vpop.permute.xlu0 %1516
      %1518 = vrot.lane.b32.xlu0 %v419, 92
      %v1519 = vpop.permute.xlu0 %1518
      %1520 = vrot.lane.b32.xlu0 %v420, 92
      %v1521 = vpop.permute.xlu0 %1520
      %1522 = vrot.lane.b32.xlu0 %v421, 92
      %v1523 = vpop.permute.xlu0 %1522
      %1524 = vrot.lane.b32.xlu0 %v422, 92
      %v1525 = vpop.permute.xlu0 %1524
      %1526 = vrot.lane.b32.xlu0 %v423, 92
      %v1527 = vpop.permute.xlu0 %1526
      %1528 = vrot.lane.b32.xlu0 %v424, 92
      %v1529 = vpop.permute.xlu0 %1528
      %1530 = vrot.lane.b32.xlu0 %v425, 92
      %v1531 = vpop.permute.xlu0 %1530
      %1532 = vrot.lane.b32.xlu0 %v426, 92
      %v1533 = vpop.permute.xlu0 %1532
      %1534 = vrot.lane.b32.xlu0 %v427, 92
      %v1535 = vpop.permute.xlu0 %1534
      %1536 = vrot.lane.b32.xlu0 %v428, 92
      %v1537 = vpop.permute.xlu0 %1536
      %1538 = vrot.lane.b32.xlu0 %v429, 92
      %v1539 = vpop.permute.xlu0 %1538
      %1540 = vrot.lane.b32.xlu0 %v430, 92
      %v1541 = vpop.permute.xlu0 %1540
      %1542 = vrot.lane.b32.xlu0 %v431, 92
      %v1543 = vpop.permute.xlu0 %1542
      %1544 = vrot.lane.b32.xlu0 %v432, 92
      %v1545 = vpop.permute.xlu0 %1544
      %1546 = vrot.lane.b32.xlu0 %v433, 92
      %v1547 = vpop.permute.xlu0 %1546
      %1548 = vrot.lane.b32.xlu0 %v434, 92
      %v1549 = vpop.permute.xlu0 %1548
      %1550 = vrot.lane.b32.xlu0 %v435, 92
      %v1551 = vpop.permute.xlu0 %1550
      %1552 = vrot.lane.b32.xlu0 %v436, 92
      %v1553 = vpop.permute.xlu0 %1552
      %1554 = vrot.lane.b32.xlu0 %v437, 92
      %v1555 = vpop.permute.xlu0 %1554
      %1556 = vrot.lane.b32.xlu0 %v438, 92
      %v1557 = vpop.permute.xlu0 %1556
      %1558 = vrot.lane.b32.xlu0 %v439, 92
      %v1559 = vpop.permute.xlu0 %1558
      %vm1560 = vcmask 752640
      %v1561 = vsel %vm1560, %v1497, %v1499
      %v1562 = vsel %vm1560, %v1499, %v1501
      %v1563 = vsel %vm1560, %v1501, %v1503
      %v1564 = vsel %vm1560, %v1503, %v1505
      %v1565 = vsel %vm1560, %v1505, %v1507
      %v1566 = vsel %vm1560, %v1507, %v1509
      %v1567 = vsel %vm1560, %v1509, %v1511
      %v1568 = vsel %vm1560, %v1511, %v1513
      %v1569 = vsel %vm1560, %v1513, %v1515
      %v1570 = vsel %vm1560, %v1515, %v1517
      %v1571 = vsel %vm1560, %v1517, %v1519
      %v1572 = vsel %vm1560, %v1519, %v1521
      %v1573 = vsel %vm1560, %v1521, %v1523
      %v1574 = vsel %vm1560, %v1523, %v1525
      %v1575 = vsel %vm1560, %v1525, %v1527
      %v1576 = vsel %vm1560, %v1527, %v1529
      %v1577 = vsel %vm1560, %v1529, %v1531
      %v1578 = vsel %vm1560, %v1531, %v1533
      %v1579 = vsel %vm1560, %v1533, %v1535
      %v1580 = vsel %vm1560, %v1535, %v1537
      %v1581 = vsel %vm1560, %v1537, %v1539
      %v1582 = vsel %vm1560, %v1539, %v1541
      %v1583 = vsel %vm1560, %v1541, %v1543
      %v1584 = vsel %vm1560, %v1543, %v1545
      %v1585 = vsel %vm1560, %v1545, %v1547
      %v1586 = vsel %vm1560, %v1547, %v1549
      %v1587 = vsel %vm1560, %v1549, %v1551
      %v1588 = vsel %vm1560, %v1551, %v1553
      %v1589 = vsel %vm1560, %v1553, %v1555
      %v1590 = vsel %vm1560, %v1555, %v1557
      %v1591 = vsel %vm1560, %v1557, %v1559
      %vm1623 = vcmask 752640
      %v1626 = vsel %vm1623, %v1559, %v1497
      %1628 = vrot.lane.b32.xlu0 %v408, 64
      %v1629 = vpop.permute.xlu0 %1628
      %1630 = vrot.lane.b32.xlu0 %v409, 64
      %v1631 = vpop.permute.xlu0 %1630
      %1632 = vrot.lane.b32.xlu0 %v410, 64
      %v1633 = vpop.permute.xlu0 %1632
      %1634 = vrot.lane.b32.xlu0 %v411, 64
      %v1635 = vpop.permute.xlu0 %1634
      %1636 = vrot.lane.b32.xlu0 %v412, 64
      %v1637 = vpop.permute.xlu0 %1636
      %1638 = vrot.lane.b32.xlu0 %v413, 64
      %v1639 = vpop.permute.xlu0 %1638
      %1640 = vrot.lane.b32.xlu0 %v414, 64
      %v1641 = vpop.permute.xlu0 %1640
      %1642 = vrot.lane.b32.xlu0 %v415, 64
      %v1643 = vpop.permute.xlu0 %1642
      %1644 = vrot.lane.b32.xlu0 %v416, 64
      %v1645 = vpop.permute.xlu0 %1644
      %1646 = vrot.lane.b32.xlu0 %v417, 64
      %v1647 = vpop.permute.xlu0 %1646
      %1648 = vrot.lane.b32.xlu0 %v418, 64
      %v1649 = vpop.permute.xlu0 %1648
      %1650 = vrot.lane.b32.xlu0 %v419, 64
      %v1651 = vpop.permute.xlu0 %1650
      %1652 = vrot.lane.b32.xlu0 %v420, 64
      %v1653 = vpop.permute.xlu0 %1652
      %1654 = vrot.lane.b32.xlu0 %v421, 64
      %v1655 = vpop.permute.xlu0 %1654
      %1656 = vrot.lane.b32.xlu0 %v422, 64
      %v1657 = vpop.permute.xlu0 %1656
      %1658 = vrot.lane.b32.xlu0 %v423, 64
      %v1659 = vpop.permute.xlu0 %1658
      %1660 = vrot.lane.b32.xlu0 %v424, 64
      %v1661 = vpop.permute.xlu0 %1660
      %1662 = vrot.lane.b32.xlu0 %v425, 64
      %v1663 = vpop.permute.xlu0 %1662
      %1664 = vrot.lane.b32.xlu0 %v426, 64
      %v1665 = vpop.permute.xlu0 %1664
      %1666 = vrot.lane.b32.xlu0 %v427, 64
      %v1667 = vpop.permute.xlu0 %1666
      %1668 = vrot.lane.b32.xlu0 %v428, 64
      %v1669 = vpop.permute.xlu0 %1668
      %1670 = vrot.lane.b32.xlu0 %v429, 64
      %v1671 = vpop.permute.xlu0 %1670
      %1672 = vrot.lane.b32.xlu0 %v430, 64
      %v1673 = vpop.permute.xlu0 %1672
      %1674 = vrot.lane.b32.xlu0 %v431, 64
      %v1675 = vpop.permute.xlu0 %1674
      %1676 = vrot.lane.b32.xlu0 %v432, 64
      %v1677 = vpop.permute.xlu0 %1676
      %1678 = vrot.lane.b32.xlu0 %v433, 64
      %v1679 = vpop.permute.xlu0 %1678
      %1680 = vrot.lane.b32.xlu0 %v434, 64
      %v1681 = vpop.permute.xlu0 %1680
      %1682 = vrot.lane.b32.xlu0 %v435, 64
      %v1683 = vpop.permute.xlu0 %1682
      %1684 = vrot.lane.b32.xlu0 %v436, 64
      %v1685 = vpop.permute.xlu0 %1684
      %1686 = vrot.lane.b32.xlu0 %v437, 64
      %v1687 = vpop.permute.xlu0 %1686
      %1688 = vrot.lane.b32.xlu0 %v438, 64
      %v1689 = vpop.permute.xlu0 %1688
      %1690 = vrot.lane.b32.xlu0 %v439, 64
      %v1691 = vpop.permute.xlu0 %1690
      %vm1692 = vcmask 523264
      %v1693 = vsel %vm1692, %v1629, %v1631
      %v1694 = vsel %vm1692, %v1631, %v1633
      %v1695 = vsel %vm1692, %v1633, %v1635
      %v1696 = vsel %vm1692, %v1635, %v1637
      %v1697 = vsel %vm1692, %v1637, %v1639
      %v1698 = vsel %vm1692, %v1639, %v1641
      %v1699 = vsel %vm1692, %v1641, %v1643
      %v1700 = vsel %vm1692, %v1643, %v1645
      %v1701 = vsel %vm1692, %v1645, %v1647
      %v1702 = vsel %vm1692, %v1647, %v1649
      %v1703 = vsel %vm1692, %v1649, %v1651
      %v1704 = vsel %vm1692, %v1651, %v1653
      %v1705 = vsel %vm1692, %v1653, %v1655
      %v1706 = vsel %vm1692, %v1655, %v1657
      %v1707 = vsel %vm1692, %v1657, %v1659
      %v1708 = vsel %vm1692, %v1659, %v1661
      %v1709 = vsel %vm1692, %v1661, %v1663
      %v1710 = vsel %vm1692, %v1663, %v1665
      %v1711 = vsel %vm1692, %v1665, %v1667
      %v1712 = vsel %vm1692, %v1667, %v1669
      %v1713 = vsel %vm1692, %v1669, %v1671
      %v1714 = vsel %vm1692, %v1671, %v1673
      %v1715 = vsel %vm1692, %v1673, %v1675
      %v1716 = vsel %vm1692, %v1675, %v1677
      %v1717 = vsel %vm1692, %v1677, %v1679
      %v1718 = vsel %vm1692, %v1679, %v1681
      %v1719 = vsel %vm1692, %v1681, %v1683
      %v1720 = vsel %vm1692, %v1683, %v1685
      %v1721 = vsel %vm1692, %v1685, %v1687
      %v1722 = vsel %vm1692, %v1687, %v1689
      %v1723 = vsel %vm1692, %v1689, %v1691
      %vm1755 = vcmask 523264
      %v1758 = vsel %vm1755, %v1691, %v1629
      %1760 = vrot.lane.b32.xlu0 %v408, 63
      %v1761 = vpop.permute.xlu0 %1760
      %1762 = vrot.lane.b32.xlu0 %v409, 63
      %v1763 = vpop.permute.xlu0 %1762
      %1764 = vrot.lane.b32.xlu0 %v410, 63
      %v1765 = vpop.permute.xlu0 %1764
      %1766 = vrot.lane.b32.xlu0 %v411, 63
      %v1767 = vpop.permute.xlu0 %1766
      %1768 = vrot.lane.b32.xlu0 %v412, 63
      %v1769 = vpop.permute.xlu0 %1768
      %1770 = vrot.lane.b32.xlu0 %v413, 63
      %v1771 = vpop.permute.xlu0 %1770
      %1772 = vrot.lane.b32.xlu0 %v414, 63
      %v1773 = vpop.permute.xlu0 %1772
      %1774 = vrot.lane.b32.xlu0 %v415, 63
      %v1775 = vpop.permute.xlu0 %1774
      %1776 = vrot.lane.b32.xlu0 %v416, 63
      %v1777 = vpop.permute.xlu0 %1776
      %1778 = vrot.lane.b32.xlu0 %v417, 63
      %v1779 = vpop.permute.xlu0 %1778
      %1780 = vrot.lane.b32.xlu0 %v418, 63
      %v1781 = vpop.permute.xlu0 %1780
      %1782 = vrot.lane.b32.xlu0 %v419, 63
      %v1783 = vpop.permute.xlu0 %1782
      %1784 = vrot.lane.b32.xlu0 %v420, 63
      %v1785 = vpop.permute.xlu0 %1784
      %1786 = vrot.lane.b32.xlu0 %v421, 63
      %v1787 = vpop.permute.xlu0 %1786
      %1788 = vrot.lane.b32.xlu0 %v422, 63
      %v1789 = vpop.permute.xlu0 %1788
      %1790 = vrot.lane.b32.xlu0 %v423, 63
      %v1791 = vpop.permute.xlu0 %1790
      %1792 = vrot.lane.b32.xlu0 %v424, 63
      %v1793 = vpop.permute.xlu0 %1792
      %1794 = vrot.lane.b32.xlu0 %v425, 63
      %v1795 = vpop.permute.xlu0 %1794
      %1796 = vrot.lane.b32.xlu0 %v426, 63
      %v1797 = vpop.permute.xlu0 %1796
      %1798 = vrot.lane.b32.xlu0 %v427, 63
      %v1799 = vpop.permute.xlu0 %1798
      %1800 = vrot.lane.b32.xlu0 %v428, 63
      %v1801 = vpop.permute.xlu0 %1800
      %1802 = vrot.lane.b32.xlu0 %v429, 63
      %v1803 = vpop.permute.xlu0 %1802
      %1804 = vrot.lane.b32.xlu0 %v430, 63
      %v1805 = vpop.permute.xlu0 %1804
      %1806 = vrot.lane.b32.xlu0 %v431, 63
      %v1807 = vpop.permute.xlu0 %1806
      %1808 = vrot.lane.b32.xlu0 %v432, 63
      %v1809 = vpop.permute.xlu0 %1808
      %1810 = vrot.lane.b32.xlu0 %v433, 63
      %v1811 = vpop.permute.xlu0 %1810
      %1812 = vrot.lane.b32.xlu0 %v434, 63
      %v1813 = vpop.permute.xlu0 %1812
      %1814 = vrot.lane.b32.xlu0 %v435, 63
      %v1815 = vpop.permute.xlu0 %1814
      %1816 = vrot.lane.b32.xlu0 %v436, 63
      %v1817 = vpop.permute.xlu0 %1816
      %1818 = vrot.lane.b32.xlu0 %v437, 63
      %v1819 = vpop.permute.xlu0 %1818
      %1820 = vrot.lane.b32.xlu0 %v438, 63
      %v1821 = vpop.permute.xlu0 %1820
      %1822 = vrot.lane.b32.xlu0 %v439, 63
      %v1823 = vpop.permute.xlu0 %1822
      %vm1824 = vcmask 515072
      %v1825 = vsel %vm1824, %v1761, %v1763
      %v1826 = vsel %vm1824, %v1763, %v1765
      %v1827 = vsel %vm1824, %v1765, %v1767
      %v1828 = vsel %vm1824, %v1767, %v1769
      %v1829 = vsel %vm1824, %v1769, %v1771
      %v1830 = vsel %vm1824, %v1771, %v1773
      %v1831 = vsel %vm1824, %v1773, %v1775
      %v1832 = vsel %vm1824, %v1775, %v1777
      %v1833 = vsel %vm1824, %v1777, %v1779
      %v1834 = vsel %vm1824, %v1779, %v1781
      %v1835 = vsel %vm1824, %v1781, %v1783
      %v1836 = vsel %vm1824, %v1783, %v1785
      %v1837 = vsel %vm1824, %v1785, %v1787
      %v1838 = vsel %vm1824, %v1787, %v1789
      %v1839 = vsel %vm1824, %v1789, %v1791
      %v1840 = vsel %vm1824, %v1791, %v1793
      %v1841 = vsel %vm1824, %v1793, %v1795
      %v1842 = vsel %vm1824, %v1795, %v1797
      %v1843 = vsel %vm1824, %v1797, %v1799
      %v1844 = vsel %vm1824, %v1799, %v1801
      %v1845 = vsel %vm1824, %v1801, %v1803
      %v1846 = vsel %vm1824, %v1803, %v1805
      %v1847 = vsel %vm1824, %v1805, %v1807
      %v1848 = vsel %vm1824, %v1807, %v1809
      %v1849 = vsel %vm1824, %v1809, %v1811
      %v1850 = vsel %vm1824, %v1811, %v1813
      %v1851 = vsel %vm1824, %v1813, %v1815
      %v1852 = vsel %vm1824, %v1815, %v1817
      %v1853 = vsel %vm1824, %v1817, %v1819
      %v1854 = vsel %vm1824, %v1819, %v1821
      %v1855 = vsel %vm1824, %v1821, %v1823
      %vm1887 = vcmask 515072
      %v1890 = vsel %vm1887, %v1823, %v1761
      %1892 = vrot.lane.b32.xlu0 %v408, 62
      %v1893 = vpop.permute.xlu0 %1892
      %1894 = vrot.lane.b32.xlu0 %v409, 62
      %v1895 = vpop.permute.xlu0 %1894
      %1896 = vrot.lane.b32.xlu0 %v410, 62
      %v1897 = vpop.permute.xlu0 %1896
      %1898 = vrot.lane.b32.xlu0 %v411, 62
      %v1899 = vpop.permute.xlu0 %1898
      %1900 = vrot.lane.b32.xlu0 %v412, 62
      %v1901 = vpop.permute.xlu0 %1900
      %1902 = vrot.lane.b32.xlu0 %v413, 62
      %v1903 = vpop.permute.xlu0 %1902
      %1904 = vrot.lane.b32.xlu0 %v414, 62
      %v1905 = vpop.permute.xlu0 %1904
      %1906 = vrot.lane.b32.xlu0 %v415, 62
      %v1907 = vpop.permute.xlu0 %1906
      %1908 = vrot.lane.b32.xlu0 %v416, 62
      %v1909 = vpop.permute.xlu0 %1908
      %1910 = vrot.lane.b32.xlu0 %v417, 62
      %v1911 = vpop.permute.xlu0 %1910
      %1912 = vrot.lane.b32.xlu0 %v418, 62
      %v1913 = vpop.permute.xlu0 %1912
      %1914 = vrot.lane.b32.xlu0 %v419, 62
      %v1915 = vpop.permute.xlu0 %1914
      %1916 = vrot.lane.b32.xlu0 %v420, 62
      %v1917 = vpop.permute.xlu0 %1916
      %1918 = vrot.lane.b32.xlu0 %v421, 62
      %v1919 = vpop.permute.xlu0 %1918
      %1920 = vrot.lane.b32.xlu0 %v422, 62
      %v1921 = vpop.permute.xlu0 %1920
      %1922 = vrot.lane.b32.xlu0 %v423, 62
      %v1923 = vpop.permute.xlu0 %1922
      %1924 = vrot.lane.b32.xlu0 %v424, 62
      %v1925 = vpop.permute.xlu0 %1924
      %1926 = vrot.lane.b32.xlu0 %v425, 62
      %v1927 = vpop.permute.xlu0 %1926
      %1928 = vrot.lane.b32.xlu0 %v426, 62
      %v1929 = vpop.permute.xlu0 %1928
      %1930 = vrot.lane.b32.xlu0 %v427, 62
      %v1931 = vpop.permute.xlu0 %1930
      %1932 = vrot.lane.b32.xlu0 %v428, 62
      %v1933 = vpop.permute.xlu0 %1932
      %1934 = vrot.lane.b32.xlu0 %v429, 62
      %v1935 = vpop.permute.xlu0 %1934
      %1936 = vrot.lane.b32.xlu0 %v430, 62
      %v1937 = vpop.permute.xlu0 %1936
      %1938 = vrot.lane.b32.xlu0 %v431, 62
      %v1939 = vpop.permute.xlu0 %1938
      %1940 = vrot.lane.b32.xlu0 %v432, 62
      %v1941 = vpop.permute.xlu0 %1940
      %1942 = vrot.lane.b32.xlu0 %v433, 62
      %v1943 = vpop.permute.xlu0 %1942
      %1944 = vrot.lane.b32.xlu0 %v434, 62
      %v1945 = vpop.permute.xlu0 %1944
      %1946 = vrot.lane.b32.xlu0 %v435, 62
      %v1947 = vpop.permute.xlu0 %1946
      %1948 = vrot.lane.b32.xlu0 %v436, 62
      %v1949 = vpop.permute.xlu0 %1948
      %1950 = vrot.lane.b32.xlu0 %v437, 62
      %v1951 = vpop.permute.xlu0 %1950
      %1952 = vrot.lane.b32.xlu0 %v438, 62
      %v1953 = vpop.permute.xlu0 %1952
      %1954 = vrot.lane.b32.xlu0 %v439, 62
      %v1955 = vpop.permute.xlu0 %1954
      %vm1956 = vcmask 506880
      %v1957 = vsel %vm1956, %v1893, %v1895
      %v1958 = vsel %vm1956, %v1895, %v1897
      %v1959 = vsel %vm1956, %v1897, %v1899
      %v1960 = vsel %vm1956, %v1899, %v1901
      %v1961 = vsel %vm1956, %v1901, %v1903
      %v1962 = vsel %vm1956, %v1903, %v1905
      %v1963 = vsel %vm1956, %v1905, %v1907
      %v1964 = vsel %vm1956, %v1907, %v1909
      %v1965 = vsel %vm1956, %v1909, %v1911
      %v1966 = vsel %vm1956, %v1911, %v1913
      %v1967 = vsel %vm1956, %v1913, %v1915
      %v1968 = vsel %vm1956, %v1915, %v1917
      %v1969 = vsel %vm1956, %v1917, %v1919
      %v1970 = vsel %vm1956, %v1919, %v1921
      %v1971 = vsel %vm1956, %v1921, %v1923
      %v1972 = vsel %vm1956, %v1923, %v1925
      %v1973 = vsel %vm1956, %v1925, %v1927
      %v1974 = vsel %vm1956, %v1927, %v1929
      %v1975 = vsel %vm1956, %v1929, %v1931
      %v1976 = vsel %vm1956, %v1931, %v1933
      %v1977 = vsel %vm1956, %v1933, %v1935
      %v1978 = vsel %vm1956, %v1935, %v1937
      %v1979 = vsel %vm1956, %v1937, %v1939
      %v1980 = vsel %vm1956, %v1939, %v1941
      %v1981 = vsel %vm1956, %v1941, %v1943
      %v1982 = vsel %vm1956, %v1943, %v1945
      %v1983 = vsel %vm1956, %v1945, %v1947
      %v1984 = vsel %vm1956, %v1947, %v1949
      %v1985 = vsel %vm1956, %v1949, %v1951
      %v1986 = vsel %vm1956, %v1951, %v1953
      %v1987 = vsel %vm1956, %v1953, %v1955
      %vm2019 = vcmask 506880
      %v2022 = vsel %vm2019, %v1955, %v1893
      %2024 = vrot.lane.b32.xlu0 %v408, 61
      %v2025 = vpop.permute.xlu0 %2024
      %2026 = vrot.lane.b32.xlu0 %v409, 61
      %v2027 = vpop.permute.xlu0 %2026
      %2028 = vrot.lane.b32.xlu0 %v410, 61
      %v2029 = vpop.permute.xlu0 %2028
      %2030 = vrot.lane.b32.xlu0 %v411, 61
      %v2031 = vpop.permute.xlu0 %2030
      %2032 = vrot.lane.b32.xlu0 %v412, 61
      %v2033 = vpop.permute.xlu0 %2032
      %2034 = vrot.lane.b32.xlu0 %v413, 61
      %v2035 = vpop.permute.xlu0 %2034
      %2036 = vrot.lane.b32.xlu0 %v414, 61
      %v2037 = vpop.permute.xlu0 %2036
      %2038 = vrot.lane.b32.xlu0 %v415, 61
      %v2039 = vpop.permute.xlu0 %2038
      %2040 = vrot.lane.b32.xlu0 %v416, 61
      %v2041 = vpop.permute.xlu0 %2040
      %2042 = vrot.lane.b32.xlu0 %v417, 61
      %v2043 = vpop.permute.xlu0 %2042
      %2044 = vrot.lane.b32.xlu0 %v418, 61
      %v2045 = vpop.permute.xlu0 %2044
      %2046 = vrot.lane.b32.xlu0 %v419, 61
      %v2047 = vpop.permute.xlu0 %2046
      %2048 = vrot.lane.b32.xlu0 %v420, 61
      %v2049 = vpop.permute.xlu0 %2048
      %2050 = vrot.lane.b32.xlu0 %v421, 61
      %v2051 = vpop.permute.xlu0 %2050
      %2052 = vrot.lane.b32.xlu0 %v422, 61
      %v2053 = vpop.permute.xlu0 %2052
      %2054 = vrot.lane.b32.xlu0 %v423, 61
      %v2055 = vpop.permute.xlu0 %2054
      %2056 = vrot.lane.b32.xlu0 %v424, 61
      %v2057 = vpop.permute.xlu0 %2056
      %2058 = vrot.lane.b32.xlu0 %v425, 61
      %v2059 = vpop.permute.xlu0 %2058
      %2060 = vrot.lane.b32.xlu0 %v426, 61
      %v2061 = vpop.permute.xlu0 %2060
      %2062 = vrot.lane.b32.xlu0 %v427, 61
      %v2063 = vpop.permute.xlu0 %2062
      %2064 = vrot.lane.b32.xlu0 %v428, 61
      %v2065 = vpop.permute.xlu0 %2064
      %2066 = vrot.lane.b32.xlu0 %v429, 61
      %v2067 = vpop.permute.xlu0 %2066
      %2068 = vrot.lane.b32.xlu0 %v430, 61
      %v2069 = vpop.permute.xlu0 %2068
      %2070 = vrot.lane.b32.xlu0 %v431, 61
      %v2071 = vpop.permute.xlu0 %2070
      %2072 = vrot.lane.b32.xlu0 %v432, 61
      %v2073 = vpop.permute.xlu0 %2072
      %2074 = vrot.lane.b32.xlu0 %v433, 61
      %v2075 = vpop.permute.xlu0 %2074
      %2076 = vrot.lane.b32.xlu0 %v434, 61
      %v2077 = vpop.permute.xlu0 %2076
      %2078 = vrot.lane.b32.xlu0 %v435, 61
      %v2079 = vpop.permute.xlu0 %2078
      %2080 = vrot.lane.b32.xlu0 %v436, 61
      %v2081 = vpop.permute.xlu0 %2080
      %2082 = vrot.lane.b32.xlu0 %v437, 61
      %v2083 = vpop.permute.xlu0 %2082
      %2084 = vrot.lane.b32.xlu0 %v438, 61
      %v2085 = vpop.permute.xlu0 %2084
      %2086 = vrot.lane.b32.xlu0 %v439, 61
      %v2087 = vpop.permute.xlu0 %2086
      %vm2088 = vcmask 498688
      %v2089 = vsel %vm2088, %v2025, %v2027
      %v2090 = vsel %vm2088, %v2027, %v2029
      %v2091 = vsel %vm2088, %v2029, %v2031
      %v2092 = vsel %vm2088, %v2031, %v2033
      %v2093 = vsel %vm2088, %v2033, %v2035
      %v2094 = vsel %vm2088, %v2035, %v2037
      %v2095 = vsel %vm2088, %v2037, %v2039
      %v2096 = vsel %vm2088, %v2039, %v2041
      %v2097 = vsel %vm2088, %v2041, %v2043
      %v2098 = vsel %vm2088, %v2043, %v2045
      %v2099 = vsel %vm2088, %v2045, %v2047
      %v2100 = vsel %vm2088, %v2047, %v2049
      %v2101 = vsel %vm2088, %v2049, %v2051
      %v2102 = vsel %vm2088, %v2051, %v2053
      %v2103 = vsel %vm2088, %v2053, %v2055
      %v2104 = vsel %vm2088, %v2055, %v2057
      %v2105 = vsel %vm2088, %v2057, %v2059
      %v2106 = vsel %vm2088, %v2059, %v2061
      %v2107 = vsel %vm2088, %v2061, %v2063
      %v2108 = vsel %vm2088, %v2063, %v2065
      %v2109 = vsel %vm2088, %v2065, %v2067
      %v2110 = vsel %vm2088, %v2067, %v2069
      %v2111 = vsel %vm2088, %v2069, %v2071
      %v2112 = vsel %vm2088, %v2071, %v2073
      %v2113 = vsel %vm2088, %v2073, %v2075
      %v2114 = vsel %vm2088, %v2075, %v2077
      %v2115 = vsel %vm2088, %v2077, %v2079
      %v2116 = vsel %vm2088, %v2079, %v2081
      %v2117 = vsel %vm2088, %v2081, %v2083
      %v2118 = vsel %vm2088, %v2083, %v2085
      %v2119 = vsel %vm2088, %v2085, %v2087
      %vm2151 = vcmask 498688
      %v2154 = vsel %vm2151, %v2087, %v2025
      %2156 = vrot.lane.b32.xlu0 %v408, 60
      %v2157 = vpop.permute.xlu0 %2156
      %2158 = vrot.lane.b32.xlu0 %v409, 60
      %v2159 = vpop.permute.xlu0 %2158
      %2160 = vrot.lane.b32.xlu0 %v410, 60
      %v2161 = vpop.permute.xlu0 %2160
      %2162 = vrot.lane.b32.xlu0 %v411, 60
      %v2163 = vpop.permute.xlu0 %2162
      %2164 = vrot.lane.b32.xlu0 %v412, 60
      %v2165 = vpop.permute.xlu0 %2164
      %2166 = vrot.lane.b32.xlu0 %v413, 60
      %v2167 = vpop.permute.xlu0 %2166
      %2168 = vrot.lane.b32.xlu0 %v414, 60
      %v2169 = vpop.permute.xlu0 %2168
      %2170 = vrot.lane.b32.xlu0 %v415, 60
      %v2171 = vpop.permute.xlu0 %2170
      %2172 = vrot.lane.b32.xlu0 %v416, 60
      %v2173 = vpop.permute.xlu0 %2172
      %2174 = vrot.lane.b32.xlu0 %v417, 60
      %v2175 = vpop.permute.xlu0 %2174
      %2176 = vrot.lane.b32.xlu0 %v418, 60
      %v2177 = vpop.permute.xlu0 %2176
      %2178 = vrot.lane.b32.xlu0 %v419, 60
      %v2179 = vpop.permute.xlu0 %2178
      %2180 = vrot.lane.b32.xlu0 %v420, 60
      %v2181 = vpop.permute.xlu0 %2180
      %2182 = vrot.lane.b32.xlu0 %v421, 60
      %v2183 = vpop.permute.xlu0 %2182
      %2184 = vrot.lane.b32.xlu0 %v422, 60
      %v2185 = vpop.permute.xlu0 %2184
      %2186 = vrot.lane.b32.xlu0 %v423, 60
      %v2187 = vpop.permute.xlu0 %2186
      %2188 = vrot.lane.b32.xlu0 %v424, 60
      %v2189 = vpop.permute.xlu0 %2188
      %2190 = vrot.lane.b32.xlu0 %v425, 60
      %v2191 = vpop.permute.xlu0 %2190
      %2192 = vrot.lane.b32.xlu0 %v426, 60
      %v2193 = vpop.permute.xlu0 %2192
      %2194 = vrot.lane.b32.xlu0 %v427, 60
      %v2195 = vpop.permute.xlu0 %2194
      %2196 = vrot.lane.b32.xlu0 %v428, 60
      %v2197 = vpop.permute.xlu0 %2196
      %2198 = vrot.lane.b32.xlu0 %v429, 60
      %v2199 = vpop.permute.xlu0 %2198
      %2200 = vrot.lane.b32.xlu0 %v430, 60
      %v2201 = vpop.permute.xlu0 %2200
      %2202 = vrot.lane.b32.xlu0 %v431, 60
      %v2203 = vpop.permute.xlu0 %2202
      %2204 = vrot.lane.b32.xlu0 %v432, 60
      %v2205 = vpop.permute.xlu0 %2204
      %2206 = vrot.lane.b32.xlu0 %v433, 60
      %v2207 = vpop.permute.xlu0 %2206
      %2208 = vrot.lane.b32.xlu0 %v434, 60
      %v2209 = vpop.permute.xlu0 %2208
      %2210 = vrot.lane.b32.xlu0 %v435, 60
      %v2211 = vpop.permute.xlu0 %2210
      %2212 = vrot.lane.b32.xlu0 %v436, 60
      %v2213 = vpop.permute.xlu0 %2212
      %2214 = vrot.lane.b32.xlu0 %v437, 60
      %v2215 = vpop.permute.xlu0 %2214
      %2216 = vrot.lane.b32.xlu0 %v438, 60
      %v2217 = vpop.permute.xlu0 %2216
      %2218 = vrot.lane.b32.xlu0 %v439, 60
      %v2219 = vpop.permute.xlu0 %2218
      %vm2220 = vcmask 490496
      %v2221 = vsel %vm2220, %v2157, %v2159
      %v2222 = vsel %vm2220, %v2159, %v2161
      %v2223 = vsel %vm2220, %v2161, %v2163
      %v2224 = vsel %vm2220, %v2163, %v2165
      %v2225 = vsel %vm2220, %v2165, %v2167
      %v2226 = vsel %vm2220, %v2167, %v2169
      %v2227 = vsel %vm2220, %v2169, %v2171
      %v2228 = vsel %vm2220, %v2171, %v2173
      %v2229 = vsel %vm2220, %v2173, %v2175
      %v2230 = vsel %vm2220, %v2175, %v2177
      %v2231 = vsel %vm2220, %v2177, %v2179
      %v2232 = vsel %vm2220, %v2179, %v2181
      %v2233 = vsel %vm2220, %v2181, %v2183
      %v2234 = vsel %vm2220, %v2183, %v2185
      %v2235 = vsel %vm2220, %v2185, %v2187
      %v2236 = vsel %vm2220, %v2187, %v2189
      %v2237 = vsel %vm2220, %v2189, %v2191
      %v2238 = vsel %vm2220, %v2191, %v2193
      %v2239 = vsel %vm2220, %v2193, %v2195
      %v2240 = vsel %vm2220, %v2195, %v2197
      %v2241 = vsel %vm2220, %v2197, %v2199
      %v2242 = vsel %vm2220, %v2199, %v2201
      %v2243 = vsel %vm2220, %v2201, %v2203
      %v2244 = vsel %vm2220, %v2203, %v2205
      %v2245 = vsel %vm2220, %v2205, %v2207
      %v2246 = vsel %vm2220, %v2207, %v2209
      %v2247 = vsel %vm2220, %v2209, %v2211
      %v2248 = vsel %vm2220, %v2211, %v2213
      %v2249 = vsel %vm2220, %v2213, %v2215
      %v2250 = vsel %vm2220, %v2215, %v2217
      %v2251 = vsel %vm2220, %v2217, %v2219
      %vm2283 = vcmask 490496
      %v2286 = vsel %vm2283, %v2219, %v2157
      %2288 = vrot.lane.b32.xlu0 %v408, 32
      %v2289 = vpop.permute.xlu0 %2288
      %2290 = vrot.lane.b32.xlu0 %v409, 32
      %v2291 = vpop.permute.xlu0 %2290
      %2292 = vrot.lane.b32.xlu0 %v410, 32
      %v2293 = vpop.permute.xlu0 %2292
      %2294 = vrot.lane.b32.xlu0 %v411, 32
      %v2295 = vpop.permute.xlu0 %2294
      %2296 = vrot.lane.b32.xlu0 %v412, 32
      %v2297 = vpop.permute.xlu0 %2296
      %2298 = vrot.lane.b32.xlu0 %v413, 32
      %v2299 = vpop.permute.xlu0 %2298
      %2300 = vrot.lane.b32.xlu0 %v414, 32
      %v2301 = vpop.permute.xlu0 %2300
      %2302 = vrot.lane.b32.xlu0 %v415, 32
      %v2303 = vpop.permute.xlu0 %2302
      %2304 = vrot.lane.b32.xlu0 %v416, 32
      %v2305 = vpop.permute.xlu0 %2304
      %2306 = vrot.lane.b32.xlu0 %v417, 32
      %v2307 = vpop.permute.xlu0 %2306
      %2308 = vrot.lane.b32.xlu0 %v418, 32
      %v2309 = vpop.permute.xlu0 %2308
      %2310 = vrot.lane.b32.xlu0 %v419, 32
      %v2311 = vpop.permute.xlu0 %2310
      %2312 = vrot.lane.b32.xlu0 %v420, 32
      %v2313 = vpop.permute.xlu0 %2312
      %2314 = vrot.lane.b32.xlu0 %v421, 32
      %v2315 = vpop.permute.xlu0 %2314
      %2316 = vrot.lane.b32.xlu0 %v422, 32
      %v2317 = vpop.permute.xlu0 %2316
      %2318 = vrot.lane.b32.xlu0 %v423, 32
      %v2319 = vpop.permute.xlu0 %2318
      %2320 = vrot.lane.b32.xlu0 %v424, 32
      %v2321 = vpop.permute.xlu0 %2320
      %2322 = vrot.lane.b32.xlu0 %v425, 32
      %v2323 = vpop.permute.xlu0 %2322
      %2324 = vrot.lane.b32.xlu0 %v426, 32
      %v2325 = vpop.permute.xlu0 %2324
      %2326 = vrot.lane.b32.xlu0 %v427, 32
      %v2327 = vpop.permute.xlu0 %2326
      %2328 = vrot.lane.b32.xlu0 %v428, 32
      %v2329 = vpop.permute.xlu0 %2328
      %2330 = vrot.lane.b32.xlu0 %v429, 32
      %v2331 = vpop.permute.xlu0 %2330
      %2332 = vrot.lane.b32.xlu0 %v430, 32
      %v2333 = vpop.permute.xlu0 %2332
      %2334 = vrot.lane.b32.xlu0 %v431, 32
      %v2335 = vpop.permute.xlu0 %2334
      %2336 = vrot.lane.b32.xlu0 %v432, 32
      %v2337 = vpop.permute.xlu0 %2336
      %2338 = vrot.lane.b32.xlu0 %v433, 32
      %v2339 = vpop.permute.xlu0 %2338
      %2340 = vrot.lane.b32.xlu0 %v434, 32
      %v2341 = vpop.permute.xlu0 %2340
      %2342 = vrot.lane.b32.xlu0 %v435, 32
      %v2343 = vpop.permute.xlu0 %2342
      %2344 = vrot.lane.b32.xlu0 %v436, 32
      %v2345 = vpop.permute.xlu0 %2344
      %2346 = vrot.lane.b32.xlu0 %v437, 32
      %v2347 = vpop.permute.xlu0 %2346
      %2348 = vrot.lane.b32.xlu0 %v438, 32
      %v2349 = vpop.permute.xlu0 %2348
      %2350 = vrot.lane.b32.xlu0 %v439, 32
      %v2351 = vpop.permute.xlu0 %2350
      %vm2352 = vcmask 261120
      %v2353 = vsel %vm2352, %v2289, %v2291
      %v2354 = vsel %vm2352, %v2291, %v2293
      %v2355 = vsel %vm2352, %v2293, %v2295
      %v2356 = vsel %vm2352, %v2295, %v2297
      %v2357 = vsel %vm2352, %v2297, %v2299
      %v2358 = vsel %vm2352, %v2299, %v2301
      %v2359 = vsel %vm2352, %v2301, %v2303
      %v2360 = vsel %vm2352, %v2303, %v2305
      %v2361 = vsel %vm2352, %v2305, %v2307
      %v2362 = vsel %vm2352, %v2307, %v2309
      %v2363 = vsel %vm2352, %v2309, %v2311
      %v2364 = vsel %vm2352, %v2311, %v2313
      %v2365 = vsel %vm2352, %v2313, %v2315
      %v2366 = vsel %vm2352, %v2315, %v2317
      %v2367 = vsel %vm2352, %v2317, %v2319
      %v2368 = vsel %vm2352, %v2319, %v2321
      %v2369 = vsel %vm2352, %v2321, %v2323
      %v2370 = vsel %vm2352, %v2323, %v2325
      %v2371 = vsel %vm2352, %v2325, %v2327
      %v2372 = vsel %vm2352, %v2327, %v2329
      %v2373 = vsel %vm2352, %v2329, %v2331
      %v2374 = vsel %vm2352, %v2331, %v2333
      %v2375 = vsel %vm2352, %v2333, %v2335
      %v2376 = vsel %vm2352, %v2335, %v2337
      %v2377 = vsel %vm2352, %v2337, %v2339
      %v2378 = vsel %vm2352, %v2339, %v2341
      %v2379 = vsel %vm2352, %v2341, %v2343
      %v2380 = vsel %vm2352, %v2343, %v2345
      %v2381 = vsel %vm2352, %v2345, %v2347
      %v2382 = vsel %vm2352, %v2347, %v2349
      %v2383 = vsel %vm2352, %v2349, %v2351
      %vm2415 = vcmask 261120
      %v2418 = vsel %vm2415, %v2351, %v2289
      %2420 = vrot.lane.b32.xlu0 %v408, 31
      %v2421 = vpop.permute.xlu0 %2420
      %2422 = vrot.lane.b32.xlu0 %v409, 31
      %v2423 = vpop.permute.xlu0 %2422
      %2424 = vrot.lane.b32.xlu0 %v410, 31
      %v2425 = vpop.permute.xlu0 %2424
      %2426 = vrot.lane.b32.xlu0 %v411, 31
      %v2427 = vpop.permute.xlu0 %2426
      %2428 = vrot.lane.b32.xlu0 %v412, 31
      %v2429 = vpop.permute.xlu0 %2428
      %2430 = vrot.lane.b32.xlu0 %v413, 31
      %v2431 = vpop.permute.xlu0 %2430
      %2432 = vrot.lane.b32.xlu0 %v414, 31
      %v2433 = vpop.permute.xlu0 %2432
      %2434 = vrot.lane.b32.xlu0 %v415, 31
      %v2435 = vpop.permute.xlu0 %2434
      %2436 = vrot.lane.b32.xlu0 %v416, 31
      %v2437 = vpop.permute.xlu0 %2436
      %2438 = vrot.lane.b32.xlu0 %v417, 31
      %v2439 = vpop.permute.xlu0 %2438
      %2440 = vrot.lane.b32.xlu0 %v418, 31
      %v2441 = vpop.permute.xlu0 %2440
      %2442 = vrot.lane.b32.xlu0 %v419, 31
      %v2443 = vpop.permute.xlu0 %2442
      %2444 = vrot.lane.b32.xlu0 %v420, 31
      %v2445 = vpop.permute.xlu0 %2444
      %2446 = vrot.lane.b32.xlu0 %v421, 31
      %v2447 = vpop.permute.xlu0 %2446
      %2448 = vrot.lane.b32.xlu0 %v422, 31
      %v2449 = vpop.permute.xlu0 %2448
      %2450 = vrot.lane.b32.xlu0 %v423, 31
      %v2451 = vpop.permute.xlu0 %2450
      %2452 = vrot.lane.b32.xlu0 %v424, 31
      %v2453 = vpop.permute.xlu0 %2452
      %2454 = vrot.lane.b32.xlu0 %v425, 31
      %v2455 = vpop.permute.xlu0 %2454
      %2456 = vrot.lane.b32.xlu0 %v426, 31
      %v2457 = vpop.permute.xlu0 %2456
      %2458 = vrot.lane.b32.xlu0 %v427, 31
      %v2459 = vpop.permute.xlu0 %2458
      %2460 = vrot.lane.b32.xlu0 %v428, 31
      %v2461 = vpop.permute.xlu0 %2460
      %2462 = vrot.lane.b32.xlu0 %v429, 31
      %v2463 = vpop.permute.xlu0 %2462
      %2464 = vrot.lane.b32.xlu0 %v430, 31
      %v2465 = vpop.permute.xlu0 %2464
      %2466 = vrot.lane.b32.xlu0 %v431, 31
      %v2467 = vpop.permute.xlu0 %2466
      %2468 = vrot.lane.b32.xlu0 %v432, 31
      %v2469 = vpop.permute.xlu0 %2468
      %2470 = vrot.lane.b32.xlu0 %v433, 31
      %v2471 = vpop.permute.xlu0 %2470
      %2472 = vrot.lane.b32.xlu0 %v434, 31
      %v2473 = vpop.permute.xlu0 %2472
      %2474 = vrot.lane.b32.xlu0 %v435, 31
      %v2475 = vpop.permute.xlu0 %2474
      %2476 = vrot.lane.b32.xlu0 %v436, 31
      %v2477 = vpop.permute.xlu0 %2476
      %2478 = vrot.lane.b32.xlu0 %v437, 31
      %v2479 = vpop.permute.xlu0 %2478
      %2480 = vrot.lane.b32.xlu0 %v438, 31
      %v2481 = vpop.permute.xlu0 %2480
      %2482 = vrot.lane.b32.xlu0 %v439, 31
      %v2483 = vpop.permute.xlu0 %2482
      %vm2484 = vcmask 252928
      %v2485 = vsel %vm2484, %v2421, %v2423
      %v2486 = vsel %vm2484, %v2423, %v2425
      %v2487 = vsel %vm2484, %v2425, %v2427
      %v2488 = vsel %vm2484, %v2427, %v2429
      %v2489 = vsel %vm2484, %v2429, %v2431
      %v2490 = vsel %vm2484, %v2431, %v2433
      %v2491 = vsel %vm2484, %v2433, %v2435
      %v2492 = vsel %vm2484, %v2435, %v2437
      %v2493 = vsel %vm2484, %v2437, %v2439
      %v2494 = vsel %vm2484, %v2439, %v2441
      %v2495 = vsel %vm2484, %v2441, %v2443
      %v2496 = vsel %vm2484, %v2443, %v2445
      %v2497 = vsel %vm2484, %v2445, %v2447
      %v2498 = vsel %vm2484, %v2447, %v2449
      %v2499 = vsel %vm2484, %v2449, %v2451
      %v2500 = vsel %vm2484, %v2451, %v2453
      %v2501 = vsel %vm2484, %v2453, %v2455
      %v2502 = vsel %vm2484, %v2455, %v2457
      %v2503 = vsel %vm2484, %v2457, %v2459
      %v2504 = vsel %vm2484, %v2459, %v2461
      %v2505 = vsel %vm2484, %v2461, %v2463
      %v2506 = vsel %vm2484, %v2463, %v2465
      %v2507 = vsel %vm2484, %v2465, %v2467
      %v2508 = vsel %vm2484, %v2467, %v2469
      %v2509 = vsel %vm2484, %v2469, %v2471
      %v2510 = vsel %vm2484, %v2471, %v2473
      %v2511 = vsel %vm2484, %v2473, %v2475
      %v2512 = vsel %vm2484, %v2475, %v2477
      %v2513 = vsel %vm2484, %v2477, %v2479
      %v2514 = vsel %vm2484, %v2479, %v2481
      %v2515 = vsel %vm2484, %v2481, %v2483
      %vm2547 = vcmask 252928
      %v2550 = vsel %vm2547, %v2483, %v2421
      %2552 = vrot.lane.b32.xlu0 %v408, 30
      %v2553 = vpop.permute.xlu0 %2552
      %2554 = vrot.lane.b32.xlu0 %v409, 30
      %v2555 = vpop.permute.xlu0 %2554
      %2556 = vrot.lane.b32.xlu0 %v410, 30
      %v2557 = vpop.permute.xlu0 %2556
      %2558 = vrot.lane.b32.xlu0 %v411, 30
      %v2559 = vpop.permute.xlu0 %2558
      %2560 = vrot.lane.b32.xlu0 %v412, 30
      %v2561 = vpop.permute.xlu0 %2560
      %2562 = vrot.lane.b32.xlu0 %v413, 30
      %v2563 = vpop.permute.xlu0 %2562
      %2564 = vrot.lane.b32.xlu0 %v414, 30
      %v2565 = vpop.permute.xlu0 %2564
      %2566 = vrot.lane.b32.xlu0 %v415, 30
      %v2567 = vpop.permute.xlu0 %2566
      %2568 = vrot.lane.b32.xlu0 %v416, 30
      %v2569 = vpop.permute.xlu0 %2568
      %2570 = vrot.lane.b32.xlu0 %v417, 30
      %v2571 = vpop.permute.xlu0 %2570
      %2572 = vrot.lane.b32.xlu0 %v418, 30
      %v2573 = vpop.permute.xlu0 %2572
      %2574 = vrot.lane.b32.xlu0 %v419, 30
      %v2575 = vpop.permute.xlu0 %2574
      %2576 = vrot.lane.b32.xlu0 %v420, 30
      %v2577 = vpop.permute.xlu0 %2576
      %2578 = vrot.lane.b32.xlu0 %v421, 30
      %v2579 = vpop.permute.xlu0 %2578
      %2580 = vrot.lane.b32.xlu0 %v422, 30
      %v2581 = vpop.permute.xlu0 %2580
      %2582 = vrot.lane.b32.xlu0 %v423, 30
      %v2583 = vpop.permute.xlu0 %2582
      %2584 = vrot.lane.b32.xlu0 %v424, 30
      %v2585 = vpop.permute.xlu0 %2584
      %2586 = vrot.lane.b32.xlu0 %v425, 30
      %v2587 = vpop.permute.xlu0 %2586
      %2588 = vrot.lane.b32.xlu0 %v426, 30
      %v2589 = vpop.permute.xlu0 %2588
      %2590 = vrot.lane.b32.xlu0 %v427, 30
      %v2591 = vpop.permute.xlu0 %2590
      %2592 = vrot.lane.b32.xlu0 %v428, 30
      %v2593 = vpop.permute.xlu0 %2592
      %2594 = vrot.lane.b32.xlu0 %v429, 30
      %v2595 = vpop.permute.xlu0 %2594
      %2596 = vrot.lane.b32.xlu0 %v430, 30
      %v2597 = vpop.permute.xlu0 %2596
      %2598 = vrot.lane.b32.xlu0 %v431, 30
      %v2599 = vpop.permute.xlu0 %2598
      %2600 = vrot.lane.b32.xlu0 %v432, 30
      %v2601 = vpop.permute.xlu0 %2600
      %2602 = vrot.lane.b32.xlu0 %v433, 30
      %v2603 = vpop.permute.xlu0 %2602
      %2604 = vrot.lane.b32.xlu0 %v434, 30
      %v2605 = vpop.permute.xlu0 %2604
      %2606 = vrot.lane.b32.xlu0 %v435, 30
      %v2607 = vpop.permute.xlu0 %2606
      %2608 = vrot.lane.b32.xlu0 %v436, 30
      %v2609 = vpop.permute.xlu0 %2608
      %2610 = vrot.lane.b32.xlu0 %v437, 30
      %v2611 = vpop.permute.xlu0 %2610
      %2612 = vrot.lane.b32.xlu0 %v438, 30
      %v2613 = vpop.permute.xlu0 %2612
      %2614 = vrot.lane.b32.xlu0 %v439, 30
      %v2615 = vpop.permute.xlu0 %2614
      %vm2616 = vcmask 244736
      %v2617 = vsel %vm2616, %v2553, %v2555
      %v2618 = vsel %vm2616, %v2555, %v2557
      %v2619 = vsel %vm2616, %v2557, %v2559
      %v2620 = vsel %vm2616, %v2559, %v2561
      %v2621 = vsel %vm2616, %v2561, %v2563
      %v2622 = vsel %vm2616, %v2563, %v2565
      %v2623 = vsel %vm2616, %v2565, %v2567
      %v2624 = vsel %vm2616, %v2567, %v2569
      %v2625 = vsel %vm2616, %v2569, %v2571
      %v2626 = vsel %vm2616, %v2571, %v2573
      %v2627 = vsel %vm2616, %v2573, %v2575
      %v2628 = vsel %vm2616, %v2575, %v2577
      %v2629 = vsel %vm2616, %v2577, %v2579
      %v2630 = vsel %vm2616, %v2579, %v2581
      %v2631 = vsel %vm2616, %v2581, %v2583
      %v2632 = vsel %vm2616, %v2583, %v2585
      %v2633 = vsel %vm2616, %v2585, %v2587
      %v2634 = vsel %vm2616, %v2587, %v2589
      %v2635 = vsel %vm2616, %v2589, %v2591
      %v2636 = vsel %vm2616, %v2591, %v2593
      %v2637 = vsel %vm2616, %v2593, %v2595
      %v2638 = vsel %vm2616, %v2595, %v2597
      %v2639 = vsel %vm2616, %v2597, %v2599
      %v2640 = vsel %vm2616, %v2599, %v2601
      %v2641 = vsel %vm2616, %v2601, %v2603
      %v2642 = vsel %vm2616, %v2603, %v2605
      %v2643 = vsel %vm2616, %v2605, %v2607
      %v2644 = vsel %vm2616, %v2607, %v2609
      %v2645 = vsel %vm2616, %v2609, %v2611
      %v2646 = vsel %vm2616, %v2611, %v2613
      %v2647 = vsel %vm2616, %v2613, %v2615
      %vm2679 = vcmask 244736
      %v2682 = vsel %vm2679, %v2615, %v2553
      %2684 = vrot.lane.b32.xlu0 %v408, 29
      %v2685 = vpop.permute.xlu0 %2684
      %2686 = vrot.lane.b32.xlu0 %v409, 29
      %v2687 = vpop.permute.xlu0 %2686
      %2688 = vrot.lane.b32.xlu0 %v410, 29
      %v2689 = vpop.permute.xlu0 %2688
      %2690 = vrot.lane.b32.xlu0 %v411, 29
      %v2691 = vpop.permute.xlu0 %2690
      %2692 = vrot.lane.b32.xlu0 %v412, 29
      %v2693 = vpop.permute.xlu0 %2692
      %2694 = vrot.lane.b32.xlu0 %v413, 29
      %v2695 = vpop.permute.xlu0 %2694
      %2696 = vrot.lane.b32.xlu0 %v414, 29
      %v2697 = vpop.permute.xlu0 %2696
      %2698 = vrot.lane.b32.xlu0 %v415, 29
      %v2699 = vpop.permute.xlu0 %2698
      %2700 = vrot.lane.b32.xlu0 %v416, 29
      %v2701 = vpop.permute.xlu0 %2700
      %2702 = vrot.lane.b32.xlu0 %v417, 29
      %v2703 = vpop.permute.xlu0 %2702
      %2704 = vrot.lane.b32.xlu0 %v418, 29
      %v2705 = vpop.permute.xlu0 %2704
      %2706 = vrot.lane.b32.xlu0 %v419, 29
      %v2707 = vpop.permute.xlu0 %2706
      %2708 = vrot.lane.b32.xlu0 %v420, 29
      %v2709 = vpop.permute.xlu0 %2708
      %2710 = vrot.lane.b32.xlu0 %v421, 29
      %v2711 = vpop.permute.xlu0 %2710
      %2712 = vrot.lane.b32.xlu0 %v422, 29
      %v2713 = vpop.permute.xlu0 %2712
      %2714 = vrot.lane.b32.xlu0 %v423, 29
      %v2715 = vpop.permute.xlu0 %2714
      %2716 = vrot.lane.b32.xlu0 %v424, 29
      %v2717 = vpop.permute.xlu0 %2716
      %2718 = vrot.lane.b32.xlu0 %v425, 29
      %v2719 = vpop.permute.xlu0 %2718
      %2720 = vrot.lane.b32.xlu0 %v426, 29
      %v2721 = vpop.permute.xlu0 %2720
      %2722 = vrot.lane.b32.xlu0 %v427, 29
      %v2723 = vpop.permute.xlu0 %2722
      %2724 = vrot.lane.b32.xlu0 %v428, 29
      %v2725 = vpop.permute.xlu0 %2724
      %2726 = vrot.lane.b32.xlu0 %v429, 29
      %v2727 = vpop.permute.xlu0 %2726
      %2728 = vrot.lane.b32.xlu0 %v430, 29
      %v2729 = vpop.permute.xlu0 %2728
      %2730 = vrot.lane.b32.xlu0 %v431, 29
      %v2731 = vpop.permute.xlu0 %2730
      %2732 = vrot.lane.b32.xlu0 %v432, 29
      %v2733 = vpop.permute.xlu0 %2732
      %2734 = vrot.lane.b32.xlu0 %v433, 29
      %v2735 = vpop.permute.xlu0 %2734
      %2736 = vrot.lane.b32.xlu0 %v434, 29
      %v2737 = vpop.permute.xlu0 %2736
      %2738 = vrot.lane.b32.xlu0 %v435, 29
      %v2739 = vpop.permute.xlu0 %2738
      %2740 = vrot.lane.b32.xlu0 %v436, 29
      %v2741 = vpop.permute.xlu0 %2740
      %2742 = vrot.lane.b32.xlu0 %v437, 29
      %v2743 = vpop.permute.xlu0 %2742
      %2744 = vrot.lane.b32.xlu0 %v438, 29
      %v2745 = vpop.permute.xlu0 %2744
      %2746 = vrot.lane.b32.xlu0 %v439, 29
      %v2747 = vpop.permute.xlu0 %2746
      %vm2748 = vcmask 236544
      %v2749 = vsel %vm2748, %v2685, %v2687
      %v2750 = vsel %vm2748, %v2687, %v2689
      %v2751 = vsel %vm2748, %v2689, %v2691
      %v2752 = vsel %vm2748, %v2691, %v2693
      %v2753 = vsel %vm2748, %v2693, %v2695
      %v2754 = vsel %vm2748, %v2695, %v2697
      %v2755 = vsel %vm2748, %v2697, %v2699
      %v2756 = vsel %vm2748, %v2699, %v2701
      %v2757 = vsel %vm2748, %v2701, %v2703
      %v2758 = vsel %vm2748, %v2703, %v2705
      %v2759 = vsel %vm2748, %v2705, %v2707
      %v2760 = vsel %vm2748, %v2707, %v2709
      %v2761 = vsel %vm2748, %v2709, %v2711
      %v2762 = vsel %vm2748, %v2711, %v2713
      %v2763 = vsel %vm2748, %v2713, %v2715
      %v2764 = vsel %vm2748, %v2715, %v2717
      %v2765 = vsel %vm2748, %v2717, %v2719
      %v2766 = vsel %vm2748, %v2719, %v2721
      %v2767 = vsel %vm2748, %v2721, %v2723
      %v2768 = vsel %vm2748, %v2723, %v2725
      %v2769 = vsel %vm2748, %v2725, %v2727
      %v2770 = vsel %vm2748, %v2727, %v2729
      %v2771 = vsel %vm2748, %v2729, %v2731
      %v2772 = vsel %vm2748, %v2731, %v2733
      %v2773 = vsel %vm2748, %v2733, %v2735
      %v2774 = vsel %vm2748, %v2735, %v2737
      %v2775 = vsel %vm2748, %v2737, %v2739
      %v2776 = vsel %vm2748, %v2739, %v2741
      %v2777 = vsel %vm2748, %v2741, %v2743
      %v2778 = vsel %vm2748, %v2743, %v2745
      %v2779 = vsel %vm2748, %v2745, %v2747
      %vm2811 = vcmask 236544
      %v2814 = vsel %vm2811, %v2747, %v2685
      %2816 = vrot.lane.b32.xlu0 %v408, 28
      %v2817 = vpop.permute.xlu0 %2816
      %2818 = vrot.lane.b32.xlu0 %v409, 28
      %v2819 = vpop.permute.xlu0 %2818
      %2820 = vrot.lane.b32.xlu0 %v410, 28
      %v2821 = vpop.permute.xlu0 %2820
      %2822 = vrot.lane.b32.xlu0 %v411, 28
      %v2823 = vpop.permute.xlu0 %2822
      %2824 = vrot.lane.b32.xlu0 %v412, 28
      %v2825 = vpop.permute.xlu0 %2824
      %2826 = vrot.lane.b32.xlu0 %v413, 28
      %v2827 = vpop.permute.xlu0 %2826
      %2828 = vrot.lane.b32.xlu0 %v414, 28
      %v2829 = vpop.permute.xlu0 %2828
      %2830 = vrot.lane.b32.xlu0 %v415, 28
      %v2831 = vpop.permute.xlu0 %2830
      %2832 = vrot.lane.b32.xlu0 %v416, 28
      %v2833 = vpop.permute.xlu0 %2832
      %2834 = vrot.lane.b32.xlu0 %v417, 28
      %v2835 = vpop.permute.xlu0 %2834
      %2836 = vrot.lane.b32.xlu0 %v418, 28
      %v2837 = vpop.permute.xlu0 %2836
      %2838 = vrot.lane.b32.xlu0 %v419, 28
      %v2839 = vpop.permute.xlu0 %2838
      %2840 = vrot.lane.b32.xlu0 %v420, 28
      %v2841 = vpop.permute.xlu0 %2840
      %2842 = vrot.lane.b32.xlu0 %v421, 28
      %v2843 = vpop.permute.xlu0 %2842
      %2844 = vrot.lane.b32.xlu0 %v422, 28
      %v2845 = vpop.permute.xlu0 %2844
      %2846 = vrot.lane.b32.xlu0 %v423, 28
      %v2847 = vpop.permute.xlu0 %2846
      %2848 = vrot.lane.b32.xlu0 %v424, 28
      %v2849 = vpop.permute.xlu0 %2848
      %2850 = vrot.lane.b32.xlu0 %v425, 28
      %v2851 = vpop.permute.xlu0 %2850
      %2852 = vrot.lane.b32.xlu0 %v426, 28
      %v2853 = vpop.permute.xlu0 %2852
      %2854 = vrot.lane.b32.xlu0 %v427, 28
      %v2855 = vpop.permute.xlu0 %2854
      %2856 = vrot.lane.b32.xlu0 %v428, 28
      %v2857 = vpop.permute.xlu0 %2856
      %2858 = vrot.lane.b32.xlu0 %v429, 28
      %v2859 = vpop.permute.xlu0 %2858
      %2860 = vrot.lane.b32.xlu0 %v430, 28
      %v2861 = vpop.permute.xlu0 %2860
      %2862 = vrot.lane.b32.xlu0 %v431, 28
      %v2863 = vpop.permute.xlu0 %2862
      %2864 = vrot.lane.b32.xlu0 %v432, 28
      %v2865 = vpop.permute.xlu0 %2864
      %2866 = vrot.lane.b32.xlu0 %v433, 28
      %v2867 = vpop.permute.xlu0 %2866
      %2868 = vrot.lane.b32.xlu0 %v434, 28
      %v2869 = vpop.permute.xlu0 %2868
      %2870 = vrot.lane.b32.xlu0 %v435, 28
      %v2871 = vpop.permute.xlu0 %2870
      %2872 = vrot.lane.b32.xlu0 %v436, 28
      %v2873 = vpop.permute.xlu0 %2872
      %2874 = vrot.lane.b32.xlu0 %v437, 28
      %v2875 = vpop.permute.xlu0 %2874
      %2876 = vrot.lane.b32.xlu0 %v438, 28
      %v2877 = vpop.permute.xlu0 %2876
      %2878 = vrot.lane.b32.xlu0 %v439, 28
      %v2879 = vpop.permute.xlu0 %2878
      %vm2880 = vcmask 228352
      %v2881 = vsel %vm2880, %v2817, %v2819
      %v2882 = vsel %vm2880, %v2819, %v2821
      %v2883 = vsel %vm2880, %v2821, %v2823
      %v2884 = vsel %vm2880, %v2823, %v2825
      %v2885 = vsel %vm2880, %v2825, %v2827
      %v2886 = vsel %vm2880, %v2827, %v2829
      %v2887 = vsel %vm2880, %v2829, %v2831
      %v2888 = vsel %vm2880, %v2831, %v2833
      %v2889 = vsel %vm2880, %v2833, %v2835
      %v2890 = vsel %vm2880, %v2835, %v2837
      %v2891 = vsel %vm2880, %v2837, %v2839
      %v2892 = vsel %vm2880, %v2839, %v2841
      %v2893 = vsel %vm2880, %v2841, %v2843
      %v2894 = vsel %vm2880, %v2843, %v2845
      %v2895 = vsel %vm2880, %v2845, %v2847
      %v2896 = vsel %vm2880, %v2847, %v2849
      %v2897 = vsel %vm2880, %v2849, %v2851
      %v2898 = vsel %vm2880, %v2851, %v2853
      %v2899 = vsel %vm2880, %v2853, %v2855
      %v2900 = vsel %vm2880, %v2855, %v2857
      %v2901 = vsel %vm2880, %v2857, %v2859
      %v2902 = vsel %vm2880, %v2859, %v2861
      %v2903 = vsel %vm2880, %v2861, %v2863
      %v2904 = vsel %vm2880, %v2863, %v2865
      %v2905 = vsel %vm2880, %v2865, %v2867
      %v2906 = vsel %vm2880, %v2867, %v2869
      %v2907 = vsel %vm2880, %v2869, %v2871
      %v2908 = vsel %vm2880, %v2871, %v2873
      %v2909 = vsel %vm2880, %v2873, %v2875
      %v2910 = vsel %vm2880, %v2875, %v2877
      %v2911 = vsel %vm2880, %v2877, %v2879
      %vm2943 = vcmask 228352
      %v2946 = vsel %vm2943, %v2879, %v2817
      %v2980 = vld [vmem:[%s1] sm:$0xff]
      %v2981 = vld [vmem:[%s1 + $0x8] sm:$0xff]
      %v2982 = vld [vmem:[%s1 + $0x10] sm:$0xff]
      %v2983 = vld [vmem:[%s1 + $0x18] sm:$0xff]
      %v2984 = vld [vmem:[%s2] sm:$0xff]
      %v2985 = vld [vmem:[%s2 + $0x8] sm:$0xff]
      %2987 = vset.pattern.permute.xlu0 0
      %2988 = vperm.xlu0 %2987, %v2984
      %v2989 = vpop.permute.xlu0 %2988
      %2992 = vset.pattern.permute.xlu0 0
      %2993 = vperm.xlu0 %2992, %v2985
      %v2994 = vpop.permute.xlu0 %2993
      %v3000 = vunpack.c.l.b16 %v2980
      %v3001 = vunpack.c.h.b16 %v2980
      %v3002 = vunpack.c.l.b16 %v2981
      %v3003 = vunpack.c.h.b16 %v2981
      %v3004 = vunpack.c.l.b16 %v2982
      %v3005 = vunpack.c.h.b16 %v2982
      %v3006 = vunpack.c.l.b16 %v2983
      %v3007 = vunpack.c.h.b16 %v2983
      %v3008 = vpack.c.b16 %v3004, %v3000
      %v3009 = vpack.c.b16 %v3005, %v3001
      %v3010 = vpack.c.b16 %v3006, %v3002
      %v3011 = vpack.c.b16 %v3007, %v3003
      %vm3015 = vcmask 130048
      %v3017 = vsel %vm3015, %v3011, 0
      %3019 = vmatprep.subr.bf16.mxu0 %v1298
      %3020 = vmatpush1.bf16.msra.mxu0 %v1297
      %3021 = vmatprep.subr.bf16.mxu0 %v1166
      %3022 = vmatpush1.bf16.msra.mxu0 %v1165
      %3023 = vmatprep.subr.bf16.mxu0 %v1034
      %3024 = vmatpush1.bf16.msra.mxu0 %v1033
      %3025 = vmatprep.subr.bf16.mxu0 %v902
      %3026 = vmatpush1.bf16.msra.mxu0 %v901
      %3027 = vmatprep.subr.bf16.mxu0 %v770
      %3028 = vmatpush1.bf16.msra.mxu0 %v769
      %3029 = vmatprep.subr.bf16.mxu0 %v638
      %3030 = vmatpush1.bf16.msra.mxu0 %v637
      %3031 = vmatprep.subr.bf16.mxu0 %v506
      %3032 = vmatpush1.bf16.msra.mxu0 %v505
      %3033 = vmatprep.subr.bf16.mxu0 %v409
      %3034 = vmatpush1.bf16.msra.mxu0 %v408
      %3035 = vmatprep.subr.bf16.mxu0 %v2354
      %3036 = vmatpush2.bf16.msra.mxu0 %v2353
      %3037 = vmatprep.subr.bf16.mxu0 %v2222
      %3038 = vmatpush2.bf16.msra.mxu0 %v2221
      %3039 = vmatprep.subr.bf16.mxu0 %v2090
      %3040 = vmatpush2.bf16.msra.mxu0 %v2089
      %3041 = vmatprep.subr.bf16.mxu0 %v1958
      %3042 = vmatpush2.bf16.msra.mxu0 %v1957
      %3043 = vmatprep.subr.bf16.mxu0 %v1826
      %3044 = vmatpush2.bf16.msra.mxu0 %v1825
      %3045 = vmatprep.subr.bf16.mxu0 %v1694
      %3046 = vmatpush2.bf16.msra.mxu0 %v1693
      %3047 = vmatprep.subr.bf16.mxu0 %v1562
      %3048 = vmatpush2.bf16.msra.mxu0 %v1561
      %3049 = vmatprep.subr.bf16.mxu0 %v1430
      %3050 = vmatpush2.bf16.msra.mxu0 %v1429
      %3051 = vmatprep.mubr.bf16.mxu0 %v3009
      %3052 = vmatmul.mubr.bf16.gmra.mxu0 %v3008
      %v3053 = vpop.f32.mrf.mxu0
      %v3054 = vadd.f32 %v2989, %v3053
      %v3055 = vpop.f32.mrf.mxu0
      %v3056 = vadd.f32 %v2989, %v3055
      %v3057 = vpop.f32.mrf.mxu0
      %v3058 = vadd.f32 %v2994, %v3057
      %v3059 = vpop.f32.mrf.mxu0
      %v3060 = vadd.f32 %v2994, %v3059
      %3061 = vdwg.mxu0
      %3062 = vmatprep.subr.bf16.mxu0 %v771
      %3063 = vmatpush1.bf16.msra.mxu0 %v770
      %3064 = vmatprep.subr.bf16.mxu0 %v639
      %3065 = vmatpush1.bf16.msra.mxu0 %v638
      %3066 = vmatprep.subr.bf16.mxu0 %v507
      %3067 = vmatpush1.bf16.msra.mxu0 %v506
      %3068 = vmatprep.subr.bf16.mxu0 %v410
      %3069 = vmatpush1.bf16.msra.mxu0 %v409
      %3070 = vmatprep.subr.bf16.mxu0 %v2882
      %3071 = vmatpush1.bf16.msra.mxu0 %v2881
      %3072 = vmatprep.subr.bf16.mxu0 %v2750
      %3073 = vmatpush1.bf16.msra.mxu0 %v2749
      %3074 = vmatprep.subr.bf16.mxu0 %v2618
      %3075 = vmatpush1.bf16.msra.mxu0 %v2617
      %3076 = vmatprep.subr.bf16.mxu0 %v2486
      %3077 = vmatpush1.bf16.msra.mxu0 %v2485
      %3078 = vmatprep.subr.bf16.mxu0 0
      %3079 = vmatpush2.bf16.msra.mxu0 0
      %3080 = vmatprep.subr.bf16.mxu0 0
      %3081 = vmatpush2.bf16.msra.mxu0 0
      %3082 = vmatprep.subr.bf16.mxu0 0
      %3083 = vmatpush2.bf16.msra.mxu0 0
      %3084 = vmatprep.subr.bf16.mxu0 0
      %3085 = vmatpush2.bf16.msra.mxu0 0
      %3086 = vmatprep.subr.bf16.mxu0 0
      %3087 = vmatpush2.bf16.msra.mxu0 0
      %3088 = vmatprep.subr.bf16.mxu0 0
      %3089 = vmatpush2.bf16.msra.mxu0 0
      %3090 = vmatprep.subr.bf16.mxu0 0
      %3091 = vmatpush2.bf16.msra.mxu0 0
      %3092 = vmatprep.subr.bf16.mxu0 %v903
      %3093 = vmatpush2.bf16.msra.mxu0 %v902
      %3094 = vmatprep.mubr.bf16.mxu0 %v3017
      %3095 = vmatmul.mubr.bf16.gmra.mxu0 %v3010
      %v3096 = vpop.f32.mrf.mxu0
      %v3097 = vadd.f32 %v3054, %v3096
      %v3098 = vpop.f32.mrf.mxu0
      %v3099 = vadd.f32 %v3056, %v3098
      %v3100 = vpop.f32.mrf.mxu0
      %v3101 = vadd.f32 %v3058, %v3100
      %v3102 = vpop.f32.mrf.mxu0
      %v3103 = vadd.f32 %v3060, %v3102
      %3104 = vdwg.mxu0
      %3105 = vmatprep.subr.bf16.mxu0 %v1300
      %3106 = vmatpush1.bf16.msra.mxu0 %v1299
      %3107 = vmatprep.subr.bf16.mxu0 %v1168
      %3108 = vmatpush1.bf16.msra.mxu0 %v1167
      %3109 = vmatprep.subr.bf16.mxu0 %v1036
      %3110 = vmatpush1.bf16.msra.mxu0 %v1035
      %3111 = vmatprep.subr.bf16.mxu0 %v904
      %3112 = vmatpush1.bf16.msra.mxu0 %v903
      %3113 = vmatprep.subr.bf16.mxu0 %v772
      %3114 = vmatpush1.bf16.msra.mxu0 %v771
      %3115 = vmatprep.subr.bf16.mxu0 %v640
      %3116 = vmatpush1.bf16.msra.mxu0 %v639
      %3117 = vmatprep.subr.bf16.mxu0 %v508
      %3118 = vmatpush1.bf16.msra.mxu0 %v507
      %3119 = vmatprep.subr.bf16.mxu0 %v411
      %3120 = vmatpush1.bf16.msra.mxu0 %v410
      %3121 = vmatprep.subr.bf16.mxu0 %v2356
      %3122 = vmatpush2.bf16.msra.mxu0 %v2355
      %3123 = vmatprep.subr.bf16.mxu0 %v2224
      %3124 = vmatpush2.bf16.msra.mxu0 %v2223
      %3125 = vmatprep.subr.bf16.mxu0 %v2092
      %3126 = vmatpush2.bf16.msra.mxu0 %v2091
      %3127 = vmatprep.subr.bf16.mxu0 %v1960
      %3128 = vmatpush2.bf16.msra.mxu0 %v1959
      %3129 = vmatprep.subr.bf16.mxu0 %v1828
      %3130 = vmatpush2.bf16.msra.mxu0 %v1827
      %3131 = vmatprep.subr.bf16.mxu0 %v1696
      %3132 = vmatpush2.bf16.msra.mxu0 %v1695
      %3133 = vmatprep.subr.bf16.mxu0 %v1564
      %3134 = vmatpush2.bf16.msra.mxu0 %v1563
      %3135 = vmatprep.subr.bf16.mxu0 %v1432
      %3136 = vmatpush2.bf16.msra.mxu0 %v1431
      %3137 = vmatprep.mubr.bf16.mxu0 %v3009
      %3138 = vmatmul.mubr.bf16.gmra.mxu0 %v3008
      %v3139 = vpop.f32.mrf.mxu0
      %v3140 = vadd.f32 %v2989, %v3139
      %v3141 = vpop.f32.mrf.mxu0
      %v3142 = vadd.f32 %v2989, %v3141
      %v3143 = vpop.f32.mrf.mxu0
      %v3144 = vadd.f32 %v2994, %v3143
      %v3145 = vpop.f32.mrf.mxu0
      %v3146 = vadd.f32 %v2994, %v3145
      %3147 = vdwg.mxu0
      %3148 = vmatprep.subr.bf16.mxu0 %v773
      %3149 = vmatpush1.bf16.msra.mxu0 %v772
      %3150 = vmatprep.subr.bf16.mxu0 %v641
      %3151 = vmatpush1.bf16.msra.mxu0 %v640
      %3152 = vmatprep.subr.bf16.mxu0 %v509
      %3153 = vmatpush1.bf16.msra.mxu0 %v508
      %3154 = vmatprep.subr.bf16.mxu0 %v412
      %3155 = vmatpush1.bf16.msra.mxu0 %v411
      %3156 = vmatprep.subr.bf16.mxu0 %v2884
      %3157 = vmatpush1.bf16.msra.mxu0 %v2883
      %3158 = vmatprep.subr.bf16.mxu0 %v2752
      %3159 = vmatpush1.bf16.msra.mxu0 %v2751
      %3160 = vmatprep.subr.bf16.mxu0 %v2620
      %3161 = vmatpush1.bf16.msra.mxu0 %v2619
      %3162 = vmatprep.subr.bf16.mxu0 %v2488
      %3163 = vmatpush1.bf16.msra.mxu0 %v2487
      %3164 = vmatprep.subr.bf16.mxu0 0
      %3165 = vmatpush2.bf16.msra.mxu0 0
      %3166 = vmatprep.subr.bf16.mxu0 0
      %3167 = vmatpush2.bf16.msra.mxu0 0
      %3168 = vmatprep.subr.bf16.mxu0 0
      %3169 = vmatpush2.bf16.msra.mxu0 0
      %3170 = vmatprep.subr.bf16.mxu0 0
      %3171 = vmatpush2.bf16.msra.mxu0 0
      %3172 = vmatprep.subr.bf16.mxu0 0
      %3173 = vmatpush2.bf16.msra.mxu0 0
      %3174 = vmatprep.subr.bf16.mxu0 0
      %3175 = vmatpush2.bf16.msra.mxu0 0
      %3176 = vmatprep.subr.bf16.mxu0 0
      %3177 = vmatpush2.bf16.msra.mxu0 0
      %3178 = vmatprep.subr.bf16.mxu0 %v905
      %3179 = vmatpush2.bf16.msra.mxu0 %v904
      %3180 = vmatprep.mubr.bf16.mxu0 %v3017
      %3181 = vmatmul.mubr.bf16.gmra.mxu0 %v3010
      %v3182 = vpop.f32.mrf.mxu0
      %v3183 = vadd.f32 %v3140, %v3182
      %v3184 = vpop.f32.mrf.mxu0
      %v3185 = vadd.f32 %v3142, %v3184
      %v3186 = vpop.f32.mrf.mxu0
      %v3187 = vadd.f32 %v3144, %v3186
      %v3188 = vpop.f32.mrf.mxu0
      %v3189 = vadd.f32 %v3146, %v3188
      %3190 = vdwg.mxu0
      %3191 = vmatprep.subr.bf16.mxu0 %v1302
      %3192 = vmatpush1.bf16.msra.mxu0 %v1301
      %3193 = vmatprep.subr.bf16.mxu0 %v1170
      %3194 = vmatpush1.bf16.msra.mxu0 %v1169
      %3195 = vmatprep.subr.bf16.mxu0 %v1038
      %3196 = vmatpush1.bf16.msra.mxu0 %v1037
      %3197 = vmatprep.subr.bf16.mxu0 %v906
      %3198 = vmatpush1.bf16.msra.mxu0 %v905
      %3199 = vmatprep.subr.bf16.mxu0 %v774
      %3200 = vmatpush1.bf16.msra.mxu0 %v773
      %3201 = vmatprep.subr.bf16.mxu0 %v642
      %3202 = vmatpush1.bf16.msra.mxu0 %v641
      %3203 = vmatprep.subr.bf16.mxu0 %v510
      %3204 = vmatpush1.bf16.msra.mxu0 %v509
      %3205 = vmatprep.subr.bf16.mxu0 %v413
      %3206 = vmatpush1.bf16.msra.mxu0 %v412
      %3207 = vmatprep.subr.bf16.mxu0 %v2358
      %3208 = vmatpush2.bf16.msra.mxu0 %v2357
      %3209 = vmatprep.subr.bf16.mxu0 %v2226
      %3210 = vmatpush2.bf16.msra.mxu0 %v2225
      %3211 = vmatprep.subr.bf16.mxu0 %v2094
      %3212 = vmatpush2.bf16.msra.mxu0 %v2093
      %3213 = vmatprep.subr.bf16.mxu0 %v1962
      %3214 = vmatpush2.bf16.msra.mxu0 %v1961
      %3215 = vmatprep.subr.bf16.mxu0 %v1830
      %3216 = vmatpush2.bf16.msra.mxu0 %v1829
      %3217 = vmatprep.subr.bf16.mxu0 %v1698
      %3218 = vmatpush2.bf16.msra.mxu0 %v1697
      %3219 = vmatprep.subr.bf16.mxu0 %v1566
      %3220 = vmatpush2.bf16.msra.mxu0 %v1565
      %3221 = vmatprep.subr.bf16.mxu0 %v1434
      %3222 = vmatpush2.bf16.msra.mxu0 %v1433
      %3223 = vmatprep.mubr.bf16.mxu0 %v3009
      %3224 = vmatmul.mubr.bf16.gmra.mxu0 %v3008
      %v3225 = vpop.f32.mrf.mxu0
      %v3226 = vadd.f32 %v2989, %v3225
      %v3227 = vpop.f32.mrf.mxu0
      %v3228 = vadd.f32 %v2989, %v3227
      %v3229 = vpop.f32.mrf.mxu0
      %v3230 = vadd.f32 %v2994, %v3229
      %v3231 = vpop.f32.mrf.mxu0
      %v3232 = vadd.f32 %v2994, %v3231
      %3233 = vdwg.mxu0
      %3234 = vmatprep.subr.bf16.mxu0 %v775
      %3235 = vmatpush1.bf16.msra.mxu0 %v774
      %3236 = vmatprep.subr.bf16.mxu0 %v643
      %3237 = vmatpush1.bf16.msra.mxu0 %v642
      %3238 = vmatprep.subr.bf16.mxu0 %v511
      %3239 = vmatpush1.bf16.msra.mxu0 %v510
      %3240 = vmatprep.subr.bf16.mxu0 %v414
      %3241 = vmatpush1.bf16.msra.mxu0 %v413
      %3242 = vmatprep.subr.bf16.mxu0 %v2886
      %3243 = vmatpush1.bf16.msra.mxu0 %v2885
      %3244 = vmatprep.subr.bf16.mxu0 %v2754
      %3245 = vmatpush1.bf16.msra.mxu0 %v2753
      %3246 = vmatprep.subr.bf16.mxu0 %v2622
      %3247 = vmatpush1.bf16.msra.mxu0 %v2621
      %3248 = vmatprep.subr.bf16.mxu0 %v2490
      %3249 = vmatpush1.bf16.msra.mxu0 %v2489
      %3250 = vmatprep.subr.bf16.mxu0 0
      %3251 = vmatpush2.bf16.msra.mxu0 0
      %3252 = vmatprep.subr.bf16.mxu0 0
      %3253 = vmatpush2.bf16.msra.mxu0 0
      %3254 = vmatprep.subr.bf16.mxu0 0
      %3255 = vmatpush2.bf16.msra.mxu0 0
      %3256 = vmatprep.subr.bf16.mxu0 0
      %3257 = vmatpush2.bf16.msra.mxu0 0
      %3258 = vmatprep.subr.bf16.mxu0 0
      %3259 = vmatpush2.bf16.msra.mxu0 0
      %3260 = vmatprep.subr.bf16.mxu0 0
      %3261 = vmatpush2.bf16.msra.mxu0 0
      %3262 = vmatprep.subr.bf16.mxu0 0
      %3263 = vmatpush2.bf16.msra.mxu0 0
      %3264 = vmatprep.subr.bf16.mxu0 %v907
      %3265 = vmatpush2.bf16.msra.mxu0 %v906
      %3266 = vmatprep.mubr.bf16.mxu0 %v3017
      %3267 = vmatmul.mubr.bf16.gmra.mxu0 %v3010
      %v3268 = vpop.f32.mrf.mxu0
      %v3269 = vadd.f32 %v3226, %v3268
      %v3270 = vpop.f32.mrf.mxu0
      %v3271 = vadd.f32 %v3228, %v3270
      %v3272 = vpop.f32.mrf.mxu0
      %v3273 = vadd.f32 %v3230, %v3272
      %v3274 = vpop.f32.mrf.mxu0
      %v3275 = vadd.f32 %v3232, %v3274
      %3276 = vdwg.mxu0
      %3277 = vmatprep.subr.bf16.mxu0 %v1304
      %3278 = vmatpush1.bf16.msra.mxu0 %v1303
      %3279 = vmatprep.subr.bf16.mxu0 %v1172
      %3280 = vmatpush1.bf16.msra.mxu0 %v1171
      %3281 = vmatprep.subr.bf16.mxu0 %v1040
      %3282 = vmatpush1.bf16.msra.mxu0 %v1039
      %3283 = vmatprep.subr.bf16.mxu0 %v908
      %3284 = vmatpush1.bf16.msra.mxu0 %v907
      %3285 = vmatprep.subr.bf16.mxu0 %v776
      %3286 = vmatpush1.bf16.msra.mxu0 %v775
      %3287 = vmatprep.subr.bf16.mxu0 %v644
      %3288 = vmatpush1.bf16.msra.mxu0 %v643
      %3289 = vmatprep.subr.bf16.mxu0 %v512
      %3290 = vmatpush1.bf16.msra.mxu0 %v511
      %3291 = vmatprep.subr.bf16.mxu0 %v415
      %3292 = vmatpush1.bf16.msra.mxu0 %v414
      %3293 = vmatprep.subr.bf16.mxu0 %v2360
      %3294 = vmatpush2.bf16.msra.mxu0 %v2359
      %3295 = vmatprep.subr.bf16.mxu0 %v2228
      %3296 = vmatpush2.bf16.msra.mxu0 %v2227
      %3297 = vmatprep.subr.bf16.mxu0 %v2096
      %3298 = vmatpush2.bf16.msra.mxu0 %v2095
      %3299 = vmatprep.subr.bf16.mxu0 %v1964
      %3300 = vmatpush2.bf16.msra.mxu0 %v1963
      %3301 = vmatprep.subr.bf16.mxu0 %v1832
      %3302 = vmatpush2.bf16.msra.mxu0 %v1831
      %3303 = vmatprep.subr.bf16.mxu0 %v1700
      %3304 = vmatpush2.bf16.msra.mxu0 %v1699
      %3305 = vmatprep.subr.bf16.mxu0 %v1568
      %3306 = vmatpush2.bf16.msra.mxu0 %v1567
      %3307 = vmatprep.subr.bf16.mxu0 %v1436
      %3308 = vmatpush2.bf16.msra.mxu0 %v1435
      %3309 = vmatprep.mubr.bf16.mxu0 %v3009
      %3310 = vmatmul.mubr.bf16.gmra.mxu0 %v3008
      %v3311 = vpop.f32.mrf.mxu0
      %v3312 = vadd.f32 %v2989, %v3311
      %v3313 = vpop.f32.mrf.mxu0
      %v3314 = vadd.f32 %v2989, %v3313
      %v3315 = vpop.f32.mrf.mxu0
      %v3316 = vadd.f32 %v2994, %v3315
      %v3317 = vpop.f32.mrf.mxu0
      %v3318 = vadd.f32 %v2994, %v3317
      %3319 = vdwg.mxu0
      %3320 = vmatprep.subr.bf16.mxu0 %v777
      %3321 = vmatpush1.bf16.msra.mxu0 %v776
      %3322 = vmatprep.subr.bf16.mxu0 %v645
      %3323 = vmatpush1.bf16.msra.mxu0 %v644
      %3324 = vmatprep.subr.bf16.mxu0 %v513
      %3325 = vmatpush1.bf16.msra.mxu0 %v512
      %3326 = vmatprep.subr.bf16.mxu0 %v416
      %3327 = vmatpush1.bf16.msra.mxu0 %v415
      %3328 = vmatprep.subr.bf16.mxu0 %v2888
      %3329 = vmatpush1.bf16.msra.mxu0 %v2887
      %3330 = vmatprep.subr.bf16.mxu0 %v2756
      %3331 = vmatpush1.bf16.msra.mxu0 %v2755
      %3332 = vmatprep.subr.bf16.mxu0 %v2624
      %3333 = vmatpush1.bf16.msra.mxu0 %v2623
      %3334 = vmatprep.subr.bf16.mxu0 %v2492
      %3335 = vmatpush1.bf16.msra.mxu0 %v2491
      %3336 = vmatprep.subr.bf16.mxu0 0
      %3337 = vmatpush2.bf16.msra.mxu0 0
      %3338 = vmatprep.subr.bf16.mxu0 0
      %3339 = vmatpush2.bf16.msra.mxu0 0
      %3340 = vmatprep.subr.bf16.mxu0 0
      %3341 = vmatpush2.bf16.msra.mxu0 0
      %3342 = vmatprep.subr.bf16.mxu0 0
      %3343 = vmatpush2.bf16.msra.mxu0 0
      %3344 = vmatprep.subr.bf16.mxu0 0
      %3345 = vmatpush2.bf16.msra.mxu0 0
      %3346 = vmatprep.subr.bf16.mxu0 0
      %3347 = vmatpush2.bf16.msra.mxu0 0
      %3348 = vmatprep.subr.bf16.mxu0 0
      %3349 = vmatpush2.bf16.msra.mxu0 0
      %3350 = vmatprep.subr.bf16.mxu0 %v909
      %3351 = vmatpush2.bf16.msra.mxu0 %v908
      %3352 = vmatprep.mubr.bf16.mxu0 %v3017
      %3353 = vmatmul.mubr.bf16.gmra.mxu0 %v3010
      %v3354 = vpop.f32.mrf.mxu0
      %v3355 = vadd.f32 %v3312, %v3354
      %v3356 = vpop.f32.mrf.mxu0
      %v3357 = vadd.f32 %v3314, %v3356
      %v3358 = vpop.f32.mrf.mxu0
      %v3359 = vadd.f32 %v3316, %v3358
      %v3360 = vpop.f32.mrf.mxu0
      %v3361 = vadd.f32 %v3318, %v3360
      %3362 = vdwg.mxu0
      %3363 = vmatprep.subr.bf16.mxu0 %v1306
      %3364 = vmatpush1.bf16.msra.mxu0 %v1305
      %3365 = vmatprep.subr.bf16.mxu0 %v1174
      %3366 = vmatpush1.bf16.msra.mxu0 %v1173
      %3367 = vmatprep.subr.bf16.mxu0 %v1042
      %3368 = vmatpush1.bf16.msra.mxu0 %v1041
      %3369 = vmatprep.subr.bf16.mxu0 %v910
      %3370 = vmatpush1.bf16.msra.mxu0 %v909
      %3371 = vmatprep.subr.bf16.mxu0 %v778
      %3372 = vmatpush1.bf16.msra.mxu0 %v777
      %3373 = vmatprep.subr.bf16.mxu0 %v646
      %3374 = vmatpush1.bf16.msra.mxu0 %v645
      %3375 = vmatprep.subr.bf16.mxu0 %v514
      %3376 = vmatpush1.bf16.msra.mxu0 %v513
      %3377 = vmatprep.subr.bf16.mxu0 %v417
      %3378 = vmatpush1.bf16.msra.mxu0 %v416
      %3379 = vmatprep.subr.bf16.mxu0 %v2362
      %3380 = vmatpush2.bf16.msra.mxu0 %v2361
      %3381 = vmatprep.subr.bf16.mxu0 %v2230
      %3382 = vmatpush2.bf16.msra.mxu0 %v2229
      %3383 = vmatprep.subr.bf16.mxu0 %v2098
      %3384 = vmatpush2.bf16.msra.mxu0 %v2097
      %3385 = vmatprep.subr.bf16.mxu0 %v1966
      %3386 = vmatpush2.bf16.msra.mxu0 %v1965
      %3387 = vmatprep.subr.bf16.mxu0 %v1834
      %3388 = vmatpush2.bf16.msra.mxu0 %v1833
      %3389 = vmatprep.subr.bf16.mxu0 %v1702
      %3390 = vmatpush2.bf16.msra.mxu0 %v1701
      %3391 = vmatprep.subr.bf16.mxu0 %v1570
      %3392 = vmatpush2.bf16.msra.mxu0 %v1569
      %3393 = vmatprep.subr.bf16.mxu0 %v1438
      %3394 = vmatpush2.bf16.msra.mxu0 %v1437
      %3395 = vmatprep.mubr.bf16.mxu0 %v3009
      %3396 = vmatmul.mubr.bf16.gmra.mxu0 %v3008
      %v3397 = vpop.f32.mrf.mxu0
      %v3398 = vadd.f32 %v2989, %v3397
      %v3399 = vpop.f32.mrf.mxu0
      %v3400 = vadd.f32 %v2989, %v3399
      %v3401 = vpop.f32.mrf.mxu0
      %v3402 = vadd.f32 %v2994, %v3401
      %v3403 = vpop.f32.mrf.mxu0
      %v3404 = vadd.f32 %v2994, %v3403
      %3405 = vdwg.mxu0
      %3406 = vmatprep.subr.bf16.mxu0 %v779
      %3407 = vmatpush1.bf16.msra.mxu0 %v778
      %3408 = vmatprep.subr.bf16.mxu0 %v647
      %3409 = vmatpush1.bf16.msra.mxu0 %v646
      %3410 = vmatprep.subr.bf16.mxu0 %v515
      %3411 = vmatpush1.bf16.msra.mxu0 %v514
      %3412 = vmatprep.subr.bf16.mxu0 %v418
      %3413 = vmatpush1.bf16.msra.mxu0 %v417
      %3414 = vmatprep.subr.bf16.mxu0 %v2890
      %3415 = vmatpush1.bf16.msra.mxu0 %v2889
      %3416 = vmatprep.subr.bf16.mxu0 %v2758
      %3417 = vmatpush1.bf16.msra.mxu0 %v2757
      %3418 = vmatprep.subr.bf16.mxu0 %v2626
      %3419 = vmatpush1.bf16.msra.mxu0 %v2625
      %3420 = vmatprep.subr.bf16.mxu0 %v2494
      %3421 = vmatpush1.bf16.msra.mxu0 %v2493
      %3422 = vmatprep.subr.bf16.mxu0 0
      %3423 = vmatpush2.bf16.msra.mxu0 0
      %3424 = vmatprep.subr.bf16.mxu0 0
      %3425 = vmatpush2.bf16.msra.mxu0 0
      %3426 = vmatprep.subr.bf16.mxu0 0
      %3427 = vmatpush2.bf16.msra.mxu0 0
      %3428 = vmatprep.subr.bf16.mxu0 0
      %3429 = vmatpush2.bf16.msra.mxu0 0
      %3430 = vmatprep.subr.bf16.mxu0 0
      %3431 = vmatpush2.bf16.msra.mxu0 0
      %3432 = vmatprep.subr.bf16.mxu0 0
      %3433 = vmatpush2.bf16.msra.mxu0 0
      %3434 = vmatprep.subr.bf16.mxu0 0
      %3435 = vmatpush2.bf16.msra.mxu0 0
      %3436 = vmatprep.subr.bf16.mxu0 %v911
      %3437 = vmatpush2.bf16.msra.mxu0 %v910
      %3438 = vmatprep.mubr.bf16.mxu0 %v3017
      %3439 = vmatmul.mubr.bf16.gmra.mxu0 %v3010
      %v3440 = vpop.f32.mrf.mxu0
      %v3441 = vadd.f32 %v3398, %v3440
      %v3442 = vpop.f32.mrf.mxu0
      %v3443 = vadd.f32 %v3400, %v3442
      %v3444 = vpop.f32.mrf.mxu0
      %v3445 = vadd.f32 %v3402, %v3444
      %v3446 = vpop.f32.mrf.mxu0
      %v3447 = vadd.f32 %v3404, %v3446
      %3448 = vdwg.mxu0
      %3449 = vmatprep.subr.bf16.mxu0 %v1308
      %3450 = vmatpush1.bf16.msra.mxu0 %v1307
      %3451 = vmatprep.subr.bf16.mxu0 %v1176
      %3452 = vmatpush1.bf16.msra.mxu0 %v1175
      %3453 = vmatprep.subr.bf16.mxu0 %v1044
      %3454 = vmatpush1.bf16.msra.mxu0 %v1043
      %3455 = vmatprep.subr.bf16.mxu0 %v912
      %3456 = vmatpush1.bf16.msra.mxu0 %v911
      %3457 = vmatprep.subr.bf16.mxu0 %v780
      %3458 = vmatpush1.bf16.msra.mxu0 %v779
      %3459 = vmatprep.subr.bf16.mxu0 %v648
      %3460 = vmatpush1.bf16.msra.mxu0 %v647
      %3461 = vmatprep.subr.bf16.mxu0 %v516
      %3462 = vmatpush1.bf16.msra.mxu0 %v515
      %3463 = vmatprep.subr.bf16.mxu0 %v419
      %3464 = vmatpush1.bf16.msra.mxu0 %v418
      %3465 = vmatprep.subr.bf16.mxu0 %v2364
      %3466 = vmatpush2.bf16.msra.mxu0 %v2363
      %3467 = vmatprep.subr.bf16.mxu0 %v2232
      %3468 = vmatpush2.bf16.msra.mxu0 %v2231
      %3469 = vmatprep.subr.bf16.mxu0 %v2100
      %3470 = vmatpush2.bf16.msra.mxu0 %v2099
      %3471 = vmatprep.subr.bf16.mxu0 %v1968
      %3472 = vmatpush2.bf16.msra.mxu0 %v1967
      %3473 = vmatprep.subr.bf16.mxu0 %v1836
      %3474 = vmatpush2.bf16.msra.mxu0 %v1835
      %3475 = vmatprep.subr.bf16.mxu0 %v1704
      %3476 = vmatpush2.bf16.msra.mxu0 %v1703
      %3477 = vmatprep.subr.bf16.mxu0 %v1572
      %3478 = vmatpush2.bf16.msra.mxu0 %v1571
      %3479 = vmatprep.subr.bf16.mxu0 %v1440
      %3480 = vmatpush2.bf16.msra.mxu0 %v1439
      %3481 = vmatprep.mubr.bf16.mxu0 %v3009
      %3482 = vmatmul.mubr.bf16.gmra.mxu0 %v3008
      %v3483 = vpop.f32.mrf.mxu0
      %v3484 = vadd.f32 %v2989, %v3483
      %v3485 = vpop.f32.mrf.mxu0
      %v3486 = vadd.f32 %v2989, %v3485
      %v3487 = vpop.f32.mrf.mxu0
      %v3488 = vadd.f32 %v2994, %v3487
      %v3489 = vpop.f32.mrf.mxu0
      %v3490 = vadd.f32 %v2994, %v3489
      %3491 = vdwg.mxu0
      %3492 = vmatprep.subr.bf16.mxu0 %v781
      %3493 = vmatpush1.bf16.msra.mxu0 %v780
      %3494 = vmatprep.subr.bf16.mxu0 %v649
      %3495 = vmatpush1.bf16.msra.mxu0 %v648
      %3496 = vmatprep.subr.bf16.mxu0 %v517
      %3497 = vmatpush1.bf16.msra.mxu0 %v516
      %3498 = vmatprep.subr.bf16.mxu0 %v420
      %3499 = vmatpush1.bf16.msra.mxu0 %v419
      %3500 = vmatprep.subr.bf16.mxu0 %v2892
      %3501 = vmatpush1.bf16.msra.mxu0 %v2891
      %3502 = vmatprep.subr.bf16.mxu0 %v2760
      %3503 = vmatpush1.bf16.msra.mxu0 %v2759
      %3504 = vmatprep.subr.bf16.mxu0 %v2628
      %3505 = vmatpush1.bf16.msra.mxu0 %v2627
      %3506 = vmatprep.subr.bf16.mxu0 %v2496
      %3507 = vmatpush1.bf16.msra.mxu0 %v2495
      %3508 = vmatprep.subr.bf16.mxu0 0
      %3509 = vmatpush2.bf16.msra.mxu0 0
      %3510 = vmatprep.subr.bf16.mxu0 0
      %3511 = vmatpush2.bf16.msra.mxu0 0
      %3512 = vmatprep.subr.bf16.mxu0 0
      %3513 = vmatpush2.bf16.msra.mxu0 0
      %3514 = vmatprep.subr.bf16.mxu0 0
      %3515 = vmatpush2.bf16.msra.mxu0 0
      %3516 = vmatprep.subr.bf16.mxu0 0
      %3517 = vmatpush2.bf16.msra.mxu0 0
      %3518 = vmatprep.subr.bf16.mxu0 0
      %3519 = vmatpush2.bf16.msra.mxu0 0
      %3520 = vmatprep.subr.bf16.mxu0 0
      %3521 = vmatpush2.bf16.msra.mxu0 0
      %3522 = vmatprep.subr.bf16.mxu0 %v913
      %3523 = vmatpush2.bf16.msra.mxu0 %v912
      %3524 = vmatprep.mubr.bf16.mxu0 %v3017
      %3525 = vmatmul.mubr.bf16.gmra.mxu0 %v3010
      %v3526 = vpop.f32.mrf.mxu0
      %v3527 = vadd.f32 %v3484, %v3526
      %v3528 = vpop.f32.mrf.mxu0
      %v3529 = vadd.f32 %v3486, %v3528
      %v3530 = vpop.f32.mrf.mxu0
      %v3531 = vadd.f32 %v3488, %v3530
      %v3532 = vpop.f32.mrf.mxu0
      %v3533 = vadd.f32 %v3490, %v3532
      %3534 = vdwg.mxu0
      %3535 = vmatprep.subr.bf16.mxu0 %v1310
      %3536 = vmatpush1.bf16.msra.mxu0 %v1309
      %3537 = vmatprep.subr.bf16.mxu0 %v1178
      %3538 = vmatpush1.bf16.msra.mxu0 %v1177
      %3539 = vmatprep.subr.bf16.mxu0 %v1046
      %3540 = vmatpush1.bf16.msra.mxu0 %v1045
      %3541 = vmatprep.subr.bf16.mxu0 %v914
      %3542 = vmatpush1.bf16.msra.mxu0 %v913
      %3543 = vmatprep.subr.bf16.mxu0 %v782
      %3544 = vmatpush1.bf16.msra.mxu0 %v781
      %3545 = vmatprep.subr.bf16.mxu0 %v650
      %3546 = vmatpush1.bf16.msra.mxu0 %v649
      %3547 = vmatprep.subr.bf16.mxu0 %v518
      %3548 = vmatpush1.bf16.msra.mxu0 %v517
      %3549 = vmatprep.subr.bf16.mxu0 %v421
      %3550 = vmatpush1.bf16.msra.mxu0 %v420
      %3551 = vmatprep.subr.bf16.mxu0 %v2366
      %3552 = vmatpush2.bf16.msra.mxu0 %v2365
      %3553 = vmatprep.subr.bf16.mxu0 %v2234
      %3554 = vmatpush2.bf16.msra.mxu0 %v2233
      %3555 = vmatprep.subr.bf16.mxu0 %v2102
      %3556 = vmatpush2.bf16.msra.mxu0 %v2101
      %3557 = vmatprep.subr.bf16.mxu0 %v1970
      %3558 = vmatpush2.bf16.msra.mxu0 %v1969
      %3559 = vmatprep.subr.bf16.mxu0 %v1838
      %3560 = vmatpush2.bf16.msra.mxu0 %v1837
      %3561 = vmatprep.subr.bf16.mxu0 %v1706
      %3562 = vmatpush2.bf16.msra.mxu0 %v1705
      %3563 = vmatprep.subr.bf16.mxu0 %v1574
      %3564 = vmatpush2.bf16.msra.mxu0 %v1573
      %3565 = vmatprep.subr.bf16.mxu0 %v1442
      %3566 = vmatpush2.bf16.msra.mxu0 %v1441
      %3567 = vmatprep.mubr.bf16.mxu0 %v3009
      %3568 = vmatmul.mubr.bf16.gmra.mxu0 %v3008
      %v3569 = vpop.f32.mrf.mxu0
      %v3570 = vadd.f32 %v2989, %v3569
      %v3571 = vpop.f32.mrf.mxu0
      %v3572 = vadd.f32 %v2989, %v3571
      %v3573 = vpop.f32.mrf.mxu0
      %v3574 = vadd.f32 %v2994, %v3573
      %v3575 = vpop.f32.mrf.mxu0
      %v3576 = vadd.f32 %v2994, %v3575
      %3577 = vdwg.mxu0
      %3578 = vmatprep.subr.bf16.mxu0 %v783
      %3579 = vmatpush1.bf16.msra.mxu0 %v782
      %3580 = vmatprep.subr.bf16.mxu0 %v651
      %3581 = vmatpush1.bf16.msra.mxu0 %v650
      %3582 = vmatprep.subr.bf16.mxu0 %v519
      %3583 = vmatpush1.bf16.msra.mxu0 %v518
      %3584 = vmatprep.subr.bf16.mxu0 %v422
      %3585 = vmatpush1.bf16.msra.mxu0 %v421
      %3586 = vmatprep.subr.bf16.mxu0 %v2894
      %3587 = vmatpush1.bf16.msra.mxu0 %v2893
      %3588 = vmatprep.subr.bf16.mxu0 %v2762
      %3589 = vmatpush1.bf16.msra.mxu0 %v2761
      %3590 = vmatprep.subr.bf16.mxu0 %v2630
      %3591 = vmatpush1.bf16.msra.mxu0 %v2629
      %3592 = vmatprep.subr.bf16.mxu0 %v2498
      %3593 = vmatpush1.bf16.msra.mxu0 %v2497
      %3594 = vmatprep.subr.bf16.mxu0 0
      %3595 = vmatpush2.bf16.msra.mxu0 0
      %3596 = vmatprep.subr.bf16.mxu0 0
      %3597 = vmatpush2.bf16.msra.mxu0 0
      %3598 = vmatprep.subr.bf16.mxu0 0
      %3599 = vmatpush2.bf16.msra.mxu0 0
      %3600 = vmatprep.subr.bf16.mxu0 0
      %3601 = vmatpush2.bf16.msra.mxu0 0
      %3602 = vmatprep.subr.bf16.mxu0 0
      %3603 = vmatpush2.bf16.msra.mxu0 0
      %3604 = vmatprep.subr.bf16.mxu0 0
      %3605 = vmatpush2.bf16.msra.mxu0 0
      %3606 = vmatprep.subr.bf16.mxu0 0
      %3607 = vmatpush2.bf16.msra.mxu0 0
      %3608 = vmatprep.subr.bf16.mxu0 %v915
      %3609 = vmatpush2.bf16.msra.mxu0 %v914
      %3610 = vmatprep.mubr.bf16.mxu0 %v3017
      %3611 = vmatmul.mubr.bf16.gmra.mxu0 %v3010
      %v3612 = vpop.f32.mrf.mxu0
      %v3613 = vadd.f32 %v3570, %v3612
      %v3614 = vpop.f32.mrf.mxu0
      %v3615 = vadd.f32 %v3572, %v3614
      %v3616 = vpop.f32.mrf.mxu0
      %v3617 = vadd.f32 %v3574, %v3616
      %v3618 = vpop.f32.mrf.mxu0
      %v3619 = vadd.f32 %v3576, %v3618
      %3620 = vdwg.mxu0
      %3621 = vmatprep.subr.bf16.mxu0 %v1312
      %3622 = vmatpush1.bf16.msra.mxu0 %v1311
      %3623 = vmatprep.subr.bf16.mxu0 %v1180
      %3624 = vmatpush1.bf16.msra.mxu0 %v1179
      %3625 = vmatprep.subr.bf16.mxu0 %v1048
      %3626 = vmatpush1.bf16.msra.mxu0 %v1047
      %3627 = vmatprep.subr.bf16.mxu0 %v916
      %3628 = vmatpush1.bf16.msra.mxu0 %v915
      %3629 = vmatprep.subr.bf16.mxu0 %v784
      %3630 = vmatpush1.bf16.msra.mxu0 %v783
      %3631 = vmatprep.subr.bf16.mxu0 %v652
      %3632 = vmatpush1.bf16.msra.mxu0 %v651
      %3633 = vmatprep.subr.bf16.mxu0 %v520
      %3634 = vmatpush1.bf16.msra.mxu0 %v519
      %3635 = vmatprep.subr.bf16.mxu0 %v423
      %3636 = vmatpush1.bf16.msra.mxu0 %v422
      %3637 = vmatprep.subr.bf16.mxu0 %v2368
      %3638 = vmatpush2.bf16.msra.mxu0 %v2367
      %3639 = vmatprep.subr.bf16.mxu0 %v2236
      %3640 = vmatpush2.bf16.msra.mxu0 %v2235
      %3641 = vmatprep.subr.bf16.mxu0 %v2104
      %3642 = vmatpush2.bf16.msra.mxu0 %v2103
      %3643 = vmatprep.subr.bf16.mxu0 %v1972
      %3644 = vmatpush2.bf16.msra.mxu0 %v1971
      %3645 = vmatprep.subr.bf16.mxu0 %v1840
      %3646 = vmatpush2.bf16.msra.mxu0 %v1839
      %3647 = vmatprep.subr.bf16.mxu0 %v1708
      %3648 = vmatpush2.bf16.msra.mxu0 %v1707
      %3649 = vmatprep.subr.bf16.mxu0 %v1576
      %3650 = vmatpush2.bf16.msra.mxu0 %v1575
      %3651 = vmatprep.subr.bf16.mxu0 %v1444
      %3652 = vmatpush2.bf16.msra.mxu0 %v1443
      %3653 = vmatprep.mubr.bf16.mxu0 %v3009
      %3654 = vmatmul.mubr.bf16.gmra.mxu0 %v3008
      %v3655 = vpop.f32.mrf.mxu0
      %v3656 = vadd.f32 %v2989, %v3655
      %v3657 = vpop.f32.mrf.mxu0
      %v3658 = vadd.f32 %v2989, %v3657
      %v3659 = vpop.f32.mrf.mxu0
      %v3660 = vadd.f32 %v2994, %v3659
      %v3661 = vpop.f32.mrf.mxu0
      %v3662 = vadd.f32 %v2994, %v3661
      %3663 = vdwg.mxu0
      %3664 = vmatprep.subr.bf16.mxu0 %v785
      %3665 = vmatpush1.bf16.msra.mxu0 %v784
      %3666 = vmatprep.subr.bf16.mxu0 %v653
      %3667 = vmatpush1.bf16.msra.mxu0 %v652
      %3668 = vmatprep.subr.bf16.mxu0 %v521
      %3669 = vmatpush1.bf16.msra.mxu0 %v520
      %3670 = vmatprep.subr.bf16.mxu0 %v424
      %3671 = vmatpush1.bf16.msra.mxu0 %v423
      %3672 = vmatprep.subr.bf16.mxu0 %v2896
      %3673 = vmatpush1.bf16.msra.mxu0 %v2895
      %3674 = vmatprep.subr.bf16.mxu0 %v2764
      %3675 = vmatpush1.bf16.msra.mxu0 %v2763
      %3676 = vmatprep.subr.bf16.mxu0 %v2632
      %3677 = vmatpush1.bf16.msra.mxu0 %v2631
      %3678 = vmatprep.subr.bf16.mxu0 %v2500
      %3679 = vmatpush1.bf16.msra.mxu0 %v2499
      %3680 = vmatprep.subr.bf16.mxu0 0
      %3681 = vmatpush2.bf16.msra.mxu0 0
      %3682 = vmatprep.subr.bf16.mxu0 0
      %3683 = vmatpush2.bf16.msra.mxu0 0
      %3684 = vmatprep.subr.bf16.mxu0 0
      %3685 = vmatpush2.bf16.msra.mxu0 0
      %3686 = vmatprep.subr.bf16.mxu0 0
      %3687 = vmatpush2.bf16.msra.mxu0 0
      %3688 = vmatprep.subr.bf16.mxu0 0
      %3689 = vmatpush2.bf16.msra.mxu0 0
      %3690 = vmatprep.subr.bf16.mxu0 0
      %3691 = vmatpush2.bf16.msra.mxu0 0
      %3692 = vmatprep.subr.bf16.mxu0 0
      %3693 = vmatpush2.bf16.msra.mxu0 0
      %3694 = vmatprep.subr.bf16.mxu0 %v917
      %3695 = vmatpush2.bf16.msra.mxu0 %v916
      %3696 = vmatprep.mubr.bf16.mxu0 %v3017
      %3697 = vmatmul.mubr.bf16.gmra.mxu0 %v3010
      %v3698 = vpop.f32.mrf.mxu0
      %v3699 = vadd.f32 %v3656, %v3698
      %v3700 = vpop.f32.mrf.mxu0
      %v3701 = vadd.f32 %v3658, %v3700
      %v3702 = vpop.f32.mrf.mxu0
      %v3703 = vadd.f32 %v3660, %v3702
      %v3704 = vpop.f32.mrf.mxu0
      %v3705 = vadd.f32 %v3662, %v3704
      %3706 = vdwg.mxu0
      %3707 = vmatprep.subr.bf16.mxu0 %v1314
      %3708 = vmatpush1.bf16.msra.mxu0 %v1313
      %3709 = vmatprep.subr.bf16.mxu0 %v1182
      %3710 = vmatpush1.bf16.msra.mxu0 %v1181
      %3711 = vmatprep.subr.bf16.mxu0 %v1050
      %3712 = vmatpush1.bf16.msra.mxu0 %v1049
      %3713 = vmatprep.subr.bf16.mxu0 %v918
      %3714 = vmatpush1.bf16.msra.mxu0 %v917
      %3715 = vmatprep.subr.bf16.mxu0 %v786
      %3716 = vmatpush1.bf16.msra.mxu0 %v785
      %3717 = vmatprep.subr.bf16.mxu0 %v654
      %3718 = vmatpush1.bf16.msra.mxu0 %v653
      %3719 = vmatprep.subr.bf16.mxu0 %v522
      %3720 = vmatpush1.bf16.msra.mxu0 %v521
      %3721 = vmatprep.subr.bf16.mxu0 %v425
      %3722 = vmatpush1.bf16.msra.mxu0 %v424
      %3723 = vmatprep.subr.bf16.mxu0 %v2370
      %3724 = vmatpush2.bf16.msra.mxu0 %v2369
      %3725 = vmatprep.subr.bf16.mxu0 %v2238
      %3726 = vmatpush2.bf16.msra.mxu0 %v2237
      %3727 = vmatprep.subr.bf16.mxu0 %v2106
      %3728 = vmatpush2.bf16.msra.mxu0 %v2105
      %3729 = vmatprep.subr.bf16.mxu0 %v1974
      %3730 = vmatpush2.bf16.msra.mxu0 %v1973
      %3731 = vmatprep.subr.bf16.mxu0 %v1842
      %3732 = vmatpush2.bf16.msra.mxu0 %v1841
      %3733 = vmatprep.subr.bf16.mxu0 %v1710
      %3734 = vmatpush2.bf16.msra.mxu0 %v1709
      %3735 = vmatprep.subr.bf16.mxu0 %v1578
      %3736 = vmatpush2.bf16.msra.mxu0 %v1577
      %3737 = vmatprep.subr.bf16.mxu0 %v1446
      %3738 = vmatpush2.bf16.msra.mxu0 %v1445
      %3739 = vmatprep.mubr.bf16.mxu0 %v3009
      %3740 = vmatmul.mubr.bf16.gmra.mxu0 %v3008
      %v3741 = vpop.f32.mrf.mxu0
      %v3742 = vadd.f32 %v2989, %v3741
      %v3743 = vpop.f32.mrf.mxu0
      %v3744 = vadd.f32 %v2989, %v3743
      %v3745 = vpop.f32.mrf.mxu0
      %v3746 = vadd.f32 %v2994, %v3745
      %v3747 = vpop.f32.mrf.mxu0
      %v3748 = vadd.f32 %v2994, %v3747
      %3749 = vdwg.mxu0
      %3750 = vmatprep.subr.bf16.mxu0 %v787
      %3751 = vmatpush1.bf16.msra.mxu0 %v786
      %3752 = vmatprep.subr.bf16.mxu0 %v655
      %3753 = vmatpush1.bf16.msra.mxu0 %v654
      %3754 = vmatprep.subr.bf16.mxu0 %v523
      %3755 = vmatpush1.bf16.msra.mxu0 %v522
      %3756 = vmatprep.subr.bf16.mxu0 %v426
      %3757 = vmatpush1.bf16.msra.mxu0 %v425
      %3758 = vmatprep.subr.bf16.mxu0 %v2898
      %3759 = vmatpush1.bf16.msra.mxu0 %v2897
      %3760 = vmatprep.subr.bf16.mxu0 %v2766
      %3761 = vmatpush1.bf16.msra.mxu0 %v2765
      %3762 = vmatprep.subr.bf16.mxu0 %v2634
      %3763 = vmatpush1.bf16.msra.mxu0 %v2633
      %3764 = vmatprep.subr.bf16.mxu0 %v2502
      %3765 = vmatpush1.bf16.msra.mxu0 %v2501
      %3766 = vmatprep.subr.bf16.mxu0 0
      %3767 = vmatpush2.bf16.msra.mxu0 0
      %3768 = vmatprep.subr.bf16.mxu0 0
      %3769 = vmatpush2.bf16.msra.mxu0 0
      %3770 = vmatprep.subr.bf16.mxu0 0
      %3771 = vmatpush2.bf16.msra.mxu0 0
      %3772 = vmatprep.subr.bf16.mxu0 0
      %3773 = vmatpush2.bf16.msra.mxu0 0
      %3774 = vmatprep.subr.bf16.mxu0 0
      %3775 = vmatpush2.bf16.msra.mxu0 0
      %3776 = vmatprep.subr.bf16.mxu0 0
      %3777 = vmatpush2.bf16.msra.mxu0 0
      %3778 = vmatprep.subr.bf16.mxu0 0
      %3779 = vmatpush2.bf16.msra.mxu0 0
      %3780 = vmatprep.subr.bf16.mxu0 %v919
      %3781 = vmatpush2.bf16.msra.mxu0 %v918
      %3782 = vmatprep.mubr.bf16.mxu0 %v3017
      %3783 = vmatmul.mubr.bf16.gmra.mxu0 %v3010
      %v3784 = vpop.f32.mrf.mxu0
      %v3785 = vadd.f32 %v3742, %v3784
      %v3786 = vpop.f32.mrf.mxu0
      %v3787 = vadd.f32 %v3744, %v3786
      %v3788 = vpop.f32.mrf.mxu0
      %v3789 = vadd.f32 %v3746, %v3788
      %v3790 = vpop.f32.mrf.mxu0
      %v3791 = vadd.f32 %v3748, %v3790
      %3792 = vdwg.mxu0
      %3793 = vmatprep.subr.bf16.mxu0 %v1316
      %3794 = vmatpush1.bf16.msra.mxu0 %v1315
      %3795 = vmatprep.subr.bf16.mxu0 %v1184
      %3796 = vmatpush1.bf16.msra.mxu0 %v1183
      %3797 = vmatprep.subr.bf16.mxu0 %v1052
      %3798 = vmatpush1.bf16.msra.mxu0 %v1051
      %3799 = vmatprep.subr.bf16.mxu0 %v920
      %3800 = vmatpush1.bf16.msra.mxu0 %v919
      %3801 = vmatprep.subr.bf16.mxu0 %v788
      %3802 = vmatpush1.bf16.msra.mxu0 %v787
      %3803 = vmatprep.subr.bf16.mxu0 %v656
      %3804 = vmatpush1.bf16.msra.mxu0 %v655
      %3805 = vmatprep.subr.bf16.mxu0 %v524
      %3806 = vmatpush1.bf16.msra.mxu0 %v523
      %3807 = vmatprep.subr.bf16.mxu0 %v427
      %3808 = vmatpush1.bf16.msra.mxu0 %v426
      %3809 = vmatprep.subr.bf16.mxu0 %v2372
      %3810 = vmatpush2.bf16.msra.mxu0 %v2371
      %3811 = vmatprep.subr.bf16.mxu0 %v2240
      %3812 = vmatpush2.bf16.msra.mxu0 %v2239
      %3813 = vmatprep.subr.bf16.mxu0 %v2108
      %3814 = vmatpush2.bf16.msra.mxu0 %v2107
      %3815 = vmatprep.subr.bf16.mxu0 %v1976
      %3816 = vmatpush2.bf16.msra.mxu0 %v1975
      %3817 = vmatprep.subr.bf16.mxu0 %v1844
      %3818 = vmatpush2.bf16.msra.mxu0 %v1843
      %3819 = vmatprep.subr.bf16.mxu0 %v1712
      %3820 = vmatpush2.bf16.msra.mxu0 %v1711
      %3821 = vmatprep.subr.bf16.mxu0 %v1580
      %3822 = vmatpush2.bf16.msra.mxu0 %v1579
      %3823 = vmatprep.subr.bf16.mxu0 %v1448
      %3824 = vmatpush2.bf16.msra.mxu0 %v1447
      %3825 = vmatprep.mubr.bf16.mxu0 %v3009
      %3826 = vmatmul.mubr.bf16.gmra.mxu0 %v3008
      %v3827 = vpop.f32.mrf.mxu0
      %v3828 = vadd.f32 %v2989, %v3827
      %v3829 = vpop.f32.mrf.mxu0
      %v3830 = vadd.f32 %v2989, %v3829
      %v3831 = vpop.f32.mrf.mxu0
      %v3832 = vadd.f32 %v2994, %v3831
      %v3833 = vpop.f32.mrf.mxu0
      %v3834 = vadd.f32 %v2994, %v3833
      %3835 = vdwg.mxu0
      %3836 = vmatprep.subr.bf16.mxu0 %v789
      %3837 = vmatpush1.bf16.msra.mxu0 %v788
      %3838 = vmatprep.subr.bf16.mxu0 %v657
      %3839 = vmatpush1.bf16.msra.mxu0 %v656
      %3840 = vmatprep.subr.bf16.mxu0 %v525
      %3841 = vmatpush1.bf16.msra.mxu0 %v524
      %3842 = vmatprep.subr.bf16.mxu0 %v428
      %3843 = vmatpush1.bf16.msra.mxu0 %v427
      %3844 = vmatprep.subr.bf16.mxu0 %v2900
      %3845 = vmatpush1.bf16.msra.mxu0 %v2899
      %3846 = vmatprep.subr.bf16.mxu0 %v2768
      %3847 = vmatpush1.bf16.msra.mxu0 %v2767
      %3848 = vmatprep.subr.bf16.mxu0 %v2636
      %3849 = vmatpush1.bf16.msra.mxu0 %v2635
      %3850 = vmatprep.subr.bf16.mxu0 %v2504
      %3851 = vmatpush1.bf16.msra.mxu0 %v2503
      %3852 = vmatprep.subr.bf16.mxu0 0
      %3853 = vmatpush2.bf16.msra.mxu0 0
      %3854 = vmatprep.subr.bf16.mxu0 0
      %3855 = vmatpush2.bf16.msra.mxu0 0
      %3856 = vmatprep.subr.bf16.mxu0 0
      %3857 = vmatpush2.bf16.msra.mxu0 0
      %3858 = vmatprep.subr.bf16.mxu0 0
      %3859 = vmatpush2.bf16.msra.mxu0 0
      %3860 = vmatprep.subr.bf16.mxu0 0
      %3861 = vmatpush2.bf16.msra.mxu0 0
      %3862 = vmatprep.subr.bf16.mxu0 0
      %3863 = vmatpush2.bf16.msra.mxu0 0
      %3864 = vmatprep.subr.bf16.mxu0 0
      %3865 = vmatpush2.bf16.msra.mxu0 0
      %3866 = vmatprep.subr.bf16.mxu0 %v921
      %3867 = vmatpush2.bf16.msra.mxu0 %v920
      %3868 = vmatprep.mubr.bf16.mxu0 %v3017
      %3869 = vmatmul.mubr.bf16.gmra.mxu0 %v3010
      %v3870 = vpop.f32.mrf.mxu0
      %v3871 = vadd.f32 %v3828, %v3870
      %v3872 = vpop.f32.mrf.mxu0
      %v3873 = vadd.f32 %v3830, %v3872
      %v3874 = vpop.f32.mrf.mxu0
      %v3875 = vadd.f32 %v3832, %v3874
      %v3876 = vpop.f32.mrf.mxu0
      %v3877 = vadd.f32 %v3834, %v3876
      %3878 = vdwg.mxu0
      %3879 = vmatprep.subr.bf16.mxu0 %v1318
      %3880 = vmatpush1.bf16.msra.mxu0 %v1317
      %3881 = vmatprep.subr.bf16.mxu0 %v1186
      %3882 = vmatpush1.bf16.msra.mxu0 %v1185
      %3883 = vmatprep.subr.bf16.mxu0 %v1054
      %3884 = vmatpush1.bf16.msra.mxu0 %v1053
      %3885 = vmatprep.subr.bf16.mxu0 %v922
      %3886 = vmatpush1.bf16.msra.mxu0 %v921
      %3887 = vmatprep.subr.bf16.mxu0 %v790
      %3888 = vmatpush1.bf16.msra.mxu0 %v789
      %3889 = vmatprep.subr.bf16.mxu0 %v658
      %3890 = vmatpush1.bf16.msra.mxu0 %v657
      %3891 = vmatprep.subr.bf16.mxu0 %v526
      %3892 = vmatpush1.bf16.msra.mxu0 %v525
      %3893 = vmatprep.subr.bf16.mxu0 %v429
      %3894 = vmatpush1.bf16.msra.mxu0 %v428
      %3895 = vmatprep.subr.bf16.mxu0 %v2374
      %3896 = vmatpush2.bf16.msra.mxu0 %v2373
      %3897 = vmatprep.subr.bf16.mxu0 %v2242
      %3898 = vmatpush2.bf16.msra.mxu0 %v2241
      %3899 = vmatprep.subr.bf16.mxu0 %v2110
      %3900 = vmatpush2.bf16.msra.mxu0 %v2109
      %3901 = vmatprep.subr.bf16.mxu0 %v1978
      %3902 = vmatpush2.bf16.msra.mxu0 %v1977
      %3903 = vmatprep.subr.bf16.mxu0 %v1846
      %3904 = vmatpush2.bf16.msra.mxu0 %v1845
      %3905 = vmatprep.subr.bf16.mxu0 %v1714
      %3906 = vmatpush2.bf16.msra.mxu0 %v1713
      %3907 = vmatprep.subr.bf16.mxu0 %v1582
      %3908 = vmatpush2.bf16.msra.mxu0 %v1581
      %3909 = vmatprep.subr.bf16.mxu0 %v1450
      %3910 = vmatpush2.bf16.msra.mxu0 %v1449
      %3911 = vmatprep.mubr.bf16.mxu0 %v3009
      %3912 = vmatmul.mubr.bf16.gmra.mxu0 %v3008
      %v3913 = vpop.f32.mrf.mxu0
      %v3914 = vadd.f32 %v2989, %v3913
      %v3915 = vpop.f32.mrf.mxu0
      %v3916 = vadd.f32 %v2989, %v3915
      %v3917 = vpop.f32.mrf.mxu0
      %v3918 = vadd.f32 %v2994, %v3917
      %v3919 = vpop.f32.mrf.mxu0
      %v3920 = vadd.f32 %v2994, %v3919
      %3921 = vdwg.mxu0
      %3922 = vmatprep.subr.bf16.mxu0 %v791
      %3923 = vmatpush1.bf16.msra.mxu0 %v790
      %3924 = vmatprep.subr.bf16.mxu0 %v659
      %3925 = vmatpush1.bf16.msra.mxu0 %v658
      %3926 = vmatprep.subr.bf16.mxu0 %v527
      %3927 = vmatpush1.bf16.msra.mxu0 %v526
      %3928 = vmatprep.subr.bf16.mxu0 %v430
      %3929 = vmatpush1.bf16.msra.mxu0 %v429
      %3930 = vmatprep.subr.bf16.mxu0 %v2902
      %3931 = vmatpush1.bf16.msra.mxu0 %v2901
      %3932 = vmatprep.subr.bf16.mxu0 %v2770
      %3933 = vmatpush1.bf16.msra.mxu0 %v2769
      %3934 = vmatprep.subr.bf16.mxu0 %v2638
      %3935 = vmatpush1.bf16.msra.mxu0 %v2637
      %3936 = vmatprep.subr.bf16.mxu0 %v2506
      %3937 = vmatpush1.bf16.msra.mxu0 %v2505
      %3938 = vmatprep.subr.bf16.mxu0 0
      %3939 = vmatpush2.bf16.msra.mxu0 0
      %3940 = vmatprep.subr.bf16.mxu0 0
      %3941 = vmatpush2.bf16.msra.mxu0 0
      %3942 = vmatprep.subr.bf16.mxu0 0
      %3943 = vmatpush2.bf16.msra.mxu0 0
      %3944 = vmatprep.subr.bf16.mxu0 0
      %3945 = vmatpush2.bf16.msra.mxu0 0
      %3946 = vmatprep.subr.bf16.mxu0 0
      %3947 = vmatpush2.bf16.msra.mxu0 0
      %3948 = vmatprep.subr.bf16.mxu0 0
      %3949 = vmatpush2.bf16.msra.mxu0 0
      %3950 = vmatprep.subr.bf16.mxu0 0
      %3951 = vmatpush2.bf16.msra.mxu0 0
      %3952 = vmatprep.subr.bf16.mxu0 %v923
      %3953 = vmatpush2.bf16.msra.mxu0 %v922
      %3954 = vmatprep.mubr.bf16.mxu0 %v3017
      %3955 = vmatmul.mubr.bf16.gmra.mxu0 %v3010
      %v3956 = vpop.f32.mrf.mxu0
      %v3957 = vadd.f32 %v3914, %v3956
      %v3958 = vpop.f32.mrf.mxu0
      %v3959 = vadd.f32 %v3916, %v3958
      %v3960 = vpop.f32.mrf.mxu0
      %v3961 = vadd.f32 %v3918, %v3960
      %v3962 = vpop.f32.mrf.mxu0
      %v3963 = vadd.f32 %v3920, %v3962
      %3964 = vdwg.mxu0
      %3965 = vmatprep.subr.bf16.mxu0 %v1320
      %3966 = vmatpush1.bf16.msra.mxu0 %v1319
      %3967 = vmatprep.subr.bf16.mxu0 %v1188
      %3968 = vmatpush1.bf16.msra.mxu0 %v1187
      %3969 = vmatprep.subr.bf16.mxu0 %v1056
      %3970 = vmatpush1.bf16.msra.mxu0 %v1055
      %3971 = vmatprep.subr.bf16.mxu0 %v924
      %3972 = vmatpush1.bf16.msra.mxu0 %v923
      %3973 = vmatprep.subr.bf16.mxu0 %v792
      %3974 = vmatpush1.bf16.msra.mxu0 %v791
      %3975 = vmatprep.subr.bf16.mxu0 %v660
      %3976 = vmatpush1.bf16.msra.mxu0 %v659
      %3977 = vmatprep.subr.bf16.mxu0 %v528
      %3978 = vmatpush1.bf16.msra.mxu0 %v527
      %3979 = vmatprep.subr.bf16.mxu0 %v431
      %3980 = vmatpush1.bf16.msra.mxu0 %v430
      %3981 = vmatprep.subr.bf16.mxu0 %v2376
      %3982 = vmatpush2.bf16.msra.mxu0 %v2375
      %3983 = vmatprep.subr.bf16.mxu0 %v2244
      %3984 = vmatpush2.bf16.msra.mxu0 %v2243
      %3985 = vmatprep.subr.bf16.mxu0 %v2112
      %3986 = vmatpush2.bf16.msra.mxu0 %v2111
      %3987 = vmatprep.subr.bf16.mxu0 %v1980
      %3988 = vmatpush2.bf16.msra.mxu0 %v1979
      %3989 = vmatprep.subr.bf16.mxu0 %v1848
      %3990 = vmatpush2.bf16.msra.mxu0 %v1847
      %3991 = vmatprep.subr.bf16.mxu0 %v1716
      %3992 = vmatpush2.bf16.msra.mxu0 %v1715
      %3993 = vmatprep.subr.bf16.mxu0 %v1584
      %3994 = vmatpush2.bf16.msra.mxu0 %v1583
      %3995 = vmatprep.subr.bf16.mxu0 %v1452
      %3996 = vmatpush2.bf16.msra.mxu0 %v1451
      %3997 = vmatprep.mubr.bf16.mxu0 %v3009
      %3998 = vmatmul.mubr.bf16.gmra.mxu0 %v3008
      %v3999 = vpop.f32.mrf.mxu0
      %v4000 = vadd.f32 %v2989, %v3999
      %v4001 = vpop.f32.mrf.mxu0
      %v4002 = vadd.f32 %v2989, %v4001
      %v4003 = vpop.f32.mrf.mxu0
      %v4004 = vadd.f32 %v2994, %v4003
      %v4005 = vpop.f32.mrf.mxu0
      %v4006 = vadd.f32 %v2994, %v4005
      %4007 = vdwg.mxu0
      %4008 = vmatprep.subr.bf16.mxu0 %v793
      %4009 = vmatpush1.bf16.msra.mxu0 %v792
      %4010 = vmatprep.subr.bf16.mxu0 %v661
      %4011 = vmatpush1.bf16.msra.mxu0 %v660
      %4012 = vmatprep.subr.bf16.mxu0 %v529
      %4013 = vmatpush1.bf16.msra.mxu0 %v528
      %4014 = vmatprep.subr.bf16.mxu0 %v432
      %4015 = vmatpush1.bf16.msra.mxu0 %v431
      %4016 = vmatprep.subr.bf16.mxu0 %v2904
      %4017 = vmatpush1.bf16.msra.mxu0 %v2903
      %4018 = vmatprep.subr.bf16.mxu0 %v2772
      %4019 = vmatpush1.bf16.msra.mxu0 %v2771
      %4020 = vmatprep.subr.bf16.mxu0 %v2640
      %4021 = vmatpush1.bf16.msra.mxu0 %v2639
      %4022 = vmatprep.subr.bf16.mxu0 %v2508
      %4023 = vmatpush1.bf16.msra.mxu0 %v2507
      %4024 = vmatprep.subr.bf16.mxu0 0
      %4025 = vmatpush2.bf16.msra.mxu0 0
      %4026 = vmatprep.subr.bf16.mxu0 0
      %4027 = vmatpush2.bf16.msra.mxu0 0
      %4028 = vmatprep.subr.bf16.mxu0 0
      %4029 = vmatpush2.bf16.msra.mxu0 0
      %4030 = vmatprep.subr.bf16.mxu0 0
      %4031 = vmatpush2.bf16.msra.mxu0 0
      %4032 = vmatprep.subr.bf16.mxu0 0
      %4033 = vmatpush2.bf16.msra.mxu0 0
      %4034 = vmatprep.subr.bf16.mxu0 0
      %4035 = vmatpush2.bf16.msra.mxu0 0
      %4036 = vmatprep.subr.bf16.mxu0 0
      %4037 = vmatpush2.bf16.msra.mxu0 0
      %4038 = vmatprep.subr.bf16.mxu0 %v925
      %4039 = vmatpush2.bf16.msra.mxu0 %v924
      %4040 = vmatprep.mubr.bf16.mxu0 %v3017
      %4041 = vmatmul.mubr.bf16.gmra.mxu0 %v3010
      %v4042 = vpop.f32.mrf.mxu0
      %v4043 = vadd.f32 %v4000, %v4042
      %v4044 = vpop.f32.mrf.mxu0
      %v4045 = vadd.f32 %v4002, %v4044
      %v4046 = vpop.f32.mrf.mxu0
      %v4047 = vadd.f32 %v4004, %v4046
      %v4048 = vpop.f32.mrf.mxu0
      %v4049 = vadd.f32 %v4006, %v4048
      %4050 = vdwg.mxu0
      %4051 = vmatprep.subr.bf16.mxu0 %v1322
      %4052 = vmatpush1.bf16.msra.mxu0 %v1321
      %4053 = vmatprep.subr.bf16.mxu0 %v1190
      %4054 = vmatpush1.bf16.msra.mxu0 %v1189
      %4055 = vmatprep.subr.bf16.mxu0 %v1058
      %4056 = vmatpush1.bf16.msra.mxu0 %v1057
      %4057 = vmatprep.subr.bf16.mxu0 %v926
      %4058 = vmatpush1.bf16.msra.mxu0 %v925
      %4059 = vmatprep.subr.bf16.mxu0 %v794
      %4060 = vmatpush1.bf16.msra.mxu0 %v793
      %4061 = vmatprep.subr.bf16.mxu0 %v662
      %4062 = vmatpush1.bf16.msra.mxu0 %v661
      %4063 = vmatprep.subr.bf16.mxu0 %v530
      %4064 = vmatpush1.bf16.msra.mxu0 %v529
      %4065 = vmatprep.subr.bf16.mxu0 %v433
      %4066 = vmatpush1.bf16.msra.mxu0 %v432
      %4067 = vmatprep.subr.bf16.mxu0 %v2378
      %4068 = vmatpush2.bf16.msra.mxu0 %v2377
      %4069 = vmatprep.subr.bf16.mxu0 %v2246
      %4070 = vmatpush2.bf16.msra.mxu0 %v2245
      %4071 = vmatprep.subr.bf16.mxu0 %v2114
      %4072 = vmatpush2.bf16.msra.mxu0 %v2113
      %4073 = vmatprep.subr.bf16.mxu0 %v1982
      %4074 = vmatpush2.bf16.msra.mxu0 %v1981
      %4075 = vmatprep.subr.bf16.mxu0 %v1850
      %4076 = vmatpush2.bf16.msra.mxu0 %v1849
      %4077 = vmatprep.subr.bf16.mxu0 %v1718
      %4078 = vmatpush2.bf16.msra.mxu0 %v1717
      %4079 = vmatprep.subr.bf16.mxu0 %v1586
      %4080 = vmatpush2.bf16.msra.mxu0 %v1585
      %4081 = vmatprep.subr.bf16.mxu0 %v1454
      %4082 = vmatpush2.bf16.msra.mxu0 %v1453
      %4083 = vmatprep.mubr.bf16.mxu0 %v3009
      %4084 = vmatmul.mubr.bf16.gmra.mxu0 %v3008
      %v4085 = vpop.f32.mrf.mxu0
      %v4086 = vadd.f32 %v2989, %v4085
      %v4087 = vpop.f32.mrf.mxu0
      %v4088 = vadd.f32 %v2989, %v4087
      %v4089 = vpop.f32.mrf.mxu0
      %v4090 = vadd.f32 %v2994, %v4089
      %v4091 = vpop.f32.mrf.mxu0
      %v4092 = vadd.f32 %v2994, %v4091
      %4093 = vdwg.mxu0
      %4094 = vmatprep.subr.bf16.mxu0 %v795
      %4095 = vmatpush1.bf16.msra.mxu0 %v794
      %4096 = vmatprep.subr.bf16.mxu0 %v663
      %4097 = vmatpush1.bf16.msra.mxu0 %v662
      %4098 = vmatprep.subr.bf16.mxu0 %v531
      %4099 = vmatpush1.bf16.msra.mxu0 %v530
      %4100 = vmatprep.subr.bf16.mxu0 %v434
      %4101 = vmatpush1.bf16.msra.mxu0 %v433
      %4102 = vmatprep.subr.bf16.mxu0 %v2906
      %4103 = vmatpush1.bf16.msra.mxu0 %v2905
      %4104 = vmatprep.subr.bf16.mxu0 %v2774
      %4105 = vmatpush1.bf16.msra.mxu0 %v2773
      %4106 = vmatprep.subr.bf16.mxu0 %v2642
      %4107 = vmatpush1.bf16.msra.mxu0 %v2641
      %4108 = vmatprep.subr.bf16.mxu0 %v2510
      %4109 = vmatpush1.bf16.msra.mxu0 %v2509
      %4110 = vmatprep.subr.bf16.mxu0 0
      %4111 = vmatpush2.bf16.msra.mxu0 0
      %4112 = vmatprep.subr.bf16.mxu0 0
      %4113 = vmatpush2.bf16.msra.mxu0 0
      %4114 = vmatprep.subr.bf16.mxu0 0
      %4115 = vmatpush2.bf16.msra.mxu0 0
      %4116 = vmatprep.subr.bf16.mxu0 0
      %4117 = vmatpush2.bf16.msra.mxu0 0
      %4118 = vmatprep.subr.bf16.mxu0 0
      %4119 = vmatpush2.bf16.msra.mxu0 0
      %4120 = vmatprep.subr.bf16.mxu0 0
      %4121 = vmatpush2.bf16.msra.mxu0 0
      %4122 = vmatprep.subr.bf16.mxu0 0
      %4123 = vmatpush2.bf16.msra.mxu0 0
      %4124 = vmatprep.subr.bf16.mxu0 %v927
      %4125 = vmatpush2.bf16.msra.mxu0 %v926
      %4126 = vmatprep.mubr.bf16.mxu0 %v3017
      %4127 = vmatmul.mubr.bf16.gmra.mxu0 %v3010
      %v4128 = vpop.f32.mrf.mxu0
      %v4129 = vadd.f32 %v4086, %v4128
      %v4130 = vpop.f32.mrf.mxu0
      %v4131 = vadd.f32 %v4088, %v4130
      %v4132 = vpop.f32.mrf.mxu0
      %v4133 = vadd.f32 %v4090, %v4132
      %v4134 = vpop.f32.mrf.mxu0
      %v4135 = vadd.f32 %v4092, %v4134
      %4136 = vdwg.mxu0
      %4137 = vmatprep.subr.bf16.mxu0 %v1324
      %4138 = vmatpush1.bf16.msra.mxu0 %v1323
      %4139 = vmatprep.subr.bf16.mxu0 %v1192
      %4140 = vmatpush1.bf16.msra.mxu0 %v1191
      %4141 = vmatprep.subr.bf16.mxu0 %v1060
      %4142 = vmatpush1.bf16.msra.mxu0 %v1059
      %4143 = vmatprep.subr.bf16.mxu0 %v928
      %4144 = vmatpush1.bf16.msra.mxu0 %v927
      %4145 = vmatprep.subr.bf16.mxu0 %v796
      %4146 = vmatpush1.bf16.msra.mxu0 %v795
      %4147 = vmatprep.subr.bf16.mxu0 %v664
      %4148 = vmatpush1.bf16.msra.mxu0 %v663
      %4149 = vmatprep.subr.bf16.mxu0 %v532
      %4150 = vmatpush1.bf16.msra.mxu0 %v531
      %4151 = vmatprep.subr.bf16.mxu0 %v435
      %4152 = vmatpush1.bf16.msra.mxu0 %v434
      %4153 = vmatprep.subr.bf16.mxu0 %v2380
      %4154 = vmatpush2.bf16.msra.mxu0 %v2379
      %4155 = vmatprep.subr.bf16.mxu0 %v2248
      %4156 = vmatpush2.bf16.msra.mxu0 %v2247
      %4157 = vmatprep.subr.bf16.mxu0 %v2116
      %4158 = vmatpush2.bf16.msra.mxu0 %v2115
      %4159 = vmatprep.subr.bf16.mxu0 %v1984
      %4160 = vmatpush2.bf16.msra.mxu0 %v1983
      %4161 = vmatprep.subr.bf16.mxu0 %v1852
      %4162 = vmatpush2.bf16.msra.mxu0 %v1851
      %4163 = vmatprep.subr.bf16.mxu0 %v1720
      %4164 = vmatpush2.bf16.msra.mxu0 %v1719
      %4165 = vmatprep.subr.bf16.mxu0 %v1588
      %4166 = vmatpush2.bf16.msra.mxu0 %v1587
      %4167 = vmatprep.subr.bf16.mxu0 %v1456
      %4168 = vmatpush2.bf16.msra.mxu0 %v1455
      %4169 = vmatprep.mubr.bf16.mxu0 %v3009
      %4170 = vmatmul.mubr.bf16.gmra.mxu0 %v3008
      %v4171 = vpop.f32.mrf.mxu0
      %v4172 = vadd.f32 %v2989, %v4171
      %v4173 = vpop.f32.mrf.mxu0
      %v4174 = vadd.f32 %v2989, %v4173
      %v4175 = vpop.f32.mrf.mxu0
      %v4176 = vadd.f32 %v2994, %v4175
      %v4177 = vpop.f32.mrf.mxu0
      %v4178 = vadd.f32 %v2994, %v4177
      %4179 = vdwg.mxu0
      %4180 = vmatprep.subr.bf16.mxu0 %v797
      %4181 = vmatpush1.bf16.msra.mxu0 %v796
      %4182 = vmatprep.subr.bf16.mxu0 %v665
      %4183 = vmatpush1.bf16.msra.mxu0 %v664
      %4184 = vmatprep.subr.bf16.mxu0 %v533
      %4185 = vmatpush1.bf16.msra.mxu0 %v532
      %4186 = vmatprep.subr.bf16.mxu0 %v436
      %4187 = vmatpush1.bf16.msra.mxu0 %v435
      %4188 = vmatprep.subr.bf16.mxu0 %v2908
      %4189 = vmatpush1.bf16.msra.mxu0 %v2907
      %4190 = vmatprep.subr.bf16.mxu0 %v2776
      %4191 = vmatpush1.bf16.msra.mxu0 %v2775
      %4192 = vmatprep.subr.bf16.mxu0 %v2644
      %4193 = vmatpush1.bf16.msra.mxu0 %v2643
      %4194 = vmatprep.subr.bf16.mxu0 %v2512
      %4195 = vmatpush1.bf16.msra.mxu0 %v2511
      %4196 = vmatprep.subr.bf16.mxu0 0
      %4197 = vmatpush2.bf16.msra.mxu0 0
      %4198 = vmatprep.subr.bf16.mxu0 0
      %4199 = vmatpush2.bf16.msra.mxu0 0
      %4200 = vmatprep.subr.bf16.mxu0 0
      %4201 = vmatpush2.bf16.msra.mxu0 0
      %4202 = vmatprep.subr.bf16.mxu0 0
      %4203 = vmatpush2.bf16.msra.mxu0 0
      %4204 = vmatprep.subr.bf16.mxu0 0
      %4205 = vmatpush2.bf16.msra.mxu0 0
      %4206 = vmatprep.subr.bf16.mxu0 0
      %4207 = vmatpush2.bf16.msra.mxu0 0
      %4208 = vmatprep.subr.bf16.mxu0 0
      %4209 = vmatpush2.bf16.msra.mxu0 0
      %4210 = vmatprep.subr.bf16.mxu0 %v929
      %4211 = vmatpush2.bf16.msra.mxu0 %v928
      %4212 = vmatprep.mubr.bf16.mxu0 %v3017
      %4213 = vmatmul.mubr.bf16.gmra.mxu0 %v3010
      %v4214 = vpop.f32.mrf.mxu0
      %v4215 = vadd.f32 %v4172, %v4214
      %v4216 = vpop.f32.mrf.mxu0
      %v4217 = vadd.f32 %v4174, %v4216
      %v4218 = vpop.f32.mrf.mxu0
      %v4219 = vadd.f32 %v4176, %v4218
      %v4220 = vpop.f32.mrf.mxu0
      %v4221 = vadd.f32 %v4178, %v4220
      %4222 = vdwg.mxu0
      %4223 = vmatprep.subr.bf16.mxu0 %v1326
      %4224 = vmatpush1.bf16.msra.mxu0 %v1325
      %4225 = vmatprep.subr.bf16.mxu0 %v1194
      %4226 = vmatpush1.bf16.msra.mxu0 %v1193
      %4227 = vmatprep.subr.bf16.mxu0 %v1062
      %4228 = vmatpush1.bf16.msra.mxu0 %v1061
      %4229 = vmatprep.subr.bf16.mxu0 %v930
      %4230 = vmatpush1.bf16.msra.mxu0 %v929
      %4231 = vmatprep.subr.bf16.mxu0 %v798
      %4232 = vmatpush1.bf16.msra.mxu0 %v797
      %4233 = vmatprep.subr.bf16.mxu0 %v666
      %4234 = vmatpush1.bf16.msra.mxu0 %v665
      %4235 = vmatprep.subr.bf16.mxu0 %v534
      %4236 = vmatpush1.bf16.msra.mxu0 %v533
      %4237 = vmatprep.subr.bf16.mxu0 %v437
      %4238 = vmatpush1.bf16.msra.mxu0 %v436
      %4239 = vmatprep.subr.bf16.mxu0 %v2382
      %4240 = vmatpush2.bf16.msra.mxu0 %v2381
      %4241 = vmatprep.subr.bf16.mxu0 %v2250
      %4242 = vmatpush2.bf16.msra.mxu0 %v2249
      %4243 = vmatprep.subr.bf16.mxu0 %v2118
      %4244 = vmatpush2.bf16.msra.mxu0 %v2117
      %4245 = vmatprep.subr.bf16.mxu0 %v1986
      %4246 = vmatpush2.bf16.msra.mxu0 %v1985
      %4247 = vmatprep.subr.bf16.mxu0 %v1854
      %4248 = vmatpush2.bf16.msra.mxu0 %v1853
      %4249 = vmatprep.subr.bf16.mxu0 %v1722
      %4250 = vmatpush2.bf16.msra.mxu0 %v1721
      %4251 = vmatprep.subr.bf16.mxu0 %v1590
      %4252 = vmatpush2.bf16.msra.mxu0 %v1589
      %4253 = vmatprep.subr.bf16.mxu0 %v1458
      %4254 = vmatpush2.bf16.msra.mxu0 %v1457
      %4255 = vmatprep.mubr.bf16.mxu0 %v3009
      %4256 = vmatmul.mubr.bf16.gmra.mxu0 %v3008
      %v4257 = vpop.f32.mrf.mxu0
      %v4258 = vadd.f32 %v2989, %v4257
      %v4259 = vpop.f32.mrf.mxu0
      %v4260 = vadd.f32 %v2989, %v4259
      %v4261 = vpop.f32.mrf.mxu0
      %v4262 = vadd.f32 %v2994, %v4261
      %v4263 = vpop.f32.mrf.mxu0
      %v4264 = vadd.f32 %v2994, %v4263
      %4265 = vdwg.mxu0
      %4266 = vmatprep.subr.bf16.mxu0 %v799
      %4267 = vmatpush1.bf16.msra.mxu0 %v798
      %4268 = vmatprep.subr.bf16.mxu0 %v667
      %4269 = vmatpush1.bf16.msra.mxu0 %v666
      %4270 = vmatprep.subr.bf16.mxu0 %v535
      %4271 = vmatpush1.bf16.msra.mxu0 %v534
      %4272 = vmatprep.subr.bf16.mxu0 %v438
      %4273 = vmatpush1.bf16.msra.mxu0 %v437
      %4274 = vmatprep.subr.bf16.mxu0 %v2910
      %4275 = vmatpush1.bf16.msra.mxu0 %v2909
      %4276 = vmatprep.subr.bf16.mxu0 %v2778
      %4277 = vmatpush1.bf16.msra.mxu0 %v2777
      %4278 = vmatprep.subr.bf16.mxu0 %v2646
      %4279 = vmatpush1.bf16.msra.mxu0 %v2645
      %4280 = vmatprep.subr.bf16.mxu0 %v2514
      %4281 = vmatpush1.bf16.msra.mxu0 %v2513
      %4282 = vmatprep.subr.bf16.mxu0 0
      %4283 = vmatpush2.bf16.msra.mxu0 0
      %4284 = vmatprep.subr.bf16.mxu0 0
      %4285 = vmatpush2.bf16.msra.mxu0 0
      %4286 = vmatprep.subr.bf16.mxu0 0
      %4287 = vmatpush2.bf16.msra.mxu0 0
      %4288 = vmatprep.subr.bf16.mxu0 0
      %4289 = vmatpush2.bf16.msra.mxu0 0
      %4290 = vmatprep.subr.bf16.mxu0 0
      %4291 = vmatpush2.bf16.msra.mxu0 0
      %4292 = vmatprep.subr.bf16.mxu0 0
      %4293 = vmatpush2.bf16.msra.mxu0 0
      %4294 = vmatprep.subr.bf16.mxu0 0
      %4295 = vmatpush2.bf16.msra.mxu0 0
      %4296 = vmatprep.subr.bf16.mxu0 %v931
      %4297 = vmatpush2.bf16.msra.mxu0 %v930
      %4298 = vmatprep.mubr.bf16.mxu0 %v3017
      %4299 = vmatmul.mubr.bf16.gmra.mxu0 %v3010
      %v4300 = vpop.f32.mrf.mxu0
      %v4301 = vadd.f32 %v4258, %v4300
      %v4302 = vpop.f32.mrf.mxu0
      %v4303 = vadd.f32 %v4260, %v4302
      %v4304 = vpop.f32.mrf.mxu0
      %v4305 = vadd.f32 %v4262, %v4304
      %v4306 = vpop.f32.mrf.mxu0
      %v4307 = vadd.f32 %v4264, %v4306
      %4308 = vdwg.mxu0
      %4309 = vmatprep.subr.bf16.mxu0 %v1362
      %4310 = vmatpush1.bf16.msra.mxu0 %v1327
      %4311 = vmatprep.subr.bf16.mxu0 %v1230
      %4312 = vmatpush1.bf16.msra.mxu0 %v1195
      %4313 = vmatprep.subr.bf16.mxu0 %v1098
      %4314 = vmatpush1.bf16.msra.mxu0 %v1063
      %4315 = vmatprep.subr.bf16.mxu0 %v966
      %4316 = vmatpush1.bf16.msra.mxu0 %v931
      %4317 = vmatprep.subr.bf16.mxu0 %v834
      %4318 = vmatpush1.bf16.msra.mxu0 %v799
      %4319 = vmatprep.subr.bf16.mxu0 %v702
      %4320 = vmatpush1.bf16.msra.mxu0 %v667
      %4321 = vmatprep.subr.bf16.mxu0 %v570
      %4322 = vmatpush1.bf16.msra.mxu0 %v535
      %4323 = vmatprep.subr.bf16.mxu0 %v439
      %4324 = vmatpush1.bf16.msra.mxu0 %v438
      %4325 = vmatprep.subr.bf16.mxu0 %v2418
      %4326 = vmatpush2.bf16.msra.mxu0 %v2383
      %4327 = vmatprep.subr.bf16.mxu0 %v2286
      %4328 = vmatpush2.bf16.msra.mxu0 %v2251
      %4329 = vmatprep.subr.bf16.mxu0 %v2154
      %4330 = vmatpush2.bf16.msra.mxu0 %v2119
      %4331 = vmatprep.subr.bf16.mxu0 %v2022
      %4332 = vmatpush2.bf16.msra.mxu0 %v1987
      %4333 = vmatprep.subr.bf16.mxu0 %v1890
      %4334 = vmatpush2.bf16.msra.mxu0 %v1855
      %4335 = vmatprep.subr.bf16.mxu0 %v1758
      %4336 = vmatpush2.bf16.msra.mxu0 %v1723
      %4337 = vmatprep.subr.bf16.mxu0 %v1626
      %4338 = vmatpush2.bf16.msra.mxu0 %v1591
      %4339 = vmatprep.subr.bf16.mxu0 %v1494
      %4340 = vmatpush2.bf16.msra.mxu0 %v1459
      %4341 = vmatprep.mubr.bf16.mxu0 %v3009
      %4342 = vmatmul.mubr.bf16.gmra.mxu0 %v3008
      %v4343 = vpop.f32.mrf.mxu0
      %v4344 = vadd.f32 %v2989, %v4343
      %v4345 = vpop.f32.mrf.mxu0
      %v4346 = vadd.f32 %v2989, %v4345
      %v4347 = vpop.f32.mrf.mxu0
      %v4348 = vadd.f32 %v2994, %v4347
      %v4349 = vpop.f32.mrf.mxu0
      %v4350 = vadd.f32 %v2994, %v4349
      %4351 = vdwg.mxu0
      %4352 = vmatprep.subr.bf16.mxu0 %v769
      %4353 = vmatpush1.bf16.msra.mxu0 %v834
      %4354 = vmatprep.subr.bf16.mxu0 %v637
      %4355 = vmatpush1.bf16.msra.mxu0 %v702
      %4356 = vmatprep.subr.bf16.mxu0 %v505
      %4357 = vmatpush1.bf16.msra.mxu0 %v570
      %4358 = vmatprep.subr.bf16.mxu0 %v408
      %4359 = vmatpush1.bf16.msra.mxu0 %v439
      %4360 = vmatprep.subr.bf16.mxu0 %v2946
      %4361 = vmatpush1.bf16.msra.mxu0 %v2911
      %4362 = vmatprep.subr.bf16.mxu0 %v2814
      %4363 = vmatpush1.bf16.msra.mxu0 %v2779
      %4364 = vmatprep.subr.bf16.mxu0 %v2682
      %4365 = vmatpush1.bf16.msra.mxu0 %v2647
      %4366 = vmatprep.subr.bf16.mxu0 %v2550
      %4367 = vmatpush1.bf16.msra.mxu0 %v2515
      %4368 = vmatprep.subr.bf16.mxu0 0
      %4369 = vmatpush2.bf16.msra.mxu0 0
      %4370 = vmatprep.subr.bf16.mxu0 0
      %4371 = vmatpush2.bf16.msra.mxu0 0
      %4372 = vmatprep.subr.bf16.mxu0 0
      %4373 = vmatpush2.bf16.msra.mxu0 0
      %4374 = vmatprep.subr.bf16.mxu0 0
      %4375 = vmatpush2.bf16.msra.mxu0 0
      %4376 = vmatprep.subr.bf16.mxu0 0
      %4377 = vmatpush2.bf16.msra.mxu0 0
      %4378 = vmatprep.subr.bf16.mxu0 0
      %4379 = vmatpush2.bf16.msra.mxu0 0
      %4380 = vmatprep.subr.bf16.mxu0 0
      %4381 = vmatpush2.bf16.msra.mxu0 0
      %4382 = vmatprep.subr.bf16.mxu0 %v901
      %4383 = vmatpush2.bf16.msra.mxu0 %v966
      %4384 = vmatprep.mubr.bf16.mxu0 %v3017
      %4385 = vmatmul.mubr.bf16.gmra.mxu0 %v3010
      %v4386 = vpop.f32.mrf.mxu0
      %v4387 = vadd.f32 %v4344, %v4386
      %v4388 = vpop.f32.mrf.mxu0
      %v4389 = vadd.f32 %v4346, %v4388
      %v4390 = vpop.f32.mrf.mxu0
      %v4391 = vadd.f32 %v4348, %v4390
      %v4392 = vpop.f32.mrf.mxu0
      %v4393 = vadd.f32 %v4350, %v4392
      %4394 = vdwg.mxu0
      %v4395 = vmax.f32 %v3097, 0.0
      %v4396 = vmax.f32 %v3099, 0.0
      %v4397 = vmax.f32 %v3183, 0.0
      %v4398 = vmax.f32 %v3185, 0.0
      %v4399 = vmax.f32 %v3269, 0.0
      %v4400 = vmax.f32 %v3271, 0.0
      %v4401 = vmax.f32 %v3355, 0.0
      %v4402 = vmax.f32 %v3357, 0.0
      %v4403 = vmax.f32 %v3441, 0.0
      %v4404 = vmax.f32 %v3443, 0.0
      %v4405 = vmax.f32 %v3527, 0.0
      %v4406 = vmax.f32 %v3529, 0.0
      %v4407 = vmax.f32 %v3613, 0.0
      %v4408 = vmax.f32 %v3615, 0.0
      %v4409 = vmax.f32 %v3699, 0.0
      %v4410 = vmax.f32 %v3701, 0.0
      %v4411 = vmax.f32 %v3785, 0.0
      %v4412 = vmax.f32 %v3787, 0.0
      %v4413 = vmax.f32 %v3871, 0.0
      %v4414 = vmax.f32 %v3873, 0.0
      %v4415 = vmax.f32 %v3957, 0.0
      %v4416 = vmax.f32 %v3959, 0.0
      %v4417 = vmax.f32 %v4043, 0.0
      %v4418 = vmax.f32 %v4045, 0.0
      %v4419 = vmax.f32 %v4129, 0.0
      %v4420 = vmax.f32 %v4131, 0.0
      %v4421 = vmax.f32 %v4215, 0.0
      %v4422 = vmax.f32 %v4217, 0.0
      %v4423 = vmax.f32 %v4301, 0.0
      %v4424 = vmax.f32 %v4303, 0.0
      %v4425 = vmax.f32 %v4387, 0.0
      %v4426 = vmax.f32 %v4389, 0.0
      %v4427 = vmax.f32 %v3101, 0.0
      %v4428 = vmax.f32 %v3103, 0.0
      %v4429 = vmax.f32 %v3187, 0.0
      %v4430 = vmax.f32 %v3189, 0.0
      %v4431 = vmax.f32 %v3273, 0.0
      %v4432 = vmax.f32 %v3275, 0.0
      %v4433 = vmax.f32 %v3359, 0.0
      %v4434 = vmax.f32 %v3361, 0.0
      %v4435 = vmax.f32 %v3445, 0.0
      %v4436 = vmax.f32 %v3447, 0.0
      %v4437 = vmax.f32 %v3531, 0.0
      %v4438 = vmax.f32 %v3533, 0.0
      %v4439 = vmax.f32 %v3617, 0.0
      %v4440 = vmax.f32 %v3619, 0.0
      %v4441 = vmax.f32 %v3703, 0.0
      %v4442 = vmax.f32 %v3705, 0.0
      %v4443 = vmax.f32 %v3789, 0.0
      %v4444 = vmax.f32 %v3791, 0.0
      %v4445 = vmax.f32 %v3875, 0.0
      %v4446 = vmax.f32 %v3877, 0.0
      %v4447 = vmax.f32 %v3961, 0.0
      %v4448 = vmax.f32 %v3963, 0.0
      %v4449 = vmax.f32 %v4047, 0.0
      %v4450 = vmax.f32 %v4049, 0.0
      %v4451 = vmax.f32 %v4133, 0.0
      %v4452 = vmax.f32 %v4135, 0.0
      %v4453 = vmax.f32 %v4219, 0.0
      %v4454 = vmax.f32 %v4221, 0.0
      %v4455 = vmax.f32 %v4305, 0.0
      %v4456 = vmax.f32 %v4307, 0.0
      %v4457 = vmax.f32 %v4391, 0.0
      %v4458 = vmax.f32 %v4393, 0.0
      %4523 = vrot.lane.b32.xlu0 %v4395, 127
      %v4524 = vpop.permute.xlu0 %4523
      %4525 = vrot.lane.b32.xlu0 %v4396, 127
      %v4526 = vpop.permute.xlu0 %4525
      %4527 = vrot.lane.b32.xlu0 %v4397, 127
      %v4528 = vpop.permute.xlu0 %4527
      %4529 = vrot.lane.b32.xlu0 %v4398, 127
      %v4530 = vpop.permute.xlu0 %4529
      %4531 = vrot.lane.b32.xlu0 %v4399, 127
      %v4532 = vpop.permute.xlu0 %4531
      %4533 = vrot.lane.b32.xlu0 %v4400, 127
      %v4534 = vpop.permute.xlu0 %4533
      %4535 = vrot.lane.b32.xlu0 %v4401, 127
      %v4536 = vpop.permute.xlu0 %4535
      %4537 = vrot.lane.b32.xlu0 %v4402, 127
      %v4538 = vpop.permute.xlu0 %4537
      %4539 = vrot.lane.b32.xlu0 %v4403, 127
      %v4540 = vpop.permute.xlu0 %4539
      %4541 = vrot.lane.b32.xlu0 %v4404, 127
      %v4542 = vpop.permute.xlu0 %4541
      %4543 = vrot.lane.b32.xlu0 %v4405, 127
      %v4544 = vpop.permute.xlu0 %4543
      %4545 = vrot.lane.b32.xlu0 %v4406, 127
      %v4546 = vpop.permute.xlu0 %4545
      %4547 = vrot.lane.b32.xlu0 %v4407, 127
      %v4548 = vpop.permute.xlu0 %4547
      %4549 = vrot.lane.b32.xlu0 %v4408, 127
      %v4550 = vpop.permute.xlu0 %4549
      %4551 = vrot.lane.b32.xlu0 %v4409, 127
      %v4552 = vpop.permute.xlu0 %4551
      %4553 = vrot.lane.b32.xlu0 %v4410, 127
      %v4554 = vpop.permute.xlu0 %4553
      %4555 = vrot.lane.b32.xlu0 %v4411, 127
      %v4556 = vpop.permute.xlu0 %4555
      %4557 = vrot.lane.b32.xlu0 %v4412, 127
      %v4558 = vpop.permute.xlu0 %4557
      %4559 = vrot.lane.b32.xlu0 %v4413, 127
      %v4560 = vpop.permute.xlu0 %4559
      %4561 = vrot.lane.b32.xlu0 %v4414, 127
      %v4562 = vpop.permute.xlu0 %4561
      %4563 = vrot.lane.b32.xlu0 %v4415, 127
      %v4564 = vpop.permute.xlu0 %4563
      %4565 = vrot.lane.b32.xlu0 %v4416, 127
      %v4566 = vpop.permute.xlu0 %4565
      %4567 = vrot.lane.b32.xlu0 %v4417, 127
      %v4568 = vpop.permute.xlu0 %4567
      %4569 = vrot.lane.b32.xlu0 %v4418, 127
      %v4570 = vpop.permute.xlu0 %4569
      %4571 = vrot.lane.b32.xlu0 %v4419, 127
      %v4572 = vpop.permute.xlu0 %4571
      %4573 = vrot.lane.b32.xlu0 %v4420, 127
      %v4574 = vpop.permute.xlu0 %4573
      %4575 = vrot.lane.b32.xlu0 %v4421, 127
      %v4576 = vpop.permute.xlu0 %4575
      %4577 = vrot.lane.b32.xlu0 %v4422, 127
      %v4578 = vpop.permute.xlu0 %4577
      %4579 = vrot.lane.b32.xlu0 %v4423, 127
      %v4580 = vpop.permute.xlu0 %4579
      %4581 = vrot.lane.b32.xlu0 %v4424, 127
      %v4582 = vpop.permute.xlu0 %4581
      %4583 = vrot.lane.b32.xlu0 %v4425, 127
      %v4584 = vpop.permute.xlu0 %4583
      %4585 = vrot.lane.b32.xlu0 %v4426, 127
      %v4586 = vpop.permute.xlu0 %4585
      %4587 = vrot.lane.b32.xlu0 %v4427, 127
      %v4588 = vpop.permute.xlu0 %4587
      %4589 = vrot.lane.b32.xlu0 %v4428, 127
      %v4590 = vpop.permute.xlu0 %4589
      %4591 = vrot.lane.b32.xlu0 %v4429, 127
      %v4592 = vpop.permute.xlu0 %4591
      %4593 = vrot.lane.b32.xlu0 %v4430, 127
      %v4594 = vpop.permute.xlu0 %4593
      %4595 = vrot.lane.b32.xlu0 %v4431, 127
      %v4596 = vpop.permute.xlu0 %4595
      %4597 = vrot.lane.b32.xlu0 %v4432, 127
      %v4598 = vpop.permute.xlu0 %4597
      %4599 = vrot.lane.b32.xlu0 %v4433, 127
      %v4600 = vpop.permute.xlu0 %4599
      %4601 = vrot.lane.b32.xlu0 %v4434, 127
      %v4602 = vpop.permute.xlu0 %4601
      %4603 = vrot.lane.b32.xlu0 %v4435, 127
      %v4604 = vpop.permute.xlu0 %4603
      %4605 = vrot.lane.b32.xlu0 %v4436, 127
      %v4606 = vpop.permute.xlu0 %4605
      %4607 = vrot.lane.b32.xlu0 %v4437, 127
      %v4608 = vpop.permute.xlu0 %4607
      %4609 = vrot.lane.b32.xlu0 %v4438, 127
      %v4610 = vpop.permute.xlu0 %4609
      %4611 = vrot.lane.b32.xlu0 %v4439, 127
      %v4612 = vpop.permute.xlu0 %4611
      %4613 = vrot.lane.b32.xlu0 %v4440, 127
      %v4614 = vpop.permute.xlu0 %4613
      %4615 = vrot.lane.b32.xlu0 %v4441, 127
      %v4616 = vpop.permute.xlu0 %4615
      %4617 = vrot.lane.b32.xlu0 %v4442, 127
      %v4618 = vpop.permute.xlu0 %4617
      %4619 = vrot.lane.b32.xlu0 %v4443, 127
      %v4620 = vpop.permute.xlu0 %4619
      %4621 = vrot.lane.b32.xlu0 %v4444, 127
      %v4622 = vpop.permute.xlu0 %4621
      %4623 = vrot.lane.b32.xlu0 %v4445, 127
      %v4624 = vpop.permute.xlu0 %4623
      %4625 = vrot.lane.b32.xlu0 %v4446, 127
      %v4626 = vpop.permute.xlu0 %4625
      %4627 = vrot.lane.b32.xlu0 %v4447, 127
      %v4628 = vpop.permute.xlu0 %4627
      %4629 = vrot.lane.b32.xlu0 %v4448, 127
      %v4630 = vpop.permute.xlu0 %4629
      %4631 = vrot.lane.b32.xlu0 %v4449, 127
      %v4632 = vpop.permute.xlu0 %4631
      %4633 = vrot.lane.b32.xlu0 %v4450, 127
      %v4634 = vpop.permute.xlu0 %4633
      %4635 = vrot.lane.b32.xlu0 %v4451, 127
      %v4636 = vpop.permute.xlu0 %4635
      %4637 = vrot.lane.b32.xlu0 %v4452, 127
      %v4638 = vpop.permute.xlu0 %4637
      %4639 = vrot.lane.b32.xlu0 %v4453, 127
      %v4640 = vpop.permute.xlu0 %4639
      %4641 = vrot.lane.b32.xlu0 %v4454, 127
      %v4642 = vpop.permute.xlu0 %4641
      %4643 = vrot.lane.b32.xlu0 %v4455, 127
      %v4644 = vpop.permute.xlu0 %4643
      %4645 = vrot.lane.b32.xlu0 %v4456, 127
      %v4646 = vpop.permute.xlu0 %4645
      %4647 = vrot.lane.b32.xlu0 %v4457, 127
      %v4648 = vpop.permute.xlu0 %4647
      %4649 = vrot.lane.b32.xlu0 %v4458, 127
      %v4650 = vpop.permute.xlu0 %4649
      %v4651 = vsel %vm567, %v4524, %v4526
      %v4652 = vsel %vm567, %v4526, %v4528
      %v4653 = vsel %vm567, %v4528, %v4530
      %v4654 = vsel %vm567, %v4530, %v4532
      %v4655 = vsel %vm567, %v4532, %v4534
      %v4656 = vsel %vm567, %v4534, %v4536
      %v4657 = vsel %vm567, %v4536, %v4538
      %v4658 = vsel %vm567, %v4540, %v4542
      %v4659 = vsel %vm567, %v4542, %v4544
      %v4660 = vsel %vm567, %v4544, %v4546
      %v4661 = vsel %vm567, %v4546, %v4548
      %v4662 = vsel %vm567, %v4548, %v4550
      %v4663 = vsel %vm567, %v4550, %v4552
      %v4664 = vsel %vm567, %v4552, %v4554
      %v4665 = vsel %vm567, %v4556, %v4558
      %v4666 = vsel %vm567, %v4558, %v4560
      %v4667 = vsel %vm567, %v4560, %v4562
      %v4668 = vsel %vm567, %v4562, %v4564
      %v4669 = vsel %vm567, %v4564, %v4566
      %v4670 = vsel %vm567, %v4566, %v4568
      %v4671 = vsel %vm567, %v4568, %v4570
      %v4672 = vsel %vm567, %v4572, %v4574
      %v4673 = vsel %vm567, %v4574, %v4576
      %v4674 = vsel %vm567, %v4576, %v4578
      %v4675 = vsel %vm567, %v4578, %v4580
      %v4676 = vsel %vm567, %v4580, %v4582
      %v4677 = vsel %vm567, %v4582, %v4584
      %v4678 = vsel %vm567, %v4584, %v4586
      %v4679 = vsel %vm567, %v4588, %v4590
      %v4680 = vsel %vm567, %v4590, %v4592
      %v4681 = vsel %vm567, %v4592, %v4594
      %v4682 = vsel %vm567, %v4594, %v4596
      %v4683 = vsel %vm567, %v4596, %v4598
      %v4684 = vsel %vm567, %v4598, %v4600
      %v4685 = vsel %vm567, %v4600, %v4602
      %v4686 = vsel %vm567, %v4604, %v4606
      %v4687 = vsel %vm567, %v4606, %v4608
      %v4688 = vsel %vm567, %v4608, %v4610
      %v4689 = vsel %vm567, %v4610, %v4612
      %v4690 = vsel %vm567, %v4612, %v4614
      %v4691 = vsel %vm567, %v4614, %v4616
      %v4692 = vsel %vm567, %v4616, %v4618
      %v4693 = vsel %vm567, %v4620, %v4622
      %v4694 = vsel %vm567, %v4622, %v4624
      %v4695 = vsel %vm567, %v4624, %v4626
      %v4696 = vsel %vm567, %v4626, %v4628
      %v4697 = vsel %vm567, %v4628, %v4630
      %v4698 = vsel %vm567, %v4630, %v4632
      %v4699 = vsel %vm567, %v4632, %v4634
      %v4700 = vsel %vm567, %v4636, %v4638
      %v4701 = vsel %vm567, %v4638, %v4640
      %v4702 = vsel %vm567, %v4640, %v4642
      %v4703 = vsel %vm567, %v4642, %v4644
      %v4704 = vsel %vm567, %v4644, %v4646
      %v4705 = vsel %vm567, %v4646, %v4648
      %v4706 = vsel %vm567, %v4648, %v4650
      %v4763 = vmax.f32 %v4395, %v4651
      %v4764 = vmax.f32 %v4396, %v4652
      %v4765 = vmax.f32 %v4397, %v4653
      %v4766 = vmax.f32 %v4398, %v4654
      %v4767 = vmax.f32 %v4399, %v4655
      %v4768 = vmax.f32 %v4400, %v4656
      %v4769 = vmax.f32 %v4401, %v4657
      %v4770 = vmax.f32 %v4403, %v4658
      %v4771 = vmax.f32 %v4404, %v4659
      %v4772 = vmax.f32 %v4405, %v4660
      %v4773 = vmax.f32 %v4406, %v4661
      %v4774 = vmax.f32 %v4407, %v4662
      %v4775 = vmax.f32 %v4408, %v4663
      %v4776 = vmax.f32 %v4409, %v4664
      %v4777 = vmax.f32 %v4411, %v4665
      %v4778 = vmax.f32 %v4412, %v4666
      %v4779 = vmax.f32 %v4413, %v4667
      %v4780 = vmax.f32 %v4414, %v4668
      %v4781 = vmax.f32 %v4415, %v4669
      %v4782 = vmax.f32 %v4416, %v4670
      %v4783 = vmax.f32 %v4417, %v4671
      %v4784 = vmax.f32 %v4419, %v4672
      %v4785 = vmax.f32 %v4420, %v4673
      %v4786 = vmax.f32 %v4421, %v4674
      %v4787 = vmax.f32 %v4422, %v4675
      %v4788 = vmax.f32 %v4423, %v4676
      %v4789 = vmax.f32 %v4424, %v4677
      %v4790 = vmax.f32 %v4425, %v4678
      %v4791 = vmax.f32 %v4427, %v4679
      %v4792 = vmax.f32 %v4428, %v4680
      %v4793 = vmax.f32 %v4429, %v4681
      %v4794 = vmax.f32 %v4430, %v4682
      %v4795 = vmax.f32 %v4431, %v4683
      %v4796 = vmax.f32 %v4432, %v4684
      %v4797 = vmax.f32 %v4433, %v4685
      %v4798 = vmax.f32 %v4435, %v4686
      %v4799 = vmax.f32 %v4436, %v4687
      %v4800 = vmax.f32 %v4437, %v4688
      %v4801 = vmax.f32 %v4438, %v4689
      %v4802 = vmax.f32 %v4439, %v4690
      %v4803 = vmax.f32 %v4440, %v4691
      %v4804 = vmax.f32 %v4441, %v4692
      %v4805 = vmax.f32 %v4443, %v4693
      %v4806 = vmax.f32 %v4444, %v4694
      %v4807 = vmax.f32 %v4445, %v4695
      %v4808 = vmax.f32 %v4446, %v4696
      %v4809 = vmax.f32 %v4447, %v4697
      %v4810 = vmax.f32 %v4448, %v4698
      %v4811 = vmax.f32 %v4449, %v4699
      %v4812 = vmax.f32 %v4451, %v4700
      %v4813 = vmax.f32 %v4452, %v4701
      %v4814 = vmax.f32 %v4453, %v4702
      %v4815 = vmax.f32 %v4454, %v4703
      %v4816 = vmax.f32 %v4455, %v4704
      %v4817 = vmax.f32 %v4456, %v4705
      %v4818 = vmax.f32 %v4457, %v4706
      %4819 = vrot.lane.b32.xlu0 %v4395, 96
      %v4820 = vpop.permute.xlu0 %4819
      %4821 = vrot.lane.b32.xlu0 %v4396, 96
      %v4822 = vpop.permute.xlu0 %4821
      %4823 = vrot.lane.b32.xlu0 %v4397, 96
      %v4824 = vpop.permute.xlu0 %4823
      %4825 = vrot.lane.b32.xlu0 %v4398, 96
      %v4826 = vpop.permute.xlu0 %4825
      %4827 = vrot.lane.b32.xlu0 %v4399, 96
      %v4828 = vpop.permute.xlu0 %4827
      %4829 = vrot.lane.b32.xlu0 %v4400, 96
      %v4830 = vpop.permute.xlu0 %4829
      %4831 = vrot.lane.b32.xlu0 %v4401, 96
      %v4832 = vpop.permute.xlu0 %4831
      %4833 = vrot.lane.b32.xlu0 %v4402, 96
      %v4834 = vpop.permute.xlu0 %4833
      %4835 = vrot.lane.b32.xlu0 %v4403, 96
      %v4836 = vpop.permute.xlu0 %4835
      %4837 = vrot.lane.b32.xlu0 %v4404, 96
      %v4838 = vpop.permute.xlu0 %4837
      %4839 = vrot.lane.b32.xlu0 %v4405, 96
      %v4840 = vpop.permute.xlu0 %4839
      %4841 = vrot.lane.b32.xlu0 %v4406, 96
      %v4842 = vpop.permute.xlu0 %4841
      %4843 = vrot.lane.b32.xlu0 %v4407, 96
      %v4844 = vpop.permute.xlu0 %4843
      %4845 = vrot.lane.b32.xlu0 %v4408, 96
      %v4846 = vpop.permute.xlu0 %4845
      %4847 = vrot.lane.b32.xlu0 %v4409, 96
      %v4848 = vpop.permute.xlu0 %4847
      %4849 = vrot.lane.b32.xlu0 %v4410, 96
      %v4850 = vpop.permute.xlu0 %4849
      %4851 = vrot.lane.b32.xlu0 %v4411, 96
      %v4852 = vpop.permute.xlu0 %4851
      %4853 = vrot.lane.b32.xlu0 %v4412, 96
      %v4854 = vpop.permute.xlu0 %4853
      %4855 = vrot.lane.b32.xlu0 %v4413, 96
      %v4856 = vpop.permute.xlu0 %4855
      %4857 = vrot.lane.b32.xlu0 %v4414, 96
      %v4858 = vpop.permute.xlu0 %4857
      %4859 = vrot.lane.b32.xlu0 %v4415, 96
      %v4860 = vpop.permute.xlu0 %4859
      %4861 = vrot.lane.b32.xlu0 %v4416, 96
      %v4862 = vpop.permute.xlu0 %4861
      %4863 = vrot.lane.b32.xlu0 %v4417, 96
      %v4864 = vpop.permute.xlu0 %4863
      %4865 = vrot.lane.b32.xlu0 %v4418, 96
      %v4866 = vpop.permute.xlu0 %4865
      %4867 = vrot.lane.b32.xlu0 %v4419, 96
      %v4868 = vpop.permute.xlu0 %4867
      %4869 = vrot.lane.b32.xlu0 %v4420, 96
      %v4870 = vpop.permute.xlu0 %4869
      %4871 = vrot.lane.b32.xlu0 %v4421, 96
      %v4872 = vpop.permute.xlu0 %4871
      %4873 = vrot.lane.b32.xlu0 %v4422, 96
      %v4874 = vpop.permute.xlu0 %4873
      %4875 = vrot.lane.b32.xlu0 %v4423, 96
      %v4876 = vpop.permute.xlu0 %4875
      %4877 = vrot.lane.b32.xlu0 %v4424, 96
      %v4878 = vpop.permute.xlu0 %4877
      %4879 = vrot.lane.b32.xlu0 %v4425, 96
      %v4880 = vpop.permute.xlu0 %4879
      %4881 = vrot.lane.b32.xlu0 %v4426, 96
      %v4882 = vpop.permute.xlu0 %4881
      %4883 = vrot.lane.b32.xlu0 %v4427, 96
      %v4884 = vpop.permute.xlu0 %4883
      %4885 = vrot.lane.b32.xlu0 %v4428, 96
      %v4886 = vpop.permute.xlu0 %4885
      %4887 = vrot.lane.b32.xlu0 %v4429, 96
      %v4888 = vpop.permute.xlu0 %4887
      %4889 = vrot.lane.b32.xlu0 %v4430, 96
      %v4890 = vpop.permute.xlu0 %4889
      %4891 = vrot.lane.b32.xlu0 %v4431, 96
      %v4892 = vpop.permute.xlu0 %4891
      %4893 = vrot.lane.b32.xlu0 %v4432, 96
      %v4894 = vpop.permute.xlu0 %4893
      %4895 = vrot.lane.b32.xlu0 %v4433, 96
      %v4896 = vpop.permute.xlu0 %4895
      %4897 = vrot.lane.b32.xlu0 %v4434, 96
      %v4898 = vpop.permute.xlu0 %4897
      %4899 = vrot.lane.b32.xlu0 %v4435, 96
      %v4900 = vpop.permute.xlu0 %4899
      %4901 = vrot.lane.b32.xlu0 %v4436, 96
      %v4902 = vpop.permute.xlu0 %4901
      %4903 = vrot.lane.b32.xlu0 %v4437, 96
      %v4904 = vpop.permute.xlu0 %4903
      %4905 = vrot.lane.b32.xlu0 %v4438, 96
      %v4906 = vpop.permute.xlu0 %4905
      %4907 = vrot.lane.b32.xlu0 %v4439, 96
      %v4908 = vpop.permute.xlu0 %4907
      %4909 = vrot.lane.b32.xlu0 %v4440, 96
      %v4910 = vpop.permute.xlu0 %4909
      %4911 = vrot.lane.b32.xlu0 %v4441, 96
      %v4912 = vpop.permute.xlu0 %4911
      %4913 = vrot.lane.b32.xlu0 %v4442, 96
      %v4914 = vpop.permute.xlu0 %4913
      %4915 = vrot.lane.b32.xlu0 %v4443, 96
      %v4916 = vpop.permute.xlu0 %4915
      %4917 = vrot.lane.b32.xlu0 %v4444, 96
      %v4918 = vpop.permute.xlu0 %4917
      %4919 = vrot.lane.b32.xlu0 %v4445, 96
      %v4920 = vpop.permute.xlu0 %4919
      %4921 = vrot.lane.b32.xlu0 %v4446, 96
      %v4922 = vpop.permute.xlu0 %4921
      %4923 = vrot.lane.b32.xlu0 %v4447, 96
      %v4924 = vpop.permute.xlu0 %4923
      %4925 = vrot.lane.b32.xlu0 %v4448, 96
      %v4926 = vpop.permute.xlu0 %4925
      %4927 = vrot.lane.b32.xlu0 %v4449, 96
      %v4928 = vpop.permute.xlu0 %4927
      %4929 = vrot.lane.b32.xlu0 %v4450, 96
      %v4930 = vpop.permute.xlu0 %4929
      %4931 = vrot.lane.b32.xlu0 %v4451, 96
      %v4932 = vpop.permute.xlu0 %4931
      %4933 = vrot.lane.b32.xlu0 %v4452, 96
      %v4934 = vpop.permute.xlu0 %4933
      %4935 = vrot.lane.b32.xlu0 %v4453, 96
      %v4936 = vpop.permute.xlu0 %4935
      %4937 = vrot.lane.b32.xlu0 %v4454, 96
      %v4938 = vpop.permute.xlu0 %4937
      %4939 = vrot.lane.b32.xlu0 %v4455, 96
      %v4940 = vpop.permute.xlu0 %4939
      %4941 = vrot.lane.b32.xlu0 %v4456, 96
      %v4942 = vpop.permute.xlu0 %4941
      %4943 = vrot.lane.b32.xlu0 %v4457, 96
      %v4944 = vpop.permute.xlu0 %4943
      %4945 = vrot.lane.b32.xlu0 %v4458, 96
      %v4946 = vpop.permute.xlu0 %4945
      %v4947 = vsel %vm1095, %v4820, %v4822
      %v4948 = vsel %vm1095, %v4822, %v4824
      %v4949 = vsel %vm1095, %v4824, %v4826
      %v4950 = vsel %vm1095, %v4826, %v4828
      %v4951 = vsel %vm1095, %v4828, %v4830
      %v4952 = vsel %vm1095, %v4830, %v4832
      %v4953 = vsel %vm1095, %v4832, %v4834
      %v4954 = vsel %vm1095, %v4836, %v4838
      %v4955 = vsel %vm1095, %v4838, %v4840
      %v4956 = vsel %vm1095, %v4840, %v4842
      %v4957 = vsel %vm1095, %v4842, %v4844
      %v4958 = vsel %vm1095, %v4844, %v4846
      %v4959 = vsel %vm1095, %v4846, %v4848
      %v4960 = vsel %vm1095, %v4848, %v4850
      %v4961 = vsel %vm1095, %v4852, %v4854
      %v4962 = vsel %vm1095, %v4854, %v4856
      %v4963 = vsel %vm1095, %v4856, %v4858
      %v4964 = vsel %vm1095, %v4858, %v4860
      %v4965 = vsel %vm1095, %v4860, %v4862
      %v4966 = vsel %vm1095, %v4862, %v4864
      %v4967 = vsel %vm1095, %v4864, %v4866
      %v4968 = vsel %vm1095, %v4868, %v4870
      %v4969 = vsel %vm1095, %v4870, %v4872
      %v4970 = vsel %vm1095, %v4872, %v4874
      %v4971 = vsel %vm1095, %v4874, %v4876
      %v4972 = vsel %vm1095, %v4876, %v4878
      %v4973 = vsel %vm1095, %v4878, %v4880
      %v4974 = vsel %vm1095, %v4880, %v4882
      %v4975 = vsel %vm1095, %v4884, %v4886
      %v4976 = vsel %vm1095, %v4886, %v4888
      %v4977 = vsel %vm1095, %v4888, %v4890
      %v4978 = vsel %vm1095, %v4890, %v4892
      %v4979 = vsel %vm1095, %v4892, %v4894
      %v4980 = vsel %vm1095, %v4894, %v4896
      %v4981 = vsel %vm1095, %v4896, %v4898
      %v4982 = vsel %vm1095, %v4900, %v4902
      %v4983 = vsel %vm1095, %v4902, %v4904
      %v4984 = vsel %vm1095, %v4904, %v4906
      %v4985 = vsel %vm1095, %v4906, %v4908
      %v4986 = vsel %vm1095, %v4908, %v4910
      %v4987 = vsel %vm1095, %v4910, %v4912
      %v4988 = vsel %vm1095, %v4912, %v4914
      %v4989 = vsel %vm1095, %v4916, %v4918
      %v4990 = vsel %vm1095, %v4918, %v4920
      %v4991 = vsel %vm1095, %v4920, %v4922
      %v4992 = vsel %vm1095, %v4922, %v4924
      %v4993 = vsel %vm1095, %v4924, %v4926
      %v4994 = vsel %vm1095, %v4926, %v4928
      %v4995 = vsel %vm1095, %v4928, %v4930
      %v4996 = vsel %vm1095, %v4932, %v4934
      %v4997 = vsel %vm1095, %v4934, %v4936
      %v4998 = vsel %vm1095, %v4936, %v4938
      %v4999 = vsel %vm1095, %v4938, %v4940
      %v5000 = vsel %vm1095, %v4940, %v4942
      %v5001 = vsel %vm1095, %v4942, %v4944
      %v5002 = vsel %vm1095, %v4944, %v4946
      %5059 = vrot.lane.b32.xlu0 %v4395, 95
      %v5060 = vpop.permute.xlu0 %5059
      %5061 = vrot.lane.b32.xlu0 %v4396, 95
      %v5062 = vpop.permute.xlu0 %5061
      %5063 = vrot.lane.b32.xlu0 %v4397, 95
      %v5064 = vpop.permute.xlu0 %5063
      %5065 = vrot.lane.b32.xlu0 %v4398, 95
      %v5066 = vpop.permute.xlu0 %5065
      %5067 = vrot.lane.b32.xlu0 %v4399, 95
      %v5068 = vpop.permute.xlu0 %5067
      %5069 = vrot.lane.b32.xlu0 %v4400, 95
      %v5070 = vpop.permute.xlu0 %5069
      %5071 = vrot.lane.b32.xlu0 %v4401, 95
      %v5072 = vpop.permute.xlu0 %5071
      %5073 = vrot.lane.b32.xlu0 %v4402, 95
      %v5074 = vpop.permute.xlu0 %5073
      %5075 = vrot.lane.b32.xlu0 %v4403, 95
      %v5076 = vpop.permute.xlu0 %5075
      %5077 = vrot.lane.b32.xlu0 %v4404, 95
      %v5078 = vpop.permute.xlu0 %5077
      %5079 = vrot.lane.b32.xlu0 %v4405, 95
      %v5080 = vpop.permute.xlu0 %5079
      %5081 = vrot.lane.b32.xlu0 %v4406, 95
      %v5082 = vpop.permute.xlu0 %5081
      %5083 = vrot.lane.b32.xlu0 %v4407, 95
      %v5084 = vpop.permute.xlu0 %5083
      %5085 = vrot.lane.b32.xlu0 %v4408, 95
      %v5086 = vpop.permute.xlu0 %5085
      %5087 = vrot.lane.b32.xlu0 %v4409, 95
      %v5088 = vpop.permute.xlu0 %5087
      %5089 = vrot.lane.b32.xlu0 %v4410, 95
      %v5090 = vpop.permute.xlu0 %5089
      %5091 = vrot.lane.b32.xlu0 %v4411, 95
      %v5092 = vpop.permute.xlu0 %5091
      %5093 = vrot.lane.b32.xlu0 %v4412, 95
      %v5094 = vpop.permute.xlu0 %5093
      %5095 = vrot.lane.b32.xlu0 %v4413, 95
      %v5096 = vpop.permute.xlu0 %5095
      %5097 = vrot.lane.b32.xlu0 %v4414, 95
      %v5098 = vpop.permute.xlu0 %5097
      %5099 = vrot.lane.b32.xlu0 %v4415, 95
      %v5100 = vpop.permute.xlu0 %5099
      %5101 = vrot.lane.b32.xlu0 %v4416, 95
      %v5102 = vpop.permute.xlu0 %5101
      %5103 = vrot.lane.b32.xlu0 %v4417, 95
      %v5104 = vpop.permute.xlu0 %5103
      %5105 = vrot.lane.b32.xlu0 %v4418, 95
      %v5106 = vpop.permute.xlu0 %5105
      %5107 = vrot.lane.b32.xlu0 %v4419, 95
      %v5108 = vpop.permute.xlu0 %5107
      %5109 = vrot.lane.b32.xlu0 %v4420, 95
      %v5110 = vpop.permute.xlu0 %5109
      %5111 = vrot.lane.b32.xlu0 %v4421, 95
      %v5112 = vpop.permute.xlu0 %5111
      %5113 = vrot.lane.b32.xlu0 %v4422, 95
      %v5114 = vpop.permute.xlu0 %5113
      %5115 = vrot.lane.b32.xlu0 %v4423, 95
      %v5116 = vpop.permute.xlu0 %5115
      %5117 = vrot.lane.b32.xlu0 %v4424, 95
      %v5118 = vpop.permute.xlu0 %5117
      %5119 = vrot.lane.b32.xlu0 %v4425, 95
      %v5120 = vpop.permute.xlu0 %5119
      %5121 = vrot.lane.b32.xlu0 %v4426, 95
      %v5122 = vpop.permute.xlu0 %5121
      %5123 = vrot.lane.b32.xlu0 %v4427, 95
      %v5124 = vpop.permute.xlu0 %5123
      %5125 = vrot.lane.b32.xlu0 %v4428, 95
      %v5126 = vpop.permute.xlu0 %5125
      %5127 = vrot.lane.b32.xlu0 %v4429, 95
      %v5128 = vpop.permute.xlu0 %5127
      %5129 = vrot.lane.b32.xlu0 %v4430, 95
      %v5130 = vpop.permute.xlu0 %5129
      %5131 = vrot.lane.b32.xlu0 %v4431, 95
      %v5132 = vpop.permute.xlu0 %5131
      %5133 = vrot.lane.b32.xlu0 %v4432, 95
      %v5134 = vpop.permute.xlu0 %5133
      %5135 = vrot.lane.b32.xlu0 %v4433, 95
      %v5136 = vpop.permute.xlu0 %5135
      %5137 = vrot.lane.b32.xlu0 %v4434, 95
      %v5138 = vpop.permute.xlu0 %5137
      %5139 = vrot.lane.b32.xlu0 %v4435, 95
      %v5140 = vpop.permute.xlu0 %5139
      %5141 = vrot.lane.b32.xlu0 %v4436, 95
      %v5142 = vpop.permute.xlu0 %5141
      %5143 = vrot.lane.b32.xlu0 %v4437, 95
      %v5144 = vpop.permute.xlu0 %5143
      %5145 = vrot.lane.b32.xlu0 %v4438, 95
      %v5146 = vpop.permute.xlu0 %5145
      %5147 = vrot.lane.b32.xlu0 %v4439, 95
      %v5148 = vpop.permute.xlu0 %5147
      %5149 = vrot.lane.b32.xlu0 %v4440, 95
      %v5150 = vpop.permute.xlu0 %5149
      %5151 = vrot.lane.b32.xlu0 %v4441, 95
      %v5152 = vpop.permute.xlu0 %5151
      %5153 = vrot.lane.b32.xlu0 %v4442, 95
      %v5154 = vpop.permute.xlu0 %5153
      %5155 = vrot.lane.b32.xlu0 %v4443, 95
      %v5156 = vpop.permute.xlu0 %5155
      %5157 = vrot.lane.b32.xlu0 %v4444, 95
      %v5158 = vpop.permute.xlu0 %5157
      %5159 = vrot.lane.b32.xlu0 %v4445, 95
      %v5160 = vpop.permute.xlu0 %5159
      %5161 = vrot.lane.b32.xlu0 %v4446, 95
      %v5162 = vpop.permute.xlu0 %5161
      %5163 = vrot.lane.b32.xlu0 %v4447, 95
      %v5164 = vpop.permute.xlu0 %5163
      %5165 = vrot.lane.b32.xlu0 %v4448, 95
      %v5166 = vpop.permute.xlu0 %5165
      %5167 = vrot.lane.b32.xlu0 %v4449, 95
      %v5168 = vpop.permute.xlu0 %5167
      %5169 = vrot.lane.b32.xlu0 %v4450, 95
      %v5170 = vpop.permute.xlu0 %5169
      %5171 = vrot.lane.b32.xlu0 %v4451, 95
      %v5172 = vpop.permute.xlu0 %5171
      %5173 = vrot.lane.b32.xlu0 %v4452, 95
      %v5174 = vpop.permute.xlu0 %5173
      %5175 = vrot.lane.b32.xlu0 %v4453, 95
      %v5176 = vpop.permute.xlu0 %5175
      %5177 = vrot.lane.b32.xlu0 %v4454, 95
      %v5178 = vpop.permute.xlu0 %5177
      %5179 = vrot.lane.b32.xlu0 %v4455, 95
      %v5180 = vpop.permute.xlu0 %5179
      %5181 = vrot.lane.b32.xlu0 %v4456, 95
      %v5182 = vpop.permute.xlu0 %5181
      %5183 = vrot.lane.b32.xlu0 %v4457, 95
      %v5184 = vpop.permute.xlu0 %5183
      %5185 = vrot.lane.b32.xlu0 %v4458, 95
      %v5186 = vpop.permute.xlu0 %5185
      %v5187 = vsel %vm1227, %v5060, %v5062
      %v5188 = vsel %vm1227, %v5062, %v5064
      %v5189 = vsel %vm1227, %v5064, %v5066
      %v5190 = vsel %vm1227, %v5066, %v5068
      %v5191 = vsel %vm1227, %v5068, %v5070
      %v5192 = vsel %vm1227, %v5070, %v5072
      %v5193 = vsel %vm1227, %v5072, %v5074
      %v5194 = vsel %vm1227, %v5076, %v5078
      %v5195 = vsel %vm1227, %v5078, %v5080
      %v5196 = vsel %vm1227, %v5080, %v5082
      %v5197 = vsel %vm1227, %v5082, %v5084
      %v5198 = vsel %vm1227, %v5084, %v5086
      %v5199 = vsel %vm1227, %v5086, %v5088
      %v5200 = vsel %vm1227, %v5088, %v5090
      %v5201 = vsel %vm1227, %v5092, %v5094
      %v5202 = vsel %vm1227, %v5094, %v5096
      %v5203 = vsel %vm1227, %v5096, %v5098
      %v5204 = vsel %vm1227, %v5098, %v5100
      %v5205 = vsel %vm1227, %v5100, %v5102
      %v5206 = vsel %vm1227, %v5102, %v5104
      %v5207 = vsel %vm1227, %v5104, %v5106
      %v5208 = vsel %vm1227, %v5108, %v5110
      %v5209 = vsel %vm1227, %v5110, %v5112
      %v5210 = vsel %vm1227, %v5112, %v5114
      %v5211 = vsel %vm1227, %v5114, %v5116
      %v5212 = vsel %vm1227, %v5116, %v5118
      %v5213 = vsel %vm1227, %v5118, %v5120
      %v5214 = vsel %vm1227, %v5120, %v5122
      %v5215 = vsel %vm1227, %v5124, %v5126
      %v5216 = vsel %vm1227, %v5126, %v5128
      %v5217 = vsel %vm1227, %v5128, %v5130
      %v5218 = vsel %vm1227, %v5130, %v5132
      %v5219 = vsel %vm1227, %v5132, %v5134
      %v5220 = vsel %vm1227, %v5134, %v5136
      %v5221 = vsel %vm1227, %v5136, %v5138
      %v5222 = vsel %vm1227, %v5140, %v5142
      %v5223 = vsel %vm1227, %v5142, %v5144
      %v5224 = vsel %vm1227, %v5144, %v5146
      %v5225 = vsel %vm1227, %v5146, %v5148
      %v5226 = vsel %vm1227, %v5148, %v5150
      %v5227 = vsel %vm1227, %v5150, %v5152
      %v5228 = vsel %vm1227, %v5152, %v5154
      %v5229 = vsel %vm1227, %v5156, %v5158
      %v5230 = vsel %vm1227, %v5158, %v5160
      %v5231 = vsel %vm1227, %v5160, %v5162
      %v5232 = vsel %vm1227, %v5162, %v5164
      %v5233 = vsel %vm1227, %v5164, %v5166
      %v5234 = vsel %vm1227, %v5166, %v5168
      %v5235 = vsel %vm1227, %v5168, %v5170
      %v5236 = vsel %vm1227, %v5172, %v5174
      %v5237 = vsel %vm1227, %v5174, %v5176
      %v5238 = vsel %vm1227, %v5176, %v5178
      %v5239 = vsel %vm1227, %v5178, %v5180
      %v5240 = vsel %vm1227, %v5180, %v5182
      %v5241 = vsel %vm1227, %v5182, %v5184
      %v5242 = vsel %vm1227, %v5184, %v5186
      %v5299 = vmax.f32 %v4947, %v5187
      %v5300 = vmax.f32 %v4948, %v5188
      %v5301 = vmax.f32 %v4949, %v5189
      %v5302 = vmax.f32 %v4950, %v5190
      %v5303 = vmax.f32 %v4951, %v5191
      %v5304 = vmax.f32 %v4952, %v5192
      %v5305 = vmax.f32 %v4953, %v5193
      %v5306 = vmax.f32 %v4954, %v5194
      %v5307 = vmax.f32 %v4955, %v5195
      %v5308 = vmax.f32 %v4956, %v5196
      %v5309 = vmax.f32 %v4957, %v5197
      %v5310 = vmax.f32 %v4958, %v5198
      %v5311 = vmax.f32 %v4959, %v5199
      %v5312 = vmax.f32 %v4960, %v5200
      %v5313 = vmax.f32 %v4961, %v5201
      %v5314 = vmax.f32 %v4962, %v5202
      %v5315 = vmax.f32 %v4963, %v5203
      %v5316 = vmax.f32 %v4964, %v5204
      %v5317 = vmax.f32 %v4965, %v5205
      %v5318 = vmax.f32 %v4966, %v5206
      %v5319 = vmax.f32 %v4967, %v5207
      %v5320 = vmax.f32 %v4968, %v5208
      %v5321 = vmax.f32 %v4969, %v5209
      %v5322 = vmax.f32 %v4970, %v5210
      %v5323 = vmax.f32 %v4971, %v5211
      %v5324 = vmax.f32 %v4972, %v5212
      %v5325 = vmax.f32 %v4973, %v5213
      %v5326 = vmax.f32 %v4974, %v5214
      %v5327 = vmax.f32 %v4975, %v5215
      %v5328 = vmax.f32 %v4976, %v5216
      %v5329 = vmax.f32 %v4977, %v5217
      %v5330 = vmax.f32 %v4978, %v5218
      %v5331 = vmax.f32 %v4979, %v5219
      %v5332 = vmax.f32 %v4980, %v5220
      %v5333 = vmax.f32 %v4981, %v5221
      %v5334 = vmax.f32 %v4982, %v5222
      %v5335 = vmax.f32 %v4983, %v5223
      %v5336 = vmax.f32 %v4984, %v5224
      %v5337 = vmax.f32 %v4985, %v5225
      %v5338 = vmax.f32 %v4986, %v5226
      %v5339 = vmax.f32 %v4987, %v5227
      %v5340 = vmax.f32 %v4988, %v5228
      %v5341 = vmax.f32 %v4989, %v5229
      %v5342 = vmax.f32 %v4990, %v5230
      %v5343 = vmax.f32 %v4991, %v5231
      %v5344 = vmax.f32 %v4992, %v5232
      %v5345 = vmax.f32 %v4993, %v5233
      %v5346 = vmax.f32 %v4994, %v5234
      %v5347 = vmax.f32 %v4995, %v5235
      %v5348 = vmax.f32 %v4996, %v5236
      %v5349 = vmax.f32 %v4997, %v5237
      %v5350 = vmax.f32 %v4998, %v5238
      %v5351 = vmax.f32 %v4999, %v5239
      %v5352 = vmax.f32 %v5000, %v5240
      %v5353 = vmax.f32 %v5001, %v5241
      %v5354 = vmax.f32 %v5002, %v5242
      %v5355 = vmax.f32 %v4763, %v5299
      %v5356 = vmax.f32 %v4764, %v5300
      %v5357 = vmax.f32 %v4765, %v5301
      %v5358 = vmax.f32 %v4766, %v5302
      %v5359 = vmax.f32 %v4767, %v5303
      %v5360 = vmax.f32 %v4768, %v5304
      %v5361 = vmax.f32 %v4769, %v5305
      %v5362 = vmax.f32 %v4770, %v5306
      %v5363 = vmax.f32 %v4771, %v5307
      %v5364 = vmax.f32 %v4772, %v5308
      %v5365 = vmax.f32 %v4773, %v5309
      %v5366 = vmax.f32 %v4774, %v5310
      %v5367 = vmax.f32 %v4775, %v5311
      %v5368 = vmax.f32 %v4776, %v5312
      %v5369 = vmax.f32 %v4777, %v5313
      %v5370 = vmax.f32 %v4778, %v5314
      %v5371 = vmax.f32 %v4779, %v5315
      %v5372 = vmax.f32 %v4780, %v5316
      %v5373 = vmax.f32 %v4781, %v5317
      %v5374 = vmax.f32 %v4782, %v5318
      %v5375 = vmax.f32 %v4783, %v5319
      %v5376 = vmax.f32 %v4784, %v5320
      %v5377 = vmax.f32 %v4785, %v5321
      %v5378 = vmax.f32 %v4786, %v5322
      %v5379 = vmax.f32 %v4787, %v5323
      %v5380 = vmax.f32 %v4788, %v5324
      %v5381 = vmax.f32 %v4789, %v5325
      %v5382 = vmax.f32 %v4790, %v5326
      %v5383 = vmax.f32 %v4791, %v5327
      %v5384 = vmax.f32 %v4792, %v5328
      %v5385 = vmax.f32 %v4793, %v5329
      %v5386 = vmax.f32 %v4794, %v5330
      %v5387 = vmax.f32 %v4795, %v5331
      %v5388 = vmax.f32 %v4796, %v5332
      %v5389 = vmax.f32 %v4797, %v5333
      %v5390 = vmax.f32 %v4798, %v5334
      %v5391 = vmax.f32 %v4799, %v5335
      %v5392 = vmax.f32 %v4800, %v5336
      %v5393 = vmax.f32 %v4801, %v5337
      %v5394 = vmax.f32 %v4802, %v5338
      %v5395 = vmax.f32 %v4803, %v5339
      %v5396 = vmax.f32 %v4804, %v5340
      %v5397 = vmax.f32 %v4805, %v5341
      %v5398 = vmax.f32 %v4806, %v5342
      %v5399 = vmax.f32 %v4807, %v5343
      %v5400 = vmax.f32 %v4808, %v5344
      %v5401 = vmax.f32 %v4809, %v5345
      %v5402 = vmax.f32 %v4810, %v5346
      %v5403 = vmax.f32 %v4811, %v5347
      %v5404 = vmax.f32 %v4812, %v5348
      %v5405 = vmax.f32 %v4813, %v5349
      %v5406 = vmax.f32 %v4814, %v5350
      %v5407 = vmax.f32 %v4815, %v5351
      %v5408 = vmax.f32 %v4816, %v5352
      %v5409 = vmax.f32 %v4817, %v5353
      %v5410 = vmax.f32 %v4818, %v5354
      %v5411 = vpack.c.bf16 %v5383, %v5355
      %v5412 = vpack.c.bf16 %v5384, %v5356
      %v5413 = vpack.c.bf16 %v5385, %v5357
      %v5414 = vpack.c.bf16 %v5386, %v5358
      %v5415 = vpack.c.bf16 %v5387, %v5359
      %v5416 = vpack.c.bf16 %v5388, %v5360
      %v5417 = vpack.c.bf16 %v5389, %v5361
      %v5418 = vpack.c.bf16 %v5390, %v5362
      %v5419 = vpack.c.bf16 %v5391, %v5363
      %v5420 = vpack.c.bf16 %v5392, %v5364
      %v5421 = vpack.c.bf16 %v5393, %v5365
      %v5422 = vpack.c.bf16 %v5394, %v5366
      %v5423 = vpack.c.bf16 %v5395, %v5367
      %v5424 = vpack.c.bf16 %v5396, %v5368
      %v5425 = vpack.c.bf16 %v5397, %v5369
      %v5426 = vpack.c.bf16 %v5398, %v5370
      %v5427 = vpack.c.bf16 %v5399, %v5371
      %v5428 = vpack.c.bf16 %v5400, %v5372
      %v5429 = vpack.c.bf16 %v5401, %v5373
      %v5430 = vpack.c.bf16 %v5402, %v5374
      %v5431 = vpack.c.bf16 %v5403, %v5375
      %v5432 = vpack.c.bf16 %v5404, %v5376
      %v5433 = vpack.c.bf16 %v5405, %v5377
      %v5434 = vpack.c.bf16 %v5406, %v5378
      %v5435 = vpack.c.bf16 %v5407, %v5379
      %v5436 = vpack.c.bf16 %v5408, %v5380
      %v5437 = vpack.c.bf16 %v5409, %v5381
      %v5438 = vpack.c.bf16 %v5410, %v5382
      %5467 = vrot.lane.b32.xlu0 %v5411, 126
      %v5468 = vpop.permute.xlu0 %5467
      %5469 = vrot.lane.b32.xlu0 %v5412, 126
      %v5470 = vpop.permute.xlu0 %5469
      %5471 = vrot.lane.b32.xlu0 %v5413, 126
      %v5472 = vpop.permute.xlu0 %5471
      %5473 = vrot.lane.b32.xlu0 %v5414, 126
      %v5474 = vpop.permute.xlu0 %5473
      %5475 = vrot.lane.b32.xlu0 %v5415, 126
      %v5476 = vpop.permute.xlu0 %5475
      %5477 = vrot.lane.b32.xlu0 %v5416, 126
      %v5478 = vpop.permute.xlu0 %5477
      %5479 = vrot.lane.b32.xlu0 %v5417, 126
      %v5480 = vpop.permute.xlu0 %5479
      %5481 = vrot.lane.b32.xlu0 %v5418, 126
      %v5482 = vpop.permute.xlu0 %5481
      %5483 = vrot.lane.b32.xlu0 %v5419, 126
      %v5484 = vpop.permute.xlu0 %5483
      %5485 = vrot.lane.b32.xlu0 %v5420, 126
      %v5486 = vpop.permute.xlu0 %5485
      %5487 = vrot.lane.b32.xlu0 %v5421, 126
      %v5488 = vpop.permute.xlu0 %5487
      %5489 = vrot.lane.b32.xlu0 %v5422, 126
      %v5490 = vpop.permute.xlu0 %5489
      %5491 = vrot.lane.b32.xlu0 %v5423, 126
      %v5492 = vpop.permute.xlu0 %5491
      %5493 = vrot.lane.b32.xlu0 %v5424, 126
      %v5494 = vpop.permute.xlu0 %5493
      %5495 = vrot.lane.b32.xlu0 %v5425, 126
      %v5496 = vpop.permute.xlu0 %5495
      %5497 = vrot.lane.b32.xlu0 %v5426, 126
      %v5498 = vpop.permute.xlu0 %5497
      %5499 = vrot.lane.b32.xlu0 %v5427, 126
      %v5500 = vpop.permute.xlu0 %5499
      %5501 = vrot.lane.b32.xlu0 %v5428, 126
      %v5502 = vpop.permute.xlu0 %5501
      %5503 = vrot.lane.b32.xlu0 %v5429, 126
      %v5504 = vpop.permute.xlu0 %5503
      %5505 = vrot.lane.b32.xlu0 %v5430, 126
      %v5506 = vpop.permute.xlu0 %5505
      %5507 = vrot.lane.b32.xlu0 %v5431, 126
      %v5508 = vpop.permute.xlu0 %5507
      %5509 = vrot.lane.b32.xlu0 %v5432, 126
      %v5510 = vpop.permute.xlu0 %5509
      %5511 = vrot.lane.b32.xlu0 %v5433, 126
      %v5512 = vpop.permute.xlu0 %5511
      %5513 = vrot.lane.b32.xlu0 %v5434, 126
      %v5514 = vpop.permute.xlu0 %5513
      %5515 = vrot.lane.b32.xlu0 %v5435, 126
      %v5516 = vpop.permute.xlu0 %5515
      %5517 = vrot.lane.b32.xlu0 %v5436, 126
      %v5518 = vpop.permute.xlu0 %5517
      %5519 = vrot.lane.b32.xlu0 %v5437, 126
      %v5520 = vpop.permute.xlu0 %5519
      %5521 = vrot.lane.b32.xlu0 %v5438, 126
      %v5522 = vpop.permute.xlu0 %5521
      %v5523 = vsel %vm636, %v5468, %v5470
      %v5524 = vsel %vm636, %v5470, %v5472
      %v5525 = vsel %vm636, %v5472, %v5474
      %v5526 = vsel %vm636, %v5474, %v5476
      %v5527 = vsel %vm636, %v5476, %v5478
      %v5528 = vsel %vm636, %v5478, %v5480
      %v5529 = vsel %vm636, %v5480, %v5482
      %v5530 = vsel %vm636, %v5482, %v5484
      %v5531 = vsel %vm636, %v5484, %v5486
      %v5532 = vsel %vm636, %v5486, %v5488
      %v5533 = vsel %vm636, %v5488, %v5490
      %v5534 = vsel %vm636, %v5490, %v5492
      %v5535 = vsel %vm636, %v5492, %v5494
      %v5536 = vsel %vm636, %v5494, %v5496
      %v5537 = vsel %vm636, %v5496, %v5498
      %v5538 = vsel %vm636, %v5498, %v5500
      %v5539 = vsel %vm636, %v5500, %v5502
      %v5540 = vsel %vm636, %v5502, %v5504
      %v5541 = vsel %vm636, %v5504, %v5506
      %v5542 = vsel %vm636, %v5506, %v5508
      %v5543 = vsel %vm636, %v5508, %v5510
      %v5544 = vsel %vm636, %v5510, %v5512
      %v5545 = vsel %vm636, %v5512, %v5514
      %v5546 = vsel %vm636, %v5514, %v5516
      %v5547 = vsel %vm636, %v5516, %v5518
      %v5548 = vsel %vm636, %v5518, %v5520
      %v5549 = vsel %vm636, %v5520, %v5522
      %v5579 = vsel %vm699, %v5522, %v5468
      %5581 = vrot.lane.b32.xlu0 %v5411, 124
      %v5582 = vpop.permute.xlu0 %5581
      %5583 = vrot.lane.b32.xlu0 %v5412, 124
      %v5584 = vpop.permute.xlu0 %5583
      %5585 = vrot.lane.b32.xlu0 %v5413, 124
      %v5586 = vpop.permute.xlu0 %5585
      %5587 = vrot.lane.b32.xlu0 %v5414, 124
      %v5588 = vpop.permute.xlu0 %5587
      %5589 = vrot.lane.b32.xlu0 %v5415, 124
      %v5590 = vpop.permute.xlu0 %5589
      %5591 = vrot.lane.b32.xlu0 %v5416, 124
      %v5592 = vpop.permute.xlu0 %5591
      %5593 = vrot.lane.b32.xlu0 %v5417, 124
      %v5594 = vpop.permute.xlu0 %5593
      %5595 = vrot.lane.b32.xlu0 %v5418, 124
      %v5596 = vpop.permute.xlu0 %5595
      %5597 = vrot.lane.b32.xlu0 %v5419, 124
      %v5598 = vpop.permute.xlu0 %5597
      %5599 = vrot.lane.b32.xlu0 %v5420, 124
      %v5600 = vpop.permute.xlu0 %5599
      %5601 = vrot.lane.b32.xlu0 %v5421, 124
      %v5602 = vpop.permute.xlu0 %5601
      %5603 = vrot.lane.b32.xlu0 %v5422, 124
      %v5604 = vpop.permute.xlu0 %5603
      %5605 = vrot.lane.b32.xlu0 %v5423, 124
      %v5606 = vpop.permute.xlu0 %5605
      %5607 = vrot.lane.b32.xlu0 %v5424, 124
      %v5608 = vpop.permute.xlu0 %5607
      %5609 = vrot.lane.b32.xlu0 %v5425, 124
      %v5610 = vpop.permute.xlu0 %5609
      %5611 = vrot.lane.b32.xlu0 %v5426, 124
      %v5612 = vpop.permute.xlu0 %5611
      %5613 = vrot.lane.b32.xlu0 %v5427, 124
      %v5614 = vpop.permute.xlu0 %5613
      %5615 = vrot.lane.b32.xlu0 %v5428, 124
      %v5616 = vpop.permute.xlu0 %5615
      %5617 = vrot.lane.b32.xlu0 %v5429, 124
      %v5618 = vpop.permute.xlu0 %5617
      %5619 = vrot.lane.b32.xlu0 %v5430, 124
      %v5620 = vpop.permute.xlu0 %5619
      %5621 = vrot.lane.b32.xlu0 %v5431, 124
      %v5622 = vpop.permute.xlu0 %5621
      %5623 = vrot.lane.b32.xlu0 %v5432, 124
      %v5624 = vpop.permute.xlu0 %5623
      %5625 = vrot.lane.b32.xlu0 %v5433, 124
      %v5626 = vpop.permute.xlu0 %5625
      %5627 = vrot.lane.b32.xlu0 %v5434, 124
      %v5628 = vpop.permute.xlu0 %5627
      %5629 = vrot.lane.b32.xlu0 %v5435, 124
      %v5630 = vpop.permute.xlu0 %5629
      %5631 = vrot.lane.b32.xlu0 %v5436, 124
      %v5632 = vpop.permute.xlu0 %5631
      %5633 = vrot.lane.b32.xlu0 %v5437, 124
      %v5634 = vpop.permute.xlu0 %5633
      %5635 = vrot.lane.b32.xlu0 %v5438, 124
      %v5636 = vpop.permute.xlu0 %5635
      %v5637 = vsel %vm900, %v5582, %v5584
      %v5638 = vsel %vm900, %v5584, %v5586
      %v5639 = vsel %vm900, %v5586, %v5588
      %v5640 = vsel %vm900, %v5588, %v5590
      %v5641 = vsel %vm900, %v5590, %v5592
      %v5642 = vsel %vm900, %v5592, %v5594
      %v5643 = vsel %vm900, %v5594, %v5596
      %v5644 = vsel %vm900, %v5596, %v5598
      %v5645 = vsel %vm900, %v5598, %v5600
      %v5646 = vsel %vm900, %v5600, %v5602
      %v5647 = vsel %vm900, %v5602, %v5604
      %v5648 = vsel %vm900, %v5604, %v5606
      %v5649 = vsel %vm900, %v5606, %v5608
      %v5650 = vsel %vm900, %v5608, %v5610
      %v5651 = vsel %vm900, %v5610, %v5612
      %v5652 = vsel %vm900, %v5612, %v5614
      %v5653 = vsel %vm900, %v5614, %v5616
      %v5654 = vsel %vm900, %v5616, %v5618
      %v5655 = vsel %vm900, %v5618, %v5620
      %v5656 = vsel %vm900, %v5620, %v5622
      %v5657 = vsel %vm900, %v5622, %v5624
      %v5658 = vsel %vm900, %v5624, %v5626
      %v5659 = vsel %vm900, %v5626, %v5628
      %v5660 = vsel %vm900, %v5628, %v5630
      %v5661 = vsel %vm900, %v5630, %v5632
      %v5662 = vsel %vm900, %v5632, %v5634
      %v5663 = vsel %vm900, %v5634, %v5636
      %v5693 = vsel %vm963, %v5636, %v5582
      %5695 = vrot.lane.b32.xlu0 %v5411, 122
      %v5696 = vpop.permute.xlu0 %5695
      %5697 = vrot.lane.b32.xlu0 %v5412, 122
      %v5698 = vpop.permute.xlu0 %5697
      %5699 = vrot.lane.b32.xlu0 %v5413, 122
      %v5700 = vpop.permute.xlu0 %5699
      %5701 = vrot.lane.b32.xlu0 %v5414, 122
      %v5702 = vpop.permute.xlu0 %5701
      %5703 = vrot.lane.b32.xlu0 %v5415, 122
      %v5704 = vpop.permute.xlu0 %5703
      %5705 = vrot.lane.b32.xlu0 %v5416, 122
      %v5706 = vpop.permute.xlu0 %5705
      %5707 = vrot.lane.b32.xlu0 %v5417, 122
      %v5708 = vpop.permute.xlu0 %5707
      %5709 = vrot.lane.b32.xlu0 %v5418, 122
      %v5710 = vpop.permute.xlu0 %5709
      %5711 = vrot.lane.b32.xlu0 %v5419, 122
      %v5712 = vpop.permute.xlu0 %5711
      %5713 = vrot.lane.b32.xlu0 %v5420, 122
      %v5714 = vpop.permute.xlu0 %5713
      %5715 = vrot.lane.b32.xlu0 %v5421, 122
      %v5716 = vpop.permute.xlu0 %5715
      %5717 = vrot.lane.b32.xlu0 %v5422, 122
      %v5718 = vpop.permute.xlu0 %5717
      %5719 = vrot.lane.b32.xlu0 %v5423, 122
      %v5720 = vpop.permute.xlu0 %5719
      %5721 = vrot.lane.b32.xlu0 %v5424, 122
      %v5722 = vpop.permute.xlu0 %5721
      %5723 = vrot.lane.b32.xlu0 %v5425, 122
      %v5724 = vpop.permute.xlu0 %5723
      %5725 = vrot.lane.b32.xlu0 %v5426, 122
      %v5726 = vpop.permute.xlu0 %5725
      %5727 = vrot.lane.b32.xlu0 %v5427, 122
      %v5728 = vpop.permute.xlu0 %5727
      %5729 = vrot.lane.b32.xlu0 %v5428, 122
      %v5730 = vpop.permute.xlu0 %5729
      %5731 = vrot.lane.b32.xlu0 %v5429, 122
      %v5732 = vpop.permute.xlu0 %5731
      %5733 = vrot.lane.b32.xlu0 %v5430, 122
      %v5734 = vpop.permute.xlu0 %5733
      %5735 = vrot.lane.b32.xlu0 %v5431, 122
      %v5736 = vpop.permute.xlu0 %5735
      %5737 = vrot.lane.b32.xlu0 %v5432, 122
      %v5738 = vpop.permute.xlu0 %5737
      %5739 = vrot.lane.b32.xlu0 %v5433, 122
      %v5740 = vpop.permute.xlu0 %5739
      %5741 = vrot.lane.b32.xlu0 %v5434, 122
      %v5742 = vpop.permute.xlu0 %5741
      %5743 = vrot.lane.b32.xlu0 %v5435, 122
      %v5744 = vpop.permute.xlu0 %5743
      %5745 = vrot.lane.b32.xlu0 %v5436, 122
      %v5746 = vpop.permute.xlu0 %5745
      %5747 = vrot.lane.b32.xlu0 %v5437, 122
      %v5748 = vpop.permute.xlu0 %5747
      %5749 = vrot.lane.b32.xlu0 %v5438, 122
      %v5750 = vpop.permute.xlu0 %5749
      %vm5751 = vcmask 998400
      %v5752 = vsel %vm5751, %v5696, %v5698
      %v5753 = vsel %vm5751, %v5698, %v5700
      %v5754 = vsel %vm5751, %v5700, %v5702
      %v5755 = vsel %vm5751, %v5702, %v5704
      %v5756 = vsel %vm5751, %v5704, %v5706
      %v5757 = vsel %vm5751, %v5706, %v5708
      %v5758 = vsel %vm5751, %v5708, %v5710
      %v5759 = vsel %vm5751, %v5710, %v5712
      %v5760 = vsel %vm5751, %v5712, %v5714
      %v5761 = vsel %vm5751, %v5714, %v5716
      %v5762 = vsel %vm5751, %v5716, %v5718
      %v5763 = vsel %vm5751, %v5718, %v5720
      %v5764 = vsel %vm5751, %v5720, %v5722
      %v5765 = vsel %vm5751, %v5722, %v5724
      %v5766 = vsel %vm5751, %v5724, %v5726
      %v5767 = vsel %vm5751, %v5726, %v5728
      %v5768 = vsel %vm5751, %v5728, %v5730
      %v5769 = vsel %vm5751, %v5730, %v5732
      %v5770 = vsel %vm5751, %v5732, %v5734
      %v5771 = vsel %vm5751, %v5734, %v5736
      %v5772 = vsel %vm5751, %v5736, %v5738
      %v5773 = vsel %vm5751, %v5738, %v5740
      %v5774 = vsel %vm5751, %v5740, %v5742
      %v5775 = vsel %vm5751, %v5742, %v5744
      %v5776 = vsel %vm5751, %v5744, %v5746
      %v5777 = vsel %vm5751, %v5746, %v5748
      %v5778 = vsel %vm5751, %v5748, %v5750
      %vm5806 = vcmask 998400
      %v5809 = vsel %vm5806, %v5750, %v5696
      %5811 = vrot.lane.b32.xlu0 %v5411, 120
      %v5812 = vpop.permute.xlu0 %5811
      %5813 = vrot.lane.b32.xlu0 %v5412, 120
      %v5814 = vpop.permute.xlu0 %5813
      %5815 = vrot.lane.b32.xlu0 %v5413, 120
      %v5816 = vpop.permute.xlu0 %5815
      %5817 = vrot.lane.b32.xlu0 %v5414, 120
      %v5818 = vpop.permute.xlu0 %5817
      %5819 = vrot.lane.b32.xlu0 %v5415, 120
      %v5820 = vpop.permute.xlu0 %5819
      %5821 = vrot.lane.b32.xlu0 %v5416, 120
      %v5822 = vpop.permute.xlu0 %5821
      %5823 = vrot.lane.b32.xlu0 %v5417, 120
      %v5824 = vpop.permute.xlu0 %5823
      %5825 = vrot.lane.b32.xlu0 %v5418, 120
      %v5826 = vpop.permute.xlu0 %5825
      %5827 = vrot.lane.b32.xlu0 %v5419, 120
      %v5828 = vpop.permute.xlu0 %5827
      %5829 = vrot.lane.b32.xlu0 %v5420, 120
      %v5830 = vpop.permute.xlu0 %5829
      %5831 = vrot.lane.b32.xlu0 %v5421, 120
      %v5832 = vpop.permute.xlu0 %5831
      %5833 = vrot.lane.b32.xlu0 %v5422, 120
      %v5834 = vpop.permute.xlu0 %5833
      %5835 = vrot.lane.b32.xlu0 %v5423, 120
      %v5836 = vpop.permute.xlu0 %5835
      %5837 = vrot.lane.b32.xlu0 %v5424, 120
      %v5838 = vpop.permute.xlu0 %5837
      %5839 = vrot.lane.b32.xlu0 %v5425, 120
      %v5840 = vpop.permute.xlu0 %5839
      %5841 = vrot.lane.b32.xlu0 %v5426, 120
      %v5842 = vpop.permute.xlu0 %5841
      %5843 = vrot.lane.b32.xlu0 %v5427, 120
      %v5844 = vpop.permute.xlu0 %5843
      %5845 = vrot.lane.b32.xlu0 %v5428, 120
      %v5846 = vpop.permute.xlu0 %5845
      %5847 = vrot.lane.b32.xlu0 %v5429, 120
      %v5848 = vpop.permute.xlu0 %5847
      %5849 = vrot.lane.b32.xlu0 %v5430, 120
      %v5850 = vpop.permute.xlu0 %5849
      %5851 = vrot.lane.b32.xlu0 %v5431, 120
      %v5852 = vpop.permute.xlu0 %5851
      %5853 = vrot.lane.b32.xlu0 %v5432, 120
      %v5854 = vpop.permute.xlu0 %5853
      %5855 = vrot.lane.b32.xlu0 %v5433, 120
      %v5856 = vpop.permute.xlu0 %5855
      %5857 = vrot.lane.b32.xlu0 %v5434, 120
      %v5858 = vpop.permute.xlu0 %5857
      %5859 = vrot.lane.b32.xlu0 %v5435, 120
      %v5860 = vpop.permute.xlu0 %5859
      %5861 = vrot.lane.b32.xlu0 %v5436, 120
      %v5862 = vpop.permute.xlu0 %5861
      %5863 = vrot.lane.b32.xlu0 %v5437, 120
      %v5864 = vpop.permute.xlu0 %5863
      %5865 = vrot.lane.b32.xlu0 %v5438, 120
      %v5866 = vpop.permute.xlu0 %5865
      %vm5867 = vcmask 982016
      %v5868 = vsel %vm5867, %v5812, %v5814
      %v5869 = vsel %vm5867, %v5814, %v5816
      %v5870 = vsel %vm5867, %v5816, %v5818
      %v5871 = vsel %vm5867, %v5818, %v5820
      %v5872 = vsel %vm5867, %v5820, %v5822
      %v5873 = vsel %vm5867, %v5822, %v5824
      %v5874 = vsel %vm5867, %v5824, %v5826
      %v5875 = vsel %vm5867, %v5826, %v5828
      %v5876 = vsel %vm5867, %v5828, %v5830
      %v5877 = vsel %vm5867, %v5830, %v5832
      %v5878 = vsel %vm5867, %v5832, %v5834
      %v5879 = vsel %vm5867, %v5834, %v5836
      %v5880 = vsel %vm5867, %v5836, %v5838
      %v5881 = vsel %vm5867, %v5838, %v5840
      %v5882 = vsel %vm5867, %v5840, %v5842
      %v5883 = vsel %vm5867, %v5842, %v5844
      %v5884 = vsel %vm5867, %v5844, %v5846
      %v5885 = vsel %vm5867, %v5846, %v5848
      %v5886 = vsel %vm5867, %v5848, %v5850
      %v5887 = vsel %vm5867, %v5850, %v5852
      %v5888 = vsel %vm5867, %v5852, %v5854
      %v5889 = vsel %vm5867, %v5854, %v5856
      %v5890 = vsel %vm5867, %v5856, %v5858
      %v5891 = vsel %vm5867, %v5858, %v5860
      %v5892 = vsel %vm5867, %v5860, %v5862
      %v5893 = vsel %vm5867, %v5862, %v5864
      %v5894 = vsel %vm5867, %v5864, %v5866
      %vm5922 = vcmask 982016
      %v5925 = vsel %vm5922, %v5866, %v5812
      %5927 = vrot.lane.b32.xlu0 %v5411, 64
      %v5928 = vpop.permute.xlu0 %5927
      %5929 = vrot.lane.b32.xlu0 %v5412, 64
      %v5930 = vpop.permute.xlu0 %5929
      %5931 = vrot.lane.b32.xlu0 %v5413, 64
      %v5932 = vpop.permute.xlu0 %5931
      %5933 = vrot.lane.b32.xlu0 %v5414, 64
      %v5934 = vpop.permute.xlu0 %5933
      %5935 = vrot.lane.b32.xlu0 %v5415, 64
      %v5936 = vpop.permute.xlu0 %5935
      %5937 = vrot.lane.b32.xlu0 %v5416, 64
      %v5938 = vpop.permute.xlu0 %5937
      %5939 = vrot.lane.b32.xlu0 %v5417, 64
      %v5940 = vpop.permute.xlu0 %5939
      %5941 = vrot.lane.b32.xlu0 %v5418, 64
      %v5942 = vpop.permute.xlu0 %5941
      %5943 = vrot.lane.b32.xlu0 %v5419, 64
      %v5944 = vpop.permute.xlu0 %5943
      %5945 = vrot.lane.b32.xlu0 %v5420, 64
      %v5946 = vpop.permute.xlu0 %5945
      %5947 = vrot.lane.b32.xlu0 %v5421, 64
      %v5948 = vpop.permute.xlu0 %5947
      %5949 = vrot.lane.b32.xlu0 %v5422, 64
      %v5950 = vpop.permute.xlu0 %5949
      %5951 = vrot.lane.b32.xlu0 %v5423, 64
      %v5952 = vpop.permute.xlu0 %5951
      %5953 = vrot.lane.b32.xlu0 %v5424, 64
      %v5954 = vpop.permute.xlu0 %5953
      %5955 = vrot.lane.b32.xlu0 %v5425, 64
      %v5956 = vpop.permute.xlu0 %5955
      %5957 = vrot.lane.b32.xlu0 %v5426, 64
      %v5958 = vpop.permute.xlu0 %5957
      %5959 = vrot.lane.b32.xlu0 %v5427, 64
      %v5960 = vpop.permute.xlu0 %5959
      %5961 = vrot.lane.b32.xlu0 %v5428, 64
      %v5962 = vpop.permute.xlu0 %5961
      %5963 = vrot.lane.b32.xlu0 %v5429, 64
      %v5964 = vpop.permute.xlu0 %5963
      %5965 = vrot.lane.b32.xlu0 %v5430, 64
      %v5966 = vpop.permute.xlu0 %5965
      %5967 = vrot.lane.b32.xlu0 %v5431, 64
      %v5968 = vpop.permute.xlu0 %5967
      %5969 = vrot.lane.b32.xlu0 %v5432, 64
      %v5970 = vpop.permute.xlu0 %5969
      %5971 = vrot.lane.b32.xlu0 %v5433, 64
      %v5972 = vpop.permute.xlu0 %5971
      %5973 = vrot.lane.b32.xlu0 %v5434, 64
      %v5974 = vpop.permute.xlu0 %5973
      %5975 = vrot.lane.b32.xlu0 %v5435, 64
      %v5976 = vpop.permute.xlu0 %5975
      %5977 = vrot.lane.b32.xlu0 %v5436, 64
      %v5978 = vpop.permute.xlu0 %5977
      %5979 = vrot.lane.b32.xlu0 %v5437, 64
      %v5980 = vpop.permute.xlu0 %5979
      %5981 = vrot.lane.b32.xlu0 %v5438, 64
      %v5982 = vpop.permute.xlu0 %5981
      %v5983 = vsel %vm1692, %v5928, %v5930
      %v5984 = vsel %vm1692, %v5930, %v5932
      %v5985 = vsel %vm1692, %v5932, %v5934
      %v5986 = vsel %vm1692, %v5934, %v5936
      %v5987 = vsel %vm1692, %v5936, %v5938
      %v5988 = vsel %vm1692, %v5938, %v5940
      %v5989 = vsel %vm1692, %v5940, %v5942
      %v5990 = vsel %vm1692, %v5942, %v5944
      %v5991 = vsel %vm1692, %v5944, %v5946
      %v5992 = vsel %vm1692, %v5946, %v5948
      %v5993 = vsel %vm1692, %v5948, %v5950
      %v5994 = vsel %vm1692, %v5950, %v5952
      %v5995 = vsel %vm1692, %v5952, %v5954
      %v5996 = vsel %vm1692, %v5954, %v5956
      %v5997 = vsel %vm1692, %v5956, %v5958
      %v5998 = vsel %vm1692, %v5958, %v5960
      %v5999 = vsel %vm1692, %v5960, %v5962
      %v6000 = vsel %vm1692, %v5962, %v5964
      %v6001 = vsel %vm1692, %v5964, %v5966
      %v6002 = vsel %vm1692, %v5966, %v5968
      %v6003 = vsel %vm1692, %v5968, %v5970
      %v6004 = vsel %vm1692, %v5970, %v5972
      %v6005 = vsel %vm1692, %v5972, %v5974
      %v6006 = vsel %vm1692, %v5974, %v5976
      %v6007 = vsel %vm1692, %v5976, %v5978
      %v6008 = vsel %vm1692, %v5978, %v5980
      %v6009 = vsel %vm1692, %v5980, %v5982
      %v6039 = vsel %vm1755, %v5982, %v5928
      %6041 = vrot.lane.b32.xlu0 %v5411, 62
      %v6042 = vpop.permute.xlu0 %6041
      %6043 = vrot.lane.b32.xlu0 %v5412, 62
      %v6044 = vpop.permute.xlu0 %6043
      %6045 = vrot.lane.b32.xlu0 %v5413, 62
      %v6046 = vpop.permute.xlu0 %6045
      %6047 = vrot.lane.b32.xlu0 %v5414, 62
      %v6048 = vpop.permute.xlu0 %6047
      %6049 = vrot.lane.b32.xlu0 %v5415, 62
      %v6050 = vpop.permute.xlu0 %6049
      %6051 = vrot.lane.b32.xlu0 %v5416, 62
      %v6052 = vpop.permute.xlu0 %6051
      %6053 = vrot.lane.b32.xlu0 %v5417, 62
      %v6054 = vpop.permute.xlu0 %6053
      %6055 = vrot.lane.b32.xlu0 %v5418, 62
      %v6056 = vpop.permute.xlu0 %6055
      %6057 = vrot.lane.b32.xlu0 %v5419, 62
      %v6058 = vpop.permute.xlu0 %6057
      %6059 = vrot.lane.b32.xlu0 %v5420, 62
      %v6060 = vpop.permute.xlu0 %6059
      %6061 = vrot.lane.b32.xlu0 %v5421, 62
      %v6062 = vpop.permute.xlu0 %6061
      %6063 = vrot.lane.b32.xlu0 %v5422, 62
      %v6064 = vpop.permute.xlu0 %6063
      %6065 = vrot.lane.b32.xlu0 %v5423, 62
      %v6066 = vpop.permute.xlu0 %6065
      %6067 = vrot.lane.b32.xlu0 %v5424, 62
      %v6068 = vpop.permute.xlu0 %6067
      %6069 = vrot.lane.b32.xlu0 %v5425, 62
      %v6070 = vpop.permute.xlu0 %6069
      %6071 = vrot.lane.b32.xlu0 %v5426, 62
      %v6072 = vpop.permute.xlu0 %6071
      %6073 = vrot.lane.b32.xlu0 %v5427, 62
      %v6074 = vpop.permute.xlu0 %6073
      %6075 = vrot.lane.b32.xlu0 %v5428, 62
      %v6076 = vpop.permute.xlu0 %6075
      %6077 = vrot.lane.b32.xlu0 %v5429, 62
      %v6078 = vpop.permute.xlu0 %6077
      %6079 = vrot.lane.b32.xlu0 %v5430, 62
      %v6080 = vpop.permute.xlu0 %6079
      %6081 = vrot.lane.b32.xlu0 %v5431, 62
      %v6082 = vpop.permute.xlu0 %6081
      %6083 = vrot.lane.b32.xlu0 %v5432, 62
      %v6084 = vpop.permute.xlu0 %6083
      %6085 = vrot.lane.b32.xlu0 %v5433, 62
      %v6086 = vpop.permute.xlu0 %6085
      %6087 = vrot.lane.b32.xlu0 %v5434, 62
      %v6088 = vpop.permute.xlu0 %6087
      %6089 = vrot.lane.b32.xlu0 %v5435, 62
      %v6090 = vpop.permute.xlu0 %6089
      %6091 = vrot.lane.b32.xlu0 %v5436, 62
      %v6092 = vpop.permute.xlu0 %6091
      %6093 = vrot.lane.b32.xlu0 %v5437, 62
      %v6094 = vpop.permute.xlu0 %6093
      %6095 = vrot.lane.b32.xlu0 %v5438, 62
      %v6096 = vpop.permute.xlu0 %6095
      %v6097 = vsel %vm1956, %v6042, %v6044
      %v6098 = vsel %vm1956, %v6044, %v6046
      %v6099 = vsel %vm1956, %v6046, %v6048
      %v6100 = vsel %vm1956, %v6048, %v6050
      %v6101 = vsel %vm1956, %v6050, %v6052
      %v6102 = vsel %vm1956, %v6052, %v6054
      %v6103 = vsel %vm1956, %v6054, %v6056
      %v6104 = vsel %vm1956, %v6056, %v6058
      %v6105 = vsel %vm1956, %v6058, %v6060
      %v6106 = vsel %vm1956, %v6060, %v6062
      %v6107 = vsel %vm1956, %v6062, %v6064
      %v6108 = vsel %vm1956, %v6064, %v6066
      %v6109 = vsel %vm1956, %v6066, %v6068
      %v6110 = vsel %vm1956, %v6068, %v6070
      %v6111 = vsel %vm1956, %v6070, %v6072
      %v6112 = vsel %vm1956, %v6072, %v6074
      %v6113 = vsel %vm1956, %v6074, %v6076
      %v6114 = vsel %vm1956, %v6076, %v6078
      %v6115 = vsel %vm1956, %v6078, %v6080
      %v6116 = vsel %vm1956, %v6080, %v6082
      %v6117 = vsel %vm1956, %v6082, %v6084
      %v6118 = vsel %vm1956, %v6084, %v6086
      %v6119 = vsel %vm1956, %v6086, %v6088
      %v6120 = vsel %vm1956, %v6088, %v6090
      %v6121 = vsel %vm1956, %v6090, %v6092
      %v6122 = vsel %vm1956, %v6092, %v6094
      %v6123 = vsel %vm1956, %v6094, %v6096
      %v6153 = vsel %vm2019, %v6096, %v6042
      %6155 = vrot.lane.b32.xlu0 %v5411, 60
      %v6156 = vpop.permute.xlu0 %6155
      %6157 = vrot.lane.b32.xlu0 %v5412, 60
      %v6158 = vpop.permute.xlu0 %6157
      %6159 = vrot.lane.b32.xlu0 %v5413, 60
      %v6160 = vpop.permute.xlu0 %6159
      %6161 = vrot.lane.b32.xlu0 %v5414, 60
      %v6162 = vpop.permute.xlu0 %6161
      %6163 = vrot.lane.b32.xlu0 %v5415, 60
      %v6164 = vpop.permute.xlu0 %6163
      %6165 = vrot.lane.b32.xlu0 %v5416, 60
      %v6166 = vpop.permute.xlu0 %6165
      %6167 = vrot.lane.b32.xlu0 %v5417, 60
      %v6168 = vpop.permute.xlu0 %6167
      %6169 = vrot.lane.b32.xlu0 %v5418, 60
      %v6170 = vpop.permute.xlu0 %6169
      %6171 = vrot.lane.b32.xlu0 %v5419, 60
      %v6172 = vpop.permute.xlu0 %6171
      %6173 = vrot.lane.b32.xlu0 %v5420, 60
      %v6174 = vpop.permute.xlu0 %6173
      %6175 = vrot.lane.b32.xlu0 %v5421, 60
      %v6176 = vpop.permute.xlu0 %6175
      %6177 = vrot.lane.b32.xlu0 %v5422, 60
      %v6178 = vpop.permute.xlu0 %6177
      %6179 = vrot.lane.b32.xlu0 %v5423, 60
      %v6180 = vpop.permute.xlu0 %6179
      %6181 = vrot.lane.b32.xlu0 %v5424, 60
      %v6182 = vpop.permute.xlu0 %6181
      %6183 = vrot.lane.b32.xlu0 %v5425, 60
      %v6184 = vpop.permute.xlu0 %6183
      %6185 = vrot.lane.b32.xlu0 %v5426, 60
      %v6186 = vpop.permute.xlu0 %6185
      %6187 = vrot.lane.b32.xlu0 %v5427, 60
      %v6188 = vpop.permute.xlu0 %6187
      %6189 = vrot.lane.b32.xlu0 %v5428, 60
      %v6190 = vpop.permute.xlu0 %6189
      %6191 = vrot.lane.b32.xlu0 %v5429, 60
      %v6192 = vpop.permute.xlu0 %6191
      %6193 = vrot.lane.b32.xlu0 %v5430, 60
      %v6194 = vpop.permute.xlu0 %6193
      %6195 = vrot.lane.b32.xlu0 %v5431, 60
      %v6196 = vpop.permute.xlu0 %6195
      %6197 = vrot.lane.b32.xlu0 %v5432, 60
      %v6198 = vpop.permute.xlu0 %6197
      %6199 = vrot.lane.b32.xlu0 %v5433, 60
      %v6200 = vpop.permute.xlu0 %6199
      %6201 = vrot.lane.b32.xlu0 %v5434, 60
      %v6202 = vpop.permute.xlu0 %6201
      %6203 = vrot.lane.b32.xlu0 %v5435, 60
      %v6204 = vpop.permute.xlu0 %6203
      %6205 = vrot.lane.b32.xlu0 %v5436, 60
      %v6206 = vpop.permute.xlu0 %6205
      %6207 = vrot.lane.b32.xlu0 %v5437, 60
      %v6208 = vpop.permute.xlu0 %6207
      %6209 = vrot.lane.b32.xlu0 %v5438, 60
      %v6210 = vpop.permute.xlu0 %6209
      %v6211 = vsel %vm2220, %v6156, %v6158
      %v6212 = vsel %vm2220, %v6158, %v6160
      %v6213 = vsel %vm2220, %v6160, %v6162
      %v6214 = vsel %vm2220, %v6162, %v6164
      %v6215 = vsel %vm2220, %v6164, %v6166
      %v6216 = vsel %vm2220, %v6166, %v6168
      %v6217 = vsel %vm2220, %v6168, %v6170
      %v6218 = vsel %vm2220, %v6170, %v6172
      %v6219 = vsel %vm2220, %v6172, %v6174
      %v6220 = vsel %vm2220, %v6174, %v6176
      %v6221 = vsel %vm2220, %v6176, %v6178
      %v6222 = vsel %vm2220, %v6178, %v6180
      %v6223 = vsel %vm2220, %v6180, %v6182
      %v6224 = vsel %vm2220, %v6182, %v6184
      %v6225 = vsel %vm2220, %v6184, %v6186
      %v6226 = vsel %vm2220, %v6186, %v6188
      %v6227 = vsel %vm2220, %v6188, %v6190
      %v6228 = vsel %vm2220, %v6190, %v6192
      %v6229 = vsel %vm2220, %v6192, %v6194
      %v6230 = vsel %vm2220, %v6194, %v6196
      %v6231 = vsel %vm2220, %v6196, %v6198
      %v6232 = vsel %vm2220, %v6198, %v6200
      %v6233 = vsel %vm2220, %v6200, %v6202
      %v6234 = vsel %vm2220, %v6202, %v6204
      %v6235 = vsel %vm2220, %v6204, %v6206
      %v6236 = vsel %vm2220, %v6206, %v6208
      %v6237 = vsel %vm2220, %v6208, %v6210
      %v6267 = vsel %vm2283, %v6210, %v6156
      %6269 = vrot.lane.b32.xlu0 %v5411, 58
      %v6270 = vpop.permute.xlu0 %6269
      %6271 = vrot.lane.b32.xlu0 %v5412, 58
      %v6272 = vpop.permute.xlu0 %6271
      %6273 = vrot.lane.b32.xlu0 %v5413, 58
      %v6274 = vpop.permute.xlu0 %6273
      %6275 = vrot.lane.b32.xlu0 %v5414, 58
      %v6276 = vpop.permute.xlu0 %6275
      %6277 = vrot.lane.b32.xlu0 %v5415, 58
      %v6278 = vpop.permute.xlu0 %6277
      %6279 = vrot.lane.b32.xlu0 %v5416, 58
      %v6280 = vpop.permute.xlu0 %6279
      %6281 = vrot.lane.b32.xlu0 %v5417, 58
      %v6282 = vpop.permute.xlu0 %6281
      %6283 = vrot.lane.b32.xlu0 %v5418, 58
      %v6284 = vpop.permute.xlu0 %6283
      %6285 = vrot.lane.b32.xlu0 %v5419, 58
      %v6286 = vpop.permute.xlu0 %6285
      %6287 = vrot.lane.b32.xlu0 %v5420, 58
      %v6288 = vpop.permute.xlu0 %6287
      %6289 = vrot.lane.b32.xlu0 %v5421, 58
      %v6290 = vpop.permute.xlu0 %6289
      %6291 = vrot.lane.b32.xlu0 %v5422, 58
      %v6292 = vpop.permute.xlu0 %6291
      %6293 = vrot.lane.b32.xlu0 %v5423, 58
      %v6294 = vpop.permute.xlu0 %6293
      %6295 = vrot.lane.b32.xlu0 %v5424, 58
      %v6296 = vpop.permute.xlu0 %6295
      %6297 = vrot.lane.b32.xlu0 %v5425, 58
      %v6298 = vpop.permute.xlu0 %6297
      %6299 = vrot.lane.b32.xlu0 %v5426, 58
      %v6300 = vpop.permute.xlu0 %6299
      %6301 = vrot.lane.b32.xlu0 %v5427, 58
      %v6302 = vpop.permute.xlu0 %6301
      %6303 = vrot.lane.b32.xlu0 %v5428, 58
      %v6304 = vpop.permute.xlu0 %6303
      %6305 = vrot.lane.b32.xlu0 %v5429, 58
      %v6306 = vpop.permute.xlu0 %6305
      %6307 = vrot.lane.b32.xlu0 %v5430, 58
      %v6308 = vpop.permute.xlu0 %6307
      %6309 = vrot.lane.b32.xlu0 %v5431, 58
      %v6310 = vpop.permute.xlu0 %6309
      %6311 = vrot.lane.b32.xlu0 %v5432, 58
      %v6312 = vpop.permute.xlu0 %6311
      %6313 = vrot.lane.b32.xlu0 %v5433, 58
      %v6314 = vpop.permute.xlu0 %6313
      %6315 = vrot.lane.b32.xlu0 %v5434, 58
      %v6316 = vpop.permute.xlu0 %6315
      %6317 = vrot.lane.b32.xlu0 %v5435, 58
      %v6318 = vpop.permute.xlu0 %6317
      %6319 = vrot.lane.b32.xlu0 %v5436, 58
      %v6320 = vpop.permute.xlu0 %6319
      %6321 = vrot.lane.b32.xlu0 %v5437, 58
      %v6322 = vpop.permute.xlu0 %6321
      %6323 = vrot.lane.b32.xlu0 %v5438, 58
      %v6324 = vpop.permute.xlu0 %6323
      %vm6325 = vcmask 474112
      %v6326 = vsel %vm6325, %v6270, %v6272
      %v6327 = vsel %vm6325, %v6272, %v6274
      %v6328 = vsel %vm6325, %v6274, %v6276
      %v6329 = vsel %vm6325, %v6276, %v6278
      %v6330 = vsel %vm6325, %v6278, %v6280
      %v6331 = vsel %vm6325, %v6280, %v6282
      %v6332 = vsel %vm6325, %v6282, %v6284
      %v6333 = vsel %vm6325, %v6284, %v6286
      %v6334 = vsel %vm6325, %v6286, %v6288
      %v6335 = vsel %vm6325, %v6288, %v6290
      %v6336 = vsel %vm6325, %v6290, %v6292
      %v6337 = vsel %vm6325, %v6292, %v6294
      %v6338 = vsel %vm6325, %v6294, %v6296
      %v6339 = vsel %vm6325, %v6296, %v6298
      %v6340 = vsel %vm6325, %v6298, %v6300
      %v6341 = vsel %vm6325, %v6300, %v6302
      %v6342 = vsel %vm6325, %v6302, %v6304
      %v6343 = vsel %vm6325, %v6304, %v6306
      %v6344 = vsel %vm6325, %v6306, %v6308
      %v6345 = vsel %vm6325, %v6308, %v6310
      %v6346 = vsel %vm6325, %v6310, %v6312
      %v6347 = vsel %vm6325, %v6312, %v6314
      %v6348 = vsel %vm6325, %v6314, %v6316
      %v6349 = vsel %vm6325, %v6316, %v6318
      %v6350 = vsel %vm6325, %v6318, %v6320
      %v6351 = vsel %vm6325, %v6320, %v6322
      %v6352 = vsel %vm6325, %v6322, %v6324
      %vm6380 = vcmask 474112
      %v6383 = vsel %vm6380, %v6324, %v6270
      %6385 = vrot.lane.b32.xlu0 %v5411, 56
      %v6386 = vpop.permute.xlu0 %6385
      %6387 = vrot.lane.b32.xlu0 %v5412, 56
      %v6388 = vpop.permute.xlu0 %6387
      %6389 = vrot.lane.b32.xlu0 %v5413, 56
      %v6390 = vpop.permute.xlu0 %6389
      %6391 = vrot.lane.b32.xlu0 %v5414, 56
      %v6392 = vpop.permute.xlu0 %6391
      %6393 = vrot.lane.b32.xlu0 %v5415, 56
      %v6394 = vpop.permute.xlu0 %6393
      %6395 = vrot.lane.b32.xlu0 %v5416, 56
      %v6396 = vpop.permute.xlu0 %6395
      %6397 = vrot.lane.b32.xlu0 %v5417, 56
      %v6398 = vpop.permute.xlu0 %6397
      %6399 = vrot.lane.b32.xlu0 %v5418, 56
      %v6400 = vpop.permute.xlu0 %6399
      %6401 = vrot.lane.b32.xlu0 %v5419, 56
      %v6402 = vpop.permute.xlu0 %6401
      %6403 = vrot.lane.b32.xlu0 %v5420, 56
      %v6404 = vpop.permute.xlu0 %6403
      %6405 = vrot.lane.b32.xlu0 %v5421, 56
      %v6406 = vpop.permute.xlu0 %6405
      %6407 = vrot.lane.b32.xlu0 %v5422, 56
      %v6408 = vpop.permute.xlu0 %6407
      %6409 = vrot.lane.b32.xlu0 %v5423, 56
      %v6410 = vpop.permute.xlu0 %6409
      %6411 = vrot.lane.b32.xlu0 %v5424, 56
      %v6412 = vpop.permute.xlu0 %6411
      %6413 = vrot.lane.b32.xlu0 %v5425, 56
      %v6414 = vpop.permute.xlu0 %6413
      %6415 = vrot.lane.b32.xlu0 %v5426, 56
      %v6416 = vpop.permute.xlu0 %6415
      %6417 = vrot.lane.b32.xlu0 %v5427, 56
      %v6418 = vpop.permute.xlu0 %6417
      %6419 = vrot.lane.b32.xlu0 %v5428, 56
      %v6420 = vpop.permute.xlu0 %6419
      %6421 = vrot.lane.b32.xlu0 %v5429, 56
      %v6422 = vpop.permute.xlu0 %6421
      %6423 = vrot.lane.b32.xlu0 %v5430, 56
      %v6424 = vpop.permute.xlu0 %6423
      %6425 = vrot.lane.b32.xlu0 %v5431, 56
      %v6426 = vpop.permute.xlu0 %6425
      %6427 = vrot.lane.b32.xlu0 %v5432, 56
      %v6428 = vpop.permute.xlu0 %6427
      %6429 = vrot.lane.b32.xlu0 %v5433, 56
      %v6430 = vpop.permute.xlu0 %6429
      %6431 = vrot.lane.b32.xlu0 %v5434, 56
      %v6432 = vpop.permute.xlu0 %6431
      %6433 = vrot.lane.b32.xlu0 %v5435, 56
      %v6434 = vpop.permute.xlu0 %6433
      %6435 = vrot.lane.b32.xlu0 %v5436, 56
      %v6436 = vpop.permute.xlu0 %6435
      %6437 = vrot.lane.b32.xlu0 %v5437, 56
      %v6438 = vpop.permute.xlu0 %6437
      %6439 = vrot.lane.b32.xlu0 %v5438, 56
      %v6440 = vpop.permute.xlu0 %6439
      %vm6441 = vcmask 457728
      %v6442 = vsel %vm6441, %v6386, %v6388
      %v6443 = vsel %vm6441, %v6388, %v6390
      %v6444 = vsel %vm6441, %v6390, %v6392
      %v6445 = vsel %vm6441, %v6392, %v6394
      %v6446 = vsel %vm6441, %v6394, %v6396
      %v6447 = vsel %vm6441, %v6396, %v6398
      %v6448 = vsel %vm6441, %v6398, %v6400
      %v6449 = vsel %vm6441, %v6400, %v6402
      %v6450 = vsel %vm6441, %v6402, %v6404
      %v6451 = vsel %vm6441, %v6404, %v6406
      %v6452 = vsel %vm6441, %v6406, %v6408
      %v6453 = vsel %vm6441, %v6408, %v6410
      %v6454 = vsel %vm6441, %v6410, %v6412
      %v6455 = vsel %vm6441, %v6412, %v6414
      %v6456 = vsel %vm6441, %v6414, %v6416
      %v6457 = vsel %vm6441, %v6416, %v6418
      %v6458 = vsel %vm6441, %v6418, %v6420
      %v6459 = vsel %vm6441, %v6420, %v6422
      %v6460 = vsel %vm6441, %v6422, %v6424
      %v6461 = vsel %vm6441, %v6424, %v6426
      %v6462 = vsel %vm6441, %v6426, %v6428
      %v6463 = vsel %vm6441, %v6428, %v6430
      %v6464 = vsel %vm6441, %v6430, %v6432
      %v6465 = vsel %vm6441, %v6432, %v6434
      %v6466 = vsel %vm6441, %v6434, %v6436
      %v6467 = vsel %vm6441, %v6436, %v6438
      %v6468 = vsel %vm6441, %v6438, %v6440
      %vm6496 = vcmask 457728
      %v6499 = vsel %vm6496, %v6440, %v6386
      %v6501 = vld [vmem:[%s3] sm:$0xff]
      %v6502 = vld [vmem:[%s3 + $0x8] sm:$0xff]
      %v6503 = vld [vmem:[%s3 + $0x10] sm:$0xff]
      %v6504 = vld [vmem:[%s3 + $0x18] sm:$0xff]
      %v6505 = vld [vmem:[%s4] sm:$0xff]
      %v6506 = vld [vmem:[%s4 + $0x8] sm:$0xff]
      %6508 = vset.pattern.permute.xlu0 0
      %6509 = vperm.xlu0 %6508, %v6505
      %v6510 = vpop.permute.xlu0 %6509
      %6513 = vset.pattern.permute.xlu0 0
      %6514 = vperm.xlu0 %6513, %v6506
      %v6515 = vpop.permute.xlu0 %6514
      %v6521 = vunpack.c.l.b16 %v6501
      %v6522 = vunpack.c.h.b16 %v6501
      %v6523 = vunpack.c.l.b16 %v6502
      %v6524 = vunpack.c.h.b16 %v6502
      %v6525 = vunpack.c.l.b16 %v6503
      %v6526 = vunpack.c.h.b16 %v6503
      %v6527 = vunpack.c.l.b16 %v6504
      %v6528 = vunpack.c.h.b16 %v6504
      %v6529 = vpack.c.b16 %v6525, %v6521
      %v6530 = vpack.c.b16 %v6526, %v6522
      %v6531 = vpack.c.b16 %v6527, %v6523
      %v6532 = vpack.c.b16 %v6528, %v6524
      %v6537 = vsel %vm3015, %v6532, 0
      %6539 = vmatprep.subr.bf16.mxu0 %v6212
      %6540 = vmatpush1.bf16.msra.mxu0 %v6211
      %6541 = vmatprep.subr.bf16.mxu0 %v6098
      %6542 = vmatpush1.bf16.msra.mxu0 %v6097
      %6543 = vmatprep.subr.bf16.mxu0 %v5984
      %6544 = vmatpush1.bf16.msra.mxu0 %v5983
      %6545 = vmatprep.subr.bf16.mxu0 %v5869
      %6546 = vmatpush1.bf16.msra.mxu0 %v5868
      %6547 = vmatprep.subr.bf16.mxu0 %v5753
      %6548 = vmatpush1.bf16.msra.mxu0 %v5752
      %6549 = vmatprep.subr.bf16.mxu0 %v5638
      %6550 = vmatpush1.bf16.msra.mxu0 %v5637
      %6551 = vmatprep.subr.bf16.mxu0 %v5524
      %6552 = vmatpush1.bf16.msra.mxu0 %v5523
      %6553 = vmatprep.subr.bf16.mxu0 %v5412
      %6554 = vmatpush1.bf16.msra.mxu0 %v5411
      %6555 = vmatprep.subr.bf16.mxu0 %v5985
      %6556 = vmatpush2.bf16.msra.mxu0 %v5984
      %6557 = vmatprep.subr.bf16.mxu0 %v5870
      %6558 = vmatpush2.bf16.msra.mxu0 %v5869
      %6559 = vmatprep.subr.bf16.mxu0 %v5754
      %6560 = vmatpush2.bf16.msra.mxu0 %v5753
      %6561 = vmatprep.subr.bf16.mxu0 %v5639
      %6562 = vmatpush2.bf16.msra.mxu0 %v5638
      %6563 = vmatprep.subr.bf16.mxu0 %v5525
      %6564 = vmatpush2.bf16.msra.mxu0 %v5524
      %6565 = vmatprep.subr.bf16.mxu0 %v5413
      %6566 = vmatpush2.bf16.msra.mxu0 %v5412
      %6567 = vmatprep.subr.bf16.mxu0 %v6443
      %6568 = vmatpush2.bf16.msra.mxu0 %v6442
      %6569 = vmatprep.subr.bf16.mxu0 %v6327
      %6570 = vmatpush2.bf16.msra.mxu0 %v6326
      %6571 = vmatprep.mubr.bf16.mxu0 %v6530
      %6572 = vmatmul.mubr.bf16.gmra.mxu0 %v6529
      %v6573 = vpop.f32.mrf.mxu0
      %v6574 = vadd.f32 %v6510, %v6573
      %v6575 = vpop.f32.mrf.mxu0
      %v6576 = vadd.f32 %v6510, %v6575
      %v6577 = vpop.f32.mrf.mxu0
      %v6578 = vadd.f32 %v6515, %v6577
      %v6579 = vpop.f32.mrf.mxu0
      %v6580 = vadd.f32 %v6515, %v6579
      %6581 = vdwg.mxu0
      %6582 = vmatprep.subr.bf16.mxu0 %v5755
      %6583 = vmatpush1.bf16.msra.mxu0 %v5754
      %6584 = vmatprep.subr.bf16.mxu0 %v5640
      %6585 = vmatpush1.bf16.msra.mxu0 %v5639
      %6586 = vmatprep.subr.bf16.mxu0 %v5526
      %6587 = vmatpush1.bf16.msra.mxu0 %v5525
      %6588 = vmatprep.subr.bf16.mxu0 %v5414
      %6589 = vmatpush1.bf16.msra.mxu0 %v5413
      %6590 = vmatprep.subr.bf16.mxu0 %v6444
      %6591 = vmatpush1.bf16.msra.mxu0 %v6443
      %6592 = vmatprep.subr.bf16.mxu0 %v6328
      %6593 = vmatpush1.bf16.msra.mxu0 %v6327
      %6594 = vmatprep.subr.bf16.mxu0 %v6213
      %6595 = vmatpush1.bf16.msra.mxu0 %v6212
      %6596 = vmatprep.subr.bf16.mxu0 %v6099
      %6597 = vmatpush1.bf16.msra.mxu0 %v6098
      %6598 = vmatprep.subr.bf16.mxu0 0
      %6599 = vmatpush2.bf16.msra.mxu0 0
      %6600 = vmatprep.subr.bf16.mxu0 0
      %6601 = vmatpush2.bf16.msra.mxu0 0
      %6602 = vmatprep.subr.bf16.mxu0 0
      %6603 = vmatpush2.bf16.msra.mxu0 0
      %6604 = vmatprep.subr.bf16.mxu0 0
      %6605 = vmatpush2.bf16.msra.mxu0 0
      %6606 = vmatprep.subr.bf16.mxu0 0
      %6607 = vmatpush2.bf16.msra.mxu0 0
      %6608 = vmatprep.subr.bf16.mxu0 0
      %6609 = vmatpush2.bf16.msra.mxu0 0
      %6610 = vmatprep.subr.bf16.mxu0 0
      %6611 = vmatpush2.bf16.msra.mxu0 0
      %6612 = vmatprep.subr.bf16.mxu0 %v5871
      %6613 = vmatpush2.bf16.msra.mxu0 %v5870
      %6614 = vmatprep.mubr.bf16.mxu0 %v6537
      %6615 = vmatmul.mubr.bf16.gmra.mxu0 %v6531
      %v6616 = vpop.f32.mrf.mxu0
      %v6617 = vadd.f32 %v6574, %v6616
      %v6618 = vpop.f32.mrf.mxu0
      %v6619 = vadd.f32 %v6576, %v6618
      %v6620 = vpop.f32.mrf.mxu0
      %v6621 = vadd.f32 %v6578, %v6620
      %v6622 = vpop.f32.mrf.mxu0
      %v6623 = vadd.f32 %v6580, %v6622
      %6624 = vdwg.mxu0
      %6625 = vmatprep.subr.bf16.mxu0 %v6214
      %6626 = vmatpush1.bf16.msra.mxu0 %v6213
      %6627 = vmatprep.subr.bf16.mxu0 %v6100
      %6628 = vmatpush1.bf16.msra.mxu0 %v6099
      %6629 = vmatprep.subr.bf16.mxu0 %v5986
      %6630 = vmatpush1.bf16.msra.mxu0 %v5985
      %6631 = vmatprep.subr.bf16.mxu0 %v5871
      %6632 = vmatpush1.bf16.msra.mxu0 %v5870
      %6633 = vmatprep.subr.bf16.mxu0 %v5755
      %6634 = vmatpush1.bf16.msra.mxu0 %v5754
      %6635 = vmatprep.subr.bf16.mxu0 %v5640
      %6636 = vmatpush1.bf16.msra.mxu0 %v5639
      %6637 = vmatprep.subr.bf16.mxu0 %v5526
      %6638 = vmatpush1.bf16.msra.mxu0 %v5525
      %6639 = vmatprep.subr.bf16.mxu0 %v5414
      %6640 = vmatpush1.bf16.msra.mxu0 %v5413
      %6641 = vmatprep.subr.bf16.mxu0 %v5987
      %6642 = vmatpush2.bf16.msra.mxu0 %v5986
      %6643 = vmatprep.subr.bf16.mxu0 %v5872
      %6644 = vmatpush2.bf16.msra.mxu0 %v5871
      %6645 = vmatprep.subr.bf16.mxu0 %v5756
      %6646 = vmatpush2.bf16.msra.mxu0 %v5755
      %6647 = vmatprep.subr.bf16.mxu0 %v5641
      %6648 = vmatpush2.bf16.msra.mxu0 %v5640
      %6649 = vmatprep.subr.bf16.mxu0 %v5527
      %6650 = vmatpush2.bf16.msra.mxu0 %v5526
      %6651 = vmatprep.subr.bf16.mxu0 %v5415
      %6652 = vmatpush2.bf16.msra.mxu0 %v5414
      %6653 = vmatprep.subr.bf16.mxu0 %v6445
      %6654 = vmatpush2.bf16.msra.mxu0 %v6444
      %6655 = vmatprep.subr.bf16.mxu0 %v6329
      %6656 = vmatpush2.bf16.msra.mxu0 %v6328
      %6657 = vmatprep.mubr.bf16.mxu0 %v6530
      %6658 = vmatmul.mubr.bf16.gmra.mxu0 %v6529
      %v6659 = vpop.f32.mrf.mxu0
      %v6660 = vadd.f32 %v6510, %v6659
      %v6661 = vpop.f32.mrf.mxu0
      %v6662 = vadd.f32 %v6510, %v6661
      %v6663 = vpop.f32.mrf.mxu0
      %v6664 = vadd.f32 %v6515, %v6663
      %v6665 = vpop.f32.mrf.mxu0
      %v6666 = vadd.f32 %v6515, %v6665
      %6667 = vdwg.mxu0
      %6668 = vmatprep.subr.bf16.mxu0 %v5757
      %6669 = vmatpush1.bf16.msra.mxu0 %v5756
      %6670 = vmatprep.subr.bf16.mxu0 %v5642
      %6671 = vmatpush1.bf16.msra.mxu0 %v5641
      %6672 = vmatprep.subr.bf16.mxu0 %v5528
      %6673 = vmatpush1.bf16.msra.mxu0 %v5527
      %6674 = vmatprep.subr.bf16.mxu0 %v5416
      %6675 = vmatpush1.bf16.msra.mxu0 %v5415
      %6676 = vmatprep.subr.bf16.mxu0 %v6446
      %6677 = vmatpush1.bf16.msra.mxu0 %v6445
      %6678 = vmatprep.subr.bf16.mxu0 %v6330
      %6679 = vmatpush1.bf16.msra.mxu0 %v6329
      %6680 = vmatprep.subr.bf16.mxu0 %v6215
      %6681 = vmatpush1.bf16.msra.mxu0 %v6214
      %6682 = vmatprep.subr.bf16.mxu0 %v6101
      %6683 = vmatpush1.bf16.msra.mxu0 %v6100
      %6684 = vmatprep.subr.bf16.mxu0 0
      %6685 = vmatpush2.bf16.msra.mxu0 0
      %6686 = vmatprep.subr.bf16.mxu0 0
      %6687 = vmatpush2.bf16.msra.mxu0 0
      %6688 = vmatprep.subr.bf16.mxu0 0
      %6689 = vmatpush2.bf16.msra.mxu0 0
      %6690 = vmatprep.subr.bf16.mxu0 0
      %6691 = vmatpush2.bf16.msra.mxu0 0
      %6692 = vmatprep.subr.bf16.mxu0 0
      %6693 = vmatpush2.bf16.msra.mxu0 0
      %6694 = vmatprep.subr.bf16.mxu0 0
      %6695 = vmatpush2.bf16.msra.mxu0 0
      %6696 = vmatprep.subr.bf16.mxu0 0
      %6697 = vmatpush2.bf16.msra.mxu0 0
      %6698 = vmatprep.subr.bf16.mxu0 %v5873
      %6699 = vmatpush2.bf16.msra.mxu0 %v5872
      %6700 = vmatprep.mubr.bf16.mxu0 %v6537
      %6701 = vmatmul.mubr.bf16.gmra.mxu0 %v6531
      %v6702 = vpop.f32.mrf.mxu0
      %v6703 = vadd.f32 %v6660, %v6702
      %v6704 = vpop.f32.mrf.mxu0
      %v6705 = vadd.f32 %v6662, %v6704
      %v6706 = vpop.f32.mrf.mxu0
      %v6707 = vadd.f32 %v6664, %v6706
      %v6708 = vpop.f32.mrf.mxu0
      %v6709 = vadd.f32 %v6666, %v6708
      %6710 = vdwg.mxu0
      %6711 = vmatprep.subr.bf16.mxu0 %v6216
      %6712 = vmatpush1.bf16.msra.mxu0 %v6215
      %6713 = vmatprep.subr.bf16.mxu0 %v6102
      %6714 = vmatpush1.bf16.msra.mxu0 %v6101
      %6715 = vmatprep.subr.bf16.mxu0 %v5988
      %6716 = vmatpush1.bf16.msra.mxu0 %v5987
      %6717 = vmatprep.subr.bf16.mxu0 %v5873
      %6718 = vmatpush1.bf16.msra.mxu0 %v5872
      %6719 = vmatprep.subr.bf16.mxu0 %v5757
      %6720 = vmatpush1.bf16.msra.mxu0 %v5756
      %6721 = vmatprep.subr.bf16.mxu0 %v5642
      %6722 = vmatpush1.bf16.msra.mxu0 %v5641
      %6723 = vmatprep.subr.bf16.mxu0 %v5528
      %6724 = vmatpush1.bf16.msra.mxu0 %v5527
      %6725 = vmatprep.subr.bf16.mxu0 %v5416
      %6726 = vmatpush1.bf16.msra.mxu0 %v5415
      %6727 = vmatprep.subr.bf16.mxu0 %v5989
      %6728 = vmatpush2.bf16.msra.mxu0 %v5988
      %6729 = vmatprep.subr.bf16.mxu0 %v5874
      %6730 = vmatpush2.bf16.msra.mxu0 %v5873
      %6731 = vmatprep.subr.bf16.mxu0 %v5758
      %6732 = vmatpush2.bf16.msra.mxu0 %v5757
      %6733 = vmatprep.subr.bf16.mxu0 %v5643
      %6734 = vmatpush2.bf16.msra.mxu0 %v5642
      %6735 = vmatprep.subr.bf16.mxu0 %v5529
      %6736 = vmatpush2.bf16.msra.mxu0 %v5528
      %6737 = vmatprep.subr.bf16.mxu0 %v5417
      %6738 = vmatpush2.bf16.msra.mxu0 %v5416
      %6739 = vmatprep.subr.bf16.mxu0 %v6447
      %6740 = vmatpush2.bf16.msra.mxu0 %v6446
      %6741 = vmatprep.subr.bf16.mxu0 %v6331
      %6742 = vmatpush2.bf16.msra.mxu0 %v6330
      %6743 = vmatprep.mubr.bf16.mxu0 %v6530
      %6744 = vmatmul.mubr.bf16.gmra.mxu0 %v6529
      %v6745 = vpop.f32.mrf.mxu0
      %v6746 = vadd.f32 %v6510, %v6745
      %v6747 = vpop.f32.mrf.mxu0
      %v6748 = vadd.f32 %v6510, %v6747
      %v6749 = vpop.f32.mrf.mxu0
      %v6750 = vadd.f32 %v6515, %v6749
      %v6751 = vpop.f32.mrf.mxu0
      %v6752 = vadd.f32 %v6515, %v6751
      %6753 = vdwg.mxu0
      %6754 = vmatprep.subr.bf16.mxu0 %v5759
      %6755 = vmatpush1.bf16.msra.mxu0 %v5758
      %6756 = vmatprep.subr.bf16.mxu0 %v5644
      %6757 = vmatpush1.bf16.msra.mxu0 %v5643
      %6758 = vmatprep.subr.bf16.mxu0 %v5530
      %6759 = vmatpush1.bf16.msra.mxu0 %v5529
      %6760 = vmatprep.subr.bf16.mxu0 %v5418
      %6761 = vmatpush1.bf16.msra.mxu0 %v5417
      %6762 = vmatprep.subr.bf16.mxu0 %v6448
      %6763 = vmatpush1.bf16.msra.mxu0 %v6447
      %6764 = vmatprep.subr.bf16.mxu0 %v6332
      %6765 = vmatpush1.bf16.msra.mxu0 %v6331
      %6766 = vmatprep.subr.bf16.mxu0 %v6217
      %6767 = vmatpush1.bf16.msra.mxu0 %v6216
      %6768 = vmatprep.subr.bf16.mxu0 %v6103
      %6769 = vmatpush1.bf16.msra.mxu0 %v6102
      %6770 = vmatprep.subr.bf16.mxu0 0
      %6771 = vmatpush2.bf16.msra.mxu0 0
      %6772 = vmatprep.subr.bf16.mxu0 0
      %6773 = vmatpush2.bf16.msra.mxu0 0
      %6774 = vmatprep.subr.bf16.mxu0 0
      %6775 = vmatpush2.bf16.msra.mxu0 0
      %6776 = vmatprep.subr.bf16.mxu0 0
      %6777 = vmatpush2.bf16.msra.mxu0 0
      %6778 = vmatprep.subr.bf16.mxu0 0
      %6779 = vmatpush2.bf16.msra.mxu0 0
      %6780 = vmatprep.subr.bf16.mxu0 0
      %6781 = vmatpush2.bf16.msra.mxu0 0
      %6782 = vmatprep.subr.bf16.mxu0 0
      %6783 = vmatpush2.bf16.msra.mxu0 0
      %6784 = vmatprep.subr.bf16.mxu0 %v5875
      %6785 = vmatpush2.bf16.msra.mxu0 %v5874
      %6786 = vmatprep.mubr.bf16.mxu0 %v6537
      %6787 = vmatmul.mubr.bf16.gmra.mxu0 %v6531
      %v6788 = vpop.f32.mrf.mxu0
      %v6789 = vadd.f32 %v6746, %v6788
      %v6790 = vpop.f32.mrf.mxu0
      %v6791 = vadd.f32 %v6748, %v6790
      %v6792 = vpop.f32.mrf.mxu0
      %v6793 = vadd.f32 %v6750, %v6792
      %v6794 = vpop.f32.mrf.mxu0
      %v6795 = vadd.f32 %v6752, %v6794
      %6796 = vdwg.mxu0
      %6797 = vmatprep.subr.bf16.mxu0 %v6218
      %6798 = vmatpush1.bf16.msra.mxu0 %v6217
      %6799 = vmatprep.subr.bf16.mxu0 %v6104
      %6800 = vmatpush1.bf16.msra.mxu0 %v6103
      %6801 = vmatprep.subr.bf16.mxu0 %v5990
      %6802 = vmatpush1.bf16.msra.mxu0 %v5989
      %6803 = vmatprep.subr.bf16.mxu0 %v5875
      %6804 = vmatpush1.bf16.msra.mxu0 %v5874
      %6805 = vmatprep.subr.bf16.mxu0 %v5759
      %6806 = vmatpush1.bf16.msra.mxu0 %v5758
      %6807 = vmatprep.subr.bf16.mxu0 %v5644
      %6808 = vmatpush1.bf16.msra.mxu0 %v5643
      %6809 = vmatprep.subr.bf16.mxu0 %v5530
      %6810 = vmatpush1.bf16.msra.mxu0 %v5529
      %6811 = vmatprep.subr.bf16.mxu0 %v5418
      %6812 = vmatpush1.bf16.msra.mxu0 %v5417
      %6813 = vmatprep.subr.bf16.mxu0 %v5991
      %6814 = vmatpush2.bf16.msra.mxu0 %v5990
      %6815 = vmatprep.subr.bf16.mxu0 %v5876
      %6816 = vmatpush2.bf16.msra.mxu0 %v5875
      %6817 = vmatprep.subr.bf16.mxu0 %v5760
      %6818 = vmatpush2.bf16.msra.mxu0 %v5759
      %6819 = vmatprep.subr.bf16.mxu0 %v5645
      %6820 = vmatpush2.bf16.msra.mxu0 %v5644
      %6821 = vmatprep.subr.bf16.mxu0 %v5531
      %6822 = vmatpush2.bf16.msra.mxu0 %v5530
      %6823 = vmatprep.subr.bf16.mxu0 %v5419
      %6824 = vmatpush2.bf16.msra.mxu0 %v5418
      %6825 = vmatprep.subr.bf16.mxu0 %v6449
      %6826 = vmatpush2.bf16.msra.mxu0 %v6448
      %6827 = vmatprep.subr.bf16.mxu0 %v6333
      %6828 = vmatpush2.bf16.msra.mxu0 %v6332
      %6829 = vmatprep.mubr.bf16.mxu0 %v6530
      %6830 = vmatmul.mubr.bf16.gmra.mxu0 %v6529
      %v6831 = vpop.f32.mrf.mxu0
      %v6832 = vpop.f32.mrf.mxu0
      %v6833 = vadd.f32 %v6510, %v6832
      %v6834 = vpop.f32.mrf.mxu0
      %v6835 = vpop.f32.mrf.mxu0
      %v6836 = vadd.f32 %v6515, %v6835
      %6837 = vdwg.mxu0
      %6838 = vmatprep.subr.bf16.mxu0 %v5761
      %6839 = vmatpush1.bf16.msra.mxu0 %v5760
      %6840 = vmatprep.subr.bf16.mxu0 %v5646
      %6841 = vmatpush1.bf16.msra.mxu0 %v5645
      %6842 = vmatprep.subr.bf16.mxu0 %v5532
      %6843 = vmatpush1.bf16.msra.mxu0 %v5531
      %6844 = vmatprep.subr.bf16.mxu0 %v5420
      %6845 = vmatpush1.bf16.msra.mxu0 %v5419
      %6846 = vmatprep.subr.bf16.mxu0 %v6450
      %6847 = vmatpush1.bf16.msra.mxu0 %v6449
      %6848 = vmatprep.subr.bf16.mxu0 %v6334
      %6849 = vmatpush1.bf16.msra.mxu0 %v6333
      %6850 = vmatprep.subr.bf16.mxu0 %v6219
      %6851 = vmatpush1.bf16.msra.mxu0 %v6218
      %6852 = vmatprep.subr.bf16.mxu0 %v6105
      %6853 = vmatpush1.bf16.msra.mxu0 %v6104
      %6854 = vmatprep.subr.bf16.mxu0 0
      %6855 = vmatpush2.bf16.msra.mxu0 0
      %6856 = vmatprep.subr.bf16.mxu0 0
      %6857 = vmatpush2.bf16.msra.mxu0 0
      %6858 = vmatprep.subr.bf16.mxu0 0
      %6859 = vmatpush2.bf16.msra.mxu0 0
      %6860 = vmatprep.subr.bf16.mxu0 0
      %6861 = vmatpush2.bf16.msra.mxu0 0
      %6862 = vmatprep.subr.bf16.mxu0 0
      %6863 = vmatpush2.bf16.msra.mxu0 0
      %6864 = vmatprep.subr.bf16.mxu0 0
      %6865 = vmatpush2.bf16.msra.mxu0 0
      %6866 = vmatprep.subr.bf16.mxu0 0
      %6867 = vmatpush2.bf16.msra.mxu0 0
      %6868 = vmatprep.subr.bf16.mxu0 %v5877
      %6869 = vmatpush2.bf16.msra.mxu0 %v5876
      %6870 = vmatprep.mubr.bf16.mxu0 %v6537
      %6871 = vmatmul.mubr.bf16.gmra.mxu0 %v6531
      %v6872 = vpop.f32.mrf.mxu0
      %v6873 = vpop.f32.mrf.mxu0
      %v6874 = vadd.f32 %v6833, %v6873
      %v6875 = vpop.f32.mrf.mxu0
      %v6876 = vpop.f32.mrf.mxu0
      %v6877 = vadd.f32 %v6836, %v6876
      %6878 = vdwg.mxu0
      %6879 = vmatprep.subr.bf16.mxu0 %v6220
      %6880 = vmatpush1.bf16.msra.mxu0 %v6219
      %6881 = vmatprep.subr.bf16.mxu0 %v6106
      %6882 = vmatpush1.bf16.msra.mxu0 %v6105
      %6883 = vmatprep.subr.bf16.mxu0 %v5992
      %6884 = vmatpush1.bf16.msra.mxu0 %v5991
      %6885 = vmatprep.subr.bf16.mxu0 %v5877
      %6886 = vmatpush1.bf16.msra.mxu0 %v5876
      %6887 = vmatprep.subr.bf16.mxu0 %v5761
      %6888 = vmatpush1.bf16.msra.mxu0 %v5760
      %6889 = vmatprep.subr.bf16.mxu0 %v5646
      %6890 = vmatpush1.bf16.msra.mxu0 %v5645
      %6891 = vmatprep.subr.bf16.mxu0 %v5532
      %6892 = vmatpush1.bf16.msra.mxu0 %v5531
      %6893 = vmatprep.subr.bf16.mxu0 %v5420
      %6894 = vmatpush1.bf16.msra.mxu0 %v5419
      %6895 = vmatprep.subr.bf16.mxu0 %v5993
      %6896 = vmatpush2.bf16.msra.mxu0 %v5992
      %6897 = vmatprep.subr.bf16.mxu0 %v5878
      %6898 = vmatpush2.bf16.msra.mxu0 %v5877
      %6899 = vmatprep.subr.bf16.mxu0 %v5762
      %6900 = vmatpush2.bf16.msra.mxu0 %v5761
      %6901 = vmatprep.subr.bf16.mxu0 %v5647
      %6902 = vmatpush2.bf16.msra.mxu0 %v5646
      %6903 = vmatprep.subr.bf16.mxu0 %v5533
      %6904 = vmatpush2.bf16.msra.mxu0 %v5532
      %6905 = vmatprep.subr.bf16.mxu0 %v5421
      %6906 = vmatpush2.bf16.msra.mxu0 %v5420
      %6907 = vmatprep.subr.bf16.mxu0 %v6451
      %6908 = vmatpush2.bf16.msra.mxu0 %v6450
      %6909 = vmatprep.subr.bf16.mxu0 %v6335
      %6910 = vmatpush2.bf16.msra.mxu0 %v6334
      %6911 = vmatprep.mubr.bf16.mxu0 %v6530
      %6912 = vmatmul.mubr.bf16.gmra.mxu0 %v6529
      %v6913 = vpop.f32.mrf.mxu0
      %v6914 = vadd.f32 %v6510, %v6913
      %v6915 = vpop.f32.mrf.mxu0
      %v6916 = vadd.f32 %v6510, %v6915
      %v6917 = vpop.f32.mrf.mxu0
      %v6918 = vadd.f32 %v6515, %v6917
      %v6919 = vpop.f32.mrf.mxu0
      %v6920 = vadd.f32 %v6515, %v6919
      %6921 = vdwg.mxu0
      %6922 = vmatprep.subr.bf16.mxu0 %v5763
      %6923 = vmatpush1.bf16.msra.mxu0 %v5762
      %6924 = vmatprep.subr.bf16.mxu0 %v5648
      %6925 = vmatpush1.bf16.msra.mxu0 %v5647
      %6926 = vmatprep.subr.bf16.mxu0 %v5534
      %6927 = vmatpush1.bf16.msra.mxu0 %v5533
      %6928 = vmatprep.subr.bf16.mxu0 %v5422
      %6929 = vmatpush1.bf16.msra.mxu0 %v5421
      %6930 = vmatprep.subr.bf16.mxu0 %v6452
      %6931 = vmatpush1.bf16.msra.mxu0 %v6451
      %6932 = vmatprep.subr.bf16.mxu0 %v6336
      %6933 = vmatpush1.bf16.msra.mxu0 %v6335
      %6934 = vmatprep.subr.bf16.mxu0 %v6221
      %6935 = vmatpush1.bf16.msra.mxu0 %v6220
      %6936 = vmatprep.subr.bf16.mxu0 %v6107
      %6937 = vmatpush1.bf16.msra.mxu0 %v6106
      %6938 = vmatprep.subr.bf16.mxu0 0
      %6939 = vmatpush2.bf16.msra.mxu0 0
      %6940 = vmatprep.subr.bf16.mxu0 0
      %6941 = vmatpush2.bf16.msra.mxu0 0
      %6942 = vmatprep.subr.bf16.mxu0 0
      %6943 = vmatpush2.bf16.msra.mxu0 0
      %6944 = vmatprep.subr.bf16.mxu0 0
      %6945 = vmatpush2.bf16.msra.mxu0 0
      %6946 = vmatprep.subr.bf16.mxu0 0
      %6947 = vmatpush2.bf16.msra.mxu0 0
      %6948 = vmatprep.subr.bf16.mxu0 0
      %6949 = vmatpush2.bf16.msra.mxu0 0
      %6950 = vmatprep.subr.bf16.mxu0 0
      %6951 = vmatpush2.bf16.msra.mxu0 0
      %6952 = vmatprep.subr.bf16.mxu0 %v5879
      %6953 = vmatpush2.bf16.msra.mxu0 %v5878
      %6954 = vmatprep.mubr.bf16.mxu0 %v6537
      %6955 = vmatmul.mubr.bf16.gmra.mxu0 %v6531
      %v6956 = vpop.f32.mrf.mxu0
      %v6957 = vadd.f32 %v6914, %v6956
      %v6958 = vpop.f32.mrf.mxu0
      %v6959 = vadd.f32 %v6916, %v6958
      %v6960 = vpop.f32.mrf.mxu0
      %v6961 = vadd.f32 %v6918, %v6960
      %v6962 = vpop.f32.mrf.mxu0
      %v6963 = vadd.f32 %v6920, %v6962
      %6964 = vdwg.mxu0
      %6965 = vmatprep.subr.bf16.mxu0 %v6222
      %6966 = vmatpush1.bf16.msra.mxu0 %v6221
      %6967 = vmatprep.subr.bf16.mxu0 %v6108
      %6968 = vmatpush1.bf16.msra.mxu0 %v6107
      %6969 = vmatprep.subr.bf16.mxu0 %v5994
      %6970 = vmatpush1.bf16.msra.mxu0 %v5993
      %6971 = vmatprep.subr.bf16.mxu0 %v5879
      %6972 = vmatpush1.bf16.msra.mxu0 %v5878
      %6973 = vmatprep.subr.bf16.mxu0 %v5763
      %6974 = vmatpush1.bf16.msra.mxu0 %v5762
      %6975 = vmatprep.subr.bf16.mxu0 %v5648
      %6976 = vmatpush1.bf16.msra.mxu0 %v5647
      %6977 = vmatprep.subr.bf16.mxu0 %v5534
      %6978 = vmatpush1.bf16.msra.mxu0 %v5533
      %6979 = vmatprep.subr.bf16.mxu0 %v5422
      %6980 = vmatpush1.bf16.msra.mxu0 %v5421
      %6981 = vmatprep.subr.bf16.mxu0 %v5995
      %6982 = vmatpush2.bf16.msra.mxu0 %v5994
      %6983 = vmatprep.subr.bf16.mxu0 %v5880
      %6984 = vmatpush2.bf16.msra.mxu0 %v5879
      %6985 = vmatprep.subr.bf16.mxu0 %v5764
      %6986 = vmatpush2.bf16.msra.mxu0 %v5763
      %6987 = vmatprep.subr.bf16.mxu0 %v5649
      %6988 = vmatpush2.bf16.msra.mxu0 %v5648
      %6989 = vmatprep.subr.bf16.mxu0 %v5535
      %6990 = vmatpush2.bf16.msra.mxu0 %v5534
      %6991 = vmatprep.subr.bf16.mxu0 %v5423
      %6992 = vmatpush2.bf16.msra.mxu0 %v5422
      %6993 = vmatprep.subr.bf16.mxu0 %v6453
      %6994 = vmatpush2.bf16.msra.mxu0 %v6452
      %6995 = vmatprep.subr.bf16.mxu0 %v6337
      %6996 = vmatpush2.bf16.msra.mxu0 %v6336
      %6997 = vmatprep.mubr.bf16.mxu0 %v6530
      %6998 = vmatmul.mubr.bf16.gmra.mxu0 %v6529
      %v6999 = vpop.f32.mrf.mxu0
      %v7000 = vadd.f32 %v6510, %v6999
      %v7001 = vpop.f32.mrf.mxu0
      %v7002 = vadd.f32 %v6510, %v7001
      %v7003 = vpop.f32.mrf.mxu0
      %v7004 = vadd.f32 %v6515, %v7003
      %v7005 = vpop.f32.mrf.mxu0
      %v7006 = vadd.f32 %v6515, %v7005
      %7007 = vdwg.mxu0
      %7008 = vmatprep.subr.bf16.mxu0 %v5765
      %7009 = vmatpush1.bf16.msra.mxu0 %v5764
      %7010 = vmatprep.subr.bf16.mxu0 %v5650
      %7011 = vmatpush1.bf16.msra.mxu0 %v5649
      %7012 = vmatprep.subr.bf16.mxu0 %v5536
      %7013 = vmatpush1.bf16.msra.mxu0 %v5535
      %7014 = vmatprep.subr.bf16.mxu0 %v5424
      %7015 = vmatpush1.bf16.msra.mxu0 %v5423
      %7016 = vmatprep.subr.bf16.mxu0 %v6454
      %7017 = vmatpush1.bf16.msra.mxu0 %v6453
      %7018 = vmatprep.subr.bf16.mxu0 %v6338
      %7019 = vmatpush1.bf16.msra.mxu0 %v6337
      %7020 = vmatprep.subr.bf16.mxu0 %v6223
      %7021 = vmatpush1.bf16.msra.mxu0 %v6222
      %7022 = vmatprep.subr.bf16.mxu0 %v6109
      %7023 = vmatpush1.bf16.msra.mxu0 %v6108
      %7024 = vmatprep.subr.bf16.mxu0 0
      %7025 = vmatpush2.bf16.msra.mxu0 0
      %7026 = vmatprep.subr.bf16.mxu0 0
      %7027 = vmatpush2.bf16.msra.mxu0 0
      %7028 = vmatprep.subr.bf16.mxu0 0
      %7029 = vmatpush2.bf16.msra.mxu0 0
      %7030 = vmatprep.subr.bf16.mxu0 0
      %7031 = vmatpush2.bf16.msra.mxu0 0
      %7032 = vmatprep.subr.bf16.mxu0 0
      %7033 = vmatpush2.bf16.msra.mxu0 0
      %7034 = vmatprep.subr.bf16.mxu0 0
      %7035 = vmatpush2.bf16.msra.mxu0 0
      %7036 = vmatprep.subr.bf16.mxu0 0
      %7037 = vmatpush2.bf16.msra.mxu0 0
      %7038 = vmatprep.subr.bf16.mxu0 %v5881
      %7039 = vmatpush2.bf16.msra.mxu0 %v5880
      %7040 = vmatprep.mubr.bf16.mxu0 %v6537
      %7041 = vmatmul.mubr.bf16.gmra.mxu0 %v6531
      %v7042 = vpop.f32.mrf.mxu0
      %v7043 = vadd.f32 %v7000, %v7042
      %v7044 = vpop.f32.mrf.mxu0
      %v7045 = vadd.f32 %v7002, %v7044
      %v7046 = vpop.f32.mrf.mxu0
      %v7047 = vadd.f32 %v7004, %v7046
      %v7048 = vpop.f32.mrf.mxu0
      %v7049 = vadd.f32 %v7006, %v7048
      %7050 = vdwg.mxu0
      %7051 = vmatprep.subr.bf16.mxu0 %v6224
      %7052 = vmatpush1.bf16.msra.mxu0 %v6223
      %7053 = vmatprep.subr.bf16.mxu0 %v6110
      %7054 = vmatpush1.bf16.msra.mxu0 %v6109
      %7055 = vmatprep.subr.bf16.mxu0 %v5996
      %7056 = vmatpush1.bf16.msra.mxu0 %v5995
      %7057 = vmatprep.subr.bf16.mxu0 %v5881
      %7058 = vmatpush1.bf16.msra.mxu0 %v5880
      %7059 = vmatprep.subr.bf16.mxu0 %v5765
      %7060 = vmatpush1.bf16.msra.mxu0 %v5764
      %7061 = vmatprep.subr.bf16.mxu0 %v5650
      %7062 = vmatpush1.bf16.msra.mxu0 %v5649
      %7063 = vmatprep.subr.bf16.mxu0 %v5536
      %7064 = vmatpush1.bf16.msra.mxu0 %v5535
      %7065 = vmatprep.subr.bf16.mxu0 %v5424
      %7066 = vmatpush1.bf16.msra.mxu0 %v5423
      %7067 = vmatprep.subr.bf16.mxu0 %v5997
      %7068 = vmatpush2.bf16.msra.mxu0 %v5996
      %7069 = vmatprep.subr.bf16.mxu0 %v5882
      %7070 = vmatpush2.bf16.msra.mxu0 %v5881
      %7071 = vmatprep.subr.bf16.mxu0 %v5766
      %7072 = vmatpush2.bf16.msra.mxu0 %v5765
      %7073 = vmatprep.subr.bf16.mxu0 %v5651
      %7074 = vmatpush2.bf16.msra.mxu0 %v5650
      %7075 = vmatprep.subr.bf16.mxu0 %v5537
      %7076 = vmatpush2.bf16.msra.mxu0 %v5536
      %7077 = vmatprep.subr.bf16.mxu0 %v5425
      %7078 = vmatpush2.bf16.msra.mxu0 %v5424
      %7079 = vmatprep.subr.bf16.mxu0 %v6455
      %7080 = vmatpush2.bf16.msra.mxu0 %v6454
      %7081 = vmatprep.subr.bf16.mxu0 %v6339
      %7082 = vmatpush2.bf16.msra.mxu0 %v6338
      %7083 = vmatprep.mubr.bf16.mxu0 %v6530
      %7084 = vmatmul.mubr.bf16.gmra.mxu0 %v6529
      %v7085 = vpop.f32.mrf.mxu0
      %v7086 = vadd.f32 %v6510, %v7085
      %v7087 = vpop.f32.mrf.mxu0
      %v7088 = vpop.f32.mrf.mxu0
      %v7089 = vadd.f32 %v6515, %v7088
      %v7090 = vpop.f32.mrf.mxu0
      %7091 = vdwg.mxu0
      %7092 = vmatprep.subr.bf16.mxu0 %v5767
      %7093 = vmatpush1.bf16.msra.mxu0 %v5766
      %7094 = vmatprep.subr.bf16.mxu0 %v5652
      %7095 = vmatpush1.bf16.msra.mxu0 %v5651
      %7096 = vmatprep.subr.bf16.mxu0 %v5538
      %7097 = vmatpush1.bf16.msra.mxu0 %v5537
      %7098 = vmatprep.subr.bf16.mxu0 %v5426
      %7099 = vmatpush1.bf16.msra.mxu0 %v5425
      %7100 = vmatprep.subr.bf16.mxu0 %v6456
      %7101 = vmatpush1.bf16.msra.mxu0 %v6455
      %7102 = vmatprep.subr.bf16.mxu0 %v6340
      %7103 = vmatpush1.bf16.msra.mxu0 %v6339
      %7104 = vmatprep.subr.bf16.mxu0 %v6225
      %7105 = vmatpush1.bf16.msra.mxu0 %v6224
      %7106 = vmatprep.subr.bf16.mxu0 %v6111
      %7107 = vmatpush1.bf16.msra.mxu0 %v6110
      %7108 = vmatprep.subr.bf16.mxu0 0
      %7109 = vmatpush2.bf16.msra.mxu0 0
      %7110 = vmatprep.subr.bf16.mxu0 0
      %7111 = vmatpush2.bf16.msra.mxu0 0
      %7112 = vmatprep.subr.bf16.mxu0 0
      %7113 = vmatpush2.bf16.msra.mxu0 0
      %7114 = vmatprep.subr.bf16.mxu0 0
      %7115 = vmatpush2.bf16.msra.mxu0 0
      %7116 = vmatprep.subr.bf16.mxu0 0
      %7117 = vmatpush2.bf16.msra.mxu0 0
      %7118 = vmatprep.subr.bf16.mxu0 0
      %7119 = vmatpush2.bf16.msra.mxu0 0
      %7120 = vmatprep.subr.bf16.mxu0 0
      %7121 = vmatpush2.bf16.msra.mxu0 0
      %7122 = vmatprep.subr.bf16.mxu0 %v5883
      %7123 = vmatpush2.bf16.msra.mxu0 %v5882
      %7124 = vmatprep.mubr.bf16.mxu0 %v6537
      %7125 = vmatmul.mubr.bf16.gmra.mxu0 %v6531
      %v7126 = vpop.f32.mrf.mxu0
      %v7127 = vadd.f32 %v7086, %v7126
      %v7128 = vpop.f32.mrf.mxu0
      %v7129 = vpop.f32.mrf.mxu0
      %v7130 = vadd.f32 %v7089, %v7129
      %v7131 = vpop.f32.mrf.mxu0
      %7132 = vdwg.mxu0
      %7133 = vmatprep.subr.bf16.mxu0 %v6226
      %7134 = vmatpush1.bf16.msra.mxu0 %v6225
      %7135 = vmatprep.subr.bf16.mxu0 %v6112
      %7136 = vmatpush1.bf16.msra.mxu0 %v6111
      %7137 = vmatprep.subr.bf16.mxu0 %v5998
      %7138 = vmatpush1.bf16.msra.mxu0 %v5997
      %7139 = vmatprep.subr.bf16.mxu0 %v5883
      %7140 = vmatpush1.bf16.msra.mxu0 %v5882
      %7141 = vmatprep.subr.bf16.mxu0 %v5767
      %7142 = vmatpush1.bf16.msra.mxu0 %v5766
      %7143 = vmatprep.subr.bf16.mxu0 %v5652
      %7144 = vmatpush1.bf16.msra.mxu0 %v5651
      %7145 = vmatprep.subr.bf16.mxu0 %v5538
      %7146 = vmatpush1.bf16.msra.mxu0 %v5537
      %7147 = vmatprep.subr.bf16.mxu0 %v5426
      %7148 = vmatpush1.bf16.msra.mxu0 %v5425
      %7149 = vmatprep.subr.bf16.mxu0 %v5999
      %7150 = vmatpush2.bf16.msra.mxu0 %v5998
      %7151 = vmatprep.subr.bf16.mxu0 %v5884
      %7152 = vmatpush2.bf16.msra.mxu0 %v5883
      %7153 = vmatprep.subr.bf16.mxu0 %v5768
      %7154 = vmatpush2.bf16.msra.mxu0 %v5767
      %7155 = vmatprep.subr.bf16.mxu0 %v5653
      %7156 = vmatpush2.bf16.msra.mxu0 %v5652
      %7157 = vmatprep.subr.bf16.mxu0 %v5539
      %7158 = vmatpush2.bf16.msra.mxu0 %v5538
      %7159 = vmatprep.subr.bf16.mxu0 %v5427
      %7160 = vmatpush2.bf16.msra.mxu0 %v5426
      %7161 = vmatprep.subr.bf16.mxu0 %v6457
      %7162 = vmatpush2.bf16.msra.mxu0 %v6456
      %7163 = vmatprep.subr.bf16.mxu0 %v6341
      %7164 = vmatpush2.bf16.msra.mxu0 %v6340
      %7165 = vmatprep.mubr.bf16.mxu0 %v6530
      %7166 = vmatmul.mubr.bf16.gmra.mxu0 %v6529
      %v7167 = vpop.f32.mrf.mxu0
      %v7168 = vadd.f32 %v6510, %v7167
      %v7169 = vpop.f32.mrf.mxu0
      %v7170 = vadd.f32 %v6510, %v7169
      %v7171 = vpop.f32.mrf.mxu0
      %v7172 = vadd.f32 %v6515, %v7171
      %v7173 = vpop.f32.mrf.mxu0
      %v7174 = vadd.f32 %v6515, %v7173
      %7175 = vdwg.mxu0
      %7176 = vmatprep.subr.bf16.mxu0 %v5769
      %7177 = vmatpush1.bf16.msra.mxu0 %v5768
      %7178 = vmatprep.subr.bf16.mxu0 %v5654
      %7179 = vmatpush1.bf16.msra.mxu0 %v5653
      %7180 = vmatprep.subr.bf16.mxu0 %v5540
      %7181 = vmatpush1.bf16.msra.mxu0 %v5539
      %7182 = vmatprep.subr.bf16.mxu0 %v5428
      %7183 = vmatpush1.bf16.msra.mxu0 %v5427
      %7184 = vmatprep.subr.bf16.mxu0 %v6458
      %7185 = vmatpush1.bf16.msra.mxu0 %v6457
      %7186 = vmatprep.subr.bf16.mxu0 %v6342
      %7187 = vmatpush1.bf16.msra.mxu0 %v6341
      %7188 = vmatprep.subr.bf16.mxu0 %v6227
      %7189 = vmatpush1.bf16.msra.mxu0 %v6226
      %7190 = vmatprep.subr.bf16.mxu0 %v6113
      %7191 = vmatpush1.bf16.msra.mxu0 %v6112
      %7192 = vmatprep.subr.bf16.mxu0 0
      %7193 = vmatpush2.bf16.msra.mxu0 0
      %7194 = vmatprep.subr.bf16.mxu0 0
      %7195 = vmatpush2.bf16.msra.mxu0 0
      %7196 = vmatprep.subr.bf16.mxu0 0
      %7197 = vmatpush2.bf16.msra.mxu0 0
      %7198 = vmatprep.subr.bf16.mxu0 0
      %7199 = vmatpush2.bf16.msra.mxu0 0
      %7200 = vmatprep.subr.bf16.mxu0 0
      %7201 = vmatpush2.bf16.msra.mxu0 0
      %7202 = vmatprep.subr.bf16.mxu0 0
      %7203 = vmatpush2.bf16.msra.mxu0 0
      %7204 = vmatprep.subr.bf16.mxu0 0
      %7205 = vmatpush2.bf16.msra.mxu0 0
      %7206 = vmatprep.subr.bf16.mxu0 %v5885
      %7207 = vmatpush2.bf16.msra.mxu0 %v5884
      %7208 = vmatprep.mubr.bf16.mxu0 %v6537
      %7209 = vmatmul.mubr.bf16.gmra.mxu0 %v6531
      %v7210 = vpop.f32.mrf.mxu0
      %v7211 = vadd.f32 %v7168, %v7210
      %v7212 = vpop.f32.mrf.mxu0
      %v7213 = vadd.f32 %v7170, %v7212
      %v7214 = vpop.f32.mrf.mxu0
      %v7215 = vadd.f32 %v7172, %v7214
      %v7216 = vpop.f32.mrf.mxu0
      %v7217 = vadd.f32 %v7174, %v7216
      %7218 = vdwg.mxu0
      %7219 = vmatprep.subr.bf16.mxu0 %v6228
      %7220 = vmatpush1.bf16.msra.mxu0 %v6227
      %7221 = vmatprep.subr.bf16.mxu0 %v6114
      %7222 = vmatpush1.bf16.msra.mxu0 %v6113
      %7223 = vmatprep.subr.bf16.mxu0 %v6000
      %7224 = vmatpush1.bf16.msra.mxu0 %v5999
      %7225 = vmatprep.subr.bf16.mxu0 %v5885
      %7226 = vmatpush1.bf16.msra.mxu0 %v5884
      %7227 = vmatprep.subr.bf16.mxu0 %v5769
      %7228 = vmatpush1.bf16.msra.mxu0 %v5768
      %7229 = vmatprep.subr.bf16.mxu0 %v5654
      %7230 = vmatpush1.bf16.msra.mxu0 %v5653
      %7231 = vmatprep.subr.bf16.mxu0 %v5540
      %7232 = vmatpush1.bf16.msra.mxu0 %v5539
      %7233 = vmatprep.subr.bf16.mxu0 %v5428
      %7234 = vmatpush1.bf16.msra.mxu0 %v5427
      %7235 = vmatprep.subr.bf16.mxu0 %v6001
      %7236 = vmatpush2.bf16.msra.mxu0 %v6000
      %7237 = vmatprep.subr.bf16.mxu0 %v5886
      %7238 = vmatpush2.bf16.msra.mxu0 %v5885
      %7239 = vmatprep.subr.bf16.mxu0 %v5770
      %7240 = vmatpush2.bf16.msra.mxu0 %v5769
      %7241 = vmatprep.subr.bf16.mxu0 %v5655
      %7242 = vmatpush2.bf16.msra.mxu0 %v5654
      %7243 = vmatprep.subr.bf16.mxu0 %v5541
      %7244 = vmatpush2.bf16.msra.mxu0 %v5540
      %7245 = vmatprep.subr.bf16.mxu0 %v5429
      %7246 = vmatpush2.bf16.msra.mxu0 %v5428
      %7247 = vmatprep.subr.bf16.mxu0 %v6459
      %7248 = vmatpush2.bf16.msra.mxu0 %v6458
      %7249 = vmatprep.subr.bf16.mxu0 %v6343
      %7250 = vmatpush2.bf16.msra.mxu0 %v6342
      %7251 = vmatprep.mubr.bf16.mxu0 %v6530
      %7252 = vmatmul.mubr.bf16.gmra.mxu0 %v6529
      %v7253 = vpop.f32.mrf.mxu0
      %v7254 = vadd.f32 %v6510, %v7253
      %v7255 = vpop.f32.mrf.mxu0
      %v7256 = vadd.f32 %v6510, %v7255
      %v7257 = vpop.f32.mrf.mxu0
      %v7258 = vadd.f32 %v6515, %v7257
      %v7259 = vpop.f32.mrf.mxu0
      %v7260 = vadd.f32 %v6515, %v7259
      %7261 = vdwg.mxu0
      %7262 = vmatprep.subr.bf16.mxu0 %v5771
      %7263 = vmatpush1.bf16.msra.mxu0 %v5770
      %7264 = vmatprep.subr.bf16.mxu0 %v5656
      %7265 = vmatpush1.bf16.msra.mxu0 %v5655
      %7266 = vmatprep.subr.bf16.mxu0 %v5542
      %7267 = vmatpush1.bf16.msra.mxu0 %v5541
      %7268 = vmatprep.subr.bf16.mxu0 %v5430
      %7269 = vmatpush1.bf16.msra.mxu0 %v5429
      %7270 = vmatprep.subr.bf16.mxu0 %v6460
      %7271 = vmatpush1.bf16.msra.mxu0 %v6459
      %7272 = vmatprep.subr.bf16.mxu0 %v6344
      %7273 = vmatpush1.bf16.msra.mxu0 %v6343
      %7274 = vmatprep.subr.bf16.mxu0 %v6229
      %7275 = vmatpush1.bf16.msra.mxu0 %v6228
      %7276 = vmatprep.subr.bf16.mxu0 %v6115
      %7277 = vmatpush1.bf16.msra.mxu0 %v6114
      %7278 = vmatprep.subr.bf16.mxu0 0
      %7279 = vmatpush2.bf16.msra.mxu0 0
      %7280 = vmatprep.subr.bf16.mxu0 0
      %7281 = vmatpush2.bf16.msra.mxu0 0
      %7282 = vmatprep.subr.bf16.mxu0 0
      %7283 = vmatpush2.bf16.msra.mxu0 0
      %7284 = vmatprep.subr.bf16.mxu0 0
      %7285 = vmatpush2.bf16.msra.mxu0 0
      %7286 = vmatprep.subr.bf16.mxu0 0
      %7287 = vmatpush2.bf16.msra.mxu0 0
      %7288 = vmatprep.subr.bf16.mxu0 0
      %7289 = vmatpush2.bf16.msra.mxu0 0
      %7290 = vmatprep.subr.bf16.mxu0 0
      %7291 = vmatpush2.bf16.msra.mxu0 0
      %7292 = vmatprep.subr.bf16.mxu0 %v5887
      %7293 = vmatpush2.bf16.msra.mxu0 %v5886
      %7294 = vmatprep.mubr.bf16.mxu0 %v6537
      %7295 = vmatmul.mubr.bf16.gmra.mxu0 %v6531
      %v7296 = vpop.f32.mrf.mxu0
      %v7297 = vadd.f32 %v7254, %v7296
      %v7298 = vpop.f32.mrf.mxu0
      %v7299 = vadd.f32 %v7256, %v7298
      %v7300 = vpop.f32.mrf.mxu0
      %v7301 = vadd.f32 %v7258, %v7300
      %v7302 = vpop.f32.mrf.mxu0
      %v7303 = vadd.f32 %v7260, %v7302
      %7304 = vdwg.mxu0
      %7305 = vmatprep.subr.bf16.mxu0 %v6230
      %7306 = vmatpush1.bf16.msra.mxu0 %v6229
      %7307 = vmatprep.subr.bf16.mxu0 %v6116
      %7308 = vmatpush1.bf16.msra.mxu0 %v6115
      %7309 = vmatprep.subr.bf16.mxu0 %v6002
      %7310 = vmatpush1.bf16.msra.mxu0 %v6001
      %7311 = vmatprep.subr.bf16.mxu0 %v5887
      %7312 = vmatpush1.bf16.msra.mxu0 %v5886
      %7313 = vmatprep.subr.bf16.mxu0 %v5771
      %7314 = vmatpush1.bf16.msra.mxu0 %v5770
      %7315 = vmatprep.subr.bf16.mxu0 %v5656
      %7316 = vmatpush1.bf16.msra.mxu0 %v5655
      %7317 = vmatprep.subr.bf16.mxu0 %v5542
      %7318 = vmatpush1.bf16.msra.mxu0 %v5541
      %7319 = vmatprep.subr.bf16.mxu0 %v5430
      %7320 = vmatpush1.bf16.msra.mxu0 %v5429
      %7321 = vmatprep.subr.bf16.mxu0 %v6003
      %7322 = vmatpush2.bf16.msra.mxu0 %v6002
      %7323 = vmatprep.subr.bf16.mxu0 %v5888
      %7324 = vmatpush2.bf16.msra.mxu0 %v5887
      %7325 = vmatprep.subr.bf16.mxu0 %v5772
      %7326 = vmatpush2.bf16.msra.mxu0 %v5771
      %7327 = vmatprep.subr.bf16.mxu0 %v5657
      %7328 = vmatpush2.bf16.msra.mxu0 %v5656
      %7329 = vmatprep.subr.bf16.mxu0 %v5543
      %7330 = vmatpush2.bf16.msra.mxu0 %v5542
      %7331 = vmatprep.subr.bf16.mxu0 %v5431
      %7332 = vmatpush2.bf16.msra.mxu0 %v5430
      %7333 = vmatprep.subr.bf16.mxu0 %v6461
      %7334 = vmatpush2.bf16.msra.mxu0 %v6460
      %7335 = vmatprep.subr.bf16.mxu0 %v6345
      %7336 = vmatpush2.bf16.msra.mxu0 %v6344
      %7337 = vmatprep.mubr.bf16.mxu0 %v6530
      %7338 = vmatmul.mubr.bf16.gmra.mxu0 %v6529
      %v7339 = vpop.f32.mrf.mxu0
      %v7340 = vadd.f32 %v6510, %v7339
      %v7341 = vpop.f32.mrf.mxu0
      %v7342 = vadd.f32 %v6510, %v7341
      %v7343 = vpop.f32.mrf.mxu0
      %v7344 = vadd.f32 %v6515, %v7343
      %v7345 = vpop.f32.mrf.mxu0
      %v7346 = vadd.f32 %v6515, %v7345
      %7347 = vdwg.mxu0
      %7348 = vmatprep.subr.bf16.mxu0 %v5773
      %7349 = vmatpush1.bf16.msra.mxu0 %v5772
      %7350 = vmatprep.subr.bf16.mxu0 %v5658
      %7351 = vmatpush1.bf16.msra.mxu0 %v5657
      %7352 = vmatprep.subr.bf16.mxu0 %v5544
      %7353 = vmatpush1.bf16.msra.mxu0 %v5543
      %7354 = vmatprep.subr.bf16.mxu0 %v5432
      %7355 = vmatpush1.bf16.msra.mxu0 %v5431
      %7356 = vmatprep.subr.bf16.mxu0 %v6462
      %7357 = vmatpush1.bf16.msra.mxu0 %v6461
      %7358 = vmatprep.subr.bf16.mxu0 %v6346
      %7359 = vmatpush1.bf16.msra.mxu0 %v6345
      %7360 = vmatprep.subr.bf16.mxu0 %v6231
      %7361 = vmatpush1.bf16.msra.mxu0 %v6230
      %7362 = vmatprep.subr.bf16.mxu0 %v6117
      %7363 = vmatpush1.bf16.msra.mxu0 %v6116
      %7364 = vmatprep.subr.bf16.mxu0 0
      %7365 = vmatpush2.bf16.msra.mxu0 0
      %7366 = vmatprep.subr.bf16.mxu0 0
      %7367 = vmatpush2.bf16.msra.mxu0 0
      %7368 = vmatprep.subr.bf16.mxu0 0
      %7369 = vmatpush2.bf16.msra.mxu0 0
      %7370 = vmatprep.subr.bf16.mxu0 0
      %7371 = vmatpush2.bf16.msra.mxu0 0
      %7372 = vmatprep.subr.bf16.mxu0 0
      %7373 = vmatpush2.bf16.msra.mxu0 0
      %7374 = vmatprep.subr.bf16.mxu0 0
      %7375 = vmatpush2.bf16.msra.mxu0 0
      %7376 = vmatprep.subr.bf16.mxu0 0
      %7377 = vmatpush2.bf16.msra.mxu0 0
      %7378 = vmatprep.subr.bf16.mxu0 %v5889
      %7379 = vmatpush2.bf16.msra.mxu0 %v5888
      %7380 = vmatprep.mubr.bf16.mxu0 %v6537
      %7381 = vmatmul.mubr.bf16.gmra.mxu0 %v6531
      %v7382 = vpop.f32.mrf.mxu0
      %v7383 = vadd.f32 %v7340, %v7382
      %v7384 = vpop.f32.mrf.mxu0
      %v7385 = vadd.f32 %v7342, %v7384
      %v7386 = vpop.f32.mrf.mxu0
      %v7387 = vadd.f32 %v7344, %v7386
      %v7388 = vpop.f32.mrf.mxu0
      %v7389 = vadd.f32 %v7346, %v7388
      %7390 = vdwg.mxu0
      %7391 = vmatprep.subr.bf16.mxu0 %v6232
      %7392 = vmatpush1.bf16.msra.mxu0 %v6231
      %7393 = vmatprep.subr.bf16.mxu0 %v6118
      %7394 = vmatpush1.bf16.msra.mxu0 %v6117
      %7395 = vmatprep.subr.bf16.mxu0 %v6004
      %7396 = vmatpush1.bf16.msra.mxu0 %v6003
      %7397 = vmatprep.subr.bf16.mxu0 %v5889
      %7398 = vmatpush1.bf16.msra.mxu0 %v5888
      %7399 = vmatprep.subr.bf16.mxu0 %v5773
      %7400 = vmatpush1.bf16.msra.mxu0 %v5772
      %7401 = vmatprep.subr.bf16.mxu0 %v5658
      %7402 = vmatpush1.bf16.msra.mxu0 %v5657
      %7403 = vmatprep.subr.bf16.mxu0 %v5544
      %7404 = vmatpush1.bf16.msra.mxu0 %v5543
      %7405 = vmatprep.subr.bf16.mxu0 %v5432
      %7406 = vmatpush1.bf16.msra.mxu0 %v5431
      %7407 = vmatprep.subr.bf16.mxu0 %v6005
      %7408 = vmatpush2.bf16.msra.mxu0 %v6004
      %7409 = vmatprep.subr.bf16.mxu0 %v5890
      %7410 = vmatpush2.bf16.msra.mxu0 %v5889
      %7411 = vmatprep.subr.bf16.mxu0 %v5774
      %7412 = vmatpush2.bf16.msra.mxu0 %v5773
      %7413 = vmatprep.subr.bf16.mxu0 %v5659
      %7414 = vmatpush2.bf16.msra.mxu0 %v5658
      %7415 = vmatprep.subr.bf16.mxu0 %v5545
      %7416 = vmatpush2.bf16.msra.mxu0 %v5544
      %7417 = vmatprep.subr.bf16.mxu0 %v5433
      %7418 = vmatpush2.bf16.msra.mxu0 %v5432
      %7419 = vmatprep.subr.bf16.mxu0 %v6463
      %7420 = vmatpush2.bf16.msra.mxu0 %v6462
      %7421 = vmatprep.subr.bf16.mxu0 %v6347
      %7422 = vmatpush2.bf16.msra.mxu0 %v6346
      %7423 = vmatprep.mubr.bf16.mxu0 %v6530
      %7424 = vmatmul.mubr.bf16.gmra.mxu0 %v6529
      %v7425 = vpop.f32.mrf.mxu0
      %v7426 = vpop.f32.mrf.mxu0
      %v7427 = vadd.f32 %v6510, %v7426
      %v7428 = vpop.f32.mrf.mxu0
      %v7429 = vpop.f32.mrf.mxu0
      %v7430 = vadd.f32 %v6515, %v7429
      %7431 = vdwg.mxu0
      %7432 = vmatprep.subr.bf16.mxu0 %v5775
      %7433 = vmatpush1.bf16.msra.mxu0 %v5774
      %7434 = vmatprep.subr.bf16.mxu0 %v5660
      %7435 = vmatpush1.bf16.msra.mxu0 %v5659
      %7436 = vmatprep.subr.bf16.mxu0 %v5546
      %7437 = vmatpush1.bf16.msra.mxu0 %v5545
      %7438 = vmatprep.subr.bf16.mxu0 %v5434
      %7439 = vmatpush1.bf16.msra.mxu0 %v5433
      %7440 = vmatprep.subr.bf16.mxu0 %v6464
      %7441 = vmatpush1.bf16.msra.mxu0 %v6463
      %7442 = vmatprep.subr.bf16.mxu0 %v6348
      %7443 = vmatpush1.bf16.msra.mxu0 %v6347
      %7444 = vmatprep.subr.bf16.mxu0 %v6233
      %7445 = vmatpush1.bf16.msra.mxu0 %v6232
      %7446 = vmatprep.subr.bf16.mxu0 %v6119
      %7447 = vmatpush1.bf16.msra.mxu0 %v6118
      %7448 = vmatprep.subr.bf16.mxu0 0
      %7449 = vmatpush2.bf16.msra.mxu0 0
      %7450 = vmatprep.subr.bf16.mxu0 0
      %7451 = vmatpush2.bf16.msra.mxu0 0
      %7452 = vmatprep.subr.bf16.mxu0 0
      %7453 = vmatpush2.bf16.msra.mxu0 0
      %7454 = vmatprep.subr.bf16.mxu0 0
      %7455 = vmatpush2.bf16.msra.mxu0 0
      %7456 = vmatprep.subr.bf16.mxu0 0
      %7457 = vmatpush2.bf16.msra.mxu0 0
      %7458 = vmatprep.subr.bf16.mxu0 0
      %7459 = vmatpush2.bf16.msra.mxu0 0
      %7460 = vmatprep.subr.bf16.mxu0 0
      %7461 = vmatpush2.bf16.msra.mxu0 0
      %7462 = vmatprep.subr.bf16.mxu0 %v5891
      %7463 = vmatpush2.bf16.msra.mxu0 %v5890
      %7464 = vmatprep.mubr.bf16.mxu0 %v6537
      %7465 = vmatmul.mubr.bf16.gmra.mxu0 %v6531
      %v7466 = vpop.f32.mrf.mxu0
      %v7467 = vpop.f32.mrf.mxu0
      %v7468 = vadd.f32 %v7427, %v7467
      %v7469 = vpop.f32.mrf.mxu0
      %v7470 = vpop.f32.mrf.mxu0
      %v7471 = vadd.f32 %v7430, %v7470
      %7472 = vdwg.mxu0
      %7473 = vmatprep.subr.bf16.mxu0 %v6234
      %7474 = vmatpush1.bf16.msra.mxu0 %v6233
      %7475 = vmatprep.subr.bf16.mxu0 %v6120
      %7476 = vmatpush1.bf16.msra.mxu0 %v6119
      %7477 = vmatprep.subr.bf16.mxu0 %v6006
      %7478 = vmatpush1.bf16.msra.mxu0 %v6005
      %7479 = vmatprep.subr.bf16.mxu0 %v5891
      %7480 = vmatpush1.bf16.msra.mxu0 %v5890
      %7481 = vmatprep.subr.bf16.mxu0 %v5775
      %7482 = vmatpush1.bf16.msra.mxu0 %v5774
      %7483 = vmatprep.subr.bf16.mxu0 %v5660
      %7484 = vmatpush1.bf16.msra.mxu0 %v5659
      %7485 = vmatprep.subr.bf16.mxu0 %v5546
      %7486 = vmatpush1.bf16.msra.mxu0 %v5545
      %7487 = vmatprep.subr.bf16.mxu0 %v5434
      %7488 = vmatpush1.bf16.msra.mxu0 %v5433
      %7489 = vmatprep.subr.bf16.mxu0 %v6007
      %7490 = vmatpush2.bf16.msra.mxu0 %v6006
      %7491 = vmatprep.subr.bf16.mxu0 %v5892
      %7492 = vmatpush2.bf16.msra.mxu0 %v5891
      %7493 = vmatprep.subr.bf16.mxu0 %v5776
      %7494 = vmatpush2.bf16.msra.mxu0 %v5775
      %7495 = vmatprep.subr.bf16.mxu0 %v5661
      %7496 = vmatpush2.bf16.msra.mxu0 %v5660
      %7497 = vmatprep.subr.bf16.mxu0 %v5547
      %7498 = vmatpush2.bf16.msra.mxu0 %v5546
      %7499 = vmatprep.subr.bf16.mxu0 %v5435
      %7500 = vmatpush2.bf16.msra.mxu0 %v5434
      %7501 = vmatprep.subr.bf16.mxu0 %v6465
      %7502 = vmatpush2.bf16.msra.mxu0 %v6464
      %7503 = vmatprep.subr.bf16.mxu0 %v6349
      %7504 = vmatpush2.bf16.msra.mxu0 %v6348
      %7505 = vmatprep.mubr.bf16.mxu0 %v6530
      %7506 = vmatmul.mubr.bf16.gmra.mxu0 %v6529
      %v7507 = vpop.f32.mrf.mxu0
      %v7508 = vadd.f32 %v6510, %v7507
      %v7509 = vpop.f32.mrf.mxu0
      %v7510 = vadd.f32 %v6510, %v7509
      %v7511 = vpop.f32.mrf.mxu0
      %v7512 = vadd.f32 %v6515, %v7511
      %v7513 = vpop.f32.mrf.mxu0
      %v7514 = vadd.f32 %v6515, %v7513
      %7515 = vdwg.mxu0
      %7516 = vmatprep.subr.bf16.mxu0 %v5777
      %7517 = vmatpush1.bf16.msra.mxu0 %v5776
      %7518 = vmatprep.subr.bf16.mxu0 %v5662
      %7519 = vmatpush1.bf16.msra.mxu0 %v5661
      %7520 = vmatprep.subr.bf16.mxu0 %v5548
      %7521 = vmatpush1.bf16.msra.mxu0 %v5547
      %7522 = vmatprep.subr.bf16.mxu0 %v5436
      %7523 = vmatpush1.bf16.msra.mxu0 %v5435
      %7524 = vmatprep.subr.bf16.mxu0 %v6466
      %7525 = vmatpush1.bf16.msra.mxu0 %v6465
      %7526 = vmatprep.subr.bf16.mxu0 %v6350
      %7527 = vmatpush1.bf16.msra.mxu0 %v6349
      %7528 = vmatprep.subr.bf16.mxu0 %v6235
      %7529 = vmatpush1.bf16.msra.mxu0 %v6234
      %7530 = vmatprep.subr.bf16.mxu0 %v6121
      %7531 = vmatpush1.bf16.msra.mxu0 %v6120
      %7532 = vmatprep.subr.bf16.mxu0 0
      %7533 = vmatpush2.bf16.msra.mxu0 0
      %7534 = vmatprep.subr.bf16.mxu0 0
      %7535 = vmatpush2.bf16.msra.mxu0 0
      %7536 = vmatprep.subr.bf16.mxu0 0
      %7537 = vmatpush2.bf16.msra.mxu0 0
      %7538 = vmatprep.subr.bf16.mxu0 0
      %7539 = vmatpush2.bf16.msra.mxu0 0
      %7540 = vmatprep.subr.bf16.mxu0 0
      %7541 = vmatpush2.bf16.msra.mxu0 0
      %7542 = vmatprep.subr.bf16.mxu0 0
      %7543 = vmatpush2.bf16.msra.mxu0 0
      %7544 = vmatprep.subr.bf16.mxu0 0
      %7545 = vmatpush2.bf16.msra.mxu0 0
      %7546 = vmatprep.subr.bf16.mxu0 %v5893
      %7547 = vmatpush2.bf16.msra.mxu0 %v5892
      %7548 = vmatprep.mubr.bf16.mxu0 %v6537
      %7549 = vmatmul.mubr.bf16.gmra.mxu0 %v6531
      %v7550 = vpop.f32.mrf.mxu0
      %v7551 = vadd.f32 %v7508, %v7550
      %v7552 = vpop.f32.mrf.mxu0
      %v7553 = vadd.f32 %v7510, %v7552
      %v7554 = vpop.f32.mrf.mxu0
      %v7555 = vadd.f32 %v7512, %v7554
      %v7556 = vpop.f32.mrf.mxu0
      %v7557 = vadd.f32 %v7514, %v7556
      %7558 = vdwg.mxu0
      %7559 = vmatprep.subr.bf16.mxu0 %v6236
      %7560 = vmatpush1.bf16.msra.mxu0 %v6235
      %7561 = vmatprep.subr.bf16.mxu0 %v6122
      %7562 = vmatpush1.bf16.msra.mxu0 %v6121
      %7563 = vmatprep.subr.bf16.mxu0 %v6008
      %7564 = vmatpush1.bf16.msra.mxu0 %v6007
      %7565 = vmatprep.subr.bf16.mxu0 %v5893
      %7566 = vmatpush1.bf16.msra.mxu0 %v5892
      %7567 = vmatprep.subr.bf16.mxu0 %v5777
      %7568 = vmatpush1.bf16.msra.mxu0 %v5776
      %7569 = vmatprep.subr.bf16.mxu0 %v5662
      %7570 = vmatpush1.bf16.msra.mxu0 %v5661
      %7571 = vmatprep.subr.bf16.mxu0 %v5548
      %7572 = vmatpush1.bf16.msra.mxu0 %v5547
      %7573 = vmatprep.subr.bf16.mxu0 %v5436
      %7574 = vmatpush1.bf16.msra.mxu0 %v5435
      %7575 = vmatprep.subr.bf16.mxu0 %v6009
      %7576 = vmatpush2.bf16.msra.mxu0 %v6008
      %7577 = vmatprep.subr.bf16.mxu0 %v5894
      %7578 = vmatpush2.bf16.msra.mxu0 %v5893
      %7579 = vmatprep.subr.bf16.mxu0 %v5778
      %7580 = vmatpush2.bf16.msra.mxu0 %v5777
      %7581 = vmatprep.subr.bf16.mxu0 %v5663
      %7582 = vmatpush2.bf16.msra.mxu0 %v5662
      %7583 = vmatprep.subr.bf16.mxu0 %v5549
      %7584 = vmatpush2.bf16.msra.mxu0 %v5548
      %7585 = vmatprep.subr.bf16.mxu0 %v5437
      %7586 = vmatpush2.bf16.msra.mxu0 %v5436
      %7587 = vmatprep.subr.bf16.mxu0 %v6467
      %7588 = vmatpush2.bf16.msra.mxu0 %v6466
      %7589 = vmatprep.subr.bf16.mxu0 %v6351
      %7590 = vmatpush2.bf16.msra.mxu0 %v6350
      %7591 = vmatprep.mubr.bf16.mxu0 %v6530
      %7592 = vmatmul.mubr.bf16.gmra.mxu0 %v6529
      %v7593 = vpop.f32.mrf.mxu0
      %v7594 = vadd.f32 %v6510, %v7593
      %v7595 = vpop.f32.mrf.mxu0
      %v7596 = vadd.f32 %v6510, %v7595
      %v7597 = vpop.f32.mrf.mxu0
      %v7598 = vadd.f32 %v6515, %v7597
      %v7599 = vpop.f32.mrf.mxu0
      %v7600 = vadd.f32 %v6515, %v7599
      %7601 = vdwg.mxu0
      %7602 = vmatprep.subr.bf16.mxu0 %v5809
      %7603 = vmatpush1.bf16.msra.mxu0 %v5778
      %7604 = vmatprep.subr.bf16.mxu0 %v5693
      %7605 = vmatpush1.bf16.msra.mxu0 %v5663
      %7606 = vmatprep.subr.bf16.mxu0 %v5579
      %7607 = vmatpush1.bf16.msra.mxu0 %v5549
      %7608 = vmatprep.subr.bf16.mxu0 %v5438
      %7609 = vmatpush1.bf16.msra.mxu0 %v5437
      %7610 = vmatprep.subr.bf16.mxu0 %v6468
      %7611 = vmatpush1.bf16.msra.mxu0 %v6467
      %7612 = vmatprep.subr.bf16.mxu0 %v6352
      %7613 = vmatpush1.bf16.msra.mxu0 %v6351
      %7614 = vmatprep.subr.bf16.mxu0 %v6237
      %7615 = vmatpush1.bf16.msra.mxu0 %v6236
      %7616 = vmatprep.subr.bf16.mxu0 %v6123
      %7617 = vmatpush1.bf16.msra.mxu0 %v6122
      %7618 = vmatprep.subr.bf16.mxu0 0
      %7619 = vmatpush2.bf16.msra.mxu0 0
      %7620 = vmatprep.subr.bf16.mxu0 0
      %7621 = vmatpush2.bf16.msra.mxu0 0
      %7622 = vmatprep.subr.bf16.mxu0 0
      %7623 = vmatpush2.bf16.msra.mxu0 0
      %7624 = vmatprep.subr.bf16.mxu0 0
      %7625 = vmatpush2.bf16.msra.mxu0 0
      %7626 = vmatprep.subr.bf16.mxu0 0
      %7627 = vmatpush2.bf16.msra.mxu0 0
      %7628 = vmatprep.subr.bf16.mxu0 0
      %7629 = vmatpush2.bf16.msra.mxu0 0
      %7630 = vmatprep.subr.bf16.mxu0 0
      %7631 = vmatpush2.bf16.msra.mxu0 0
      %7632 = vmatprep.subr.bf16.mxu0 %v5925
      %7633 = vmatpush2.bf16.msra.mxu0 %v5894
      %7634 = vmatprep.mubr.bf16.mxu0 %v6537
      %7635 = vmatmul.mubr.bf16.gmra.mxu0 %v6531
      %v7636 = vpop.f32.mrf.mxu0
      %v7637 = vadd.f32 %v7594, %v7636
      %v7638 = vpop.f32.mrf.mxu0
      %v7639 = vadd.f32 %v7596, %v7638
      %v7640 = vpop.f32.mrf.mxu0
      %v7641 = vadd.f32 %v7598, %v7640
      %v7642 = vpop.f32.mrf.mxu0
      %v7643 = vadd.f32 %v7600, %v7642
      %7644 = vdwg.mxu0
      %7645 = vmatprep.subr.bf16.mxu0 %v6267
      %7646 = vmatpush1.bf16.msra.mxu0 %v6237
      %7647 = vmatprep.subr.bf16.mxu0 %v6153
      %7648 = vmatpush1.bf16.msra.mxu0 %v6123
      %7649 = vmatprep.subr.bf16.mxu0 %v6039
      %7650 = vmatpush1.bf16.msra.mxu0 %v6009
      %7651 = vmatprep.subr.bf16.mxu0 %v5925
      %7652 = vmatpush1.bf16.msra.mxu0 %v5894
      %7653 = vmatprep.subr.bf16.mxu0 %v5809
      %7654 = vmatpush1.bf16.msra.mxu0 %v5778
      %7655 = vmatprep.subr.bf16.mxu0 %v5693
      %7656 = vmatpush1.bf16.msra.mxu0 %v5663
      %7657 = vmatprep.subr.bf16.mxu0 %v5579
      %7658 = vmatpush1.bf16.msra.mxu0 %v5549
      %7659 = vmatprep.subr.bf16.mxu0 %v5438
      %7660 = vmatpush1.bf16.msra.mxu0 %v5437
      %7661 = vmatprep.subr.bf16.mxu0 %v5983
      %7662 = vmatpush2.bf16.msra.mxu0 %v6039
      %7663 = vmatprep.subr.bf16.mxu0 %v5868
      %7664 = vmatpush2.bf16.msra.mxu0 %v5925
      %7665 = vmatprep.subr.bf16.mxu0 %v5752
      %7666 = vmatpush2.bf16.msra.mxu0 %v5809
      %7667 = vmatprep.subr.bf16.mxu0 %v5637
      %7668 = vmatpush2.bf16.msra.mxu0 %v5693
      %7669 = vmatprep.subr.bf16.mxu0 %v5523
      %7670 = vmatpush2.bf16.msra.mxu0 %v5579
      %7671 = vmatprep.subr.bf16.mxu0 %v5411
      %7672 = vmatpush2.bf16.msra.mxu0 %v5438
      %7673 = vmatprep.subr.bf16.mxu0 %v6499
      %7674 = vmatpush2.bf16.msra.mxu0 %v6468
      %7675 = vmatprep.subr.bf16.mxu0 %v6383
      %7676 = vmatpush2.bf16.msra.mxu0 %v6352
      %7677 = vmatprep.mubr.bf16.mxu0 %v6530
      %7678 = vmatmul.mubr.bf16.gmra.mxu0 %v6529
      %v7679 = vpop.f32.mrf.mxu0
      %v7680 = vadd.f32 %v6510, %v7679
      %v7681 = vpop.f32.mrf.mxu0
      %v7682 = vpop.f32.mrf.mxu0
      %v7683 = vadd.f32 %v6515, %v7682
      %v7684 = vpop.f32.mrf.mxu0
      %7685 = vdwg.mxu0
      %7686 = vmatprep.subr.bf16.mxu0 %v5753
      %7687 = vmatpush1.bf16.msra.mxu0 %v5752
      %7688 = vmatprep.subr.bf16.mxu0 %v5638
      %7689 = vmatpush1.bf16.msra.mxu0 %v5637
      %7690 = vmatprep.subr.bf16.mxu0 %v5524
      %7691 = vmatpush1.bf16.msra.mxu0 %v5523
      %7692 = vmatprep.subr.bf16.mxu0 %v5412
      %7693 = vmatpush1.bf16.msra.mxu0 %v5411
      %7694 = vmatprep.subr.bf16.mxu0 %v6442
      %7695 = vmatpush1.bf16.msra.mxu0 %v6499
      %7696 = vmatprep.subr.bf16.mxu0 %v6326
      %7697 = vmatpush1.bf16.msra.mxu0 %v6383
      %7698 = vmatprep.subr.bf16.mxu0 %v6211
      %7699 = vmatpush1.bf16.msra.mxu0 %v6267
      %7700 = vmatprep.subr.bf16.mxu0 %v6097
      %7701 = vmatpush1.bf16.msra.mxu0 %v6153
      %7702 = vmatprep.subr.bf16.mxu0 0
      %7703 = vmatpush2.bf16.msra.mxu0 0
      %7704 = vmatprep.subr.bf16.mxu0 0
      %7705 = vmatpush2.bf16.msra.mxu0 0
      %7706 = vmatprep.subr.bf16.mxu0 0
      %7707 = vmatpush2.bf16.msra.mxu0 0
      %7708 = vmatprep.subr.bf16.mxu0 0
      %7709 = vmatpush2.bf16.msra.mxu0 0
      %7710 = vmatprep.subr.bf16.mxu0 0
      %7711 = vmatpush2.bf16.msra.mxu0 0
      %7712 = vmatprep.subr.bf16.mxu0 0
      %7713 = vmatpush2.bf16.msra.mxu0 0
      %7714 = vmatprep.subr.bf16.mxu0 0
      %7715 = vmatpush2.bf16.msra.mxu0 0
      %7716 = vmatprep.subr.bf16.mxu0 %v5869
      %7717 = vmatpush2.bf16.msra.mxu0 %v5868
      %7718 = vmatprep.mubr.bf16.mxu0 %v6537
      %7719 = vmatmul.mubr.bf16.gmra.mxu0 %v6531
      %v7720 = vpop.f32.mrf.mxu0
      %v7721 = vadd.f32 %v7680, %v7720
      %v7722 = vpop.f32.mrf.mxu0
      %v7723 = vpop.f32.mrf.mxu0
      %v7724 = vadd.f32 %v7683, %v7723
      %v7725 = vpop.f32.mrf.mxu0
      %7726 = vdwg.mxu0
      %v7727 = vmax.f32 %v6617, 0.0
      %v7728 = vmax.f32 %v6619, 0.0
      %v7729 = vmax.f32 %v6703, 0.0
      %v7730 = vmax.f32 %v6705, 0.0
      %v7731 = vmax.f32 %v6789, 0.0
      %v7732 = vmax.f32 %v6791, 0.0
      %v7733 = vmax.f32 %v6874, 0.0
      %v7734 = vmax.f32 %v6957, 0.0
      %v7735 = vmax.f32 %v6959, 0.0
      %v7736 = vmax.f32 %v7043, 0.0
      %v7737 = vmax.f32 %v7045, 0.0
      %v7738 = vmax.f32 %v7127, 0.0
      %v7739 = vmax.f32 %v7211, 0.0
      %v7740 = vmax.f32 %v7213, 0.0
      %v7741 = vmax.f32 %v7297, 0.0
      %v7742 = vmax.f32 %v7299, 0.0
      %v7743 = vmax.f32 %v7383, 0.0
      %v7744 = vmax.f32 %v7385, 0.0
      %v7745 = vmax.f32 %v7468, 0.0
      %v7746 = vmax.f32 %v7551, 0.0
      %v7747 = vmax.f32 %v7553, 0.0
      %v7748 = vmax.f32 %v7637, 0.0
      %v7749 = vmax.f32 %v7639, 0.0
      %v7750 = vmax.f32 %v7721, 0.0
      %v7751 = vmax.f32 %v6621, 0.0
      %v7752 = vmax.f32 %v6623, 0.0
      %v7753 = vmax.f32 %v6707, 0.0
      %v7754 = vmax.f32 %v6709, 0.0
      %v7755 = vmax.f32 %v6793, 0.0
      %v7756 = vmax.f32 %v6795, 0.0
      %v7757 = vmax.f32 %v6877, 0.0
      %v7758 = vmax.f32 %v6961, 0.0
      %v7759 = vmax.f32 %v6963, 0.0
      %v7760 = vmax.f32 %v7047, 0.0
      %v7761 = vmax.f32 %v7049, 0.0
      %v7762 = vmax.f32 %v7130, 0.0
      %v7763 = vmax.f32 %v7215, 0.0
      %v7764 = vmax.f32 %v7217, 0.0
      %v7765 = vmax.f32 %v7301, 0.0
      %v7766 = vmax.f32 %v7303, 0.0
      %v7767 = vmax.f32 %v7387, 0.0
      %v7768 = vmax.f32 %v7389, 0.0
      %v7769 = vmax.f32 %v7471, 0.0
      %v7770 = vmax.f32 %v7555, 0.0
      %v7771 = vmax.f32 %v7557, 0.0
      %v7772 = vmax.f32 %v7641, 0.0
      %v7773 = vmax.f32 %v7643, 0.0
      %v7774 = vmax.f32 %v7724, 0.0
      %7823 = vrot.lane.b32.xlu0 %v7727, 126
      %v7824 = vpop.permute.xlu0 %7823
      %7825 = vrot.lane.b32.xlu0 %v7728, 126
      %v7826 = vpop.permute.xlu0 %7825
      %7827 = vrot.lane.b32.xlu0 %v7729, 126
      %v7828 = vpop.permute.xlu0 %7827
      %7829 = vrot.lane.b32.xlu0 %v7730, 126
      %v7830 = vpop.permute.xlu0 %7829
      %7831 = vrot.lane.b32.xlu0 %v7731, 126
      %v7832 = vpop.permute.xlu0 %7831
      %7833 = vrot.lane.b32.xlu0 %v7732, 126
      %v7834 = vpop.permute.xlu0 %7833
      %7835 = vrot.lane.b32.xlu0 %v7733, 126
      %v7836 = vpop.permute.xlu0 %7835
      %7837 = vrot.lane.b32.xlu0 %v7734, 126
      %v7838 = vpop.permute.xlu0 %7837
      %7839 = vrot.lane.b32.xlu0 %v7735, 126
      %v7840 = vpop.permute.xlu0 %7839
      %7841 = vrot.lane.b32.xlu0 %v7736, 126
      %v7842 = vpop.permute.xlu0 %7841
      %7843 = vrot.lane.b32.xlu0 %v7737, 126
      %v7844 = vpop.permute.xlu0 %7843
      %7845 = vrot.lane.b32.xlu0 %v7738, 126
      %v7846 = vpop.permute.xlu0 %7845
      %7847 = vrot.lane.b32.xlu0 %v7739, 126
      %v7848 = vpop.permute.xlu0 %7847
      %7849 = vrot.lane.b32.xlu0 %v7740, 126
      %v7850 = vpop.permute.xlu0 %7849
      %7851 = vrot.lane.b32.xlu0 %v7741, 126
      %v7852 = vpop.permute.xlu0 %7851
      %7853 = vrot.lane.b32.xlu0 %v7742, 126
      %v7854 = vpop.permute.xlu0 %7853
      %7855 = vrot.lane.b32.xlu0 %v7743, 126
      %v7856 = vpop.permute.xlu0 %7855
      %7857 = vrot.lane.b32.xlu0 %v7744, 126
      %v7858 = vpop.permute.xlu0 %7857
      %7859 = vrot.lane.b32.xlu0 %v7745, 126
      %v7860 = vpop.permute.xlu0 %7859
      %7861 = vrot.lane.b32.xlu0 %v7746, 126
      %v7862 = vpop.permute.xlu0 %7861
      %7863 = vrot.lane.b32.xlu0 %v7747, 126
      %v7864 = vpop.permute.xlu0 %7863
      %7865 = vrot.lane.b32.xlu0 %v7748, 126
      %v7866 = vpop.permute.xlu0 %7865
      %7867 = vrot.lane.b32.xlu0 %v7749, 126
      %v7868 = vpop.permute.xlu0 %7867
      %7869 = vrot.lane.b32.xlu0 %v7750, 126
      %v7870 = vpop.permute.xlu0 %7869
      %7871 = vrot.lane.b32.xlu0 %v7751, 126
      %v7872 = vpop.permute.xlu0 %7871
      %7873 = vrot.lane.b32.xlu0 %v7752, 126
      %v7874 = vpop.permute.xlu0 %7873
      %7875 = vrot.lane.b32.xlu0 %v7753, 126
      %v7876 = vpop.permute.xlu0 %7875
      %7877 = vrot.lane.b32.xlu0 %v7754, 126
      %v7878 = vpop.permute.xlu0 %7877
      %7879 = vrot.lane.b32.xlu0 %v7755, 126
      %v7880 = vpop.permute.xlu0 %7879
      %7881 = vrot.lane.b32.xlu0 %v7756, 126
      %v7882 = vpop.permute.xlu0 %7881
      %7883 = vrot.lane.b32.xlu0 %v7757, 126
      %v7884 = vpop.permute.xlu0 %7883
      %7885 = vrot.lane.b32.xlu0 %v7758, 126
      %v7886 = vpop.permute.xlu0 %7885
      %7887 = vrot.lane.b32.xlu0 %v7759, 126
      %v7888 = vpop.permute.xlu0 %7887
      %7889 = vrot.lane.b32.xlu0 %v7760, 126
      %v7890 = vpop.permute.xlu0 %7889
      %7891 = vrot.lane.b32.xlu0 %v7761, 126
      %v7892 = vpop.permute.xlu0 %7891
      %7893 = vrot.lane.b32.xlu0 %v7762, 126
      %v7894 = vpop.permute.xlu0 %7893
      %7895 = vrot.lane.b32.xlu0 %v7763, 126
      %v7896 = vpop.permute.xlu0 %7895
      %7897 = vrot.lane.b32.xlu0 %v7764, 126
      %v7898 = vpop.permute.xlu0 %7897
      %7899 = vrot.lane.b32.xlu0 %v7765, 126
      %v7900 = vpop.permute.xlu0 %7899
      %7901 = vrot.lane.b32.xlu0 %v7766, 126
      %v7902 = vpop.permute.xlu0 %7901
      %7903 = vrot.lane.b32.xlu0 %v7767, 126
      %v7904 = vpop.permute.xlu0 %7903
      %7905 = vrot.lane.b32.xlu0 %v7768, 126
      %v7906 = vpop.permute.xlu0 %7905
      %7907 = vrot.lane.b32.xlu0 %v7769, 126
      %v7908 = vpop.permute.xlu0 %7907
      %7909 = vrot.lane.b32.xlu0 %v7770, 126
      %v7910 = vpop.permute.xlu0 %7909
      %7911 = vrot.lane.b32.xlu0 %v7771, 126
      %v7912 = vpop.permute.xlu0 %7911
      %7913 = vrot.lane.b32.xlu0 %v7772, 126
      %v7914 = vpop.permute.xlu0 %7913
      %7915 = vrot.lane.b32.xlu0 %v7773, 126
      %v7916 = vpop.permute.xlu0 %7915
      %7917 = vrot.lane.b32.xlu0 %v7774, 126
      %v7918 = vpop.permute.xlu0 %7917
      %v7919 = vsel %vm699, %v7824, %v7826
      %v7920 = vsel %vm699, %v7826, %v7828
      %v7921 = vsel %vm699, %v7828, %v7830
      %v7922 = vsel %vm699, %v7830, %v7832
      %v7923 = vsel %vm699, %v7832, %v7834
      %v7924 = vsel %vm699, %v7836, %v7838
      %v7925 = vsel %vm699, %v7838, %v7840
      %v7926 = vsel %vm699, %v7840, %v7842
      %v7927 = vsel %vm699, %v7842, %v7844
      %v7928 = vsel %vm699, %v7844, %v7846
      %v7929 = vsel %vm699, %v7848, %v7850
      %v7930 = vsel %vm699, %v7850, %v7852
      %v7931 = vsel %vm699, %v7852, %v7854
      %v7932 = vsel %vm699, %v7854, %v7856
      %v7933 = vsel %vm699, %v7856, %v7858
      %v7934 = vsel %vm699, %v7860, %v7862
      %v7935 = vsel %vm699, %v7862, %v7864
      %v7936 = vsel %vm699, %v7864, %v7866
      %v7937 = vsel %vm699, %v7866, %v7868
      %v7938 = vsel %vm699, %v7868, %v7870
      %v7939 = vsel %vm699, %v7872, %v7874
      %v7940 = vsel %vm699, %v7874, %v7876
      %v7941 = vsel %vm699, %v7876, %v7878
      %v7942 = vsel %vm699, %v7878, %v7880
      %v7943 = vsel %vm699, %v7880, %v7882
      %v7944 = vsel %vm699, %v7884, %v7886
      %v7945 = vsel %vm699, %v7886, %v7888
      %v7946 = vsel %vm699, %v7888, %v7890
      %v7947 = vsel %vm699, %v7890, %v7892
      %v7948 = vsel %vm699, %v7892, %v7894
      %v7949 = vsel %vm699, %v7896, %v7898
      %v7950 = vsel %vm699, %v7898, %v7900
      %v7951 = vsel %vm699, %v7900, %v7902
      %v7952 = vsel %vm699, %v7902, %v7904
      %v7953 = vsel %vm699, %v7904, %v7906
      %v7954 = vsel %vm699, %v7908, %v7910
      %v7955 = vsel %vm699, %v7910, %v7912
      %v7956 = vsel %vm699, %v7912, %v7914
      %v7957 = vsel %vm699, %v7914, %v7916
      %v7958 = vsel %vm699, %v7916, %v7918
      %v7999 = vmax.f32 %v7727, %v7919
      %v8000 = vmax.f32 %v7728, %v7920
      %v8001 = vmax.f32 %v7729, %v7921
      %v8002 = vmax.f32 %v7730, %v7922
      %v8003 = vmax.f32 %v7731, %v7923
      %v8004 = vmax.f32 %v7733, %v7924
      %v8005 = vmax.f32 %v7734, %v7925
      %v8006 = vmax.f32 %v7735, %v7926
      %v8007 = vmax.f32 %v7736, %v7927
      %v8008 = vmax.f32 %v7737, %v7928
      %v8009 = vmax.f32 %v7739, %v7929
      %v8010 = vmax.f32 %v7740, %v7930
      %v8011 = vmax.f32 %v7741, %v7931
      %v8012 = vmax.f32 %v7742, %v7932
      %v8013 = vmax.f32 %v7743, %v7933
      %v8014 = vmax.f32 %v7745, %v7934
      %v8015 = vmax.f32 %v7746, %v7935
      %v8016 = vmax.f32 %v7747, %v7936
      %v8017 = vmax.f32 %v7748, %v7937
      %v8018 = vmax.f32 %v7749, %v7938
      %v8019 = vmax.f32 %v7751, %v7939
      %v8020 = vmax.f32 %v7752, %v7940
      %v8021 = vmax.f32 %v7753, %v7941
      %v8022 = vmax.f32 %v7754, %v7942
      %v8023 = vmax.f32 %v7755, %v7943
      %v8024 = vmax.f32 %v7757, %v7944
      %v8025 = vmax.f32 %v7758, %v7945
      %v8026 = vmax.f32 %v7759, %v7946
      %v8027 = vmax.f32 %v7760, %v7947
      %v8028 = vmax.f32 %v7761, %v7948
      %v8029 = vmax.f32 %v7763, %v7949
      %v8030 = vmax.f32 %v7764, %v7950
      %v8031 = vmax.f32 %v7765, %v7951
      %v8032 = vmax.f32 %v7766, %v7952
      %v8033 = vmax.f32 %v7767, %v7953
      %v8034 = vmax.f32 %v7769, %v7954
      %v8035 = vmax.f32 %v7770, %v7955
      %v8036 = vmax.f32 %v7771, %v7956
      %v8037 = vmax.f32 %v7772, %v7957
      %v8038 = vmax.f32 %v7773, %v7958
      %8039 = vrot.lane.b32.xlu0 %v7727, 64
      %v8040 = vpop.permute.xlu0 %8039
      %8041 = vrot.lane.b32.xlu0 %v7728, 64
      %v8042 = vpop.permute.xlu0 %8041
      %8043 = vrot.lane.b32.xlu0 %v7729, 64
      %v8044 = vpop.permute.xlu0 %8043
      %8045 = vrot.lane.b32.xlu0 %v7730, 64
      %v8046 = vpop.permute.xlu0 %8045
      %8047 = vrot.lane.b32.xlu0 %v7731, 64
      %v8048 = vpop.permute.xlu0 %8047
      %8049 = vrot.lane.b32.xlu0 %v7732, 64
      %v8050 = vpop.permute.xlu0 %8049
      %8051 = vrot.lane.b32.xlu0 %v7733, 64
      %v8052 = vpop.permute.xlu0 %8051
      %8053 = vrot.lane.b32.xlu0 %v7734, 64
      %v8054 = vpop.permute.xlu0 %8053
      %8055 = vrot.lane.b32.xlu0 %v7735, 64
      %v8056 = vpop.permute.xlu0 %8055
      %8057 = vrot.lane.b32.xlu0 %v7736, 64
      %v8058 = vpop.permute.xlu0 %8057
      %8059 = vrot.lane.b32.xlu0 %v7737, 64
      %v8060 = vpop.permute.xlu0 %8059
      %8061 = vrot.lane.b32.xlu0 %v7738, 64
      %v8062 = vpop.permute.xlu0 %8061
      %8063 = vrot.lane.b32.xlu0 %v7739, 64
      %v8064 = vpop.permute.xlu0 %8063
      %8065 = vrot.lane.b32.xlu0 %v7740, 64
      %v8066 = vpop.permute.xlu0 %8065
      %8067 = vrot.lane.b32.xlu0 %v7741, 64
      %v8068 = vpop.permute.xlu0 %8067
      %8069 = vrot.lane.b32.xlu0 %v7742, 64
      %v8070 = vpop.permute.xlu0 %8069
      %8071 = vrot.lane.b32.xlu0 %v7743, 64
      %v8072 = vpop.permute.xlu0 %8071
      %8073 = vrot.lane.b32.xlu0 %v7744, 64
      %v8074 = vpop.permute.xlu0 %8073
      %8075 = vrot.lane.b32.xlu0 %v7745, 64
      %v8076 = vpop.permute.xlu0 %8075
      %8077 = vrot.lane.b32.xlu0 %v7746, 64
      %v8078 = vpop.permute.xlu0 %8077
      %8079 = vrot.lane.b32.xlu0 %v7747, 64
      %v8080 = vpop.permute.xlu0 %8079
      %8081 = vrot.lane.b32.xlu0 %v7748, 64
      %v8082 = vpop.permute.xlu0 %8081
      %8083 = vrot.lane.b32.xlu0 %v7749, 64
      %v8084 = vpop.permute.xlu0 %8083
      %8085 = vrot.lane.b32.xlu0 %v7750, 64
      %v8086 = vpop.permute.xlu0 %8085
      %8087 = vrot.lane.b32.xlu0 %v7751, 64
      %v8088 = vpop.permute.xlu0 %8087
      %8089 = vrot.lane.b32.xlu0 %v7752, 64
      %v8090 = vpop.permute.xlu0 %8089
      %8091 = vrot.lane.b32.xlu0 %v7753, 64
      %v8092 = vpop.permute.xlu0 %8091
      %8093 = vrot.lane.b32.xlu0 %v7754, 64
      %v8094 = vpop.permute.xlu0 %8093
      %8095 = vrot.lane.b32.xlu0 %v7755, 64
      %v8096 = vpop.permute.xlu0 %8095
      %8097 = vrot.lane.b32.xlu0 %v7756, 64
      %v8098 = vpop.permute.xlu0 %8097
      %8099 = vrot.lane.b32.xlu0 %v7757, 64
      %v8100 = vpop.permute.xlu0 %8099
      %8101 = vrot.lane.b32.xlu0 %v7758, 64
      %v8102 = vpop.permute.xlu0 %8101
      %8103 = vrot.lane.b32.xlu0 %v7759, 64
      %v8104 = vpop.permute.xlu0 %8103
      %8105 = vrot.lane.b32.xlu0 %v7760, 64
      %v8106 = vpop.permute.xlu0 %8105
      %8107 = vrot.lane.b32.xlu0 %v7761, 64
      %v8108 = vpop.permute.xlu0 %8107
      %8109 = vrot.lane.b32.xlu0 %v7762, 64
      %v8110 = vpop.permute.xlu0 %8109
      %8111 = vrot.lane.b32.xlu0 %v7763, 64
      %v8112 = vpop.permute.xlu0 %8111
      %8113 = vrot.lane.b32.xlu0 %v7764, 64
      %v8114 = vpop.permute.xlu0 %8113
      %8115 = vrot.lane.b32.xlu0 %v7765, 64
      %v8116 = vpop.permute.xlu0 %8115
      %8117 = vrot.lane.b32.xlu0 %v7766, 64
      %v8118 = vpop.permute.xlu0 %8117
      %8119 = vrot.lane.b32.xlu0 %v7767, 64
      %v8120 = vpop.permute.xlu0 %8119
      %8121 = vrot.lane.b32.xlu0 %v7768, 64
      %v8122 = vpop.permute.xlu0 %8121
      %8123 = vrot.lane.b32.xlu0 %v7769, 64
      %v8124 = vpop.permute.xlu0 %8123
      %8125 = vrot.lane.b32.xlu0 %v7770, 64
      %v8126 = vpop.permute.xlu0 %8125
      %8127 = vrot.lane.b32.xlu0 %v7771, 64
      %v8128 = vpop.permute.xlu0 %8127
      %8129 = vrot.lane.b32.xlu0 %v7772, 64
      %v8130 = vpop.permute.xlu0 %8129
      %8131 = vrot.lane.b32.xlu0 %v7773, 64
      %v8132 = vpop.permute.xlu0 %8131
      %8133 = vrot.lane.b32.xlu0 %v7774, 64
      %v8134 = vpop.permute.xlu0 %8133
      %v8135 = vsel %vm1755, %v8040, %v8042
      %v8136 = vsel %vm1755, %v8042, %v8044
      %v8137 = vsel %vm1755, %v8044, %v8046
      %v8138 = vsel %vm1755, %v8046, %v8048
      %v8139 = vsel %vm1755, %v8048, %v8050
      %v8140 = vsel %vm1755, %v8052, %v8054
      %v8141 = vsel %vm1755, %v8054, %v8056
      %v8142 = vsel %vm1755, %v8056, %v8058
      %v8143 = vsel %vm1755, %v8058, %v8060
      %v8144 = vsel %vm1755, %v8060, %v8062
      %v8145 = vsel %vm1755, %v8064, %v8066
      %v8146 = vsel %vm1755, %v8066, %v8068
      %v8147 = vsel %vm1755, %v8068, %v8070
      %v8148 = vsel %vm1755, %v8070, %v8072
      %v8149 = vsel %vm1755, %v8072, %v8074
      %v8150 = vsel %vm1755, %v8076, %v8078
      %v8151 = vsel %vm1755, %v8078, %v8080
      %v8152 = vsel %vm1755, %v8080, %v8082
      %v8153 = vsel %vm1755, %v8082, %v8084
      %v8154 = vsel %vm1755, %v8084, %v8086
      %v8155 = vsel %vm1755, %v8088, %v8090
      %v8156 = vsel %vm1755, %v8090, %v8092
      %v8157 = vsel %vm1755, %v8092, %v8094
      %v8158 = vsel %vm1755, %v8094, %v8096
      %v8159 = vsel %vm1755, %v8096, %v8098
      %v8160 = vsel %vm1755, %v8100, %v8102
      %v8161 = vsel %vm1755, %v8102, %v8104
      %v8162 = vsel %vm1755, %v8104, %v8106
      %v8163 = vsel %vm1755, %v8106, %v8108
      %v8164 = vsel %vm1755, %v8108, %v8110
      %v8165 = vsel %vm1755, %v8112, %v8114
      %v8166 = vsel %vm1755, %v8114, %v8116
      %v8167 = vsel %vm1755, %v8116, %v8118
      %v8168 = vsel %vm1755, %v8118, %v8120
      %v8169 = vsel %vm1755, %v8120, %v8122
      %v8170 = vsel %vm1755, %v8124, %v8126
      %v8171 = vsel %vm1755, %v8126, %v8128
      %v8172 = vsel %vm1755, %v8128, %v8130
      %v8173 = vsel %vm1755, %v8130, %v8132
      %v8174 = vsel %vm1755, %v8132, %v8134
      %8215 = vrot.lane.b32.xlu0 %v7727, 62
      %v8216 = vpop.permute.xlu0 %8215
      %8217 = vrot.lane.b32.xlu0 %v7728, 62
      %v8218 = vpop.permute.xlu0 %8217
      %8219 = vrot.lane.b32.xlu0 %v7729, 62
      %v8220 = vpop.permute.xlu0 %8219
      %8221 = vrot.lane.b32.xlu0 %v7730, 62
      %v8222 = vpop.permute.xlu0 %8221
      %8223 = vrot.lane.b32.xlu0 %v7731, 62
      %v8224 = vpop.permute.xlu0 %8223
      %8225 = vrot.lane.b32.xlu0 %v7732, 62
      %v8226 = vpop.permute.xlu0 %8225
      %8227 = vrot.lane.b32.xlu0 %v7733, 62
      %v8228 = vpop.permute.xlu0 %8227
      %8229 = vrot.lane.b32.xlu0 %v7734, 62
      %v8230 = vpop.permute.xlu0 %8229
      %8231 = vrot.lane.b32.xlu0 %v7735, 62
      %v8232 = vpop.permute.xlu0 %8231
      %8233 = vrot.lane.b32.xlu0 %v7736, 62
      %v8234 = vpop.permute.xlu0 %8233
      %8235 = vrot.lane.b32.xlu0 %v7737, 62
      %v8236 = vpop.permute.xlu0 %8235
      %8237 = vrot.lane.b32.xlu0 %v7738, 62
      %v8238 = vpop.permute.xlu0 %8237
      %8239 = vrot.lane.b32.xlu0 %v7739, 62
      %v8240 = vpop.permute.xlu0 %8239
      %8241 = vrot.lane.b32.xlu0 %v7740, 62
      %v8242 = vpop.permute.xlu0 %8241
      %8243 = vrot.lane.b32.xlu0 %v7741, 62
      %v8244 = vpop.permute.xlu0 %8243
      %8245 = vrot.lane.b32.xlu0 %v7742, 62
      %v8246 = vpop.permute.xlu0 %8245
      %8247 = vrot.lane.b32.xlu0 %v7743, 62
      %v8248 = vpop.permute.xlu0 %8247
      %8249 = vrot.lane.b32.xlu0 %v7744, 62
      %v8250 = vpop.permute.xlu0 %8249
      %8251 = vrot.lane.b32.xlu0 %v7745, 62
      %v8252 = vpop.permute.xlu0 %8251
      %8253 = vrot.lane.b32.xlu0 %v7746, 62
      %v8254 = vpop.permute.xlu0 %8253
      %8255 = vrot.lane.b32.xlu0 %v7747, 62
      %v8256 = vpop.permute.xlu0 %8255
      %8257 = vrot.lane.b32.xlu0 %v7748, 62
      %v8258 = vpop.permute.xlu0 %8257
      %8259 = vrot.lane.b32.xlu0 %v7749, 62
      %v8260 = vpop.permute.xlu0 %8259
      %8261 = vrot.lane.b32.xlu0 %v7750, 62
      %v8262 = vpop.permute.xlu0 %8261
      %8263 = vrot.lane.b32.xlu0 %v7751, 62
      %v8264 = vpop.permute.xlu0 %8263
      %8265 = vrot.lane.b32.xlu0 %v7752, 62
      %v8266 = vpop.permute.xlu0 %8265
      %8267 = vrot.lane.b32.xlu0 %v7753, 62
      %v8268 = vpop.permute.xlu0 %8267
      %8269 = vrot.lane.b32.xlu0 %v7754, 62
      %v8270 = vpop.permute.xlu0 %8269
      %8271 = vrot.lane.b32.xlu0 %v7755, 62
      %v8272 = vpop.permute.xlu0 %8271
      %8273 = vrot.lane.b32.xlu0 %v7756, 62
      %v8274 = vpop.permute.xlu0 %8273
      %8275 = vrot.lane.b32.xlu0 %v7757, 62
      %v8276 = vpop.permute.xlu0 %8275
      %8277 = vrot.lane.b32.xlu0 %v7758, 62
      %v8278 = vpop.permute.xlu0 %8277
      %8279 = vrot.lane.b32.xlu0 %v7759, 62
      %v8280 = vpop.permute.xlu0 %8279
      %8281 = vrot.lane.b32.xlu0 %v7760, 62
      %v8282 = vpop.permute.xlu0 %8281
      %8283 = vrot.lane.b32.xlu0 %v7761, 62
      %v8284 = vpop.permute.xlu0 %8283
      %8285 = vrot.lane.b32.xlu0 %v7762, 62
      %v8286 = vpop.permute.xlu0 %8285
      %8287 = vrot.lane.b32.xlu0 %v7763, 62
      %v8288 = vpop.permute.xlu0 %8287
      %8289 = vrot.lane.b32.xlu0 %v7764, 62
      %v8290 = vpop.permute.xlu0 %8289
      %8291 = vrot.lane.b32.xlu0 %v7765, 62
      %v8292 = vpop.permute.xlu0 %8291
      %8293 = vrot.lane.b32.xlu0 %v7766, 62
      %v8294 = vpop.permute.xlu0 %8293
      %8295 = vrot.lane.b32.xlu0 %v7767, 62
      %v8296 = vpop.permute.xlu0 %8295
      %8297 = vrot.lane.b32.xlu0 %v7768, 62
      %v8298 = vpop.permute.xlu0 %8297
      %8299 = vrot.lane.b32.xlu0 %v7769, 62
      %v8300 = vpop.permute.xlu0 %8299
      %8301 = vrot.lane.b32.xlu0 %v7770, 62
      %v8302 = vpop.permute.xlu0 %8301
      %8303 = vrot.lane.b32.xlu0 %v7771, 62
      %v8304 = vpop.permute.xlu0 %8303
      %8305 = vrot.lane.b32.xlu0 %v7772, 62
      %v8306 = vpop.permute.xlu0 %8305
      %8307 = vrot.lane.b32.xlu0 %v7773, 62
      %v8308 = vpop.permute.xlu0 %8307
      %8309 = vrot.lane.b32.xlu0 %v7774, 62
      %v8310 = vpop.permute.xlu0 %8309
      %v8311 = vsel %vm2019, %v8216, %v8218
      %v8312 = vsel %vm2019, %v8218, %v8220
      %v8313 = vsel %vm2019, %v8220, %v8222
      %v8314 = vsel %vm2019, %v8222, %v8224
      %v8315 = vsel %vm2019, %v8224, %v8226
      %v8316 = vsel %vm2019, %v8228, %v8230
      %v8317 = vsel %vm2019, %v8230, %v8232
      %v8318 = vsel %vm2019, %v8232, %v8234
      %v8319 = vsel %vm2019, %v8234, %v8236
      %v8320 = vsel %vm2019, %v8236, %v8238
      %v8321 = vsel %vm2019, %v8240, %v8242
      %v8322 = vsel %vm2019, %v8242, %v8244
      %v8323 = vsel %vm2019, %v8244, %v8246
      %v8324 = vsel %vm2019, %v8246, %v8248
      %v8325 = vsel %vm2019, %v8248, %v8250
      %v8326 = vsel %vm2019, %v8252, %v8254
      %v8327 = vsel %vm2019, %v8254, %v8256
      %v8328 = vsel %vm2019, %v8256, %v8258
      %v8329 = vsel %vm2019, %v8258, %v8260
      %v8330 = vsel %vm2019, %v8260, %v8262
      %v8331 = vsel %vm2019, %v8264, %v8266
      %v8332 = vsel %vm2019, %v8266, %v8268
      %v8333 = vsel %vm2019, %v8268, %v8270
      %v8334 = vsel %vm2019, %v8270, %v8272
      %v8335 = vsel %vm2019, %v8272, %v8274
      %v8336 = vsel %vm2019, %v8276, %v8278
      %v8337 = vsel %vm2019, %v8278, %v8280
      %v8338 = vsel %vm2019, %v8280, %v8282
      %v8339 = vsel %vm2019, %v8282, %v8284
      %v8340 = vsel %vm2019, %v8284, %v8286
      %v8341 = vsel %vm2019, %v8288, %v8290
      %v8342 = vsel %vm2019, %v8290, %v8292
      %v8343 = vsel %vm2019, %v8292, %v8294
      %v8344 = vsel %vm2019, %v8294, %v8296
      %v8345 = vsel %vm2019, %v8296, %v8298
      %v8346 = vsel %vm2019, %v8300, %v8302
      %v8347 = vsel %vm2019, %v8302, %v8304
      %v8348 = vsel %vm2019, %v8304, %v8306
      %v8349 = vsel %vm2019, %v8306, %v8308
      %v8350 = vsel %vm2019, %v8308, %v8310
      %v8391 = vmax.f32 %v8135, %v8311
      %v8392 = vmax.f32 %v8136, %v8312
      %v8393 = vmax.f32 %v8137, %v8313
      %v8394 = vmax.f32 %v8138, %v8314
      %v8395 = vmax.f32 %v8139, %v8315
      %v8396 = vmax.f32 %v8140, %v8316
      %v8397 = vmax.f32 %v8141, %v8317
      %v8398 = vmax.f32 %v8142, %v8318
      %v8399 = vmax.f32 %v8143, %v8319
      %v8400 = vmax.f32 %v8144, %v8320
      %v8401 = vmax.f32 %v8145, %v8321
      %v8402 = vmax.f32 %v8146, %v8322
      %v8403 = vmax.f32 %v8147, %v8323
      %v8404 = vmax.f32 %v8148, %v8324
      %v8405 = vmax.f32 %v8149, %v8325
      %v8406 = vmax.f32 %v8150, %v8326
      %v8407 = vmax.f32 %v8151, %v8327
      %v8408 = vmax.f32 %v8152, %v8328
      %v8409 = vmax.f32 %v8153, %v8329
      %v8410 = vmax.f32 %v8154, %v8330
      %v8411 = vmax.f32 %v8155, %v8331
      %v8412 = vmax.f32 %v8156, %v8332
      %v8413 = vmax.f32 %v8157, %v8333
      %v8414 = vmax.f32 %v8158, %v8334
      %v8415 = vmax.f32 %v8159, %v8335
      %v8416 = vmax.f32 %v8160, %v8336
      %v8417 = vmax.f32 %v8161, %v8337
      %v8418 = vmax.f32 %v8162, %v8338
      %v8419 = vmax.f32 %v8163, %v8339
      %v8420 = vmax.f32 %v8164, %v8340
      %v8421 = vmax.f32 %v8165, %v8341
      %v8422 = vmax.f32 %v8166, %v8342
      %v8423 = vmax.f32 %v8167, %v8343
      %v8424 = vmax.f32 %v8168, %v8344
      %v8425 = vmax.f32 %v8169, %v8345
      %v8426 = vmax.f32 %v8170, %v8346
      %v8427 = vmax.f32 %v8171, %v8347
      %v8428 = vmax.f32 %v8172, %v8348
      %v8429 = vmax.f32 %v8173, %v8349
      %v8430 = vmax.f32 %v8174, %v8350
      %v8431 = vmax.f32 %v7999, %v8391
      %v8432 = vmax.f32 %v8000, %v8392
      %v8433 = vmax.f32 %v8001, %v8393
      %v8434 = vmax.f32 %v8002, %v8394
      %v8435 = vmax.f32 %v8003, %v8395
      %v8436 = vmax.f32 %v8004, %v8396
      %v8437 = vmax.f32 %v8005, %v8397
      %v8438 = vmax.f32 %v8006, %v8398
      %v8439 = vmax.f32 %v8007, %v8399
      %v8440 = vmax.f32 %v8008, %v8400
      %v8441 = vmax.f32 %v8009, %v8401
      %v8442 = vmax.f32 %v8010, %v8402
      %v8443 = vmax.f32 %v8011, %v8403
      %v8444 = vmax.f32 %v8012, %v8404
      %v8445 = vmax.f32 %v8013, %v8405
      %v8446 = vmax.f32 %v8014, %v8406
      %v8447 = vmax.f32 %v8015, %v8407
      %v8448 = vmax.f32 %v8016, %v8408
      %v8449 = vmax.f32 %v8017, %v8409
      %v8450 = vmax.f32 %v8018, %v8410
      %v8451 = vmax.f32 %v8019, %v8411
      %v8452 = vmax.f32 %v8020, %v8412
      %v8453 = vmax.f32 %v8021, %v8413
      %v8454 = vmax.f32 %v8022, %v8414
      %v8455 = vmax.f32 %v8023, %v8415
      %v8456 = vmax.f32 %v8024, %v8416
      %v8457 = vmax.f32 %v8025, %v8417
      %v8458 = vmax.f32 %v8026, %v8418
      %v8459 = vmax.f32 %v8027, %v8419
      %v8460 = vmax.f32 %v8028, %v8420
      %v8461 = vmax.f32 %v8029, %v8421
      %v8462 = vmax.f32 %v8030, %v8422
      %v8463 = vmax.f32 %v8031, %v8423
      %v8464 = vmax.f32 %v8032, %v8424
      %v8465 = vmax.f32 %v8033, %v8425
      %v8466 = vmax.f32 %v8034, %v8426
      %v8467 = vmax.f32 %v8035, %v8427
      %v8468 = vmax.f32 %v8036, %v8428
      %v8469 = vmax.f32 %v8037, %v8429
      %v8470 = vmax.f32 %v8038, %v8430
      %v8471 = vpack.c.bf16 %v8451, %v8431
      %v8472 = vpack.c.bf16 %v8452, %v8432
      %v8473 = vpack.c.bf16 %v8453, %v8433
      %v8474 = vpack.c.bf16 %v8454, %v8434
      %v8475 = vpack.c.bf16 %v8455, %v8435
      %v8476 = vpack.c.bf16 %v8456, %v8436
      %v8477 = vpack.c.bf16 %v8457, %v8437
      %v8478 = vpack.c.bf16 %v8458, %v8438
      %v8479 = vpack.c.bf16 %v8459, %v8439
      %v8480 = vpack.c.bf16 %v8460, %v8440
      %v8481 = vpack.c.bf16 %v8461, %v8441
      %v8482 = vpack.c.bf16 %v8462, %v8442
      %v8483 = vpack.c.bf16 %v8463, %v8443
      %v8484 = vpack.c.bf16 %v8464, %v8444
      %v8485 = vpack.c.bf16 %v8465, %v8445
      %v8486 = vpack.c.bf16 %v8466, %v8446
      %v8487 = vpack.c.bf16 %v8467, %v8447
      %v8488 = vpack.c.bf16 %v8468, %v8448
      %v8489 = vpack.c.bf16 %v8469, %v8449
      %v8490 = vpack.c.bf16 %v8470, %v8450
      %8503 = vrot.lane.b32.xlu0 %v8471, 124
      %v8504 = vpop.permute.xlu0 %8503
      %8505 = vrot.lane.b32.xlu0 %v8472, 124
      %v8506 = vpop.permute.xlu0 %8505
      %8507 = vrot.lane.b32.xlu0 %v8473, 124
      %v8508 = vpop.permute.xlu0 %8507
      %8509 = vrot.lane.b32.xlu0 %v8475, 124
      %v8510 = vpop.permute.xlu0 %8509
      %8511 = vrot.lane.b32.xlu0 %v8476, 124
      %v8512 = vpop.permute.xlu0 %8511
      %8513 = vrot.lane.b32.xlu0 %v8477, 124
      %v8514 = vpop.permute.xlu0 %8513
      %8515 = vrot.lane.b32.xlu0 %v8481, 124
      %v8516 = vpop.permute.xlu0 %8515
      %8517 = vrot.lane.b32.xlu0 %v8482, 124
      %v8518 = vpop.permute.xlu0 %8517
      %8519 = vrot.lane.b32.xlu0 %v8483, 124
      %v8520 = vpop.permute.xlu0 %8519
      %8521 = vrot.lane.b32.xlu0 %v8485, 124
      %v8522 = vpop.permute.xlu0 %8521
      %8523 = vrot.lane.b32.xlu0 %v8486, 124
      %v8524 = vpop.permute.xlu0 %8523
      %8525 = vrot.lane.b32.xlu0 %v8487, 124
      %v8526 = vpop.permute.xlu0 %8525
      %v8527 = vsel %vm900, %v8504, %v8506
      %v8528 = vsel %vm900, %v8506, %v8508
      %v8529 = vsel %vm900, %v8510, %v8512
      %v8530 = vsel %vm900, %v8512, %v8514
      %v8531 = vsel %vm900, %v8516, %v8518
      %v8532 = vsel %vm900, %v8518, %v8520
      %v8533 = vsel %vm900, %v8522, %v8524
      %v8534 = vsel %vm900, %v8524, %v8526
      %8543 = vrot.lane.b32.xlu0 %v8471, 120
      %v8544 = vpop.permute.xlu0 %8543
      %8545 = vrot.lane.b32.xlu0 %v8472, 120
      %v8546 = vpop.permute.xlu0 %8545
      %8547 = vrot.lane.b32.xlu0 %v8473, 120
      %v8548 = vpop.permute.xlu0 %8547
      %8549 = vrot.lane.b32.xlu0 %v8475, 120
      %v8550 = vpop.permute.xlu0 %8549
      %8551 = vrot.lane.b32.xlu0 %v8476, 120
      %v8552 = vpop.permute.xlu0 %8551
      %8553 = vrot.lane.b32.xlu0 %v8477, 120
      %v8554 = vpop.permute.xlu0 %8553
      %8555 = vrot.lane.b32.xlu0 %v8481, 120
      %v8556 = vpop.permute.xlu0 %8555
      %8557 = vrot.lane.b32.xlu0 %v8482, 120
      %v8558 = vpop.permute.xlu0 %8557
      %8559 = vrot.lane.b32.xlu0 %v8483, 120
      %v8560 = vpop.permute.xlu0 %8559
      %8561 = vrot.lane.b32.xlu0 %v8485, 120
      %v8562 = vpop.permute.xlu0 %8561
      %8563 = vrot.lane.b32.xlu0 %v8486, 120
      %v8564 = vpop.permute.xlu0 %8563
      %8565 = vrot.lane.b32.xlu0 %v8487, 120
      %v8566 = vpop.permute.xlu0 %8565
      %v8567 = vsel %vm5867, %v8544, %v8546
      %v8568 = vsel %vm5867, %v8546, %v8548
      %v8569 = vsel %vm5867, %v8550, %v8552
      %v8570 = vsel %vm5867, %v8552, %v8554
      %v8571 = vsel %vm5867, %v8556, %v8558
      %v8572 = vsel %vm5867, %v8558, %v8560
      %v8573 = vsel %vm5867, %v8562, %v8564
      %v8574 = vsel %vm5867, %v8564, %v8566
      %8583 = vrot.lane.b32.xlu0 %v8471, 116
      %v8584 = vpop.permute.xlu0 %8583
      %8585 = vrot.lane.b32.xlu0 %v8472, 116
      %v8586 = vpop.permute.xlu0 %8585
      %8587 = vrot.lane.b32.xlu0 %v8473, 116
      %v8588 = vpop.permute.xlu0 %8587
      %8589 = vrot.lane.b32.xlu0 %v8475, 116
      %v8590 = vpop.permute.xlu0 %8589
      %8591 = vrot.lane.b32.xlu0 %v8476, 116
      %v8592 = vpop.permute.xlu0 %8591
      %8593 = vrot.lane.b32.xlu0 %v8477, 116
      %v8594 = vpop.permute.xlu0 %8593
      %8595 = vrot.lane.b32.xlu0 %v8481, 116
      %v8596 = vpop.permute.xlu0 %8595
      %8597 = vrot.lane.b32.xlu0 %v8482, 116
      %v8598 = vpop.permute.xlu0 %8597
      %8599 = vrot.lane.b32.xlu0 %v8483, 116
      %v8600 = vpop.permute.xlu0 %8599
      %8601 = vrot.lane.b32.xlu0 %v8485, 116
      %v8602 = vpop.permute.xlu0 %8601
      %8603 = vrot.lane.b32.xlu0 %v8486, 116
      %v8604 = vpop.permute.xlu0 %8603
      %8605 = vrot.lane.b32.xlu0 %v8487, 116
      %v8606 = vpop.permute.xlu0 %8605
      %vm8607 = vcmask 949248
      %v8608 = vsel %vm8607, %v8584, %v8586
      %v8609 = vsel %vm8607, %v8586, %v8588
      %v8610 = vsel %vm8607, %v8590, %v8592
      %v8611 = vsel %vm8607, %v8592, %v8594
      %v8612 = vsel %vm8607, %v8596, %v8598
      %v8613 = vsel %vm8607, %v8598, %v8600
      %v8614 = vsel %vm8607, %v8602, %v8604
      %v8615 = vsel %vm8607, %v8604, %v8606
      %8624 = vrot.lane.b32.xlu0 %v8471, 112
      %v8625 = vpop.permute.xlu0 %8624
      %8626 = vrot.lane.b32.xlu0 %v8472, 112
      %v8627 = vpop.permute.xlu0 %8626
      %8628 = vrot.lane.b32.xlu0 %v8473, 112
      %v8629 = vpop.permute.xlu0 %8628
      %8630 = vrot.lane.b32.xlu0 %v8475, 112
      %v8631 = vpop.permute.xlu0 %8630
      %8632 = vrot.lane.b32.xlu0 %v8476, 112
      %v8633 = vpop.permute.xlu0 %8632
      %8634 = vrot.lane.b32.xlu0 %v8477, 112
      %v8635 = vpop.permute.xlu0 %8634
      %8636 = vrot.lane.b32.xlu0 %v8481, 112
      %v8637 = vpop.permute.xlu0 %8636
      %8638 = vrot.lane.b32.xlu0 %v8482, 112
      %v8639 = vpop.permute.xlu0 %8638
      %8640 = vrot.lane.b32.xlu0 %v8483, 112
      %v8641 = vpop.permute.xlu0 %8640
      %8642 = vrot.lane.b32.xlu0 %v8485, 112
      %v8643 = vpop.permute.xlu0 %8642
      %8644 = vrot.lane.b32.xlu0 %v8486, 112
      %v8645 = vpop.permute.xlu0 %8644
      %8646 = vrot.lane.b32.xlu0 %v8487, 112
      %v8647 = vpop.permute.xlu0 %8646
      %vm8648 = vcmask 916480
      %v8649 = vsel %vm8648, %v8625, %v8627
      %v8650 = vsel %vm8648, %v8627, %v8629
      %v8651 = vsel %vm8648, %v8631, %v8633
      %v8652 = vsel %vm8648, %v8633, %v8635
      %v8653 = vsel %vm8648, %v8637, %v8639
      %v8654 = vsel %vm8648, %v8639, %v8641
      %v8655 = vsel %vm8648, %v8643, %v8645
      %v8656 = vsel %vm8648, %v8645, %v8647
      %8669 = vrot.lane.b32.xlu0 %v8474, 124
      %v8670 = vpop.permute.xlu0 %8669
      %8671 = vrot.lane.b32.xlu0 %v8478, 124
      %v8672 = vpop.permute.xlu0 %8671
      %8673 = vrot.lane.b32.xlu0 %v8484, 124
      %v8674 = vpop.permute.xlu0 %8673
      %8675 = vrot.lane.b32.xlu0 %v8488, 124
      %v8676 = vpop.permute.xlu0 %8675
      %v8677 = vsel %vm900, %v8508, %v8670
      %v8678 = vsel %vm900, %v8514, %v8672
      %v8679 = vsel %vm900, %v8520, %v8674
      %v8680 = vsel %vm900, %v8526, %v8676
      %8685 = vrot.lane.b32.xlu0 %v8474, 120
      %v8686 = vpop.permute.xlu0 %8685
      %8687 = vrot.lane.b32.xlu0 %v8478, 120
      %v8688 = vpop.permute.xlu0 %8687
      %8689 = vrot.lane.b32.xlu0 %v8484, 120
      %v8690 = vpop.permute.xlu0 %8689
      %8691 = vrot.lane.b32.xlu0 %v8488, 120
      %v8692 = vpop.permute.xlu0 %8691
      %v8693 = vsel %vm5867, %v8548, %v8686
      %v8694 = vsel %vm5867, %v8554, %v8688
      %v8695 = vsel %vm5867, %v8560, %v8690
      %v8696 = vsel %vm5867, %v8566, %v8692
      %8701 = vrot.lane.b32.xlu0 %v8474, 116
      %v8702 = vpop.permute.xlu0 %8701
      %8703 = vrot.lane.b32.xlu0 %v8478, 116
      %v8704 = vpop.permute.xlu0 %8703
      %8705 = vrot.lane.b32.xlu0 %v8484, 116
      %v8706 = vpop.permute.xlu0 %8705
      %8707 = vrot.lane.b32.xlu0 %v8488, 116
      %v8708 = vpop.permute.xlu0 %8707
      %v8709 = vsel %vm8607, %v8588, %v8702
      %v8710 = vsel %vm8607, %v8594, %v8704
      %v8711 = vsel %vm8607, %v8600, %v8706
      %v8712 = vsel %vm8607, %v8606, %v8708
      %8717 = vrot.lane.b32.xlu0 %v8474, 112
      %v8718 = vpop.permute.xlu0 %8717
      %8719 = vrot.lane.b32.xlu0 %v8478, 112
      %v8720 = vpop.permute.xlu0 %8719
      %8721 = vrot.lane.b32.xlu0 %v8484, 112
      %v8722 = vpop.permute.xlu0 %8721
      %8723 = vrot.lane.b32.xlu0 %v8488, 112
      %v8724 = vpop.permute.xlu0 %8723
      %v8725 = vsel %vm8648, %v8629, %v8718
      %v8726 = vsel %vm8648, %v8635, %v8720
      %v8727 = vsel %vm8648, %v8641, %v8722
      %v8728 = vsel %vm8648, %v8647, %v8724
      %8735 = vrot.lane.b32.xlu0 %v8479, 124
      %v8736 = vpop.permute.xlu0 %8735
      %8737 = vrot.lane.b32.xlu0 %v8489, 124
      %v8738 = vpop.permute.xlu0 %8737
      %v8739 = vsel %vm900, %v8670, %v8510
      %v8740 = vsel %vm900, %v8672, %v8736
      %v8741 = vsel %vm900, %v8674, %v8522
      %v8742 = vsel %vm900, %v8676, %v8738
      %8747 = vrot.lane.b32.xlu0 %v8479, 120
      %v8748 = vpop.permute.xlu0 %8747
      %8749 = vrot.lane.b32.xlu0 %v8489, 120
      %v8750 = vpop.permute.xlu0 %8749
      %v8751 = vsel %vm5867, %v8686, %v8550
      %v8752 = vsel %vm5867, %v8688, %v8748
      %v8753 = vsel %vm5867, %v8690, %v8562
      %v8754 = vsel %vm5867, %v8692, %v8750
      %8759 = vrot.lane.b32.xlu0 %v8479, 116
      %v8760 = vpop.permute.xlu0 %8759
      %8761 = vrot.lane.b32.xlu0 %v8489, 116
      %v8762 = vpop.permute.xlu0 %8761
      %v8763 = vsel %vm8607, %v8702, %v8590
      %v8764 = vsel %vm8607, %v8704, %v8760
      %v8765 = vsel %vm8607, %v8706, %v8602
      %v8766 = vsel %vm8607, %v8708, %v8762
      %8771 = vrot.lane.b32.xlu0 %v8479, 112
      %v8772 = vpop.permute.xlu0 %8771
      %8773 = vrot.lane.b32.xlu0 %v8489, 112
      %v8774 = vpop.permute.xlu0 %8773
      %v8775 = vsel %vm8648, %v8718, %v8631
      %v8776 = vsel %vm8648, %v8720, %v8772
      %v8777 = vsel %vm8648, %v8722, %v8643
      %v8778 = vsel %vm8648, %v8724, %v8774
      %8785 = vrot.lane.b32.xlu0 %v8480, 124
      %v8786 = vpop.permute.xlu0 %8785
      %8787 = vrot.lane.b32.xlu0 %v8490, 124
      %v8788 = vpop.permute.xlu0 %8787
      %v8789 = vsel %vm900, %v8736, %v8786
      %v8790 = vsel %vm900, %v8738, %v8788
      %8793 = vrot.lane.b32.xlu0 %v8480, 120
      %v8794 = vpop.permute.xlu0 %8793
      %8795 = vrot.lane.b32.xlu0 %v8490, 120
      %v8796 = vpop.permute.xlu0 %8795
      %v8797 = vsel %vm5867, %v8748, %v8794
      %v8798 = vsel %vm5867, %v8750, %v8796
      %8801 = vrot.lane.b32.xlu0 %v8480, 116
      %v8802 = vpop.permute.xlu0 %8801
      %8803 = vrot.lane.b32.xlu0 %v8490, 116
      %v8804 = vpop.permute.xlu0 %8803
      %v8805 = vsel %vm8607, %v8760, %v8802
      %v8806 = vsel %vm8607, %v8762, %v8804
      %8809 = vrot.lane.b32.xlu0 %v8480, 112
      %v8810 = vpop.permute.xlu0 %8809
      %8811 = vrot.lane.b32.xlu0 %v8490, 112
      %v8812 = vpop.permute.xlu0 %8811
      %v8813 = vsel %vm8648, %v8772, %v8810
      %v8814 = vsel %vm8648, %v8774, %v8812
      %v8817 = vsel %vm900, %v8786, %v8516
      %v8821 = vsel %vm963, %v8788, %v8504
      %v8823 = vsel %vm5867, %v8794, %v8556
      %v8827 = vsel %vm5922, %v8796, %v8544
      %v8829 = vsel %vm8607, %v8802, %v8596
      %vm8831 = vcmask 949248
      %v8834 = vsel %vm8831, %v8804, %v8584
      %v8836 = vsel %vm8648, %v8810, %v8637
      %vm8838 = vcmask 916480
      %v8841 = vsel %vm8838, %v8812, %v8625
      %v8843 = vld [vmem:[%s5] sm:$0xff]
      %v8844 = vld [vmem:[%s5 + $0x8] sm:$0xff]
      %v8845 = vld [vmem:[%s5 + $0x10] sm:$0xff]
      %v8846 = vld [vmem:[%s5 + $0x18] sm:$0xff]
      %v8847 = vld [vmem:[%s5 + $0x20] sm:$0xff]
      %v8848 = vld [vmem:[%s5 + $0x28] sm:$0xff]
      %v8849 = vld [vmem:[%s5 + $0x30] sm:$0xff]
      %v8850 = vld [vmem:[%s5 + $0x38] sm:$0xff]
      %v8851 = vld [vmem:[%s6] sm:$0xff]
      %v8852 = vld [vmem:[%s6 + $0x8] sm:$0xff]
      %v8853 = vld [vmem:[%s6 + $0x10] sm:$0xff]
      %v8854 = vld [vmem:[%s6 + $0x18] sm:$0xff]
      %8856 = vset.pattern.permute.xlu0 0
      %8857 = vperm.xlu0 %8856, %v8851
      %v8858 = vpop.permute.xlu0 %8857
      %8861 = vset.pattern.permute.xlu0 0
      %8862 = vperm.xlu0 %8861, %v8852
      %v8863 = vpop.permute.xlu0 %8862
      %8866 = vset.pattern.permute.xlu0 0
      %8867 = vperm.xlu0 %8866, %v8853
      %v8868 = vpop.permute.xlu0 %8867
      %8871 = vset.pattern.permute.xlu0 0
      %8872 = vperm.xlu0 %8871, %v8854
      %v8873 = vpop.permute.xlu0 %8872
      %v8883 = vunpack.c.l.b16 %v8843
      %v8884 = vunpack.c.h.b16 %v8843
      %v8885 = vunpack.c.l.b16 %v8844
      %v8886 = vunpack.c.h.b16 %v8844
      %v8887 = vunpack.c.l.b16 %v8845
      %v8888 = vunpack.c.h.b16 %v8845
      %v8889 = vunpack.c.l.b16 %v8846
      %v8890 = vunpack.c.h.b16 %v8846
      %v8891 = vunpack.c.l.b16 %v8847
      %v8892 = vunpack.c.h.b16 %v8847
      %v8893 = vunpack.c.l.b16 %v8848
      %v8894 = vunpack.c.h.b16 %v8848
      %v8895 = vunpack.c.l.b16 %v8849
      %v8896 = vunpack.c.h.b16 %v8849
      %v8897 = vunpack.c.l.b16 %v8850
      %v8898 = vunpack.c.h.b16 %v8850
      %v8899 = vpack.c.b16 %v8887, %v8883
      %v8900 = vpack.c.b16 %v8888, %v8884
      %v8901 = vpack.c.b16 %v8889, %v8885
      %v8902 = vpack.c.b16 %v8890, %v8886
      %v8903 = vpack.c.b16 %v8895, %v8891
      %v8904 = vpack.c.b16 %v8896, %v8892
      %v8905 = vpack.c.b16 %v8897, %v8893
      %v8906 = vpack.c.b16 %v8898, %v8894
      %v8914 = vsel %vm3015, %v8902, 0
      %v8917 = vsel %vm3015, %v8906, 0
      %8919 = vmatprep.subr.bf16.mxu0 %v8693
      %8920 = vmatpush1.bf16.msra.mxu0 %v8568
      %8921 = vmatprep.subr.bf16.mxu0 %v8677
      %8922 = vmatpush1.bf16.msra.mxu0 %v8528
      %8923 = vmatprep.subr.bf16.mxu0 %v8473
      %8924 = vmatpush1.bf16.msra.mxu0 %v8472
      %8925 = vmatprep.subr.bf16.mxu0 %v8650
      %8926 = vmatpush1.bf16.msra.mxu0 %v8649
      %8927 = vmatprep.subr.bf16.mxu0 %v8609
      %8928 = vmatpush1.bf16.msra.mxu0 %v8608
      %8929 = vmatprep.subr.bf16.mxu0 %v8568
      %8930 = vmatpush1.bf16.msra.mxu0 %v8567
      %8931 = vmatprep.subr.bf16.mxu0 %v8528
      %8932 = vmatpush1.bf16.msra.mxu0 %v8527
      %8933 = vmatprep.subr.bf16.mxu0 %v8472
      %8934 = vmatpush1.bf16.msra.mxu0 %v8471
      %8935 = vmatprep.subr.bf16.mxu0 %v8475
      %8936 = vmatpush2.bf16.msra.mxu0 %v8474
      %8937 = vmatprep.subr.bf16.mxu0 %v8775
      %8938 = vmatpush2.bf16.msra.mxu0 %v8725
      %8939 = vmatprep.subr.bf16.mxu0 %v8763
      %8940 = vmatpush2.bf16.msra.mxu0 %v8709
      %8941 = vmatprep.subr.bf16.mxu0 %v8751
      %8942 = vmatpush2.bf16.msra.mxu0 %v8693
      %8943 = vmatprep.subr.bf16.mxu0 %v8739
      %8944 = vmatpush2.bf16.msra.mxu0 %v8677
      %8945 = vmatprep.subr.bf16.mxu0 %v8474
      %8946 = vmatpush2.bf16.msra.mxu0 %v8473
      %8947 = vmatprep.subr.bf16.mxu0 %v8725
      %8948 = vmatpush2.bf16.msra.mxu0 %v8650
      %8949 = vmatprep.subr.bf16.mxu0 %v8709
      %8950 = vmatpush2.bf16.msra.mxu0 %v8609
      %8951 = vmatprep.mubr.bf16.mxu0 %v8900
      %8952 = vmatmul.mubr.bf16.gmra.mxu0 %v8899
      %v8953 = vpop.f32.mrf.mxu0
      %v8954 = vadd.f32 %v8858, %v8953
      %v8955 = vpop.f32.mrf.mxu0
      %v8956 = vpop.f32.mrf.mxu0
      %v8957 = vadd.f32 %v8863, %v8956
      %v8958 = vpop.f32.mrf.mxu0
      %8959 = vmatprep.mubr.bf16.mxu0 %v8904
      %8960 = vmatmul.mubr.bf16.gmra.mxu0 %v8903
      %v8961 = vpop.f32.mrf.mxu0
      %v8962 = vadd.f32 %v8868, %v8961
      %v8963 = vpop.f32.mrf.mxu0
      %v8964 = vpop.f32.mrf.mxu0
      %v8965 = vadd.f32 %v8873, %v8964
      %v8966 = vpop.f32.mrf.mxu0
      %8967 = vdwg.mxu0
      %8968 = vmatprep.subr.bf16.mxu0 %v8611
      %8969 = vmatpush1.bf16.msra.mxu0 %v8610
      %8970 = vmatprep.subr.bf16.mxu0 %v8570
      %8971 = vmatpush1.bf16.msra.mxu0 %v8569
      %8972 = vmatprep.subr.bf16.mxu0 %v8530
      %8973 = vmatpush1.bf16.msra.mxu0 %v8529
      %8974 = vmatprep.subr.bf16.mxu0 %v8476
      %8975 = vmatpush1.bf16.msra.mxu0 %v8475
      %8976 = vmatprep.subr.bf16.mxu0 %v8651
      %8977 = vmatpush1.bf16.msra.mxu0 %v8775
      %8978 = vmatprep.subr.bf16.mxu0 %v8610
      %8979 = vmatpush1.bf16.msra.mxu0 %v8763
      %8980 = vmatprep.subr.bf16.mxu0 %v8569
      %8981 = vmatpush1.bf16.msra.mxu0 %v8751
      %8982 = vmatprep.subr.bf16.mxu0 %v8529
      %8983 = vmatpush1.bf16.msra.mxu0 %v8739
      %8984 = vmatprep.subr.bf16.mxu0 0
      %8985 = vmatpush2.bf16.msra.mxu0 0
      %8986 = vmatprep.subr.bf16.mxu0 0
      %8987 = vmatpush2.bf16.msra.mxu0 0
      %8988 = vmatprep.subr.bf16.mxu0 0
      %8989 = vmatpush2.bf16.msra.mxu0 0
      %8990 = vmatprep.subr.bf16.mxu0 0
      %8991 = vmatpush2.bf16.msra.mxu0 0
      %8992 = vmatprep.subr.bf16.mxu0 0
      %8993 = vmatpush2.bf16.msra.mxu0 0
      %8994 = vmatprep.subr.bf16.mxu0 0
      %8995 = vmatpush2.bf16.msra.mxu0 0
      %8996 = vmatprep.subr.bf16.mxu0 0
      %8997 = vmatpush2.bf16.msra.mxu0 0
      %8998 = vmatprep.subr.bf16.mxu0 %v8652
      %8999 = vmatpush2.bf16.msra.mxu0 %v8651
      %9000 = vmatprep.mubr.bf16.mxu0 %v8914
      %9001 = vmatmul.mubr.bf16.gmra.mxu0 %v8901
      %v9002 = vpop.f32.mrf.mxu0
      %v9003 = vadd.f32 %v8954, %v9002
      %v9004 = vpop.f32.mrf.mxu0
      %v9005 = vpop.f32.mrf.mxu0
      %v9006 = vadd.f32 %v8957, %v9005
      %v9007 = vpop.f32.mrf.mxu0
      %9008 = vmatprep.mubr.bf16.mxu0 %v8917
      %9009 = vmatmul.mubr.bf16.gmra.mxu0 %v8905
      %v9010 = vpop.f32.mrf.mxu0
      %v9011 = vadd.f32 %v8962, %v9010
      %v9012 = vpop.f32.mrf.mxu0
      %v9013 = vpop.f32.mrf.mxu0
      %v9014 = vadd.f32 %v8965, %v9013
      %v9015 = vpop.f32.mrf.mxu0
      %9016 = vdwg.mxu0
      %9017 = vmatprep.subr.bf16.mxu0 %v8694
      %9018 = vmatpush1.bf16.msra.mxu0 %v8570
      %9019 = vmatprep.subr.bf16.mxu0 %v8678
      %9020 = vmatpush1.bf16.msra.mxu0 %v8530
      %9021 = vmatprep.subr.bf16.mxu0 %v8477
      %9022 = vmatpush1.bf16.msra.mxu0 %v8476
      %9023 = vmatprep.subr.bf16.mxu0 %v8652
      %9024 = vmatpush1.bf16.msra.mxu0 %v8651
      %9025 = vmatprep.subr.bf16.mxu0 %v8611
      %9026 = vmatpush1.bf16.msra.mxu0 %v8610
      %9027 = vmatprep.subr.bf16.mxu0 %v8570
      %9028 = vmatpush1.bf16.msra.mxu0 %v8569
      %9029 = vmatprep.subr.bf16.mxu0 %v8530
      %9030 = vmatpush1.bf16.msra.mxu0 %v8529
      %9031 = vmatprep.subr.bf16.mxu0 %v8476
      %9032 = vmatpush1.bf16.msra.mxu0 %v8475
      %9033 = vmatprep.subr.bf16.mxu0 %v8479
      %9034 = vmatpush2.bf16.msra.mxu0 %v8478
      %9035 = vmatprep.subr.bf16.mxu0 %v8776
      %9036 = vmatpush2.bf16.msra.mxu0 %v8726
      %9037 = vmatprep.subr.bf16.mxu0 %v8764
      %9038 = vmatpush2.bf16.msra.mxu0 %v8710
      %9039 = vmatprep.subr.bf16.mxu0 %v8752
      %9040 = vmatpush2.bf16.msra.mxu0 %v8694
      %9041 = vmatprep.subr.bf16.mxu0 %v8740
      %9042 = vmatpush2.bf16.msra.mxu0 %v8678
      %9043 = vmatprep.subr.bf16.mxu0 %v8478
      %9044 = vmatpush2.bf16.msra.mxu0 %v8477
      %9045 = vmatprep.subr.bf16.mxu0 %v8726
      %9046 = vmatpush2.bf16.msra.mxu0 %v8652
      %9047 = vmatprep.subr.bf16.mxu0 %v8710
      %9048 = vmatpush2.bf16.msra.mxu0 %v8611
      %9049 = vmatprep.mubr.bf16.mxu0 %v8900
      %9050 = vmatmul.mubr.bf16.gmra.mxu0 %v8899
      %v9051 = vpop.f32.mrf.mxu0
      %v9052 = vpop.f32.mrf.mxu0
      %v9053 = vadd.f32 %v8858, %v9052
      %v9054 = vpop.f32.mrf.mxu0
      %v9055 = vpop.f32.mrf.mxu0
      %v9056 = vadd.f32 %v8863, %v9055
      %9057 = vmatprep.mubr.bf16.mxu0 %v8904
      %9058 = vmatmul.mubr.bf16.gmra.mxu0 %v8903
      %v9059 = vpop.f32.mrf.mxu0
      %v9060 = vpop.f32.mrf.mxu0
      %v9061 = vadd.f32 %v8868, %v9060
      %v9062 = vpop.f32.mrf.mxu0
      %v9063 = vpop.f32.mrf.mxu0
      %v9064 = vadd.f32 %v8873, %v9063
      %9065 = vdwg.mxu0
      %9066 = vmatprep.subr.bf16.mxu0 %v8829
      %9067 = vmatpush1.bf16.msra.mxu0 %v8805
      %9068 = vmatprep.subr.bf16.mxu0 %v8823
      %9069 = vmatpush1.bf16.msra.mxu0 %v8797
      %9070 = vmatprep.subr.bf16.mxu0 %v8817
      %9071 = vmatpush1.bf16.msra.mxu0 %v8789
      %9072 = vmatprep.subr.bf16.mxu0 %v8480
      %9073 = vmatpush1.bf16.msra.mxu0 %v8479
      %9074 = vmatprep.subr.bf16.mxu0 %v8813
      %9075 = vmatpush1.bf16.msra.mxu0 %v8776
      %9076 = vmatprep.subr.bf16.mxu0 %v8805
      %9077 = vmatpush1.bf16.msra.mxu0 %v8764
      %9078 = vmatprep.subr.bf16.mxu0 %v8797
      %9079 = vmatpush1.bf16.msra.mxu0 %v8752
      %9080 = vmatprep.subr.bf16.mxu0 %v8789
      %9081 = vmatpush1.bf16.msra.mxu0 %v8740
      %9082 = vmatprep.subr.bf16.mxu0 0
      %9083 = vmatpush2.bf16.msra.mxu0 0
      %9084 = vmatprep.subr.bf16.mxu0 0
      %9085 = vmatpush2.bf16.msra.mxu0 0
      %9086 = vmatprep.subr.bf16.mxu0 0
      %9087 = vmatpush2.bf16.msra.mxu0 0
      %9088 = vmatprep.subr.bf16.mxu0 0
      %9089 = vmatpush2.bf16.msra.mxu0 0
      %9090 = vmatprep.subr.bf16.mxu0 0
      %9091 = vmatpush2.bf16.msra.mxu0 0
      %9092 = vmatprep.subr.bf16.mxu0 0
      %9093 = vmatpush2.bf16.msra.mxu0 0
      %9094 = vmatprep.subr.bf16.mxu0 0
      %9095 = vmatpush2.bf16.msra.mxu0 0
      %9096 = vmatprep.subr.bf16.mxu0 %v8836
      %9097 = vmatpush2.bf16.msra.mxu0 %v8813
      %9098 = vmatprep.mubr.bf16.mxu0 %v8914
      %9099 = vmatmul.mubr.bf16.gmra.mxu0 %v8901
      %v9100 = vpop.f32.mrf.mxu0
      %v9101 = vpop.f32.mrf.mxu0
      %v9102 = vadd.f32 %v9053, %v9101
      %v9103 = vpop.f32.mrf.mxu0
      %v9104 = vpop.f32.mrf.mxu0
      %v9105 = vadd.f32 %v9056, %v9104
      %9106 = vmatprep.mubr.bf16.mxu0 %v8917
      %9107 = vmatmul.mubr.bf16.gmra.mxu0 %v8905
      %v9108 = vpop.f32.mrf.mxu0
      %v9109 = vpop.f32.mrf.mxu0
      %v9110 = vadd.f32 %v9061, %v9109
      %v9111 = vpop.f32.mrf.mxu0
      %v9112 = vpop.f32.mrf.mxu0
      %v9113 = vadd.f32 %v9064, %v9112
      %9114 = vdwg.mxu0
      %9115 = vmatprep.subr.bf16.mxu0 %v8695
      %9116 = vmatpush1.bf16.msra.mxu0 %v8572
      %9117 = vmatprep.subr.bf16.mxu0 %v8679
      %9118 = vmatpush1.bf16.msra.mxu0 %v8532
      %9119 = vmatprep.subr.bf16.mxu0 %v8483
      %9120 = vmatpush1.bf16.msra.mxu0 %v8482
      %9121 = vmatprep.subr.bf16.mxu0 %v8654
      %9122 = vmatpush1.bf16.msra.mxu0 %v8653
      %9123 = vmatprep.subr.bf16.mxu0 %v8613
      %9124 = vmatpush1.bf16.msra.mxu0 %v8612
      %9125 = vmatprep.subr.bf16.mxu0 %v8572
      %9126 = vmatpush1.bf16.msra.mxu0 %v8571
      %9127 = vmatprep.subr.bf16.mxu0 %v8532
      %9128 = vmatpush1.bf16.msra.mxu0 %v8531
      %9129 = vmatprep.subr.bf16.mxu0 %v8482
      %9130 = vmatpush1.bf16.msra.mxu0 %v8481
      %9131 = vmatprep.subr.bf16.mxu0 %v8485
      %9132 = vmatpush2.bf16.msra.mxu0 %v8484
      %9133 = vmatprep.subr.bf16.mxu0 %v8777
      %9134 = vmatpush2.bf16.msra.mxu0 %v8727
      %9135 = vmatprep.subr.bf16.mxu0 %v8765
      %9136 = vmatpush2.bf16.msra.mxu0 %v8711
      %9137 = vmatprep.subr.bf16.mxu0 %v8753
      %9138 = vmatpush2.bf16.msra.mxu0 %v8695
      %9139 = vmatprep.subr.bf16.mxu0 %v8741
      %9140 = vmatpush2.bf16.msra.mxu0 %v8679
      %9141 = vmatprep.subr.bf16.mxu0 %v8484
      %9142 = vmatpush2.bf16.msra.mxu0 %v8483
      %9143 = vmatprep.subr.bf16.mxu0 %v8727
      %9144 = vmatpush2.bf16.msra.mxu0 %v8654
      %9145 = vmatprep.subr.bf16.mxu0 %v8711
      %9146 = vmatpush2.bf16.msra.mxu0 %v8613
      %9147 = vmatprep.mubr.bf16.mxu0 %v8900
      %9148 = vmatmul.mubr.bf16.gmra.mxu0 %v8899
      %v9149 = vpop.f32.mrf.mxu0
      %v9150 = vadd.f32 %v8858, %v9149
      %v9151 = vpop.f32.mrf.mxu0
      %v9152 = vpop.f32.mrf.mxu0
      %v9153 = vadd.f32 %v8863, %v9152
      %v9154 = vpop.f32.mrf.mxu0
      %9155 = vmatprep.mubr.bf16.mxu0 %v8904
      %9156 = vmatmul.mubr.bf16.gmra.mxu0 %v8903
      %v9157 = vpop.f32.mrf.mxu0
      %v9158 = vadd.f32 %v8868, %v9157
      %v9159 = vpop.f32.mrf.mxu0
      %v9160 = vpop.f32.mrf.mxu0
      %v9161 = vadd.f32 %v8873, %v9160
      %v9162 = vpop.f32.mrf.mxu0
      %9163 = vdwg.mxu0
      %9164 = vmatprep.subr.bf16.mxu0 %v8615
      %9165 = vmatpush1.bf16.msra.mxu0 %v8614
      %9166 = vmatprep.subr.bf16.mxu0 %v8574
      %9167 = vmatpush1.bf16.msra.mxu0 %v8573
      %9168 = vmatprep.subr.bf16.mxu0 %v8534
      %9169 = vmatpush1.bf16.msra.mxu0 %v8533
      %9170 = vmatprep.subr.bf16.mxu0 %v8486
      %9171 = vmatpush1.bf16.msra.mxu0 %v8485
      %9172 = vmatprep.subr.bf16.mxu0 %v8655
      %9173 = vmatpush1.bf16.msra.mxu0 %v8777
      %9174 = vmatprep.subr.bf16.mxu0 %v8614
      %9175 = vmatpush1.bf16.msra.mxu0 %v8765
      %9176 = vmatprep.subr.bf16.mxu0 %v8573
      %9177 = vmatpush1.bf16.msra.mxu0 %v8753
      %9178 = vmatprep.subr.bf16.mxu0 %v8533
      %9179 = vmatpush1.bf16.msra.mxu0 %v8741
      %9180 = vmatprep.subr.bf16.mxu0 0
      %9181 = vmatpush2.bf16.msra.mxu0 0
      %9182 = vmatprep.subr.bf16.mxu0 0
      %9183 = vmatpush2.bf16.msra.mxu0 0
      %9184 = vmatprep.subr.bf16.mxu0 0
      %9185 = vmatpush2.bf16.msra.mxu0 0
      %9186 = vmatprep.subr.bf16.mxu0 0
      %9187 = vmatpush2.bf16.msra.mxu0 0
      %9188 = vmatprep.subr.bf16.mxu0 0
      %9189 = vmatpush2.bf16.msra.mxu0 0
      %9190 = vmatprep.subr.bf16.mxu0 0
      %9191 = vmatpush2.bf16.msra.mxu0 0
      %9192 = vmatprep.subr.bf16.mxu0 0
      %9193 = vmatpush2.bf16.msra.mxu0 0
      %9194 = vmatprep.subr.bf16.mxu0 %v8656
      %9195 = vmatpush2.bf16.msra.mxu0 %v8655
      %9196 = vmatprep.mubr.bf16.mxu0 %v8914
      %9197 = vmatmul.mubr.bf16.gmra.mxu0 %v8901
      %v9198 = vpop.f32.mrf.mxu0
      %v9199 = vadd.f32 %v9150, %v9198
      %v9200 = vpop.f32.mrf.mxu0
      %v9201 = vpop.f32.mrf.mxu0
      %v9202 = vadd.f32 %v9153, %v9201
      %v9203 = vpop.f32.mrf.mxu0
      %9204 = vmatprep.mubr.bf16.mxu0 %v8917
      %9205 = vmatmul.mubr.bf16.gmra.mxu0 %v8905
      %v9206 = vpop.f32.mrf.mxu0
      %v9207 = vadd.f32 %v9158, %v9206
      %v9208 = vpop.f32.mrf.mxu0
      %v9209 = vpop.f32.mrf.mxu0
      %v9210 = vadd.f32 %v9161, %v9209
      %v9211 = vpop.f32.mrf.mxu0
      %9212 = vdwg.mxu0
      %9213 = vmatprep.subr.bf16.mxu0 %v8696
      %9214 = vmatpush1.bf16.msra.mxu0 %v8574
      %9215 = vmatprep.subr.bf16.mxu0 %v8680
      %9216 = vmatpush1.bf16.msra.mxu0 %v8534
      %9217 = vmatprep.subr.bf16.mxu0 %v8487
      %9218 = vmatpush1.bf16.msra.mxu0 %v8486
      %9219 = vmatprep.subr.bf16.mxu0 %v8656
      %9220 = vmatpush1.bf16.msra.mxu0 %v8655
      %9221 = vmatprep.subr.bf16.mxu0 %v8615
      %9222 = vmatpush1.bf16.msra.mxu0 %v8614
      %9223 = vmatprep.subr.bf16.mxu0 %v8574
      %9224 = vmatpush1.bf16.msra.mxu0 %v8573
      %9225 = vmatprep.subr.bf16.mxu0 %v8534
      %9226 = vmatpush1.bf16.msra.mxu0 %v8533
      %9227 = vmatprep.subr.bf16.mxu0 %v8486
      %9228 = vmatpush1.bf16.msra.mxu0 %v8485
      %9229 = vmatprep.subr.bf16.mxu0 %v8489
      %9230 = vmatpush2.bf16.msra.mxu0 %v8488
      %9231 = vmatprep.subr.bf16.mxu0 %v8778
      %9232 = vmatpush2.bf16.msra.mxu0 %v8728
      %9233 = vmatprep.subr.bf16.mxu0 %v8766
      %9234 = vmatpush2.bf16.msra.mxu0 %v8712
      %9235 = vmatprep.subr.bf16.mxu0 %v8754
      %9236 = vmatpush2.bf16.msra.mxu0 %v8696
      %9237 = vmatprep.subr.bf16.mxu0 %v8742
      %9238 = vmatpush2.bf16.msra.mxu0 %v8680
      %9239 = vmatprep.subr.bf16.mxu0 %v8488
      %9240 = vmatpush2.bf16.msra.mxu0 %v8487
      %9241 = vmatprep.subr.bf16.mxu0 %v8728
      %9242 = vmatpush2.bf16.msra.mxu0 %v8656
      %9243 = vmatprep.subr.bf16.mxu0 %v8712
      %9244 = vmatpush2.bf16.msra.mxu0 %v8615
      %9245 = vmatprep.mubr.bf16.mxu0 %v8900
      %9246 = vmatmul.mubr.bf16.gmra.mxu0 %v8899
      %v9247 = vpop.f32.mrf.mxu0
      %v9248 = vpop.f32.mrf.mxu0
      %v9249 = vadd.f32 %v8858, %v9248
      %v9250 = vpop.f32.mrf.mxu0
      %v9251 = vpop.f32.mrf.mxu0
      %v9252 = vadd.f32 %v8863, %v9251
      %9253 = vmatprep.mubr.bf16.mxu0 %v8904
      %9254 = vmatmul.mubr.bf16.gmra.mxu0 %v8903
      %v9255 = vpop.f32.mrf.mxu0
      %v9256 = vpop.f32.mrf.mxu0
      %v9257 = vadd.f32 %v8868, %v9256
      %v9258 = vpop.f32.mrf.mxu0
      %v9259 = vpop.f32.mrf.mxu0
      %v9260 = vadd.f32 %v8873, %v9259
      %9261 = vdwg.mxu0
      %9262 = vmatprep.subr.bf16.mxu0 %v8834
      %9263 = vmatpush1.bf16.msra.mxu0 %v8806
      %9264 = vmatprep.subr.bf16.mxu0 %v8827
      %9265 = vmatpush1.bf16.msra.mxu0 %v8798
      %9266 = vmatprep.subr.bf16.mxu0 %v8821
      %9267 = vmatpush1.bf16.msra.mxu0 %v8790
      %9268 = vmatprep.subr.bf16.mxu0 %v8490
      %9269 = vmatpush1.bf16.msra.mxu0 %v8489
      %9270 = vmatprep.subr.bf16.mxu0 %v8814
      %9271 = vmatpush1.bf16.msra.mxu0 %v8778
      %9272 = vmatprep.subr.bf16.mxu0 %v8806
      %9273 = vmatpush1.bf16.msra.mxu0 %v8766
      %9274 = vmatprep.subr.bf16.mxu0 %v8798
      %9275 = vmatpush1.bf16.msra.mxu0 %v8754
      %9276 = vmatprep.subr.bf16.mxu0 %v8790
      %9277 = vmatpush1.bf16.msra.mxu0 %v8742
      %9278 = vmatprep.subr.bf16.mxu0 0
      %9279 = vmatpush2.bf16.msra.mxu0 0
      %9280 = vmatprep.subr.bf16.mxu0 0
      %9281 = vmatpush2.bf16.msra.mxu0 0
      %9282 = vmatprep.subr.bf16.mxu0 0
      %9283 = vmatpush2.bf16.msra.mxu0 0
      %9284 = vmatprep.subr.bf16.mxu0 0
      %9285 = vmatpush2.bf16.msra.mxu0 0
      %9286 = vmatprep.subr.bf16.mxu0 0
      %9287 = vmatpush2.bf16.msra.mxu0 0
      %9288 = vmatprep.subr.bf16.mxu0 0
      %9289 = vmatpush2.bf16.msra.mxu0 0
      %9290 = vmatprep.subr.bf16.mxu0 0
      %9291 = vmatpush2.bf16.msra.mxu0 0
      %9292 = vmatprep.subr.bf16.mxu0 %v8841
      %9293 = vmatpush2.bf16.msra.mxu0 %v8814
      %9294 = vmatprep.mubr.bf16.mxu0 %v8914
      %9295 = vmatmul.mubr.bf16.gmra.mxu0 %v8901
      %v9296 = vpop.f32.mrf.mxu0
      %v9297 = vpop.f32.mrf.mxu0
      %v9298 = vadd.f32 %v9249, %v9297
      %v9299 = vpop.f32.mrf.mxu0
      %v9300 = vpop.f32.mrf.mxu0
      %v9301 = vadd.f32 %v9252, %v9300
      %9302 = vmatprep.mubr.bf16.mxu0 %v8917
      %9303 = vmatmul.mubr.bf16.gmra.mxu0 %v8905
      %v9304 = vpop.f32.mrf.mxu0
      %v9305 = vpop.f32.mrf.mxu0
      %v9306 = vadd.f32 %v9257, %v9305
      %v9307 = vpop.f32.mrf.mxu0
      %v9308 = vpop.f32.mrf.mxu0
      %v9309 = vadd.f32 %v9260, %v9308
      %9310 = vdwg.mxu0
      %v9311 = vmax.f32 %v9003, 0.0
      %v9312 = vmax.f32 %v9102, 0.0
      %v9313 = vmax.f32 %v9199, 0.0
      %v9314 = vmax.f32 %v9298, 0.0
      %v9315 = vmax.f32 %v9006, 0.0
      %v9316 = vmax.f32 %v9105, 0.0
      %v9317 = vmax.f32 %v9202, 0.0
      %v9318 = vmax.f32 %v9301, 0.0
      %v9319 = vmax.f32 %v9011, 0.0
      %v9320 = vmax.f32 %v9110, 0.0
      %v9321 = vmax.f32 %v9207, 0.0
      %v9322 = vmax.f32 %v9306, 0.0
      %v9323 = vmax.f32 %v9014, 0.0
      %v9324 = vmax.f32 %v9113, 0.0
      %v9325 = vmax.f32 %v9210, 0.0
      %v9326 = vmax.f32 %v9309, 0.0
      %9331 = vrot.lane.b32.xlu0 %v9312, 1
      %v9332 = vpop.permute.xlu0 %9331
      %9333 = vrot.lane.b32.xlu0 %v9316, 1
      %v9334 = vpop.permute.xlu0 %9333
      %9335 = vrot.lane.b32.xlu0 %v9320, 1
      %v9336 = vpop.permute.xlu0 %9335
      %9337 = vrot.lane.b32.xlu0 %v9324, 1
      %v9338 = vpop.permute.xlu0 %9337
      %9347 = vrot.lane.b32.xlu0 %v9313, 2
      %v9348 = vpop.permute.xlu0 %9347
      %9349 = vrot.lane.b32.xlu0 %v9317, 2
      %v9350 = vpop.permute.xlu0 %9349
      %9351 = vrot.lane.b32.xlu0 %v9321, 2
      %v9352 = vpop.permute.xlu0 %9351
      %9353 = vrot.lane.b32.xlu0 %v9325, 2
      %v9354 = vpop.permute.xlu0 %9353
      %9363 = vrot.lane.b32.xlu0 %v9314, 3
      %v9364 = vpop.permute.xlu0 %9363
      %9365 = vrot.lane.b32.xlu0 %v9318, 3
      %v9366 = vpop.permute.xlu0 %9365
      %9367 = vrot.lane.b32.xlu0 %v9322, 3
      %v9368 = vpop.permute.xlu0 %9367
      %9369 = vrot.lane.b32.xlu0 %v9326, 3
      %v9370 = vpop.permute.xlu0 %9369
      %vm9375 = vcmask 7168
      %v9376 = vsel %vm9375, %v9311, %v9332
      %v9377 = vsel %vm9375, %v9315, %v9334
      %v9378 = vsel %vm9375, %v9319, %v9336
      %v9379 = vsel %vm9375, %v9323, %v9338
      %vm9380 = vcmask 15360
      %v9381 = vsel %vm9380, %v9376, %v9348
      %v9382 = vsel %vm9380, %v9377, %v9350
      %v9383 = vsel %vm9380, %v9378, %v9352
      %v9384 = vsel %vm9380, %v9379, %v9354
      %vm9385 = vcmask 23552
      %v9386 = vsel %vm9385, %v9381, %v9364
      %v9387 = vsel %vm9385, %v9382, %v9366
      %v9388 = vsel %vm9385, %v9383, %v9368
      %v9389 = vsel %vm9385, %v9384, %v9370
      %vm9390 = vcmask 31744
      %9391 = vst.msk [vmem:[%s278] sm:$0xff] %vm9390, %v9386
      %9392 = vst.msk [vmem:[%s278 + $0x8] sm:$0xff] %vm9390, %v9387
      %9393 = vst.msk [vmem:[%s278 + $0x10] sm:$0xff] %vm9390, %v9388
      %9394 = vst.msk [vmem:[%s278 + $0x18] sm:$0xff] %vm9390, %v9389
      %p9395 = scmp.lt.s32.totalorder %s18, 3
      %s9396 = scalar_select %p9395, %s18, 3
      %s9397 = smul.addr %s9396, 4
      %s9398 = smul.addr %s9397, 8
      %s9399 = scalar_lea.vmem %s7, %s9398
      // Predicated region
      $region49: #{feature_extractor_forward.1} parent=47 // pred_check
        %p9400 = pneg %p188
      $region50: #{feature_extractor_forward.1} parent=47 // pred_check_branch
        %9402 = sbr.rel (%p9400) target = $region52
      $region51: #{feature_extractor_forward.1} parent=47 // pred_region
        _
      $region52: #{feature_extractor_forward.1} parent=47 // pred_fallthru
        _
    $region48: #{feature_extractor_forward.1} parent=5 // pred_fallthru
      _
    %p9403 = scmp.le.s32.totalorder 2, %s13
    // Predicated region
    $region53: #{feature_extractor_forward.1} parent=5 // pred_check
      %p9404 = pneg %p9403
    $region54: #{feature_extractor_forward.1} parent=5 // pred_check_branch
      %9406 = sbr.rel (%p9404) target = $region56
    $region55: #{feature_extractor_forward.1} parent=5 // pred_region
      %s9407 = ssub.s32 %s13, 2
      // Predicated region
      $region57: #{feature_extractor_forward.1} parent=55 // pred_check
        %p9408 = pneg %p194
      $region58: #{feature_extractor_forward.1} parent=55 // pred_check_branch
        %9410 = sbr.rel (%p9408) target = $region60
      $region59: #{feature_extractor_forward.1} parent=55 // pred_region
        %p9411 = scmp.lt.s32.totalorder %s19, 3
        %s9412 = scalar_select %p9411, %s19, 3
        %s9413 = smul.addr %s9412, 4
        %s9414 = smul.addr %s9413, 8
        %s9415 = scalar_lea.vmem %s7, %s9414
      $region60: #{feature_extractor_forward.1} parent=55 // pred_fallthru
        _
    $region56: #{feature_extractor_forward.1} parent=5 // pred_fallthru
      _
  $region6: #{feature_extractor_forward.1} parent=0 // loop_footer
    %s17 = sadd.s32 1, %s13
  $region7: #{feature_extractor_forward.1} parent=0 // loop_footer_branch
    %12 = sbr.rel target = $region3
  $region8: #{feature_extractor_forward.1} parent=0 // loop_exit
    _

</llo_original>
